<compile_context>
chip_gen: v5e
topology: v5e:2x2
jax: 0.10.0
libtpu: 0.0.40
codegen_flags: <defaults>
</compile_context>

<pallas_src>
import functools
import math

import jax
import jax.numpy as jnp
import numpy as np
from jax.experimental import pallas as pl
from jax.experimental.pallas import tpu as pltpu

_BBOX_XFORM_CLIP = math.log(1000.0 / 16.0)
_VMEM_LIMIT = 32 * 1024 * 1024  # conservative, fits v5e/v6e/v7x scoped VMEM


def _round_up(v, m):
    return ((v + m - 1) // m) * m


# ------------------------- Pallas kernels -------------------------

def _roi_align_kernel(idx_ref, feat_ref, ay_ref, bx_ref, out_ref, *, P, C, pad):
    """RoIAlign for one RoI: pooled = Ay @ feat_slab @ Bx (separable bilinear+avg)."""
    del idx_ref  # only used by the index_map (scalar prefetch selects the image)
    tmp = jnp.dot(ay_ref[0], feat_ref[0],
                  preferred_element_type=jnp.float32)          # (P, Wf*C)
    pooled = jnp.dot(tmp.astype(jnp.bfloat16), bx_ref[0],
                     preferred_element_type=jnp.float32)       # (P, P*C)
    if pad:
        # emit the zero-padded (P+2, (P+2)*C) slab the mask-head 3x3 convs expect
        out_ref[0] = jnp.zeros((P + 2, (P + 2) * C), jnp.float32)
        out_ref[0, 1:P + 1, C:C * (P + 1)] = pooled
    else:
        out_ref[0] = pooled


def pallas_roi_align(img_ids, feat_slab, ay, bx, *, P, C, pad):
    R = ay.shape[0]
    _, Hf, WfC = feat_slab.shape
    PC = P * C
    if pad:
        out_shape = jax.ShapeDtypeStruct((R, P + 2, (P + 2) * C), jnp.float32)
        out_spec = pl.BlockSpec((1, P + 2, (P + 2) * C), lambda r, idx: (r, 0, 0))
    else:
        out_shape = jax.ShapeDtypeStruct((R, P, PC), jnp.float32)
        out_spec = pl.BlockSpec((1, P, PC), lambda r, idx: (r, 0, 0))
    return pl.pallas_call(
        functools.partial(_roi_align_kernel, P=P, C=C, pad=pad),
        out_shape=out_shape,
        grid_spec=pltpu.PrefetchScalarGridSpec(
            num_scalar_prefetch=1,
            grid=(R,),
            in_specs=[
                pl.BlockSpec((1, Hf, WfC), lambda r, idx: (idx[r], 0, 0)),
                pl.BlockSpec((1, P, Hf), lambda r, idx: (r, 0, 0)),
                pl.BlockSpec((1, WfC, PC), lambda r, idx: (r, 0, 0)),
            ],
            out_specs=out_spec),
        compiler_params=pltpu.CompilerParams(
            dimension_semantics=("arbitrary",),
            vmem_limit_bytes=_VMEM_LIMIT),
    )(img_ids, feat_slab, ay, bx)


def _box_branch_kernel(x_ref, meta_ref, w6_ref, b6_ref, w7_ref, b7_ref,
                       wc_ref, bc_ref, wb_ref, bb_ref,
                       scores_ref, boxes_ref, *, K, kp4, wx, wy, ww, wh):
    """Fused: fc6 -> fc7 -> {cls, bbox} heads -> softmax -> decode -> clip."""
    h = jnp.dot(x_ref[...], w6_ref[...], preferred_element_type=jnp.float32) + b6_ref[...]
    h = jnp.maximum(h, 0.0).astype(jnp.bfloat16)
    h = jnp.dot(h, w7_ref[...], preferred_element_type=jnp.float32) + b7_ref[...]
    h = jnp.maximum(h, 0.0).astype(jnp.bfloat16)

    # --- class scores (softmax fused in the epilogue, padded lanes masked out) ---
    logits = jnp.dot(h, wc_ref[...], preferred_element_type=jnp.float32) + bc_ref[...]
    col = jax.lax.broadcasted_iota(jnp.int32, logits.shape, 1)
    logits = jnp.where(col < K, logits, jnp.full_like(logits, -1e30))
    m = jnp.max(logits, axis=-1, keepdims=True)
    e = jnp.exp(logits - m)
    scores_ref[...] = e * pl.reciprocal(jnp.sum(e, axis=-1, keepdims=True), approx=True)

    # --- bbox regression + BoxCoder.decode + clip_boxes_to_image (f32 math) ---
    # bbox weight columns were reordered in __init__ to [dx|dy|dw|dh] blocks of kp4.
    reg = jnp.dot(h, wb_ref[...], preferred_element_type=jnp.float32) + bb_ref[...]
    meta = meta_ref[...]
    widths = meta[:, 2:3] - meta[:, 0:1]
    heights = meta[:, 3:4] - meta[:, 1:2]
    ctr_x = meta[:, 0:1] + 0.5 * widths
    ctr_y = meta[:, 1:2] + 0.5 * heights
    img_w = meta[:, 4:5]
    img_h = meta[:, 5:6]
    dx = reg[:, 0 * kp4:1 * kp4] * (1.0 / wx)
    dy = reg[:, 1 * kp4:2 * kp4] * (1.0 / wy)
    dw = jnp.minimum(reg[:, 2 * kp4:3 * kp4] * (1.0 / ww), _BBOX_XFORM_CLIP)
    dh = jnp.minimum(reg[:, 3 * kp4:4 * kp4] * (1.0 / wh), _BBOX_XFORM_CLIP)
    pcx = dx * widths + ctr_x
    pcy = dy * heights + ctr_y
    pw = jnp.exp(dw) * widths
    ph = jnp.exp(dh) * heights
    boxes_ref[:, 0 * kp4:1 * kp4] = jnp.clip(pcx - 0.5 * pw, 0.0, img_w)
    boxes_ref[:, 1 * kp4:2 * kp4] = jnp.clip(pcy - 0.5 * ph, 0.0, img_h)
    boxes_ref[:, 2 * kp4:3 * kp4] = jnp.clip(pcx + 0.5 * pw, 0.0, img_w)
    boxes_ref[:, 3 * kp4:4 * kp4] = jnp.clip(pcy + 0.5 * ph, 0.0, img_h)


def pallas_box_branch(x_pad, meta, params, *, K, kp4, reg_weights, tm):
    r_pad, box_in_pad = x_pad.shape
    cls_pad = params['wc'].shape[1]
    reg_pad = params['wb'].shape[1]

    def full(a):
        return pl.BlockSpec(a.shape, lambda i, _n=a.ndim: (0,) * _n)

    return pl.pallas_call(
        functools.partial(_box_branch_kernel, K=K, kp4=kp4,
                          wx=reg_weights[0], wy=reg_weights[1],
                          ww=reg_weights[2], wh=reg_weights[3]),
        out_shape=(jax.ShapeDtypeStruct((r_pad, cls_pad), jnp.float32),
                   jax.ShapeDtypeStruct((r_pad, reg_pad), jnp.float32)),
        grid=(r_pad // tm,),
        in_specs=[
            pl.BlockSpec((tm, box_in_pad), lambda i: (i, 0)),
            pl.BlockSpec((tm, meta.shape[1]), lambda i: (i, 0)),
            full(params['w6']), full(params['b6']),
            full(params['w7']), full(params['b7']),
            full(params['wc']), full(params['bc']),
            full(params['wb']), full(params['bb']),
        ],
        out_specs=(pl.BlockSpec((tm, cls_pad), lambda i: (i, 0)),
                   pl.BlockSpec((tm, reg_pad), lambda i: (i, 0))),
        compiler_params=pltpu.CompilerParams(
            dimension_semantics=("parallel",),
            vmem_limit_bytes=_VMEM_LIMIT),
    )(x_pad, meta, params['w6'], params['b6'], params['w7'], params['b7'],
      params['wc'], params['bc'], params['wb'], params['bb'])


def _mask_head_kernel(x_ref, *refs, n_conv, P, Cm, K):
    """Fused mask head for one RoI: n_conv x (3x3 conv + ReLU) -> deconv2x2 s2 + ReLU
    -> 1x1 conv -> sigmoid.  All intermediates live in VMEM scratch (2-D slabs,
    column layout w*C + c); 3x3 convs use Toeplitz weights (3 row-shifted matmuls)."""
    conv_refs = refs[:2 * n_conv]
    (wdrow_ref, bdrow_ref, w1big_ref, b1row_ref,
     out_ref, pada_ref, padb_ref) = refs[2 * n_conv:]

    pada_ref[...] = jnp.zeros(pada_ref.shape, jnp.float32)
    padb_ref[...] = jnp.zeros(padb_ref.shape, jnp.float32)
    pads = (pada_ref, padb_ref)

    def conv3x3(src, t_ref, b_ref):
        acc = jnp.zeros((P, P * Cm), jnp.float32)
        for dyy in range(3):
            acc = acc + jnp.dot(src(dyy), t_ref[dyy],
                                preferred_element_type=jnp.float32)
        return jnp.maximum(acc + b_ref[...], 0.0)

    src = lambda dyy: x_ref[0, dyy:dyy + P, :].astype(jnp.bfloat16)
    y = None
    for layer in range(n_conv):
        y = conv3x3(src, conv_refs[2 * layer], conv_refs[2 * layer + 1])
        if layer < n_conv - 1:
            dst = pads[layer % 2]
            dst[1:P + 1, Cm:Cm * (P + 1)] = y          # re-pad into scratch interior
            src = lambda dyy, _d=dst: _d[dyy:dyy + P, :].astype(jnp.bfloat16)

    yb = y.astype(jnp.bfloat16)                         # (P, P*Cm)
    for i in range(2):                                  # even / odd deconv output rows
        z = jnp.dot(yb, wdrow_ref[i], preferred_element_type=jnp.float32) + bdrow_ref[...]
        z = jnp.maximum(z, 0.0).astype(jnp.bfloat16)    # (P, 2*P*Cm)
        logit = (jnp.dot(z, w1big_ref[...], preferred_element_type=jnp.float32)
                 + b1row_ref[...])                      # (P, 2*P*K)
        out_ref[0, i] = pl.reciprocal(1.0 + jnp.exp(-logit), approx=True)  # sigmoid


def pallas_mask_head(x_pad, conv_params, wdrow, bdrow, w1big, b1row, *, P, Cm, K):
    D = x_pad.shape[0]
    n_conv = len(conv_params)

    def full(a):
        return pl.BlockSpec(a.shape, lambda d, _n=a.ndim: (0,) * _n)

    flat_args = []
    in_specs = [pl.BlockSpec((1,) + x_pad.shape[1:], lambda d: (d, 0, 0))]
    for (t, b) in conv_params:
        flat_args += [t, b]
        in_specs += [full(t), full(b)]
    flat_args += [wdrow, bdrow, w1big, b1row]
    in_specs += [full(wdrow), full(bdrow), full(w1big), full(b1row)]

    out_w = 2 * P * K
    return pl.pallas_call(
        functools.partial(_mask_head_kernel, n_conv=n_conv, P=P, Cm=Cm, K=K),
        out_shape=jax.ShapeDtypeStruct((D, 2, P, out_w), jnp.float32),
        grid=(D,),
        in_specs=in_specs,
        out_specs=pl.BlockSpec((1, 2, P, out_w), lambda d: (d, 0, 0, 0)),
        scratch_shapes=[pltpu.VMEM((P + 2, (P + 2) * Cm), jnp.float32),
                        pltpu.VMEM((P + 2, (P + 2) * Cm), jnp.float32)],
        compiler_params=pltpu.CompilerParams(
            dimension_semantics=("parallel",),
            vmem_limit_bytes=_VMEM_LIMIT),
    )(x_pad, *flat_args)


# ------------------------- RoIHeads (inference) -------------------------

def _init_linear(key, fan_in, fan_out, scale=0.05):
    k1, k2 = jax.random.split(key)
    w = scale * jax.random.normal(k1, (fan_in, fan_out), jnp.float32)
    b = 0.01 * jax.random.normal(k2, (fan_out,), jnp.float32)
    return np.asarray(w), np.asarray(b)


class RoIHeadsPallas:
    def __init__(self, key, in_channels=8, box_pool=7, representation=64,
                 num_classes=8, mask_pool=14, mask_channels=16, mask_layers=4,
                 spatial_scale=0.25, sampling_ratio=2, score_thresh=0.05,
                 nms_thresh=0.5, detections_per_img=4,
                 bbox_reg_weights=(10.0, 10.0, 5.0, 5.0)):
        self.training = False
        self.in_channels = in_channels
        self.box_pool = box_pool
        self.mask_pool = mask_pool
        self.mask_channels = mask_channels
        self.num_classes = num_classes
        self.spatial_scale = spatial_scale
        self.sampling_ratio = sampling_ratio
        self.score_thresh = score_thresh
        self.nms_thresh = nms_thresh
        self.detections_per_img = detections_per_img
        self.bbox_reg_weights = bbox_reg_weights

        keys = jax.random.split(key, 12)
        K = num_classes
        box_in = in_channels * box_pool * box_pool
        self.box_in_pad = _round_up(box_in, 128)
        rep_pad = _round_up(representation, 128)
        cls_pad = _round_up(K, 128)
        self.kp4 = _round_up(K, 32)          # per-component block, 4*kp4 is lane-dense
        reg_pad = 4 * self.kp4

        # ---- box head + predictor weights, padded to lane-dense (bf16 for MXU) ----
        w6, b6 = _init_linear(keys[0], box_in, representation)
        w7, b7 = _init_linear(keys[1], representation, representation)
        wc, bc = _init_linear(keys[2], representation, K)
        wb, bb = _init_linear(keys[3], representation, 4 * K)

        w6p = np.zeros((self.box_in_pad, rep_pad), np.float32)
        w6p[:box_in, :representation] = w6
        b6p = np.zeros((1, rep_pad), np.float32); b6p[0, :representation] = b6
        w7p = np.zeros((rep_pad, rep_pad), np.float32)
        w7p[:representation, :representation] = w7
        b7p = np.zeros((1, rep_pad), np.float32); b7p[0, :representation] = b7
        wcp = np.zeros((rep_pad, cls_pad), np.float32); wcp[:representation, :K] = wc
        bcp = np.zeros((1, cls_pad), np.float32); bcp[0, :K] = bc
        # reorder bbox columns from per-class (dx,dy,dw,dh) to component-major blocks
        # so the fused decode uses contiguous lane slices.
        wbp = np.zeros((rep_pad, reg_pad), np.float32)
        bbp = np.zeros((1, reg_pad), np.float32)
        for comp in range(4):
            for k in range(K):
                wbp[:representation, comp * self.kp4 + k] = wb[:, 4 * k + comp]
                bbp[0, comp * self.kp4 + k] = bb[4 * k + comp]
        self.box_params = {
            'w6': jnp.asarray(w6p, jnp.bfloat16), 'b6': jnp.asarray(b6p),
            'w7': jnp.asarray(w7p, jnp.bfloat16), 'b7': jnp.asarray(b7p),
            'wc': jnp.asarray(wcp, jnp.bfloat16), 'bc': jnp.asarray(bcp),
            'wb': jnp.asarray(wbp, jnp.bfloat16), 'bb': jnp.asarray(bbp),
        }

        # ---- mask head: Toeplitz-expanded 3x3 conv weights (in-kernel "im2col") ----
        P, Pp, Cm = mask_pool, mask_pool + 2, mask_channels
        self.mask_conv_params = []
        cin = in_channels
        for layer in range(mask_layers):
            kw, kb = jax.random.split(keys[4 + layer])
            w = np.asarray(0.05 * jax.random.normal(kw, (3, 3, cin, Cm), jnp.float32))
            b = np.asarray(0.01 * jax.random.normal(kb, (Cm,), jnp.float32))
            T = np.zeros((3, Pp * cin, P * Cm), np.float32)
            for dy in range(3):
                for dx in range(3):
                    for wcol in range(P):
                        T[dy, (wcol + dx) * cin:(wcol + dx + 1) * cin,
                          wcol * Cm:(wcol + 1) * Cm] = w[dy, dx]
            bslab = np.tile(b, P).reshape(1, P * Cm)
            self.mask_conv_params.append(
                (jnp.asarray(T, jnp.bfloat16), jnp.asarray(bslab)))
            cin = Cm

        # ---- mask predictor: deconv 2x2 s2 (row-group matmuls) + 1x1 (block-diag) ----
        kw, kb = jax.random.split(keys[8])
        wd = np.asarray(0.05 * jax.random.normal(kw, (Cm, Cm, 2, 2), jnp.float32))
        bd = np.asarray(0.01 * jax.random.normal(kb, (Cm,), jnp.float32))
        wdrow = np.zeros((2, P * Cm, 2 * P * Cm), np.float32)
        for i in range(2):
            for j in range(2):
                for wcol in range(P):
                    wdrow[i, wcol * Cm:(wcol + 1) * Cm,
                          (2 * wcol + j) * Cm:(2 * wcol + j + 1) * Cm] = wd[:, :, i, j]
        bdrow = np.tile(bd, 2 * P).reshape(1, 2 * P * Cm)
        w1, b1 = _init_linear(keys[9], Cm, K)
        w1big = np.kron(np.eye(2 * P, dtype=np.float32), w1)       # (2P*Cm, 2P*K)
        b1row = np.tile(b1, 2 * P).reshape(1, 2 * P * K)
        self.mask_wdrow = jnp.asarray(wdrow, jnp.bfloat16)
        self.mask_bdrow = jnp.asarray(bdrow)
        self.mask_w1big = jnp.asarray(w1big, jnp.bfloat16)
        self.mask_b1row = jnp.asarray(b1row)

        self._forward_jit = jax.jit(self._forward_impl, static_argnums=(2,))

    def has_mask(self):
        return True

    # Per-RoI separable bilinear interpolation + sr-average, as small dense matrices.
    def _roi_interp(self, boxes, P, Hf, Wf):
        C = self.in_channels
        sr = self.sampling_ratio
        scale = self.spatial_scale
        eyec = jnp.eye(C, dtype=jnp.float32)

        def per_roi(box):
            x1, y1, x2, y2 = box * scale
            roi_w = jnp.maximum(x2 - x1, 1.0)
            roi_h = jnp.maximum(y2 - y1, 1.0)
            bin_w = roi_w / P
            bin_h = roi_h / P
            g = jnp.arange(P, dtype=jnp.float32)[:, None]
            sub = (jnp.arange(sr, dtype=jnp.float32)[None, :] + 0.5) / sr
            ys = y1 + (g + sub) * bin_h           # (P, sr) sample coords
            xs = x1 + (g + sub) * bin_w

            def axis_weights(coords, L):
                c = jnp.clip(coords, 0.0, L - 1.0)
                c0 = jnp.floor(c)
                c1 = jnp.minimum(c0 + 1.0, L - 1.0)
                lc = c - c0
                idx = jnp.arange(L, dtype=jnp.float32)
                w = ((1.0 - lc)[..., None] * (c0[..., None] == idx).astype(jnp.float32)
                     + lc[..., None] * (c1[..., None] == idx).astype(jnp.float32))
                return w.mean(axis=1)             # average sr sub-samples -> (P, L)

            ay = axis_weights(ys, Hf)             # (P, Hf)
            ax = axis_weights(xs, Wf)             # (P, Wf)
            bx = (ax.T[:, None, :, None] * eyec[None, :, None, :]).reshape(Wf * C, P * C)
            return ay, bx

        ay, bx = jax.vmap(per_roi)(boxes)
        return ay.astype(jnp.bfloat16), bx.astype(jnp.bfloat16)

    def _forward_impl(self, features, proposals, image_shapes):
        # features: (N, Hf, Wf, C) NHWC
        K = self.num_classes
        num_images = len(proposals)
        boxes_per_image = [int(p.shape[0]) for p in proposals]
        R = sum(boxes_per_image)
        N, Hf, Wf, C = features.shape
        feat_slab = features.reshape(N, Hf, Wf * C).astype(jnp.bfloat16)

        all_props = jnp.concatenate(proposals, axis=0)
        img_ids = jnp.concatenate(
            [jnp.full((boxes_per_image[i],), i, jnp.int32) for i in range(num_images)])

        # ---- box branch: Pallas RoIAlign -> fused head/predictor/softmax/decode ----
        ay, bx = self._roi_interp(all_props, self.box_pool, Hf, Wf)
        box_feats = pallas_roi_align(img_ids, feat_slab, ay, bx,
                                     P=self.box_pool, C=C, pad=False)   # (R, P, P*C)

        tm = 128 if R >= 128 else 8
        r_pad = _round_up(R, tm)
        x = box_feats.reshape(R, self.box_pool * self.box_pool * C)
        x = jnp.pad(x, ((0, r_pad - R), (0, self.box_in_pad - x.shape[1])))
        x = x.astype(jnp.bfloat16)

        meta = jnp.zeros((r_pad, 128), jnp.float32)
        meta = meta.at[:R, 0:4].set(all_props)
        img_wh = jnp.concatenate(
            [jnp.tile(jnp.array([[float(image_shapes[i][1]), float(image_shapes[i][0])]],
                                jnp.float32), (boxes_per_image[i], 1))
             for i in range(num_images)], axis=0)
        meta = meta.at[:R, 4:6].set(img_wh)

        scores_slab, boxes_slab = pallas_box_branch(
            x, meta, self.box_params, K=K, kp4=self.kp4,
            reg_weights=self.bbox_reg_weights, tm=tm)
        pred_scores = scores_slab[:R, :K]
        pred_boxes = boxes_slab[:R].reshape(R, 4, self.kp4)[:, :, :K]
        pred_boxes = jnp.transpose(pred_boxes, (0, 2, 1))                # (R, K, 4)

        # ---- postprocess_detections ----
        result = []
        start = 0
        for i in range(num_images):
            n = boxes_per_image[i]
            boxes_i = pred_boxes[start:start + n, 1:, :].reshape(-1, 4)
            scores_i = pred_scores[start:start + n, 1:].reshape(-1)
            labels_i = jnp.tile(jnp.arange(1, K, dtype=jnp.int32), (n,))
            # TODO(synk): score_thresh filtering, remove_small_boxes and batched_nms
            # are dynamic-shape data-dependent ops; replaced by fixed-size top-k.
            top_scores, top_idx = jax.lax.top_k(scores_i, self.detections_per_img)
            result.append({'boxes': boxes_i[top_idx],
                           'labels': labels_i[top_idx],
                           'scores': top_scores})
            start += n
        losses = {}

        # ---- mask branch: padded Pallas RoIAlign -> fully fused mask head ----
        det = self.detections_per_img
        D = num_images * det
        mask_boxes = jnp.concatenate([r['boxes'] for r in result], axis=0)   # (D, 4)
        mask_img_ids = jnp.concatenate(
            [jnp.full((det,), i, jnp.int32) for i in range(num_images)])
        ay_m, bx_m = self._roi_interp(mask_boxes, self.mask_pool, Hf, Wf)
        mask_feats = pallas_roi_align(mask_img_ids, feat_slab, ay_m, bx_m,
                                      P=self.mask_pool, C=C, pad=True)
        mask_out = pallas_mask_head(mask_feats, self.mask_conv_params,
                                    self.mask_wdrow, self.mask_bdrow,
                                    self.mask_w1big, self.mask_b1row,
                                    P=self.mask_pool, Cm=self.mask_channels, K=K)
        P2 = 2 * self.mask_pool
        probs = mask_out.reshape(D, 2, self.mask_pool, P2, K)
        probs = jnp.transpose(probs, (0, 2, 1, 3, 4)).reshape(D, P2, P2, K)
        labels_cat = jnp.concatenate([r['labels'] for r in result], axis=0)
        selected = probs[jnp.arange(D), :, :, labels_cat][:, None]      # (D, 1, 28, 28)
        for i in range(num_images):
            result[i]['masks'] = selected[i * det:(i + 1) * det]
        return result, losses

    def forward(self, features, proposals, image_shapes, targets=None):
        # TODO(synk): training branch (proposal matching, fg/bg sampling,
        # fastrcnn_loss / maskrcnn_loss) needs data-dependent dynamic shapes;
        # only the inference forward path is implemented.
        assert not self.training
        del targets
        return self._forward_jit(
            features, tuple(proposals),
            tuple(tuple(int(v) for v in s) for s in image_shapes))


# ------------------------- main -------------------------

if __name__ == "__main__":
    key = jax.random.PRNGKey(0)
    k_feat, k_prop, k_params = jax.random.split(key, 3)

    num_images, C, Hf, Wf = 2, 8, 16, 16
    image_shapes = [(64, 64), (64, 64)]                    # (H, W)
    features_nchw = jax.random.normal(k_feat, (num_images, C, Hf, Wf), jnp.float32)
    features_nhwc = jnp.transpose(features_nchw, (0, 2, 3, 1))

    proposals = []
    kp = k_prop
    for i in range(num_images):
        kp, k1 = jax.random.split(kp)
        pts = jax.random.uniform(k1, (8, 4), minval=0.0, maxval=60.0)
        x1 = jnp.minimum(pts[:, 0], pts[:, 2])
        x2 = jnp.minimum(jnp.maximum(pts[:, 0], pts[:, 2]) + 2.0, 64.0)
        y1 = jnp.minimum(pts[:, 1], pts[:, 3])
        y2 = jnp.minimum(jnp.maximum(pts[:, 1], pts[:, 3]) + 2.0, 64.0)
        proposals.append(jnp.stack([x1, y1, x2, y2], axis=1))

    heads = RoIHeadsPallas(k_params, in_channels=C)
    result, losses = heads.forward(features_nhwc, proposals, image_shapes)
    jax.block_until_ready((result, losses))
    print("KERNEL_OK")
</pallas_src>

<mosaic_0001>
module attributes {stable_mosaic.version = 11 : i64} {
  func.func @_roi_align_kernel(%arg0: i32, %arg1: memref<16xi32, #tpu.memory_space<smem>>, %arg2: memref<1x16x128xbf16, #tpu.memory_space<vmem>>, %arg3: memref<1x7x16xbf16, #tpu.memory_space<vmem>>, %arg4: memref<1x128x56xbf16, #tpu.memory_space<vmem>>, %arg5: memref<1x7x56xf32, #tpu.memory_space<vmem>>) attributes {dimension_semantics = [#tpu.dimension_semantics<arbitrary>], iteration_bounds = array<i64: 16>, scalar_prefetch = 1 : i64, scratch_operands = 0 : i64, tpu.core_type = #tpu.core_type<tc>, window_params = [{transform_indices = @transform_0, window_bounds = array<i64: 1, 16, 128>}, {transform_indices = @transform_1, window_bounds = array<i64: 1, 7, 16>}, {transform_indices = @transform_2, window_bounds = array<i64: 1, 128, 56>}, {transform_indices = @transform_3, window_bounds = array<i64: 1, 7, 56>}]} {
    %c0 = arith.constant 0 : index
    %c0_0 = arith.constant 0 : index
    %c0_1 = arith.constant 0 : index
    %0 = vector.load %arg3[%c0, %c0_0, %c0_1] : memref<1x7x16xbf16, #tpu.memory_space<vmem>>, vector<1x7x16xbf16>
    %1 = vector.shape_cast %0 : vector<1x7x16xbf16> to vector<7x16xbf16>
    %c0_2 = arith.constant 0 : index
    %c0_3 = arith.constant 0 : index
    %c0_4 = arith.constant 0 : index
    %2 = vector.load %arg2[%c0_2, %c0_3, %c0_4] : memref<1x16x128xbf16, #tpu.memory_space<vmem>>, vector<1x16x128xbf16>
    %3 = vector.shape_cast %2 : vector<1x16x128xbf16> to vector<16x128xbf16>
    %cst = arith.constant dense<0.000000e+00> : vector<7x128xf32>
    %4 = tpu.matmul %1, %3, %cst {dimension_numbers = #tpu.dot_dimension_numbers<[1], [0], [0], [1], [0, 0, 1, 1], [], []>} : vector<7x16xbf16>, vector<16x128xbf16>, vector<7x128xf32> -> vector<7x128xf32>
    %5 = arith.truncf %4 : vector<7x128xf32> to vector<7x128xbf16>
    %c0_5 = arith.constant 0 : index
    %c0_6 = arith.constant 0 : index
    %c0_7 = arith.constant 0 : index
    %6 = vector.load %arg4[%c0_5, %c0_6, %c0_7] : memref<1x128x56xbf16, #tpu.memory_space<vmem>>, vector<1x128x56xbf16>
    %7 = vector.shape_cast %6 : vector<1x128x56xbf16> to vector<128x56xbf16>
    %cst_8 = arith.constant dense<0.000000e+00> : vector<7x56xf32>
    %8 = tpu.matmul %5, %7, %cst_8 {dimension_numbers = #tpu.dot_dimension_numbers<[1], [0], [0], [1], [0, 0, 1, 1], [], []>} : vector<7x128xbf16>, vector<128x56xbf16>, vector<7x56xf32> -> vector<7x56xf32>
    %c0_9 = arith.constant 0 : index
    %c0_10 = arith.constant 0 : index
    %c0_11 = arith.constant 0 : index
    %9 = vector.load %arg5[%c0_9, %c0_10, %c0_11] : memref<1x7x56xf32, #tpu.memory_space<vmem>>, vector<1x7x56xf32>
    %10 = vector.shape_cast %9 : vector<1x7x56xf32> to vector<7x56xf32>
    %11 = vector.shape_cast %8 : vector<7x56xf32> to vector<1x7x56xf32>
    tpu.vector_store %arg5[%c0_9, %c0_10, %c0_11], %11 {strides = array<i32>} : memref<1x7x56xf32, #tpu.memory_space<vmem>>, vector<1x7x56xf32>,
    return
  }
  func.func @transform_0(%arg0: i32, %arg1: memref<16xi32, #tpu.memory_space<smem>>) -> (i32, i32, i32) {
    %0 = arith.index_cast %arg0 : i32 to index
    %1 = memref.load %arg1[%0] : memref<16xi32, #tpu.memory_space<smem>>
    %c0_i32 = arith.constant 0 : i32
    %c0_i32_0 = arith.constant 0 : i32
    %c0_i32_1 = arith.constant 0 : i32
    return %1, %c0_i32, %c0_i32_0 : i32, i32, i32
  }
  func.func @transform_1(%arg0: i32, %arg1: memref<16xi32, #tpu.memory_space<smem>>) -> (i32, i32, i32) {
    %c0_i32 = arith.constant 0 : i32
    %c0_i32_0 = arith.constant 0 : i32
    %c0_i32_1 = arith.constant 0 : i32
    return %arg0, %c0_i32, %c0_i32_0 : i32, i32, i32
  }
  func.func @transform_2(%arg0: i32, %arg1: memref<16xi32, #tpu.memory_space<smem>>) -> (i32, i32, i32) {
    %c0_i32 = arith.constant 0 : i32
    %c0_i32_0 = arith.constant 0 : i32
    %c0_i32_1 = arith.constant 0 : i32
    return %arg0, %c0_i32, %c0_i32_0 : i32, i32, i32
  }
  func.func @transform_3(%arg0: i32, %arg1: memref<16xi32, #tpu.memory_space<smem>>) -> (i32, i32, i32) {
    %c0_i32 = arith.constant 0 : i32
    %c0_i32_0 = arith.constant 0 : i32
    %c0_i32_1 = arith.constant 0 : i32
    return %arg0, %c0_i32, %c0_i32_0 : i32, i32, i32
  }
}

module attributes {stable_mosaic.version = 11 : i64} {
  func.func @_box_branch_kernel(%arg0: i32, %arg1: memref<8x512xbf16, #tpu.memory_space<vmem>>, %arg2: memref<8x128xf32, #tpu.memory_space<vmem>>, %arg3: memref<512x128xbf16, #tpu.memory_space<vmem>>, %arg4: memref<1x128xf32, #tpu.memory_space<vmem>>, %arg5: memref<128x128xbf16, #tpu.memory_space<vmem>>, %arg6: memref<1x128xf32, #tpu.memory_space<vmem>>, %arg7: memref<128x128xbf16, #tpu.memory_space<vmem>>, %arg8: memref<1x128xf32, #tpu.memory_space<vmem>>, %arg9: memref<128x128xbf16, #tpu.memory_space<vmem>>, %arg10: memref<1x128xf32, #tpu.memory_space<vmem>>, %arg11: memref<8x128xf32, #tpu.memory_space<vmem>>, %arg12: memref<8x128xf32, #tpu.memory_space<vmem>>) attributes {dimension_semantics = [#tpu.dimension_semantics<parallel>], iteration_bounds = array<i64: 2>, scalar_prefetch = 0 : i64, scratch_operands = 0 : i64, tpu.core_type = #tpu.core_type<tc>, window_params = [{transform_indices = @transform_0, window_bounds = array<i64: 8, 512>}, {transform_indices = @transform_1, window_bounds = array<i64: 8, 128>}, {pipeline_mode = #tpu.pipeline_mode<synchronous>, transform_indices = @transform_2, window_bounds = array<i64: 512, 128>}, {pipeline_mode = #tpu.pipeline_mode<synchronous>, transform_indices = @transform_3, window_bounds = array<i64: 1, 128>}, {pipeline_mode = #tpu.pipeline_mode<synchronous>, transform_indices = @transform_4, window_bounds = array<i64: 128, 128>}, {pipeline_mode = #tpu.pipeline_mode<synchronous>, transform_indices = @transform_5, window_bounds = array<i64: 1, 128>}, {pipeline_mode = #tpu.pipeline_mode<synchronous>, transform_indices = @transform_6, window_bounds = array<i64: 128, 128>}, {pipeline_mode = #tpu.pipeline_mode<synchronous>, transform_indices = @transform_7, window_bounds = array<i64: 1, 128>}, {pipeline_mode = #tpu.pipeline_mode<synchronous>, transform_indices = @transform_8, window_bounds = array<i64: 128, 128>}, {pipeline_mode = #tpu.pipeline_mode<synchronous>, transform_indices = @transform_9, window_bounds = array<i64: 1, 128>}, {transform_indices = @transform_10, window_bounds = array<i64: 8, 128>}, {transform_indices = @transform_11, window_bounds = array<i64: 8, 128>}]} {
    %c0 = arith.constant 0 : index
    %c0_0 = arith.constant 0 : index
    %0 = vector.load %arg1[%c0, %c0_0] : memref<8x512xbf16, #tpu.memory_space<vmem>>, vector<8x512xbf16>
    %c0_1 = arith.constant 0 : index
    %c0_2 = arith.constant 0 : index
    %1 = vector.load %arg3[%c0_1, %c0_2] : memref<512x128xbf16, #tpu.memory_space<vmem>>, vector<512x128xbf16>
    %cst = arith.constant dense<0.000000e+00> : vector<8x128xf32>
    %2 = tpu.matmul %0, %1, %cst {dimension_numbers = #tpu.dot_dimension_numbers<[1], [0], [0], [1], [0, 0, 1, 1], [], []>} : vector<8x512xbf16>, vector<512x128xbf16>, vector<8x128xf32> -> vector<8x128xf32>
    %c0_3 = arith.constant 0 : index
    %c0_4 = arith.constant 0 : index
    %3 = vector.load %arg4[%c0_3, %c0_4] : memref<1x128xf32, #tpu.memory_space<vmem>>, vector<1x128xf32>
    %4 = vector.broadcast %3 : vector<1x128xf32> to vector<8x128xf32>
    %5 = arith.addf %2, %4 : vector<8x128xf32>
    %cst_5 = arith.constant 0.000000e+00 : f32
    %6 = vector.broadcast %cst_5 : f32 to vector<8x128xf32>
    %7 = arith.maximumf %5, %6 : vector<8x128xf32>
    %8 = arith.truncf %7 : vector<8x128xf32> to vector<8x128xbf16>
    %c0_6 = arith.constant 0 : index
    %c0_7 = arith.constant 0 : index
    %9 = vector.load %arg5[%c0_6, %c0_7] : memref<128x128xbf16, #tpu.memory_space<vmem>>, vector<128x128xbf16>
    %cst_8 = arith.constant dense<0.000000e+00> : vector<8x128xf32>
    %10 = tpu.matmul %8, %9, %cst_8 {dimension_numbers = #tpu.dot_dimension_numbers<[1], [0], [0], [1], [0, 0, 1, 1], [], []>} : vector<8x128xbf16>, vector<128x128xbf16>, vector<8x128xf32> -> vector<8x128xf32>
    %c0_9 = arith.constant 0 : index
    %c0_10 = arith.constant 0 : index
    %11 = vector.load %arg6[%c0_9, %c0_10] : memref<1x128xf32, #tpu.memory_space<vmem>>, vector<1x128xf32>
    %12 = vector.broadcast %11 : vector<1x128xf32> to vector<8x128xf32>
    %13 = arith.addf %10, %12 : vector<8x128xf32>
    %cst_11 = arith.constant 0.000000e+00 : f32
    %14 = vector.broadcast %cst_11 : f32 to vector<8x128xf32>
    %15 = arith.maximumf %13, %14 : vector<8x128xf32>
    %16 = arith.truncf %15 : vector<8x128xf32> to vector<8x128xbf16>
    %c0_12 = arith.constant 0 : index
    %c0_13 = arith.constant 0 : index
    %17 = vector.load %arg7[%c0_12, %c0_13] : memref<128x128xbf16, #tpu.memory_space<vmem>>, vector<128x128xbf16>
    %cst_14 = arith.constant dense<0.000000e+00> : vector<8x128xf32>
    %18 = tpu.matmul %16, %17, %cst_14 {dimension_numbers = #tpu.dot_dimension_numbers<[1], [0], [0], [1], [0, 0, 1, 1], [], []>} : vector<8x128xbf16>, vector<128x128xbf16>, vector<8x128xf32> -> vector<8x128xf32>
    %c0_15 = arith.constant 0 : index
    %c0_16 = arith.constant 0 : index
    %19 = vector.load %arg8[%c0_15, %c0_16] : memref<1x128xf32, #tpu.memory_space<vmem>>, vector<1x128xf32>
    %20 = vector.broadcast %19 : vector<1x128xf32> to vector<8x128xf32>
    %21 = arith.addf %18, %20 : vector<8x128xf32>
    %22 = tpu.iota {dimensions = array<i32: 1>} : vector<8x128xi32>
    %c8_i32 = arith.constant 8 : i32
    %23 = vector.broadcast %c8_i32 : i32 to vector<8x128xi32>
    %24 = arith.cmpi slt, %22, %23 : vector<8x128xi32>
    %cst_17 = arith.constant -1.000000e+30 : f32
    %25 = vector.broadcast %cst_17 : f32 to vector<8x128xf32>
    %26 = arith.select %24, %21, %25 : vector<8x128xi1>, vector<8x128xf32>
    %cst_18 = arith.constant dense<0xFF800000> : vector<8xf32>
    %27 = vector.multi_reduction <maximumf>, %26, %cst_18 [1] : vector<8x128xf32> to vector<8xf32>
    %28 = vector.shape_cast %27 : vector<8xf32> to vector<8x1xf32>
    %29 = vector.broadcast %28 : vector<8x1xf32> to vector<8x128xf32>
    %30 = arith.subf %26, %29 : vector<8x128xf32>
    %31 = math.exp %30 : vector<8x128xf32>
    %cst_19 = arith.constant dense<0.000000e+00> : vector<8xf32>
    %32 = vector.multi_reduction <add>, %31, %cst_19 [1] : vector<8x128xf32> to vector<8xf32>
    %33 = vector.shape_cast %32 : vector<8xf32> to vector<8x1xf32>
    %34 = tpu.reciprocal %33 {approx = true} : vector<8x1xf32> -> vector<8x1xf32>
    %35 = vector.broadcast %34 : vector<8x1xf32> to vector<8x128xf32>
    %36 = arith.mulf %31, %35 : vector<8x128xf32>
    %c0_20 = arith.constant 0 : index
    %c0_21 = arith.constant 0 : index
    %37 = vector.load %arg11[%c0_20, %c0_21] : memref<8x128xf32, #tpu.memory_space<vmem>>, vector<8x128xf32>
    tpu.vector_store %arg11[%c0_20, %c0_21], %36 {strides = array<i32>} : memref<8x128xf32, #tpu.memory_space<vmem>>, vector<8x128xf32>,
    %c0_22 = arith.constant 0 : index
    %c0_23 = arith.constant 0 : index
    %38 = vector.load %arg9[%c0_22, %c0_23] : memref<128x128xbf16, #tpu.memory_space<vmem>>, vector<128x128xbf16>
    %cst_24 = arith.constant dense<0.000000e+00> : vector<8x128xf32>
    %39 = tpu.matmul %16, %38, %cst_24 {dimension_numbers = #tpu.dot_dimension_numbers<[1], [0], [0], [1], [0, 0, 1, 1], [], []>} : vector<8x128xbf16>, vector<128x128xbf16>, vector<8x128xf32> -> vector<8x128xf32>
    %c0_25 = arith.constant 0 : index
    %c0_26 = arith.constant 0 : index
    %40 = vector.load %arg10[%c0_25, %c0_26] : memref<1x128xf32, #tpu.memory_space<vmem>>, vector<1x128xf32>
    %41 = vector.broadcast %40 : vector<1x128xf32> to vector<8x128xf32>
    %42 = arith.addf %39, %41 : vector<8x128xf32>
    %c0_27 = arith.constant 0 : index
    %c0_28 = arith.constant 0 : index
    %43 = vector.load %arg2[%c0_27, %c0_28] : memref<8x128xf32, #tpu.memory_space<vmem>>, vector<8x128xf32>
    %44 = vector.extract_strided_slice %43 {offsets = [0, 2], sizes = [8, 1], strides = [1, 1]} : vector<8x128xf32> to vector<8x1xf32>
    %45 = vector.extract_strided_slice %43 {offsets = [0, 0], sizes = [8, 1], strides = [1, 1]} : vector<8x128xf32> to vector<8x1xf32>
    %46 = arith.subf %44, %45 : vector<8x1xf32>
    %47 = vector.extract_strided_slice %43 {offsets = [0, 3], sizes = [8, 1], strides = [1, 1]} : vector<8x128xf32> to vector<8x1xf32>
    %48 = vector.extract_strided_slice %43 {offsets = [0, 1], sizes = [8, 1], strides = [1, 1]} : vector<8x128xf32> to vector<8x1xf32>
    %49 = arith.subf %47, %48 : vector<8x1xf32>
    %50 = vector.extract_strided_slice %43 {offsets = [0, 0], sizes = [8, 1], strides = [1, 1]} : vector<8x128xf32> to vector<8x1xf32>
    %cst_29 = arith.constant 5.000000e-01 : f32
    %51 = vector.broadcast %cst_29 : f32 to vector<8x1xf32>
    %52 = arith.mulf %51, %46 : vector<8x1xf32>
    %53 = arith.addf %50, %52 : vector<8x1xf32>
    %54 = vector.extract_strided_slice %43 {offsets = [0, 1], sizes = [8, 1], strides = [1, 1]} : vector<8x128xf32> to vector<8x1xf32>
    %cst_30 = arith.constant 5.000000e-01 : f32
    %55 = vector.broadcast %cst_30 : f32 to vector<8x1xf32>
    %56 = arith.mulf %55, %49 : vector<8x1xf32>
    %57 = arith.addf %54, %56 : vector<8x1xf32>
    %58 = vector.extract_strided_slice %43 {offsets = [0, 4], sizes = [8, 1], strides = [1, 1]} : vector<8x128xf32> to vector<8x1xf32>
    %59 = vector.extract_strided_slice %43 {offsets = [0, 5], sizes = [8, 1], strides = [1, 1]} : vector<8x128xf32> to vector<8x1xf32>
    %60 = vector.extract_strided_slice %42 {offsets = [0, 0], sizes = [8, 32], strides = [1, 1]} : vector<8x128xf32> to vector<8x32xf32>
    %cst_31 = arith.constant 1.000000e-01 : f32
    %61 = vector.broadcast %cst_31 : f32 to vector<8x32xf32>
    %62 = arith.mulf %60, %61 : vector<8x32xf32>
    %63 = vector.extract_strided_slice %42 {offsets = [0, 32], sizes = [8, 32], strides = [1, 1]} : vector<8x128xf32> to vector<8x32xf32>
    %cst_32 = arith.constant 1.000000e-01 : f32
    %64 = vector.broadcast %cst_32 : f32 to vector<8x32xf32>
    %65 = arith.mulf %63, %64 : vector<8x32xf32>
    %66 = vector.extract_strided_slice %42 {offsets = [0, 64], sizes = [8, 32], strides = [1, 1]} : vector<8x128xf32> to vector<8x32xf32>
    %cst_33 = arith.constant 2.000000e-01 : f32
    %67 = vector.broadcast %cst_33 : f32 to vector<8x32xf32>
    %68 = arith.mulf %66, %67 : vector<8x32xf32>
    %cst_34 = arith.constant 4.13516665 : f32
    %69 = vector.broadcast %cst_34 : f32 to vector<8x32xf32>
    %70 = arith.minimumf %68, %69 : vector<8x32xf32>
    %71 = vector.extract_strided_slice %42 {offsets = [0, 96], sizes = [8, 32], strides = [1, 1]} : vector<8x128xf32> to vector<8x32xf32>
    %cst_35 = arith.constant 2.000000e-01 : f32
    %72 = vector.broadcast %cst_35 : f32 to vector<8x32xf32>
    %73 = arith.mulf %71, %72 : vector<8x32xf32>
    %cst_36 = arith.constant 4.13516665 : f32
    %74 = vector.broadcast %cst_36 : f32 to vector<8x32xf32>
    %75 = arith.minimumf %73, %74 : vector<8x32xf32>
    %76 = vector.broadcast %46 : vector<8x1xf32> to vector<8x32xf32>
    %77 = arith.mulf %62, %76 : vector<8x32xf32>
    %78 = vector.broadcast %53 : vector<8x1xf32> to vector<8x32xf32>
    %79 = arith.addf %77, %78 : vector<8x32xf32>
    %80 = vector.broadcast %49 : vector<8x1xf32> to vector<8x32xf32>
    %81 = arith.mulf %65, %80 : vector<8x32xf32>
    %82 = vector.broadcast %57 : vector<8x1xf32> to vector<8x32xf32>
    %83 = arith.addf %81, %82 : vector<8x32xf32>
    %84 = math.exp %70 : vector<8x32xf32>
    %85 = vector.broadcast %46 : vector<8x1xf32> to vector<8x32xf32>
    %86 = arith.mulf %84, %85 : vector<8x32xf32>
    %87 = math.exp %75 : vector<8x32xf32>
    %88 = vector.broadcast %49 : vector<8x1xf32> to vector<8x32xf32>
    %89 = arith.mulf %87, %88 : vector<8x32xf32>
    %cst_37 = arith.constant 5.000000e-01 : f32
    %90 = vector.broadcast %cst_37 : f32 to vector<8x32xf32>
    %91 = arith.mulf %90, %86 : vector<8x32xf32>
    %92 = arith.subf %79, %91 : vector<8x32xf32>
    %cst_38 = arith.constant 0.000000e+00 : f32
    %93 = vector.broadcast %cst_38 : f32 to vector<8x32xf32>
    %94 = arith.maximumf %93, %92 : vector<8x32xf32>
    %95 = vector.broadcast %58 : vector<8x1xf32> to vector<8x32xf32>
    %96 = arith.minimumf %95, %94 : vector<8x32xf32>
    %c0_39 = arith.constant 0 : index
    %c0_40 = arith.constant 0 : index
    %97 = vector.load %arg12[%c0_39, %c0_40] : memref<8x128xf32, #tpu.memory_space<vmem>>, vector<8x32xf32>
    tpu.vector_store %arg12[%c0_39, %c0_40], %96 {strides = array<i32>} : memref<8x128xf32, #tpu.memory_space<vmem>>, vector<8x32xf32>,
    %cst_41 = arith.constant 5.000000e-01 : f32
    %98 = vector.broadcast %cst_41 : f32 to vector<8x32xf32>
    %99 = arith.mulf %98, %89 : vector<8x32xf32>
    %100 = arith.subf %83, %99 : vector<8x32xf32>
    %cst_42 = arith.constant 0.000000e+00 : f32
    %101 = vector.broadcast %cst_42 : f32 to vector<8x32xf32>
    %102 = arith.maximumf %101, %100 : vector<8x32xf32>
    %103 = vector.broadcast %59 : vector<8x1xf32> to vector<8x32xf32>
    %104 = arith.minimumf %103, %102 : vector<8x32xf32>
    %c0_43 = arith.constant 0 : index
    %c32 = arith.constant 32 : index
    %105 = vector.load %arg12[%c0_43, %c32] : memref<8x128xf32, #tpu.memory_space<vmem>>, vector<8x32xf32>
    tpu.vector_store %arg12[%c0_43, %c32], %104 {strides = array<i32>} : memref<8x128xf32, #tpu.memory_space<vmem>>, vector<8x32xf32>,
    %cst_44 = arith.constant 5.000000e-01 : f32
    %106 = vector.broadcast %cst_44 : f32 to vector<8x32xf32>
    %107 = arith.mulf %106, %86 : vector<8x32xf32>
    %108 = arith.addf %79, %107 : vector<8x32xf32>
    %cst_45 = arith.constant 0.000000e+00 : f32
    %109 = vector.broadcast %cst_45 : f32 to vector<8x32xf32>
    %110 = arith.maximumf %109, %108 : vector<8x32xf32>
    %111 = vector.broadcast %58 : vector<8x1xf32> to vector<8x32xf32>
    %112 = arith.minimumf %111, %110 : vector<8x32xf32>
    %c0_46 = arith.constant 0 : index
    %c64 = arith.constant 64 : index
    %113 = vector.load %arg12[%c0_46, %c64] : memref<8x128xf32, #tpu.memory_space<vmem>>, vector<8x32xf32>
    tpu.vector_store %arg12[%c0_46, %c64], %112 {strides = array<i32>} : memref<8x128xf32, #tpu.memory_space<vmem>>, vector<8x32xf32>,
    %cst_47 = arith.constant 5.000000e-01 : f32
    %114 = vector.broadcast %cst_47 : f32 to vector<8x32xf32>
    %115 = arith.mulf %114, %89 : vector<8x32xf32>
    %116 = arith.addf %83, %115 : vector<8x32xf32>
    %cst_48 = arith.constant 0.000000e+00 : f32
    %117 = vector.broadcast %cst_48 : f32 to vector<8x32xf32>
    %118 = arith.maximumf %117, %116 : vector<8x32xf32>
    %119 = vector.broadcast %59 : vector<8x1xf32> to vector<8x32xf32>
    %120 = arith.minimumf %119, %118 : vector<8x32xf32>
    %c0_49 = arith.constant 0 : index
    %c96 = arith.constant 96 : index
    %121 = vector.load %arg12[%c0_49, %c96] : memref<8x128xf32, #tpu.memory_space<vmem>>, vector<8x32xf32>
    tpu.vector_store %arg12[%c0_49, %c96], %120 {strides = array<i32>} : memref<8x128xf32, #tpu.memory_space<vmem>>, vector<8x32xf32>,
    return
  }
  func.func @transform_0(%arg0: i32) -> (i32, i32) {
    %c0_i32 = arith.constant 0 : i32
    %c0_i32_0 = arith.constant 0 : i32
    return %arg0, %c0_i32 : i32, i32
  }
  func.func @transform_1(%arg0: i32) -> (i32, i32) {
    %c0_i32 = arith.constant 0 : i32
    %c0_i32_0 = arith.constant 0 : i32
    return %arg0, %c0_i32 : i32, i32
  }
  func.func @transform_2(%arg0: i32) -> (i32, i32) {
    %c0_i32 = arith.constant 0 : i32
    %c0_i32_0 = arith.constant 0 : i32
    %c0_i32_1 = arith.constant 0 : i32
    return %c0_i32, %c0_i32_0 : i32, i32
  }
  func.func @transform_3(%arg0: i32) -> (i32, i32) {
    %c0_i32 = arith.constant 0 : i32
    %c0_i32_0 = arith.constant 0 : i32
    %c0_i32_1 = arith.constant 0 : i32
    return %c0_i32, %c0_i32_0 : i32, i32
  }
  func.func @transform_4(%arg0: i32) -> (i32, i32) {
    %c0_i32 = arith.constant 0 : i32
    %c0_i32_0 = arith.constant 0 : i32
    %c0_i32_1 = arith.constant 0 : i32
    return %c0_i32, %c0_i32_0 : i32, i32
  }
  func.func @transform_5(%arg0: i32) -> (i32, i32) {
    %c0_i32 = arith.constant 0 : i32
    %c0_i32_0 = arith.constant 0 : i32
    %c0_i32_1 = arith.constant 0 : i32
    return %c0_i32, %c0_i32_0 : i32, i32
  }
  func.func @transform_6(%arg0: i32) -> (i32, i32) {
    %c0_i32 = arith.constant 0 : i32
    %c0_i32_0 = arith.constant 0 : i32
    %c0_i32_1 = arith.constant 0 : i32
    return %c0_i32, %c0_i32_0 : i32, i32
  }
  func.func @transform_7(%arg0: i32) -> (i32, i32) {
    %c0_i32 = arith.constant 0 : i32
    %c0_i32_0 = arith.constant 0 : i32
    %c0_i32_1 = arith.constant 0 : i32
    return %c0_i32, %c0_i32_0 : i32, i32
  }
  func.func @transform_8(%arg0: i32) -> (i32, i32) {
    %c0_i32 = arith.constant 0 : i32
    %c0_i32_0 = arith.constant 0 : i32
    %c0_i32_1 = arith.constant 0 : i32
    return %c0_i32, %c0_i32_0 : i32, i32
  }
  func.func @transform_9(%arg0: i32) -> (i32, i32) {
    %c0_i32 = arith.constant 0 : i32
    %c0_i32_0 = arith.constant 0 : i32
    %c0_i32_1 = arith.constant 0 : i32
    return %c0_i32, %c0_i32_0 : i32, i32
  }
  func.func @transform_10(%arg0: i32) -> (i32, i32) {
    %c0_i32 = arith.constant 0 : i32
    %c0_i32_0 = arith.constant 0 : i32
    return %arg0, %c0_i32 : i32, i32
  }
  func.func @transform_11(%arg0: i32) -> (i32, i32) {
    %c0_i32 = arith.constant 0 : i32
    %c0_i32_0 = arith.constant 0 : i32
    return %arg0, %c0_i32 : i32, i32
  }
}

module attributes {stable_mosaic.version = 11 : i64} {
  func.func @_roi_align_kernel(%arg0: i32, %arg1: memref<8xi32, #tpu.memory_space<smem>>, %arg2: memref<1x16x128xbf16, #tpu.memory_space<vmem>>, %arg3: memref<1x14x16xbf16, #tpu.memory_space<vmem>>, %arg4: memref<1x128x112xbf16, #tpu.memory_space<vmem>>, %arg5: memref<1x16x128xf32, #tpu.memory_space<vmem>>) attributes {dimension_semantics = [#tpu.dimension_semantics<arbitrary>], iteration_bounds = array<i64: 8>, scalar_prefetch = 1 : i64, scratch_operands = 0 : i64, tpu.core_type = #tpu.core_type<tc>, window_params = [{transform_indices = @transform_0, window_bounds = array<i64: 1, 16, 128>}, {transform_indices = @transform_1, window_bounds = array<i64: 1, 14, 16>}, {transform_indices = @transform_2, window_bounds = array<i64: 1, 128, 112>}, {transform_indices = @transform_3, window_bounds = array<i64: 1, 16, 128>}]} {
    %c0 = arith.constant 0 : index
    %c0_0 = arith.constant 0 : index
    %c0_1 = arith.constant 0 : index
    %0 = vector.load %arg3[%c0, %c0_0, %c0_1] : memref<1x14x16xbf16, #tpu.memory_space<vmem>>, vector<1x14x16xbf16>
    %1 = vector.shape_cast %0 : vector<1x14x16xbf16> to vector<14x16xbf16>
    %c0_2 = arith.constant 0 : index
    %c0_3 = arith.constant 0 : index
    %c0_4 = arith.constant 0 : index
    %2 = vector.load %arg2[%c0_2, %c0_3, %c0_4] : memref<1x16x128xbf16, #tpu.memory_space<vmem>>, vector<1x16x128xbf16>
    %3 = vector.shape_cast %2 : vector<1x16x128xbf16> to vector<16x128xbf16>
    %cst = arith.constant dense<0.000000e+00> : vector<14x128xf32>
    %4 = tpu.matmul %1, %3, %cst {dimension_numbers = #tpu.dot_dimension_numbers<[1], [0], [0], [1], [0, 0, 1, 1], [], []>} : vector<14x16xbf16>, vector<16x128xbf16>, vector<14x128xf32> -> vector<14x128xf32>
    %5 = arith.truncf %4 : vector<14x128xf32> to vector<14x128xbf16>
    %c0_5 = arith.constant 0 : index
    %c0_6 = arith.constant 0 : index
    %c0_7 = arith.constant 0 : index
    %6 = vector.load %arg4[%c0_5, %c0_6, %c0_7] : memref<1x128x112xbf16, #tpu.memory_space<vmem>>, vector<1x128x112xbf16>
    %7 = vector.shape_cast %6 : vector<1x128x112xbf16> to vector<128x112xbf16>
    %cst_8 = arith.constant dense<0.000000e+00> : vector<14x112xf32>
    %8 = tpu.matmul %5, %7, %cst_8 {dimension_numbers = #tpu.dot_dimension_numbers<[1], [0], [0], [1], [0, 0, 1, 1], [], []>} : vector<14x128xbf16>, vector<128x112xbf16>, vector<14x112xf32> -> vector<14x112xf32>
    %cst_9 = arith.constant 0.000000e+00 : f32
    %9 = vector.broadcast %cst_9 : f32 to vector<16x128xf32>
    %c0_10 = arith.constant 0 : index
    %c0_11 = arith.constant 0 : index
    %c0_12 = arith.constant 0 : index
    %10 = vector.load %arg5[%c0_10, %c0_11, %c0_12] : memref<1x16x128xf32, #tpu.memory_space<vmem>>, vector<1x16x128xf32>
    %11 = vector.shape_cast %10 : vector<1x16x128xf32> to vector<16x128xf32>
    %12 = vector.shape_cast %9 : vector<16x128xf32> to vector<1x16x128xf32>
    tpu.vector_store %arg5[%c0_10, %c0_11, %c0_12], %12 {strides = array<i32>} : memref<1x16x128xf32, #tpu.memory_space<vmem>>, vector<1x16x128xf32>,
    %c0_13 = arith.constant 0 : index
    %c1 = arith.constant 1 : index
    %c8 = arith.constant 8 : index
    %13 = vector.load %arg5[%c0_13, %c1, %c8] : memref<1x16x128xf32, #tpu.memory_space<vmem>>, vector<1x14x112xf32>
    %14 = vector.shape_cast %13 : vector<1x14x112xf32> to vector<14x112xf32>
    %15 = vector.shape_cast %8 : vector<14x112xf32> to vector<1x14x112xf32>
    tpu.vector_store %arg5[%c0_13, %c1, %c8], %15 {strides = array<i32>} : memref<1x16x128xf32, #tpu.memory_space<vmem>>, vector<1x14x112xf32>,
    return
  }
  func.func @transform_0(%arg0: i32, %arg1: memref<8xi32, #tpu.memory_space<smem>>) -> (i32, i32, i32) {
    %0 = arith.index_cast %arg0 : i32 to index
    %1 = memref.load %arg1[%0] : memref<8xi32, #tpu.memory_space<smem>>
    %c0_i32 = arith.constant 0 : i32
    %c0_i32_0 = arith.constant 0 : i32
    %c0_i32_1 = arith.constant 0 : i32
    return %1, %c0_i32, %c0_i32_0 : i32, i32, i32
  }
  func.func @transform_1(%arg0: i32, %arg1: memref<8xi32, #tpu.memory_space<smem>>) -> (i32, i32, i32) {
    %c0_i32 = arith.constant 0 : i32
    %c0_i32_0 = arith.constant 0 : i32
    %c0_i32_1 = arith.constant 0 : i32
    return %arg0, %c0_i32, %c0_i32_0 : i32, i32, i32
  }
  func.func @transform_2(%arg0: i32, %arg1: memref<8xi32, #tpu.memory_space<smem>>) -> (i32, i32, i32) {
    %c0_i32 = arith.constant 0 : i32
    %c0_i32_0 = arith.constant 0 : i32
    %c0_i32_1 = arith.constant 0 : i32
    return %arg0, %c0_i32, %c0_i32_0 : i32, i32, i32
  }
  func.func @transform_3(%arg0: i32, %arg1: memref<8xi32, #tpu.memory_space<smem>>) -> (i32, i32, i32) {
    %c0_i32 = arith.constant 0 : i32
    %c0_i32_0 = arith.constant 0 : i32
    %c0_i32_1 = arith.constant 0 : i32
    return %arg0, %c0_i32, %c0_i32_0 : i32, i32, i32
  }
}

module attributes {stable_mosaic.version = 11 : i64} {
  func.func @_mask_head_kernel(%arg0: i32, %arg1: memref<1x16x128xf32, #tpu.memory_space<vmem>>, %arg2: memref<3x128x224xbf16, #tpu.memory_space<vmem>>, %arg3: memref<1x224xf32, #tpu.memory_space<vmem>>, %arg4: memref<3x256x224xbf16, #tpu.memory_space<vmem>>, %arg5: memref<1x224xf32, #tpu.memory_space<vmem>>, %arg6: memref<3x256x224xbf16, #tpu.memory_space<vmem>>, %arg7: memref<1x224xf32, #tpu.memory_space<vmem>>, %arg8: memref<3x256x224xbf16, #tpu.memory_space<vmem>>, %arg9: memref<1x224xf32, #tpu.memory_space<vmem>>, %arg10: memref<2x224x448xbf16, #tpu.memory_space<vmem>>, %arg11: memref<1x448xf32, #tpu.memory_space<vmem>>, %arg12: memref<448x224xbf16, #tpu.memory_space<vmem>>, %arg13: memref<1x224xf32, #tpu.memory_space<vmem>>, %arg14: memref<1x2x14x224xf32, #tpu.memory_space<vmem>>, %arg15: memref<16x256xf32, #tpu.memory_space<vmem>>, %arg16: memref<16x256xf32, #tpu.memory_space<vmem>>) attributes {dimension_semantics = [#tpu.dimension_semantics<parallel>], iteration_bounds = array<i64: 8>, scalar_prefetch = 0 : i64, scratch_operands = 2 : i64, tpu.core_type = #tpu.core_type<tc>, window_params = [{transform_indices = @transform_0, window_bounds = array<i64: 1, 16, 128>}, {pipeline_mode = #tpu.pipeline_mode<synchronous>, transform_indices = @transform_1, window_bounds = array<i64: 3, 128, 224>}, {pipeline_mode = #tpu.pipeline_mode<synchronous>, transform_indices = @transform_2, window_bounds = array<i64: 1, 224>}, {pipeline_mode = #tpu.pipeline_mode<synchronous>, transform_indices = @transform_3, window_bounds = array<i64: 3, 256, 224>}, {pipeline_mode = #tpu.pipeline_mode<synchronous>, transform_indices = @transform_4, window_bounds = array<i64: 1, 224>}, {pipeline_mode = #tpu.pipeline_mode<synchronous>, transform_indices = @transform_5, window_bounds = array<i64: 3, 256, 224>}, {pipeline_mode = #tpu.pipeline_mode<synchronous>, transform_indices = @transform_6, window_bounds = array<i64: 1, 224>}, {pipeline_mode = #tpu.pipeline_mode<synchronous>, transform_indices = @transform_7, window_bounds = array<i64: 3, 256, 224>}, {pipeline_mode = #tpu.pipeline_mode<synchronous>, transform_indices = @transform_8, window_bounds = array<i64: 1, 224>}, {pipeline_mode = #tpu.pipeline_mode<synchronous>, transform_indices = @transform_9, window_bounds = array<i64: 2, 224, 448>}, {pipeline_mode = #tpu.pipeline_mode<synchronous>, transform_indices = @transform_10, window_bounds = array<i64: 1, 448>}, {pipeline_mode = #tpu.pipeline_mode<synchronous>, transform_indices = @transform_11, window_bounds = array<i64: 448, 224>}, {pipeline_mode = #tpu.pipeline_mode<synchronous>, transform_indices = @transform_12, window_bounds = array<i64: 1, 224>}, {transform_indices = @transform_13, window_bounds = array<i64: 1, 2, 14, 224>}]} {
    %cst = arith.constant 0.000000e+00 : f32
    %0 = vector.broadcast %cst : f32 to vector<16x256xf32>
    %c0 = arith.constant 0 : index
    %c0_0 = arith.constant 0 : index
    %1 = vector.load %arg15[%c0, %c0_0] : memref<16x256xf32, #tpu.memory_space<vmem>>, vector<16x256xf32>
    tpu.vector_store %arg15[%c0, %c0_0], %0 {strides = array<i32>} : memref<16x256xf32, #tpu.memory_space<vmem>>, vector<16x256xf32>,
    %cst_1 = arith.constant 0.000000e+00 : f32
    %2 = vector.broadcast %cst_1 : f32 to vector<16x256xf32>
    %c0_2 = arith.constant 0 : index
    %c0_3 = arith.constant 0 : index
    %3 = vector.load %arg16[%c0_2, %c0_3] : memref<16x256xf32, #tpu.memory_space<vmem>>, vector<16x256xf32>
    tpu.vector_store %arg16[%c0_2, %c0_3], %2 {strides = array<i32>} : memref<16x256xf32, #tpu.memory_space<vmem>>, vector<16x256xf32>,
    %cst_4 = arith.constant 0.000000e+00 : f32
    %4 = vector.broadcast %cst_4 : f32 to vector<14x224xf32>
    %c0_5 = arith.constant 0 : index
    %c0_6 = arith.constant 0 : index
    %c0_7 = arith.constant 0 : index
    %5 = vector.load %arg1[%c0_5, %c0_6, %c0_7] : memref<1x16x128xf32, #tpu.memory_space<vmem>>, vector<1x14x128xf32>
    %6 = vector.shape_cast %5 : vector<1x14x128xf32> to vector<14x128xf32>
    %7 = arith.truncf %6 : vector<14x128xf32> to vector<14x128xbf16>
    %c0_8 = arith.constant 0 : index
    %c0_9 = arith.constant 0 : index
    %c0_10 = arith.constant 0 : index
    %8 = vector.load %arg2[%c0_8, %c0_9, %c0_10] : memref<3x128x224xbf16, #tpu.memory_space<vmem>>, vector<1x128x224xbf16>
    %9 = vector.shape_cast %8 : vector<1x128x224xbf16> to vector<128x224xbf16>
    %cst_11 = arith.constant dense<0.000000e+00> : vector<14x224xf32>
    %10 = tpu.matmul %7, %9, %cst_11 {dimension_numbers = #tpu.dot_dimension_numbers<[1], [0], [0], [1], [0, 0, 1, 1], [], []>} : vector<14x128xbf16>, vector<128x224xbf16>, vector<14x224xf32> -> vector<14x224xf32>
    %11 = arith.addf %4, %10 : vector<14x224xf32>
    %c0_12 = arith.constant 0 : index
    %c1 = arith.constant 1 : index
    %c0_13 = arith.constant 0 : index
    %12 = vector.load %arg1[%c0_12, %c1, %c0_13] : memref<1x16x128xf32, #tpu.memory_space<vmem>>, vector<1x14x128xf32>
    %13 = vector.shape_cast %12 : vector<1x14x128xf32> to vector<14x128xf32>
    %14 = arith.truncf %13 : vector<14x128xf32> to vector<14x128xbf16>
    %c1_14 = arith.constant 1 : index
    %c0_15 = arith.constant 0 : index
    %c0_16 = arith.constant 0 : index
    %15 = vector.load %arg2[%c1_14, %c0_15, %c0_16] : memref<3x128x224xbf16, #tpu.memory_space<vmem>>, vector<1x128x224xbf16>
    %16 = vector.shape_cast %15 : vector<1x128x224xbf16> to vector<128x224xbf16>
    %cst_17 = arith.constant dense<0.000000e+00> : vector<14x224xf32>
    %17 = tpu.matmul %14, %16, %cst_17 {dimension_numbers = #tpu.dot_dimension_numbers<[1], [0], [0], [1], [0, 0, 1, 1], [], []>} : vector<14x128xbf16>, vector<128x224xbf16>, vector<14x224xf32> -> vector<14x224xf32>
    %18 = arith.addf %11, %17 : vector<14x224xf32>
    %c0_18 = arith.constant 0 : index
    %c2 = arith.constant 2 : index
    %c0_19 = arith.constant 0 : index
    %19 = vector.load %arg1[%c0_18, %c2, %c0_19] : memref<1x16x128xf32, #tpu.memory_space<vmem>>, vector<1x14x128xf32>
    %20 = vector.shape_cast %19 : vector<1x14x128xf32> to vector<14x128xf32>
    %21 = arith.truncf %20 : vector<14x128xf32> to vector<14x128xbf16>
    %c2_20 = arith.constant 2 : index
    %c0_21 = arith.constant 0 : index
    %c0_22 = arith.constant 0 : index
    %22 = vector.load %arg2[%c2_20, %c0_21, %c0_22] : memref<3x128x224xbf16, #tpu.memory_space<vmem>>, vector<1x128x224xbf16>
    %23 = vector.shape_cast %22 : vector<1x128x224xbf16> to vector<128x224xbf16>
    %cst_23 = arith.constant dense<0.000000e+00> : vector<14x224xf32>
    %24 = tpu.matmul %21, %23, %cst_23 {dimension_numbers = #tpu.dot_dimension_numbers<[1], [0], [0], [1], [0, 0, 1, 1], [], []>} : vector<14x128xbf16>, vector<128x224xbf16>, vector<14x224xf32> -> vector<14x224xf32>
    %25 = arith.addf %18, %24 : vector<14x224xf32>
    %c0_24 = arith.constant 0 : index
    %c0_25 = arith.constant 0 : index
    %26 = vector.load %arg3[%c0_24, %c0_25] : memref<1x224xf32, #tpu.memory_space<vmem>>, vector<1x224xf32>
    %27 = vector.broadcast %26 : vector<1x224xf32> to vector<14x224xf32>
    %28 = arith.addf %25, %27 : vector<14x224xf32>
    %cst_26 = arith.constant 0.000000e+00 : f32
    %29 = vector.broadcast %cst_26 : f32 to vector<14x224xf32>
    %30 = arith.maximumf %28, %29 : vector<14x224xf32>
    %c1_27 = arith.constant 1 : index
    %c16 = arith.constant 16 : index
    %31 = vector.load %arg15[%c1_27, %c16] : memref<16x256xf32, #tpu.memory_space<vmem>>, vector<14x224xf32>
    tpu.vector_store %arg15[%c1_27, %c16], %30 {strides = array<i32>} : memref<16x256xf32, #tpu.memory_space<vmem>>, vector<14x224xf32>,
    %cst_28 = arith.constant 0.000000e+00 : f32
    %32 = vector.broadcast %cst_28 : f32 to vector<14x224xf32>
    %c0_29 = arith.constant 0 : index
    %c0_30 = arith.constant 0 : index
    %33 = vector.load %arg15[%c0_29, %c0_30] : memref<16x256xf32, #tpu.memory_space<vmem>>, vector<14x256xf32>
    %34 = arith.truncf %33 : vector<14x256xf32> to vector<14x256xbf16>
    %c0_31 = arith.constant 0 : index
    %c0_32 = arith.constant 0 : index
    %c0_33 = arith.constant 0 : index
    %35 = vector.load %arg4[%c0_31, %c0_32, %c0_33] : memref<3x256x224xbf16, #tpu.memory_space<vmem>>, vector<1x256x224xbf16>
    %36 = vector.shape_cast %35 : vector<1x256x224xbf16> to vector<256x224xbf16>
    %cst_34 = arith.constant dense<0.000000e+00> : vector<14x224xf32>
    %37 = tpu.matmul %34, %36, %cst_34 {dimension_numbers = #tpu.dot_dimension_numbers<[1], [0], [0], [1], [0, 0, 1, 1], [], []>} : vector<14x256xbf16>, vector<256x224xbf16>, vector<14x224xf32> -> vector<14x224xf32>
    %38 = arith.addf %32, %37 : vector<14x224xf32>
    %c1_35 = arith.constant 1 : index
    %c0_36 = arith.constant 0 : index
    %39 = vector.load %arg15[%c1_35, %c0_36] : memref<16x256xf32, #tpu.memory_space<vmem>>, vector<14x256xf32>
    %40 = arith.truncf %39 : vector<14x256xf32> to vector<14x256xbf16>
    %c1_37 = arith.constant 1 : index
    %c0_38 = arith.constant 0 : index
    %c0_39 = arith.constant 0 : index
    %41 = vector.load %arg4[%c1_37, %c0_38, %c0_39] : memref<3x256x224xbf16, #tpu.memory_space<vmem>>, vector<1x256x224xbf16>
    %42 = vector.shape_cast %41 : vector<1x256x224xbf16> to vector<256x224xbf16>
    %cst_40 = arith.constant dense<0.000000e+00> : vector<14x224xf32>
    %43 = tpu.matmul %40, %42, %cst_40 {dimension_numbers = #tpu.dot_dimension_numbers<[1], [0], [0], [1], [0, 0, 1, 1], [], []>} : vector<14x256xbf16>, vector<256x224xbf16>, vector<14x224xf32> -> vector<14x224xf32>
    %44 = arith.addf %38, %43 : vector<14x224xf32>
    %c2_41 = arith.constant 2 : index
    %c0_42 = arith.constant 0 : index
    %45 = vector.load %arg15[%c2_41, %c0_42] : memref<16x256xf32, #tpu.memory_space<vmem>>, vector<14x256xf32>
    %46 = arith.truncf %45 : vector<14x256xf32> to vector<14x256xbf16>
    %c2_43 = arith.constant 2 : index
    %c0_44 = arith.constant 0 : index
    %c0_45 = arith.constant 0 : index
    %47 = vector.load %arg4[%c2_43, %c0_44, %c0_45] : memref<3x256x224xbf16, #tpu.memory_space<vmem>>, vector<1x256x224xbf16>
    %48 = vector.shape_cast %47 : vector<1x256x224xbf16> to vector<256x224xbf16>
    %cst_46 = arith.constant dense<0.000000e+00> : vector<14x224xf32>
    %49 = tpu.matmul %46, %48, %cst_46 {dimension_numbers = #tpu.dot_dimension_numbers<[1], [0], [0], [1], [0, 0, 1, 1], [], []>} : vector<14x256xbf16>, vector<256x224xbf16>, vector<14x224xf32> -> vector<14x224xf32>
    %50 = arith.addf %44, %49 : vector<14x224xf32>
    %c0_47 = arith.constant 0 : index
    %c0_48 = arith.constant 0 : index
    %51 = vector.load %arg5[%c0_47, %c0_48] : memref<1x224xf32, #tpu.memory_space<vmem>>, vector<1x224xf32>
    %52 = vector.broadcast %51 : vector<1x224xf32> to vector<14x224xf32>
    %53 = arith.addf %50, %52 : vector<14x224xf32>
    %cst_49 = arith.constant 0.000000e+00 : f32
    %54 = vector.broadcast %cst_49 : f32 to vector<14x224xf32>
    %55 = arith.maximumf %53, %54 : vector<14x224xf32>
    %c1_50 = arith.constant 1 : index
    %c16_51 = arith.constant 16 : index
    %56 = vector.load %arg16[%c1_50, %c16_51] : memref<16x256xf32, #tpu.memory_space<vmem>>, vector<14x224xf32>
    tpu.vector_store %arg16[%c1_50, %c16_51], %55 {strides = array<i32>} : memref<16x256xf32, #tpu.memory_space<vmem>>, vector<14x224xf32>,
    %cst_52 = arith.constant 0.000000e+00 : f32
    %57 = vector.broadcast %cst_52 : f32 to vector<14x224xf32>
    %c0_53 = arith.constant 0 : index
    %c0_54 = arith.constant 0 : index
    %58 = vector.load %arg16[%c0_53, %c0_54] : memref<16x256xf32, #tpu.memory_space<vmem>>, vector<14x256xf32>
    %59 = arith.truncf %58 : vector<14x256xf32> to vector<14x256xbf16>
    %c0_55 = arith.constant 0 : index
    %c0_56 = arith.constant 0 : index
    %c0_57 = arith.constant 0 : index
    %60 = vector.load %arg6[%c0_55, %c0_56, %c0_57] : memref<3x256x224xbf16, #tpu.memory_space<vmem>>, vector<1x256x224xbf16>
    %61 = vector.shape_cast %60 : vector<1x256x224xbf16> to vector<256x224xbf16>
    %cst_58 = arith.constant dense<0.000000e+00> : vector<14x224xf32>
    %62 = tpu.matmul %59, %61, %cst_58 {dimension_numbers = #tpu.dot_dimension_numbers<[1], [0], [0], [1], [0, 0, 1, 1], [], []>} : vector<14x256xbf16>, vector<256x224xbf16>, vector<14x224xf32> -> vector<14x224xf32>
    %63 = arith.addf %57, %62 : vector<14x224xf32>
    %c1_59 = arith.constant 1 : index
    %c0_60 = arith.constant 0 : index
    %64 = vector.load %arg16[%c1_59, %c0_60] : memref<16x256xf32, #tpu.memory_space<vmem>>, vector<14x256xf32>
    %65 = arith.truncf %64 : vector<14x256xf32> to vector<14x256xbf16>
    %c1_61 = arith.constant 1 : index
    %c0_62 = arith.constant 0 : index
    %c0_63 = arith.constant 0 : index
    %66 = vector.load %arg6[%c1_61, %c0_62, %c0_63] : memref<3x256x224xbf16, #tpu.memory_space<vmem>>, vector<1x256x224xbf16>
    %67 = vector.shape_cast %66 : vector<1x256x224xbf16> to vector<256x224xbf16>
    %cst_64 = arith.constant dense<0.000000e+00> : vector<14x224xf32>
    %68 = tpu.matmul %65, %67, %cst_64 {dimension_numbers = #tpu.dot_dimension_numbers<[1], [0], [0], [1], [0, 0, 1, 1], [], []>} : vector<14x256xbf16>, vector<256x224xbf16>, vector<14x224xf32> -> vector<14x224xf32>
    %69 = arith.addf %63, %68 : vector<14x224xf32>
    %c2_65 = arith.constant 2 : index
    %c0_66 = arith.constant 0 : index
    %70 = vector.load %arg16[%c2_65, %c0_66] : memref<16x256xf32, #tpu.memory_space<vmem>>, vector<14x256xf32>
    %71 = arith.truncf %70 : vector<14x256xf32> to vector<14x256xbf16>
    %c2_67 = arith.constant 2 : index
    %c0_68 = arith.constant 0 : index
    %c0_69 = arith.constant 0 : index
    %72 = vector.load %arg6[%c2_67, %c0_68, %c0_69] : memref<3x256x224xbf16, #tpu.memory_space<vmem>>, vector<1x256x224xbf16>
    %73 = vector.shape_cast %72 : vector<1x256x224xbf16> to vector<256x224xbf16>
    %cst_70 = arith.constant dense<0.000000e+00> : vector<14x224xf32>
    %74 = tpu.matmul %71, %73, %cst_70 {dimension_numbers = #tpu.dot_dimension_numbers<[1], [0], [0], [1], [0, 0, 1, 1], [], []>} : vector<14x256xbf16>, vector<256x224xbf16>, vector<14x224xf32> -> vector<14x224xf32>
    %75 = arith.addf %69, %74 : vector<14x224xf32>
    %c0_71 = arith.constant 0 : index
    %c0_72 = arith.constant 0 : index
    %76 = vector.load %arg7[%c0_71, %c0_72] : memref<1x224xf32, #tpu.memory_space<vmem>>, vector<1x224xf32>
    %77 = vector.broadcast %76 : vector<1x224xf32> to vector<14x224xf32>
    %78 = arith.addf %75, %77 : vector<14x224xf32>
    %cst_73 = arith.constant 0.000000e+00 : f32
    %79 = vector.broadcast %cst_73 : f32 to vector<14x224xf32>
    %80 = arith.maximumf %78, %79 : vector<14x224xf32>
    %c1_74 = arith.constant 1 : index
    %c16_75 = arith.constant 16 : index
    %81 = vector.load %arg15[%c1_74, %c16_75] : memref<16x256xf32, #tpu.memory_space<vmem>>, vector<14x224xf32>
    tpu.vector_store %arg15[%c1_74, %c16_75], %80 {strides = array<i32>} : memref<16x256xf32, #tpu.memory_space<vmem>>, vector<14x224xf32>,
    %cst_76 = arith.constant 0.000000e+00 : f32
    %82 = vector.broadcast %cst_76 : f32 to vector<14x224xf32>
    %c0_77 = arith.constant 0 : index
    %c0_78 = arith.constant 0 : index
    %83 = vector.load %arg15[%c0_77, %c0_78] : memref<16x256xf32, #tpu.memory_space<vmem>>, vector<14x256xf32>
    %84 = arith.truncf %83 : vector<14x256xf32> to vector<14x256xbf16>
    %c0_79 = arith.constant 0 : index
    %c0_80 = arith.constant 0 : index
    %c0_81 = arith.constant 0 : index
    %85 = vector.load %arg8[%c0_79, %c0_80, %c0_81] : memref<3x256x224xbf16, #tpu.memory_space<vmem>>, vector<1x256x224xbf16>
    %86 = vector.shape_cast %85 : vector<1x256x224xbf16> to vector<256x224xbf16>
    %cst_82 = arith.constant dense<0.000000e+00> : vector<14x224xf32>
    %87 = tpu.matmul %84, %86, %cst_82 {dimension_numbers = #tpu.dot_dimension_numbers<[1], [0], [0], [1], [0, 0, 1, 1], [], []>} : vector<14x256xbf16>, vector<256x224xbf16>, vector<14x224xf32> -> vector<14x224xf32>
    %88 = arith.addf %82, %87 : vector<14x224xf32>
    %c1_83 = arith.constant 1 : index
    %c0_84 = arith.constant 0 : index
    %89 = vector.load %arg15[%c1_83, %c0_84] : memref<16x256xf32, #tpu.memory_space<vmem>>, vector<14x256xf32>
    %90 = arith.truncf %89 : vector<14x256xf32> to vector<14x256xbf16>
    %c1_85 = arith.constant 1 : index
    %c0_86 = arith.constant 0 : index
    %c0_87 = arith.constant 0 : index
    %91 = vector.load %arg8[%c1_85, %c0_86, %c0_87] : memref<3x256x224xbf16, #tpu.memory_space<vmem>>, vector<1x256x224xbf16>
    %92 = vector.shape_cast %91 : vector<1x256x224xbf16> to vector<256x224xbf16>
    %cst_88 = arith.constant dense<0.000000e+00> : vector<14x224xf32>
    %93 = tpu.matmul %90, %92, %cst_88 {dimension_numbers = #tpu.dot_dimension_numbers<[1], [0], [0], [1], [0, 0, 1, 1], [], []>} : vector<14x256xbf16>, vector<256x224xbf16>, vector<14x224xf32> -> vector<14x224xf32>
    %94 = arith.addf %88, %93 : vector<14x224xf32>
    %c2_89 = arith.constant 2 : index
    %c0_90 = arith.constant 0 : index
    %95 = vector.load %arg15[%c2_89, %c0_90] : memref<16x256xf32, #tpu.memory_space<vmem>>, vector<14x256xf32>
    %96 = arith.truncf %95 : vector<14x256xf32> to vector<14x256xbf16>
    %c2_91 = arith.constant 2 : index
    %c0_92 = arith.constant 0 : index
    %c0_93 = arith.constant 0 : index
    %97 = vector.load %arg8[%c2_91, %c0_92, %c0_93] : memref<3x256x224xbf16, #tpu.memory_space<vmem>>, vector<1x256x224xbf16>
    %98 = vector.shape_cast %97 : vector<1x256x224xbf16> to vector<256x224xbf16>
    %cst_94 = arith.constant dense<0.000000e+00> : vector<14x224xf32>
    %99 = tpu.matmul %96, %98, %cst_94 {dimension_numbers = #tpu.dot_dimension_numbers<[1], [0], [0], [1], [0, 0, 1, 1], [], []>} : vector<14x256xbf16>, vector<256x224xbf16>, vector<14x224xf32> -> vector<14x224xf32>
    %100 = arith.addf %94, %99 : vector<14x224xf32>
    %c0_95 = arith.constant 0 : index
    %c0_96 = arith.constant 0 : index
    %101 = vector.load %arg9[%c0_95, %c0_96] : memref<1x224xf32, #tpu.memory_space<vmem>>, vector<1x224xf32>
    %102 = vector.broadcast %101 : vector<1x224xf32> to vector<14x224xf32>
    %103 = arith.addf %100, %102 : vector<14x224xf32>
    %cst_97 = arith.constant 0.000000e+00 : f32
    %104 = vector.broadcast %cst_97 : f32 to vector<14x224xf32>
    %105 = arith.maximumf %103, %104 : vector<14x224xf32>
    %106 = arith.truncf %105 : vector<14x224xf32> to vector<14x224xbf16>
    %c0_98 = arith.constant 0 : index
    %c0_99 = arith.constant 0 : index
    %c0_100 = arith.constant 0 : index
    %107 = vector.load %arg10[%c0_98, %c0_99, %c0_100] : memref<2x224x448xbf16, #tpu.memory_space<vmem>>, vector<1x224x448xbf16>
    %108 = vector.shape_cast %107 : vector<1x224x448xbf16> to vector<224x448xbf16>
    %cst_101 = arith.constant dense<0.000000e+00> : vector<14x448xf32>
    %109 = tpu.matmul %106, %108, %cst_101 {dimension_numbers = #tpu.dot_dimension_numbers<[1], [0], [0], [1], [0, 0, 1, 1], [], []>} : vector<14x224xbf16>, vector<224x448xbf16>, vector<14x448xf32> -> vector<14x448xf32>
    %c0_102 = arith.constant 0 : index
    %c0_103 = arith.constant 0 : index
    %110 = vector.load %arg11[%c0_102, %c0_103] : memref<1x448xf32, #tpu.memory_space<vmem>>, vector<1x448xf32>
    %111 = vector.broadcast %110 : vector<1x448xf32> to vector<14x448xf32>
    %112 = arith.addf %109, %111 : vector<14x448xf32>
    %cst_104 = arith.constant 0.000000e+00 : f32
    %113 = vector.broadcast %cst_104 : f32 to vector<14x448xf32>
    %114 = arith.maximumf %112, %113 : vector<14x448xf32>
    %115 = arith.truncf %114 : vector<14x448xf32> to vector<14x448xbf16>
    %c0_105 = arith.constant 0 : index
    %c0_106 = arith.constant 0 : index
    %116 = vector.load %arg12[%c0_105, %c0_106] : memref<448x224xbf16, #tpu.memory_space<vmem>>, vector<448x224xbf16>
    %cst_107 = arith.constant dense<0.000000e+00> : vector<14x224xf32>
    %117 = tpu.matmul %115, %116, %cst_107 {dimension_numbers = #tpu.dot_dimension_numbers<[1], [0], [0], [1], [0, 0, 1, 1], [], []>} : vector<14x448xbf16>, vector<448x224xbf16>, vector<14x224xf32> -> vector<14x224xf32>
    %c0_108 = arith.constant 0 : index
    %c0_109 = arith.constant 0 : index
    %118 = vector.load %arg13[%c0_108, %c0_109] : memref<1x224xf32, #tpu.memory_space<vmem>>, vector<1x224xf32>
    %119 = vector.broadcast %118 : vector<1x224xf32> to vector<14x224xf32>
    %120 = arith.addf %117, %119 : vector<14x224xf32>
    %cst_110 = arith.constant 0.000000e+00 : f32
    %121 = vector.broadcast %cst_110 : f32 to vector<14x224xf32>
    %122 = arith.subf %121, %120 : vector<14x224xf32>
    %123 = math.exp %122 : vector<14x224xf32>
    %cst_111 = arith.constant 1.000000e+00 : f32
    %124 = vector.broadcast %cst_111 : f32 to vector<14x224xf32>
    %125 = arith.addf %124, %123 : vector<14x224xf32>
    %126 = tpu.reciprocal %125 {approx = true} : vector<14x224xf32> -> vector<14x224xf32>
    %c0_112 = arith.constant 0 : index
    %c0_113 = arith.constant 0 : index
    %c0_114 = arith.constant 0 : index
    %c0_115 = arith.constant 0 : index
    %127 = vector.load %arg14[%c0_112, %c0_113, %c0_114, %c0_115] : memref<1x2x14x224xf32, #tpu.memory_space<vmem>>, vector<1x1x14x224xf32>
    %128 = vector.shape_cast %127 : vector<1x1x14x224xf32> to vector<14x224xf32>
    %129 = vector.shape_cast %126 : vector<14x224xf32> to vector<1x1x14x224xf32>
    tpu.vector_store %arg14[%c0_112, %c0_113, %c0_114, %c0_115], %129 {strides = array<i32>} : memref<1x2x14x224xf32, #tpu.memory_space<vmem>>, vector<1x1x14x224xf32>,
    %c1_116 = arith.constant 1 : index
    %c0_117 = arith.constant 0 : index
    %c0_118 = arith.constant 0 : index
    %130 = vector.load %arg10[%c1_116, %c0_117, %c0_118] : memref<2x224x448xbf16, #tpu.memory_space<vmem>>, vector<1x224x448xbf16>
    %131 = vector.shape_cast %130 : vector<1x224x448xbf16> to vector<224x448xbf16>
    %cst_119 = arith.constant dense<0.000000e+00> : vector<14x448xf32>
    %132 = tpu.matmul %106, %131, %cst_119 {dimension_numbers = #tpu.dot_dimension_numbers<[1], [0], [0], [1], [0, 0, 1, 1], [], []>} : vector<14x224xbf16>, vector<224x448xbf16>, vector<14x448xf32> -> vector<14x448xf32>
    %c0_120 = arith.constant 0 : index
    %c0_121 = arith.constant 0 : index
    %133 = vector.load %arg11[%c0_120, %c0_121] : memref<1x448xf32, #tpu.memory_space<vmem>>, vector<1x448xf32>
    %134 = vector.broadcast %133 : vector<1x448xf32> to vector<14x448xf32>
    %135 = arith.addf %132, %134 : vector<14x448xf32>
    %cst_122 = arith.constant 0.000000e+00 : f32
    %136 = vector.broadcast %cst_122 : f32 to vector<14x448xf32>
    %137 = arith.maximumf %135, %136 : vector<14x448xf32>
    %138 = arith.truncf %137 : vector<14x448xf32> to vector<14x448xbf16>
    %c0_123 = arith.constant 0 : index
    %c0_124 = arith.constant 0 : index
    %139 = vector.load %arg12[%c0_123, %c0_124] : memref<448x224xbf16, #tpu.memory_space<vmem>>, vector<448x224xbf16>
    %cst_125 = arith.constant dense<0.000000e+00> : vector<14x224xf32>
    %140 = tpu.matmul %138, %139, %cst_125 {dimension_numbers = #tpu.dot_dimension_numbers<[1], [0], [0], [1], [0, 0, 1, 1], [], []>} : vector<14x448xbf16>, vector<448x224xbf16>, vector<14x224xf32> -> vector<14x224xf32>
    %c0_126 = arith.constant 0 : index
    %c0_127 = arith.constant 0 : index
    %141 = vector.load %arg13[%c0_126, %c0_127] : memref<1x224xf32, #tpu.memory_space<vmem>>, vector<1x224xf32>
    %142 = vector.broadcast %141 : vector<1x224xf32> to vector<14x224xf32>
    %143 = arith.addf %140, %142 : vector<14x224xf32>
    %cst_128 = arith.constant 0.000000e+00 : f32
    %144 = vector.broadcast %cst_128 : f32 to vector<14x224xf32>
    %145 = arith.subf %144, %143 : vector<14x224xf32>
    %146 = math.exp %145 : vector<14x224xf32>
    %cst_129 = arith.constant 1.000000e+00 : f32
    %147 = vector.broadcast %cst_129 : f32 to vector<14x224xf32>
    %148 = arith.addf %147, %146 : vector<14x224xf32>
    %149 = tpu.reciprocal %148 {approx = true} : vector<14x224xf32> -> vector<14x224xf32>
    %c0_130 = arith.constant 0 : index
    %c1_131 = arith.constant 1 : index
    %c0_132 = arith.constant 0 : index
    %c0_133 = arith.constant 0 : index
    %150 = vector.load %arg14[%c0_130, %c1_131, %c0_132, %c0_133] : memref<1x2x14x224xf32, #tpu.memory_space<vmem>>, vector<1x1x14x224xf32>
    %151 = vector.shape_cast %150 : vector<1x1x14x224xf32> to vector<14x224xf32>
    %152 = vector.shape_cast %149 : vector<14x224xf32> to vector<1x1x14x224xf32>
    tpu.vector_store %arg14[%c0_130, %c1_131, %c0_132, %c0_133], %152 {strides = array<i32>} : memref<1x2x14x224xf32, #tpu.memory_space<vmem>>, vector<1x1x14x224xf32>,
    return
  }
  func.func @transform_0(%arg0: i32) -> (i32, i32, i32) {
    %c0_i32 = arith.constant 0 : i32
    %c0_i32_0 = arith.constant 0 : i32
    %c0_i32_1 = arith.constant 0 : i32
    return %arg0, %c0_i32, %c0_i32_0 : i32, i32, i32
  }
  func.func @transform_1(%arg0: i32) -> (i32, i32, i32) {
    %c0_i32 = arith.constant 0 : i32
    %c0_i32_0 = arith.constant 0 : i32
    %c0_i32_1 = arith.constant 0 : i32
    %c0_i32_2 = arith.constant 0 : i32
    return %c0_i32, %c0_i32_0, %c0_i32_1 : i32, i32, i32
  }
  func.func @transform_2(%arg0: i32) -> (i32, i32) {
    %c0_i32 = arith.constant 0 : i32
    %c0_i32_0 = arith.constant 0 : i32
    %c0_i32_1 = arith.constant 0 : i32
    return %c0_i32, %c0_i32_0 : i32, i32
  }
  func.func @transform_3(%arg0: i32) -> (i32, i32, i32) {
    %c0_i32 = arith.constant 0 : i32
    %c0_i32_0 = arith.constant 0 : i32
    %c0_i32_1 = arith.constant 0 : i32
    %c0_i32_2 = arith.constant 0 : i32
    return %c0_i32, %c0_i32_0, %c0_i32_1 : i32, i32, i32
  }
  func.func @transform_4(%arg0: i32) -> (i32, i32) {
    %c0_i32 = arith.constant 0 : i32
    %c0_i32_0 = arith.constant 0 : i32
    %c0_i32_1 = arith.constant 0 : i32
    return %c0_i32, %c0_i32_0 : i32, i32
  }
  func.func @transform_5(%arg0: i32) -> (i32, i32, i32) {
    %c0_i32 = arith.constant 0 : i32
    %c0_i32_0 = arith.constant 0 : i32
    %c0_i32_1 = arith.constant 0 : i32
    %c0_i32_2 = arith.constant 0 : i32
    return %c0_i32, %c0_i32_0, %c0_i32_1 : i32, i32, i32
  }
  func.func @transform_6(%arg0: i32) -> (i32, i32) {
    %c0_i32 = arith.constant 0 : i32
    %c0_i32_0 = arith.constant 0 : i32
    %c0_i32_1 = arith.constant 0 : i32
    return %c0_i32, %c0_i32_0 : i32, i32
  }
  func.func @transform_7(%arg0: i32) -> (i32, i32, i32) {
    %c0_i32 = arith.constant 0 : i32
    %c0_i32_0 = arith.constant 0 : i32
    %c0_i32_1 = arith.constant 0 : i32
    %c0_i32_2 = arith.constant 0 : i32
    return %c0_i32, %c0_i32_0, %c0_i32_1 : i32, i32, i32
  }
  func.func @transform_8(%arg0: i32) -> (i32, i32) {
    %c0_i32 = arith.constant 0 : i32
    %c0_i32_0 = arith.constant 0 : i32
    %c0_i32_1 = arith.constant 0 : i32
    return %c0_i32, %c0_i32_0 : i32, i32
  }
  func.func @transform_9(%arg0: i32) -> (i32, i32, i32) {
    %c0_i32 = arith.constant 0 : i32
    %c0_i32_0 = arith.constant 0 : i32
    %c0_i32_1 = arith.constant 0 : i32
    %c0_i32_2 = arith.constant 0 : i32
    return %c0_i32, %c0_i32_0, %c0_i32_1 : i32, i32, i32
  }
  func.func @transform_10(%arg0: i32) -> (i32, i32) {
    %c0_i32 = arith.constant 0 : i32
    %c0_i32_0 = arith.constant 0 : i32
    %c0_i32_1 = arith.constant 0 : i32
    return %c0_i32, %c0_i32_0 : i32, i32
  }
  func.func @transform_11(%arg0: i32) -> (i32, i32) {
    %c0_i32 = arith.constant 0 : i32
    %c0_i32_0 = arith.constant 0 : i32
    %c0_i32_1 = arith.constant 0 : i32
    return %c0_i32, %c0_i32_0 : i32, i32
  }
  func.func @transform_12(%arg0: i32) -> (i32, i32) {
    %c0_i32 = arith.constant 0 : i32
    %c0_i32_0 = arith.constant 0 : i32
    %c0_i32_1 = arith.constant 0 : i32
    return %c0_i32, %c0_i32_0 : i32, i32
  }
  func.func @transform_13(%arg0: i32) -> (i32, i32, i32, i32) {
    %c0_i32 = arith.constant 0 : i32
    %c0_i32_0 = arith.constant 0 : i32
    %c0_i32_1 = arith.constant 0 : i32
    %c0_i32_2 = arith.constant 0 : i32
    return %arg0, %c0_i32, %c0_i32_0, %c0_i32_1 : i32, i32, i32, i32
  }
}

</mosaic_0001>

<llo_original>
// kernel: _forward_impl.4
$region0: #{_forward_impl.4}
  #allocation0 [shape = 'u32[]', space=smem, size = 0x4, offset = 0x4, fixed_abs, tag = 'smem constant byte address 0x4 - core index']
  #allocation1 [shape = 'u32[72,128]{1,0:T(1,128)}', space=vmem, size = 0x9000, scoped, tag = 'internal scratch']
  #allocation2 [shape = 's32[1]{0}', space=sflag, size = 0x4, scoped, tag = 'scoped memory for _forward_impl.4']
  #allocation3 [shape = 'u8[512]{0}', space=smem, size = 0x200, scoped, tag = 'prefetched SMEM operand 0']
  %s0 = inlined_call_operand.vmem [shape: s32[16], index: 0, kind: input, shape index: {}]
  %s1 = inlined_call_operand.vmem [shape: bf16[2,16,128], index: 1, kind: input, shape index: {}]
  %s2 = inlined_call_operand.vmem [shape: bf16[16,7,16], index: 2, kind: input, shape index: {}]
  %s3 = inlined_call_operand.vmem [shape: bf16[16,128,56], index: 3, kind: input, shape index: {}]
  %s4 = inlined_call_operand.vmem [shape: f32[16,7,56], index: 4, kind: output, shape index: {}]
  %s5 = sld [smem:[#allocation0]]
  $region45: #{_forward_impl.4} parent=0
    _
  %s7 = ssub.s32 1, %s5
  %s8 = scalar_select 0, %s7, %s5
  %s10 = sshll.u32 %s0, 4
  %s11 = int_to_ptr.vmem [resolvable:$true] %s10
  %13 = dma.vmem_to_smem %s11, 16, [#allocation3], [#allocation2]
  %15 = dma.done [#allocation2], 16
  %16 = sfence
  loop: start=0, step=1, limit=18
  $region2: #{_forward_impl.4} parent=0 // loop_pre_header
    _
  $region3: #{_forward_impl.4} parent=0 // loop_header
    %s18 = sphi 0, %s22
    %p19 = scmp.ge.s32.totalorder %s18, 18
    %s30 = sphi 0, %s32
    %s33 = sphi 0, %s30
    %s34 = sphi 0, %s33
    %s50 = sphi 0, %s34
    %s56 = sphi 0, %s58
    %s59 = sphi 0, %s56
    %s60 = sphi 0, %s59
    %s76 = sphi 0, %s60
    %s82 = sphi 0, %s84
    %s85 = sphi 0, %s82
    %s86 = sphi 0, %s85
    %s102 = sphi 0, %s86
    %s108 = sphi 0, %s110
    %s111 = sphi 0, %s108
    %s112 = sphi 0, %s111
    %s128 = sphi 0, %s112
  $region4: #{_forward_impl.4} parent=0 // loop_header_branch
    %21 = sbr.rel (%p19) target = $region8
  $region5: #{_forward_impl.4} parent=0 // loop_body
    %s23 = ssub.s32 %s18, 1
    %s24 = ssub.s32 %s18, 2
    %s25 = sadd.s32 %s18, 1
    %s26 = sld [smem:[#allocation3 + %s18]]
    %s27 = sld [smem:[#allocation3 + %s25]]
    %s28 = ssub.s32 %s26, %s27
    %p29 = scmp.eq.s32.totalorder %s28, 0
    %s31 = sadd.s32 %s30, 1
    %s32 = scalar_select %p29, %s30, %s31
    %p35 = pneg %p29
    %p36 = scmp.eq.s32.totalorder %s18, 15
    %p37 = por %p35, %p36
    %p38 = scmp.ne.s32.totalorder %s30, %s33
    %p39 = scmp.eq.s32.totalorder %s18, 0
    %p40 = por %p38, %p39
    %p41 = scmp.ne.s32.totalorder %s30, %s33
    %p42 = scmp.eq.s32.totalorder %s23, 15
    %p43 = por %p41, %p42
    %p44 = scmp.ne.s32.totalorder %s33, %s34
    %p45 = scmp.eq.s32.totalorder %s23, 0
    %p46 = por %p44, %p45
    %p47 = scmp.ne.s32.totalorder %s33, %s34
    %p48 = scmp.eq.s32.totalorder %s24, 15
    %p49 = por %p47, %p48
    %p51 = scmp.ne.s32.totalorder %s34, %s50
    %p52 = scmp.eq.s32.totalorder %s24, 0
    %p53 = por %p51, %p52
    %s54 = ssub.s32 %s18, %s25
    %p55 = scmp.eq.s32.totalorder %s54, 0
    %s57 = sadd.s32 %s56, 1
    %s58 = scalar_select %p55, %s56, %s57
    %p61 = pneg %p55
    %p62 = scmp.eq.s32.totalorder %s18, 15
    %p63 = por %p61, %p62
    %p64 = scmp.ne.s32.totalorder %s56, %s59
    %p65 = scmp.eq.s32.totalorder %s18, 0
    %p66 = por %p64, %p65
    %p67 = scmp.ne.s32.totalorder %s56, %s59
    %p68 = scmp.eq.s32.totalorder %s23, 15
    %p69 = por %p67, %p68
    %p70 = scmp.ne.s32.totalorder %s59, %s60
    %p71 = scmp.eq.s32.totalorder %s23, 0
    %p72 = por %p70, %p71
    %p73 = scmp.ne.s32.totalorder %s59, %s60
    %p74 = scmp.eq.s32.totalorder %s24, 15
    %p75 = por %p73, %p74
    %p77 = scmp.ne.s32.totalorder %s60, %s76
    %p78 = scmp.eq.s32.totalorder %s24, 0
    %p79 = por %p77, %p78
    %s80 = ssub.s32 %s18, %s25
    %p81 = scmp.eq.s32.totalorder %s80, 0
    %s83 = sadd.s32 %s82, 1
    %s84 = scalar_select %p81, %s82, %s83
    %p87 = pneg %p81
    %p88 = scmp.eq.s32.totalorder %s18, 15
    %p89 = por %p87, %p88
    %p90 = scmp.ne.s32.totalorder %s82, %s85
    %p91 = scmp.eq.s32.totalorder %s18, 0
    %p92 = por %p90, %p91
    %p93 = scmp.ne.s32.totalorder %s82, %s85
    %p94 = scmp.eq.s32.totalorder %s23, 15
    %p95 = por %p93, %p94
    %p96 = scmp.ne.s32.totalorder %s85, %s86
    %p97 = scmp.eq.s32.totalorder %s23, 0
    %p98 = por %p96, %p97
    %p99 = scmp.ne.s32.totalorder %s85, %s86
    %p100 = scmp.eq.s32.totalorder %s24, 15
    %p101 = por %p99, %p100
    %p103 = scmp.ne.s32.totalorder %s86, %s102
    %p104 = scmp.eq.s32.totalorder %s24, 0
    %p105 = por %p103, %p104
    %s106 = ssub.s32 %s18, %s25
    %p107 = scmp.eq.s32.totalorder %s106, 0
    %s109 = sadd.s32 %s108, 1
    %s110 = scalar_select %p107, %s108, %s109
    %p113 = pneg %p107
    %p114 = scmp.eq.s32.totalorder %s18, 15
    %p115 = por %p113, %p114
    %p116 = scmp.ne.s32.totalorder %s108, %s111
    %p117 = scmp.eq.s32.totalorder %s18, 0
    %p118 = por %p116, %p117
    %p119 = scmp.ne.s32.totalorder %s108, %s111
    %p120 = scmp.eq.s32.totalorder %s23, 15
    %p121 = por %p119, %p120
    %p122 = scmp.ne.s32.totalorder %s111, %s112
    %p123 = scmp.eq.s32.totalorder %s23, 0
    %p124 = por %p122, %p123
    %p125 = scmp.ne.s32.totalorder %s111, %s112
    %p126 = scmp.eq.s32.totalorder %s24, 15
    %p127 = por %p125, %p126
    %p129 = scmp.ne.s32.totalorder %s112, %s128
    %p130 = scmp.eq.s32.totalorder %s24, 0
    %p131 = por %p129, %p130
    %p132 = scmp.le.s32.totalorder 1, %s18
    %p133 = scmp.lt.s32.totalorder %s18, 17
    %p134 = pnand %p132, %p133
    %p135 = pneg %p134
    // Predicated region
    $region9: #{_forward_impl.4} parent=5 // pred_check
      _
    $region10: #{_forward_impl.4} parent=5 // pred_check_branch
      %137 = sbr.rel (%p134) target = $region12
    $region11: #{_forward_impl.4} parent=5 // pred_region
      %s138 = ssub.s32 %s18, 1
    $region12: #{_forward_impl.4} parent=5 // pred_fallthru
      _
    %p139 = scmp.lt.s32.totalorder %s18, 16
    // Predicated region
    $region13: #{_forward_impl.4} parent=5 // pred_check
      %p140 = pneg %p139
    $region14: #{_forward_impl.4} parent=5 // pred_check_branch
      %142 = sbr.rel (%p140) target = $region16
    $region15: #{_forward_impl.4} parent=5 // pred_region
      // Predicated region
      $region17: #{_forward_impl.4} parent=15 // pred_check
        %p143 = pneg %p40
      $region18: #{_forward_impl.4} parent=15 // pred_check_branch
        %145 = sbr.rel (%p143) target = $region20
      $region19: #{_forward_impl.4} parent=15 // pred_region
        %s146 = sld [smem:[#allocation3 + %s18]]
        %p147 = scmp.lt.s32.totalorder %s146, 1
        %s148 = scalar_select %p147, %s146, 1
        %s149 = smul.addr %s148, 2
        %s150 = smul.addr %s149, 4
        %s151 = scalar_lea.vmem %s1, %s150
        %s152 = sld [smem:[#allocation3 + %s18]]
      $region20: #{_forward_impl.4} parent=15 // pred_fallthru
        _
      // Predicated region
      $region21: #{_forward_impl.4} parent=15 // pred_check
        %p153 = pneg %p66
      $region22: #{_forward_impl.4} parent=15 // pred_check_branch
        %155 = sbr.rel (%p153) target = $region24
      $region23: #{_forward_impl.4} parent=15 // pred_region
        %p156 = scmp.lt.s32.totalorder %s18, 15
        %s157 = scalar_select %p156, %s18, 15
        %s158 = smul.addr %s157, 4
        %s159 = scalar_lea.vmem %s2, %s158
      $region24: #{_forward_impl.4} parent=15 // pred_fallthru
        _
      // Predicated region
      $region25: #{_forward_impl.4} parent=15 // pred_check
        %p160 = pneg %p92
      $region26: #{_forward_impl.4} parent=15 // pred_check_branch
        %162 = sbr.rel (%p160) target = $region28
      $region27: #{_forward_impl.4} parent=15 // pred_region
        %p163 = scmp.lt.s32.totalorder %s18, 15
        %s164 = scalar_select %p163, %s18, 15
        %s165 = smul.addr %s164, 16
        %s166 = smul.addr %s165, 4
        %s167 = scalar_lea.vmem %s3, %s166
      $region28: #{_forward_impl.4} parent=15 // pred_fallthru
        _
    $region16: #{_forward_impl.4} parent=5 // pred_fallthru
      _
    %p168 = scmp.le.s32.totalorder 1, %s18
    %p169 = scmp.lt.s32.totalorder %s18, 17
    %p170 = pnand %p168, %p169
    %p171 = pneg %p170
    // Predicated region
    $region29: #{_forward_impl.4} parent=5 // pred_check
      _
    $region30: #{_forward_impl.4} parent=5 // pred_check_branch
      %173 = sbr.rel (%p170) target = $region32
    $region31: #{_forward_impl.4} parent=5 // pred_region
      %s174 = ssub.s32 %s18, 1
      %s175 = sld [smem:[#allocation3 + %s23]]
      %p176 = scmp.lt.s32.totalorder %s175, 1
      %s177 = scalar_select %p176, %s175, 1
      %s178 = smul.addr %s177, 2
      %s179 = smul.addr %s178, 4
      %s180 = scalar_lea.vmem %s1, %s179
      %p181 = pneg %p46
      %p182 = pneg %p43
      %p183 = scmp.lt.s32.totalorder %s23, 15
      %s184 = scalar_select %p183, %s23, 15
      %s185 = smul.addr %s184, 4
      %s186 = scalar_lea.vmem %s2, %s185
      %p187 = pneg %p72
      %p188 = pneg %p69
      %p189 = scmp.lt.s32.totalorder %s23, 15
      %s190 = scalar_select %p189, %s23, 15
      %s191 = smul.addr %s190, 16
      %s192 = smul.addr %s191, 4
      %s193 = scalar_lea.vmem %s3, %s192
      %p194 = pneg %p98
      %p195 = pneg %p95
      %p196 = pneg %p124
      %p197 = pneg %p121
      %p198 = scmp.lt.s32.totalorder %s23, 15
      %s199 = scalar_select %p198, %s23, 15
      %s200 = smul.addr %s199, 8
      %s201 = scalar_lea.vmem %s4, %s200
      %s202 = sld [smem:[#allocation3 + %s23]]
      %p203 = scmp.lt.s32.totalorder %s202, 1
      %s204 = scalar_select %p203, %s202, 1
      %s205 = smul.addr %s204, 2
      %s206 = smul.addr %s205, 4
      %s207 = scalar_lea.vmem %s1, %s206
      %s208 = sld [smem:[#allocation3 + %s23]]
      %p209 = scmp.lt.s32.totalorder %s23, 15
      %s210 = scalar_select %p209, %s23, 15
      %s211 = smul.addr %s210, 4
      %s212 = scalar_lea.vmem %s2, %s211
      %p213 = scmp.lt.s32.totalorder %s23, 15
      %s214 = scalar_select %p213, %s23, 15
      %s215 = smul.addr %s214, 16
      %s216 = smul.addr %s215, 4
      %s217 = scalar_lea.vmem %s3, %s216
      %p218 = scmp.lt.s32.totalorder %s23, 15
      %s219 = scalar_select %p218, %s23, 15
      %s220 = smul.addr %s219, 8
      %s221 = scalar_lea.vmem %s4, %s220
      %v223 = vld [vmem:[%s212] sm:$0xf]
      %v224 = vld [vmem:[%s207] sm:$0xf]
      %v225 = vld [vmem:[%s207 + $0x4] sm:$0xf]
      %v228 = vunpack.c.l.b16 %v224
      %v229 = vunpack.c.l.b16 %v225
      %v230 = vpack.c.b16 %v229, %v228
      %vm232 = vcmask 130048
      %v234 = vsel %vm232, %v223, 0
      %236 = vmatpush.bf16.msra.mxu0 0
      %237 = vmatpush.bf16.msra.mxu0 0
      %238 = vmatpush.bf16.msra.mxu0 0
      %239 = vmatpush.bf16.msra.mxu0 0
      %240 = vmatpush.bf16.msra.mxu0 0
      %241 = vmatpush.bf16.msra.mxu0 0
      %242 = vmatpush.bf16.msra.mxu0 0
      %243 = vmatpush.bf16.msra.mxu0 %v230
      %244 = vmatmul.bf16.gmra.mxu0 %v234
      %v245 = vpop.f32.mrf.mxu0
      %v246 = vadd.f32 0.0, %v245
      %v247 = vpop.f32.mrf.mxu0
      %248 = vdwg.mxu0
      %v249 = vpack.c.bf16 %v246, %v246
      %v250 = vld [vmem:[%s217] sm:$0xf]
      %v251 = vld [vmem:[%s217 + $0x4] sm:$0xf]
      %v252 = vld [vmem:[%s217 + $0x8] sm:$0xf]
      %v253 = vld [vmem:[%s217 + $0xc] sm:$0xf]
      %v254 = vld [vmem:[%s217 + $0x10] sm:$0xf]
      %v255 = vld [vmem:[%s217 + $0x14] sm:$0xf]
      %v256 = vld [vmem:[%s217 + $0x18] sm:$0xf]
      %v257 = vld [vmem:[%s217 + $0x1c] sm:$0xf]
      %v258 = vld [vmem:[%s217 + $0x20] sm:$0xf]
      %v259 = vld [vmem:[%s217 + $0x24] sm:$0xf]
      %v260 = vld [vmem:[%s217 + $0x28] sm:$0xf]
      %v261 = vld [vmem:[%s217 + $0x2c] sm:$0xf]
      %v262 = vld [vmem:[%s217 + $0x30] sm:$0xf]
      %v263 = vld [vmem:[%s217 + $0x34] sm:$0xf]
      %v264 = vld [vmem:[%s217 + $0x38] sm:$0xf]
      %v265 = vld [vmem:[%s217 + $0x3c] sm:$0xf]
      %v282 = vunpack.c.l.b16 %v250
      %v283 = vunpack.c.l.b16 %v251
      %v284 = vunpack.c.l.b16 %v252
      %v285 = vunpack.c.l.b16 %v253
      %v286 = vunpack.c.l.b16 %v254
      %v287 = vunpack.c.l.b16 %v255
      %v288 = vunpack.c.l.b16 %v256
      %v289 = vunpack.c.l.b16 %v257
      %v290 = vunpack.c.l.b16 %v258
      %v291 = vunpack.c.l.b16 %v259
      %v292 = vunpack.c.l.b16 %v260
      %v293 = vunpack.c.l.b16 %v261
      %v294 = vunpack.c.l.b16 %v262
      %v295 = vunpack.c.l.b16 %v263
      %v296 = vunpack.c.l.b16 %v264
      %v297 = vunpack.c.l.b16 %v265
      %v298 = vpack.c.b16 %v283, %v282
      %v299 = vpack.c.b16 %v285, %v284
      %v300 = vpack.c.b16 %v287, %v286
      %v301 = vpack.c.b16 %v289, %v288
      %v302 = vpack.c.b16 %v291, %v290
      %v303 = vpack.c.b16 %v293, %v292
      %v304 = vpack.c.b16 %v295, %v294
      %v305 = vpack.c.b16 %v297, %v296
      %314 = vmatpush.bf16.msra.mxu0 %v305
      %315 = vmatpush.bf16.msra.mxu0 %v304
      %316 = vmatpush.bf16.msra.mxu0 %v303
      %317 = vmatpush.bf16.msra.mxu0 %v302
      %318 = vmatpush.bf16.msra.mxu0 %v301
      %319 = vmatpush.bf16.msra.mxu0 %v300
      %320 = vmatpush.bf16.msra.mxu0 %v299
      %321 = vmatpush.bf16.msra.mxu0 %v298
      %322 = vmatmul.bf16.gmra.mxu0 %v249
      %v323 = vpop.f32.mrf.mxu0
      %v324 = vadd.f32 0.0, %v323
      %v325 = vpop.f32.mrf.mxu0
      %326 = vdwg.mxu0
      %vm327 = vcmask 456704
      %328 = vst.msk [vmem:[%s221] sm:$0x7f] %vm327, %v324
      %p329 = scmp.lt.s32.totalorder %s23, 15
      %s330 = scalar_select %p329, %s23, 15
      %s331 = smul.addr %s330, 8
      %s332 = scalar_lea.vmem %s4, %s331
      // Predicated region
      $region33: #{_forward_impl.4} parent=31 // pred_check
        %p333 = pneg %p121
      $region34: #{_forward_impl.4} parent=31 // pred_check_branch
        %335 = sbr.rel (%p333) target = $region36
      $region35: #{_forward_impl.4} parent=31 // pred_region
        _
      $region36: #{_forward_impl.4} parent=31 // pred_fallthru
        _
    $region32: #{_forward_impl.4} parent=5 // pred_fallthru
      _
    %p336 = scmp.le.s32.totalorder 2, %s18
    // Predicated region
    $region37: #{_forward_impl.4} parent=5 // pred_check
      %p337 = pneg %p336
    $region38: #{_forward_impl.4} parent=5 // pred_check_branch
      %339 = sbr.rel (%p337) target = $region40
    $region39: #{_forward_impl.4} parent=5 // pred_region
      %s340 = ssub.s32 %s18, 2
      // Predicated region
      $region41: #{_forward_impl.4} parent=39 // pred_check
        %p341 = pneg %p127
      $region42: #{_forward_impl.4} parent=39 // pred_check_branch
        %343 = sbr.rel (%p341) target = $region44
      $region43: #{_forward_impl.4} parent=39 // pred_region
        %p344 = scmp.lt.s32.totalorder %s24, 15
        %s345 = scalar_select %p344, %s24, 15
        %s346 = smul.addr %s345, 8
        %s347 = scalar_lea.vmem %s4, %s346
      $region44: #{_forward_impl.4} parent=39 // pred_fallthru
        _
    $region40: #{_forward_impl.4} parent=5 // pred_fallthru
      _
  $region6: #{_forward_impl.4} parent=0 // loop_footer
    %s22 = sadd.s32 1, %s18
  $region7: #{_forward_impl.4} parent=0 // loop_footer_branch
    %17 = sbr.rel target = $region3
  $region8: #{_forward_impl.4} parent=0 // loop_exit
    _

// kernel: tile.13
$region0: #{tile.13}
  #allocation0 [shape = 's32[1]{0}', space=sflag, size = 0x4, scoped, tag = 'scoped memory for tile.13']
  %s0 = inlined_call_operand.vmem [shape: s32[7], index: 0, kind: input, shape index: {}]
  %s1 = inlined_call_operand.vmem [shape: s32[8,7], index: 1, kind: output, shape index: {}]
  // Predicated region
  $region2: #{tile.13} parent=0 // pred_check
    _
  $region3: #{tile.13} parent=0 // pred_check_branch
    %3 = sbr.rel (0) target = $region5
  $region4: #{tile.13} parent=0 // pred_region
    _
  $region5: #{tile.13} parent=0 // pred_fallthru
    _
  %v4 = vld [vmem:[%s0] ss:$0 sm:$0xff]
  %5 = vst [vmem:[%s1] sm:$0xff] %v4

// kernel: tile.14
$region0: #{tile.14}
  %s0 = inlined_call_operand.vmem [shape: s32[8,7], index: 0, kind: input, shape index: {}]
  %s1 = inlined_call_operand.vmem [shape: s32[56], index: 1, kind: output, shape index: {}]
  $region1: #{tile.14} parent=0
    #allocation0 [shape = 'u8[4096]{0}', space=vmem, size = 0x1000, scoped, tag = 'scoped mem for output reshape']
    %v2 = vld [vmem:[%s0] sm:$0x1]
    %vm3 = vcmask 56320
    %4 = vst.msk [vmem:[#allocation0] sm:$0x1] %vm3, %v2
    %s5 = scalar_lea.vmem %s0, 7
    %v6 = vld [vmem:[%s5] sm:$0x1]
    %7 = vrot.lane.b32.xlu0 %v6, 49
    %v8 = vpop.permute.xlu0 %7
    %vm9 = vcmask 458120
    %10 = vst.msk [vmem:[#allocation0] sm:$0x1] %vm9, %v8
    %s11 = scalar_lea.vmem %s0, 6
    %v12 = vld [vmem:[%s11] sm:$0x1]
    %13 = vrot.lane.b32.xlu0 %v12, 42
    %v14 = vpop.permute.xlu0 %13
    %vm15 = vcmask 400720
    %16 = vst.msk [vmem:[#allocation0] sm:$0x1] %vm15, %v14
    %s17 = scalar_lea.vmem %s0, 5
    %v18 = vld [vmem:[%s17] sm:$0x1]
    %19 = vrot.lane.b32.xlu0 %v18, 35
    %v20 = vpop.permute.xlu0 %19
    %vm21 = vcmask 343320
    %22 = vst.msk [vmem:[#allocation0] sm:$0x1] %vm21, %v20
    %s23 = scalar_lea.vmem %s0, 4
    %v24 = vld [vmem:[%s23] sm:$0x1]
    %25 = vrot.lane.b32.xlu0 %v24, 28
    %v26 = vpop.permute.xlu0 %25
    %vm27 = vcmask 285920
    %28 = vst.msk [vmem:[#allocation0] sm:$0x1] %vm27, %v26
    %s29 = scalar_lea.vmem %s0, 3
    %v30 = vld [vmem:[%s29] sm:$0x1]
    %31 = vrot.lane.b32.xlu0 %v30, 21
    %v32 = vpop.permute.xlu0 %31
    %vm33 = vcmask 228520
    %34 = vst.msk [vmem:[#allocation0] sm:$0x1] %vm33, %v32
    %s35 = scalar_lea.vmem %s0, 2
    %v36 = vld [vmem:[%s35] sm:$0x1]
    %37 = vrot.lane.b32.xlu0 %v36, 14
    %v38 = vpop.permute.xlu0 %37
    %vm39 = vcmask 171120
    %40 = vst.msk [vmem:[#allocation0] sm:$0x1] %vm39, %v38
    %s41 = scalar_lea.vmem %s0, 1
    %v42 = vld [vmem:[%s41] sm:$0x1]
    %43 = vrot.lane.b32.xlu0 %v42, 7
    %v44 = vpop.permute.xlu0 %43
    %vm45 = vcmask 113720
    %46 = vst.msk [vmem:[#allocation0] sm:$0x1] %vm45, %v44
    %s48 = ssub.s32 2, 1
    %v49 = vld [vmem:[#allocation0] sm:%s48]
    %s51 = ssub.s32 2, 1
    %52 = vst [vmem:[%s1] sm:%s51] %v49

// kernel: _forward_impl.5
$region0: #{_forward_impl.5}
  #allocation0 [shape = 'u32[]', space=smem, size = 0x4, offset = 0x4, fixed_abs, tag = 'smem constant byte address 0x4 - core index']
  #allocation1 [shape = 'u32[72,128]{1,0:T(1,128)}', space=vmem, size = 0x9000, scoped, tag = 'internal scratch']
  %s0 = inlined_call_operand.vmem [shape: bf16[16,512], index: 0, kind: input, shape index: {}]
  %s1 = inlined_call_operand.vmem [shape: f32[16,128], index: 1, kind: input, shape index: {}]
  %s2 = inlined_call_operand.vmem [shape: bf16[512,128], index: 2, kind: input, shape index: {}]
  %s3 = inlined_call_operand.vmem [shape: f32[1,128], index: 3, kind: input, shape index: {}]
  %s4 = inlined_call_operand.vmem [shape: bf16[128,128], index: 4, kind: input, shape index: {}]
  %s5 = inlined_call_operand.vmem [shape: f32[1,128], index: 5, kind: input, shape index: {}]
  %s6 = inlined_call_operand.vmem [shape: bf16[128,128], index: 6, kind: input, shape index: {}]
  %s7 = inlined_call_operand.vmem [shape: f32[1,128], index: 7, kind: input, shape index: {}]
  %s8 = inlined_call_operand.vmem [shape: bf16[128,128], index: 8, kind: input, shape index: {}]
  %s9 = inlined_call_operand.vmem [shape: f32[1,128], index: 9, kind: input, shape index: {}]
  %s10 = inlined_call_operand.vmem [shape: f32[16,128], index: 10, kind: output, shape index: {0}]
  %s11 = inlined_call_operand.vmem [shape: f32[16,128], index: 11, kind: output, shape index: {1}]
  %12 = xla_tuple %s10, %s11
  %s13 = sld [smem:[#allocation0]]
  $region81: #{_forward_impl.5} parent=0
    _
  %s15 = ssub.s32 1, %s13
  %s16 = scalar_select 0, %s15, %s13
  loop: start=0, step=1, limit=4
  $region2: #{_forward_impl.5} parent=0 // loop_pre_header
    _
  $region3: #{_forward_impl.5} parent=0 // loop_header
    %s18 = sphi 0, %s22
    %p19 = scmp.ge.s32.totalorder %s18, 4
    %s28 = sphi 0, %s30
    %s31 = sphi 0, %s28
    %s32 = sphi 0, %s31
    %s48 = sphi 0, %s32
    %s54 = sphi 0, %s56
    %s57 = sphi 0, %s54
    %s58 = sphi 0, %s57
    %s74 = sphi 0, %s58
    %s78 = sphi 0, %s78
    %s80 = sphi 0, %s78
    %s81 = sphi 0, %s80
    %s95 = sphi 0, %s81
    %s99 = sphi 0, %s99
    %s101 = sphi 0, %s99
    %s102 = sphi 0, %s101
    %s116 = sphi 0, %s102
    %s120 = sphi 0, %s120
    %s122 = sphi 0, %s120
    %s123 = sphi 0, %s122
    %s137 = sphi 0, %s123
    %s141 = sphi 0, %s141
    %s143 = sphi 0, %s141
    %s144 = sphi 0, %s143
    %s158 = sphi 0, %s144
    %s162 = sphi 0, %s162
    %s164 = sphi 0, %s162
    %s165 = sphi 0, %s164
    %s179 = sphi 0, %s165
    %s183 = sphi 0, %s183
    %s185 = sphi 0, %s183
    %s186 = sphi 0, %s185
    %s200 = sphi 0, %s186
    %s204 = sphi 0, %s204
    %s206 = sphi 0, %s204
    %s207 = sphi 0, %s206
    %s221 = sphi 0, %s207
    %s225 = sphi 0, %s225
    %s227 = sphi 0, %s225
    %s228 = sphi 0, %s227
    %s242 = sphi 0, %s228
    %s248 = sphi 0, %s250
    %s251 = sphi 0, %s248
    %s252 = sphi 0, %s251
    %s268 = sphi 0, %s252
    %s274 = sphi 0, %s276
    %s277 = sphi 0, %s274
    %s278 = sphi 0, %s277
    %s294 = sphi 0, %s278
  $region4: #{_forward_impl.5} parent=0 // loop_header_branch
    %21 = sbr.rel (%p19) target = $region8
  $region5: #{_forward_impl.5} parent=0 // loop_body
    %s23 = ssub.s32 %s18, 1
    %s24 = ssub.s32 %s18, 2
    %s25 = sadd.s32 %s18, 1
    %s26 = ssub.s32 %s18, %s25
    %p27 = scmp.eq.s32.totalorder %s26, 0
    %s29 = sadd.s32 %s28, 1
    %s30 = scalar_select %p27, %s28, %s29
    %p33 = pneg %p27
    %p34 = scmp.eq.s32.totalorder %s18, 1
    %p35 = por %p33, %p34
    %p36 = scmp.ne.s32.totalorder %s28, %s31
    %p37 = scmp.eq.s32.totalorder %s18, 0
    %p38 = por %p36, %p37
    %p39 = scmp.ne.s32.totalorder %s28, %s31
    %p40 = scmp.eq.s32.totalorder %s23, 1
    %p41 = por %p39, %p40
    %p42 = scmp.ne.s32.totalorder %s31, %s32
    %p43 = scmp.eq.s32.totalorder %s23, 0
    %p44 = por %p42, %p43
    %p45 = scmp.ne.s32.totalorder %s31, %s32
    %p46 = scmp.eq.s32.totalorder %s24, 1
    %p47 = por %p45, %p46
    %p49 = scmp.ne.s32.totalorder %s32, %s48
    %p50 = scmp.eq.s32.totalorder %s24, 0
    %p51 = por %p49, %p50
    %s52 = ssub.s32 %s18, %s25
    %p53 = scmp.eq.s32.totalorder %s52, 0
    %s55 = sadd.s32 %s54, 1
    %s56 = scalar_select %p53, %s54, %s55
    %p59 = pneg %p53
    %p60 = scmp.eq.s32.totalorder %s18, 1
    %p61 = por %p59, %p60
    %p62 = scmp.ne.s32.totalorder %s54, %s57
    %p63 = scmp.eq.s32.totalorder %s18, 0
    %p64 = por %p62, %p63
    %p65 = scmp.ne.s32.totalorder %s54, %s57
    %p66 = scmp.eq.s32.totalorder %s23, 1
    %p67 = por %p65, %p66
    %p68 = scmp.ne.s32.totalorder %s57, %s58
    %p69 = scmp.eq.s32.totalorder %s23, 0
    %p70 = por %p68, %p69
    %p71 = scmp.ne.s32.totalorder %s57, %s58
    %p72 = scmp.eq.s32.totalorder %s24, 1
    %p73 = por %p71, %p72
    %p75 = scmp.ne.s32.totalorder %s58, %s74
    %p76 = scmp.eq.s32.totalorder %s24, 0
    %p77 = por %p75, %p76
    %s79 = sadd.s32 %s78, 1
    %p82 = scmp.eq.s32.totalorder %s18, 1
    %p83 = scmp.ne.s32.totalorder %s78, %s80
    %p84 = scmp.eq.s32.totalorder %s18, 0
    %p85 = por %p83, %p84
    %p86 = scmp.ne.s32.totalorder %s78, %s80
    %p87 = scmp.eq.s32.totalorder %s23, 1
    %p88 = por %p86, %p87
    %p89 = scmp.ne.s32.totalorder %s80, %s81
    %p90 = scmp.eq.s32.totalorder %s23, 0
    %p91 = por %p89, %p90
    %p92 = scmp.ne.s32.totalorder %s80, %s81
    %p93 = scmp.eq.s32.totalorder %s24, 1
    %p94 = por %p92, %p93
    %p96 = scmp.ne.s32.totalorder %s81, %s95
    %p97 = scmp.eq.s32.totalorder %s24, 0
    %p98 = por %p96, %p97
    %s100 = sadd.s32 %s99, 1
    %p103 = scmp.eq.s32.totalorder %s18, 1
    %p104 = scmp.ne.s32.totalorder %s99, %s101
    %p105 = scmp.eq.s32.totalorder %s18, 0
    %p106 = por %p104, %p105
    %p107 = scmp.ne.s32.totalorder %s99, %s101
    %p108 = scmp.eq.s32.totalorder %s23, 1
    %p109 = por %p107, %p108
    %p110 = scmp.ne.s32.totalorder %s101, %s102
    %p111 = scmp.eq.s32.totalorder %s23, 0
    %p112 = por %p110, %p111
    %p113 = scmp.ne.s32.totalorder %s101, %s102
    %p114 = scmp.eq.s32.totalorder %s24, 1
    %p115 = por %p113, %p114
    %p117 = scmp.ne.s32.totalorder %s102, %s116
    %p118 = scmp.eq.s32.totalorder %s24, 0
    %p119 = por %p117, %p118
    %s121 = sadd.s32 %s120, 1
    %p124 = scmp.eq.s32.totalorder %s18, 1
    %p125 = scmp.ne.s32.totalorder %s120, %s122
    %p126 = scmp.eq.s32.totalorder %s18, 0
    %p127 = por %p125, %p126
    %p128 = scmp.ne.s32.totalorder %s120, %s122
    %p129 = scmp.eq.s32.totalorder %s23, 1
    %p130 = por %p128, %p129
    %p131 = scmp.ne.s32.totalorder %s122, %s123
    %p132 = scmp.eq.s32.totalorder %s23, 0
    %p133 = por %p131, %p132
    %p134 = scmp.ne.s32.totalorder %s122, %s123
    %p135 = scmp.eq.s32.totalorder %s24, 1
    %p136 = por %p134, %p135
    %p138 = scmp.ne.s32.totalorder %s123, %s137
    %p139 = scmp.eq.s32.totalorder %s24, 0
    %p140 = por %p138, %p139
    %s142 = sadd.s32 %s141, 1
    %p145 = scmp.eq.s32.totalorder %s18, 1
    %p146 = scmp.ne.s32.totalorder %s141, %s143
    %p147 = scmp.eq.s32.totalorder %s18, 0
    %p148 = por %p146, %p147
    %p149 = scmp.ne.s32.totalorder %s141, %s143
    %p150 = scmp.eq.s32.totalorder %s23, 1
    %p151 = por %p149, %p150
    %p152 = scmp.ne.s32.totalorder %s143, %s144
    %p153 = scmp.eq.s32.totalorder %s23, 0
    %p154 = por %p152, %p153
    %p155 = scmp.ne.s32.totalorder %s143, %s144
    %p156 = scmp.eq.s32.totalorder %s24, 1
    %p157 = por %p155, %p156
    %p159 = scmp.ne.s32.totalorder %s144, %s158
    %p160 = scmp.eq.s32.totalorder %s24, 0
    %p161 = por %p159, %p160
    %s163 = sadd.s32 %s162, 1
    %p166 = scmp.eq.s32.totalorder %s18, 1
    %p167 = scmp.ne.s32.totalorder %s162, %s164
    %p168 = scmp.eq.s32.totalorder %s18, 0
    %p169 = por %p167, %p168
    %p170 = scmp.ne.s32.totalorder %s162, %s164
    %p171 = scmp.eq.s32.totalorder %s23, 1
    %p172 = por %p170, %p171
    %p173 = scmp.ne.s32.totalorder %s164, %s165
    %p174 = scmp.eq.s32.totalorder %s23, 0
    %p175 = por %p173, %p174
    %p176 = scmp.ne.s32.totalorder %s164, %s165
    %p177 = scmp.eq.s32.totalorder %s24, 1
    %p178 = por %p176, %p177
    %p180 = scmp.ne.s32.totalorder %s165, %s179
    %p181 = scmp.eq.s32.totalorder %s24, 0
    %p182 = por %p180, %p181
    %s184 = sadd.s32 %s183, 1
    %p187 = scmp.eq.s32.totalorder %s18, 1
    %p188 = scmp.ne.s32.totalorder %s183, %s185
    %p189 = scmp.eq.s32.totalorder %s18, 0
    %p190 = por %p188, %p189
    %p191 = scmp.ne.s32.totalorder %s183, %s185
    %p192 = scmp.eq.s32.totalorder %s23, 1
    %p193 = por %p191, %p192
    %p194 = scmp.ne.s32.totalorder %s185, %s186
    %p195 = scmp.eq.s32.totalorder %s23, 0
    %p196 = por %p194, %p195
    %p197 = scmp.ne.s32.totalorder %s185, %s186
    %p198 = scmp.eq.s32.totalorder %s24, 1
    %p199 = por %p197, %p198
    %p201 = scmp.ne.s32.totalorder %s186, %s200
    %p202 = scmp.eq.s32.totalorder %s24, 0
    %p203 = por %p201, %p202
    %s205 = sadd.s32 %s204, 1
    %p208 = scmp.eq.s32.totalorder %s18, 1
    %p209 = scmp.ne.s32.totalorder %s204, %s206
    %p210 = scmp.eq.s32.totalorder %s18, 0
    %p211 = por %p209, %p210
    %p212 = scmp.ne.s32.totalorder %s204, %s206
    %p213 = scmp.eq.s32.totalorder %s23, 1
    %p214 = por %p212, %p213
    %p215 = scmp.ne.s32.totalorder %s206, %s207
    %p216 = scmp.eq.s32.totalorder %s23, 0
    %p217 = por %p215, %p216
    %p218 = scmp.ne.s32.totalorder %s206, %s207
    %p219 = scmp.eq.s32.totalorder %s24, 1
    %p220 = por %p218, %p219
    %p222 = scmp.ne.s32.totalorder %s207, %s221
    %p223 = scmp.eq.s32.totalorder %s24, 0
    %p224 = por %p222, %p223
    %s226 = sadd.s32 %s225, 1
    %p229 = scmp.eq.s32.totalorder %s18, 1
    %p230 = scmp.ne.s32.totalorder %s225, %s227
    %p231 = scmp.eq.s32.totalorder %s18, 0
    %p232 = por %p230, %p231
    %p233 = scmp.ne.s32.totalorder %s225, %s227
    %p234 = scmp.eq.s32.totalorder %s23, 1
    %p235 = por %p233, %p234
    %p236 = scmp.ne.s32.totalorder %s227, %s228
    %p237 = scmp.eq.s32.totalorder %s23, 0
    %p238 = por %p236, %p237
    %p239 = scmp.ne.s32.totalorder %s227, %s228
    %p240 = scmp.eq.s32.totalorder %s24, 1
    %p241 = por %p239, %p240
    %p243 = scmp.ne.s32.totalorder %s228, %s242
    %p244 = scmp.eq.s32.totalorder %s24, 0
    %p245 = por %p243, %p244
    %s246 = ssub.s32 %s18, %s25
    %p247 = scmp.eq.s32.totalorder %s246, 0
    %s249 = sadd.s32 %s248, 1
    %s250 = scalar_select %p247, %s248, %s249
    %p253 = pneg %p247
    %p254 = scmp.eq.s32.totalorder %s18, 1
    %p255 = por %p253, %p254
    %p256 = scmp.ne.s32.totalorder %s248, %s251
    %p257 = scmp.eq.s32.totalorder %s18, 0
    %p258 = por %p256, %p257
    %p259 = scmp.ne.s32.totalorder %s248, %s251
    %p260 = scmp.eq.s32.totalorder %s23, 1
    %p261 = por %p259, %p260
    %p262 = scmp.ne.s32.totalorder %s251, %s252
    %p263 = scmp.eq.s32.totalorder %s23, 0
    %p264 = por %p262, %p263
    %p265 = scmp.ne.s32.totalorder %s251, %s252
    %p266 = scmp.eq.s32.totalorder %s24, 1
    %p267 = por %p265, %p266
    %p269 = scmp.ne.s32.totalorder %s252, %s268
    %p270 = scmp.eq.s32.totalorder %s24, 0
    %p271 = por %p269, %p270
    %s272 = ssub.s32 %s18, %s25
    %p273 = scmp.eq.s32.totalorder %s272, 0
    %s275 = sadd.s32 %s274, 1
    %s276 = scalar_select %p273, %s274, %s275
    %p279 = pneg %p273
    %p280 = scmp.eq.s32.totalorder %s18, 1
    %p281 = por %p279, %p280
    %p282 = scmp.ne.s32.totalorder %s274, %s277
    %p283 = scmp.eq.s32.totalorder %s18, 0
    %p284 = por %p282, %p283
    %p285 = scmp.ne.s32.totalorder %s274, %s277
    %p286 = scmp.eq.s32.totalorder %s23, 1
    %p287 = por %p285, %p286
    %p288 = scmp.ne.s32.totalorder %s277, %s278
    %p289 = scmp.eq.s32.totalorder %s23, 0
    %p290 = por %p288, %p289
    %p291 = scmp.ne.s32.totalorder %s277, %s278
    %p292 = scmp.eq.s32.totalorder %s24, 1
    %p293 = por %p291, %p292
    %p295 = scmp.ne.s32.totalorder %s278, %s294
    %p296 = scmp.eq.s32.totalorder %s24, 0
    %p297 = por %p295, %p296
    %p298 = scmp.le.s32.totalorder 1, %s18
    %p299 = scmp.lt.s32.totalorder %s18, 3
    %p300 = pnand %p298, %p299
    %p301 = pneg %p300
    // Predicated region
    $region9: #{_forward_impl.5} parent=5 // pred_check
      _
    $region10: #{_forward_impl.5} parent=5 // pred_check_branch
      %303 = sbr.rel (%p300) target = $region12
    $region11: #{_forward_impl.5} parent=5 // pred_region
      %s304 = ssub.s32 %s18, 1
      // Predicated region
      $region13: #{_forward_impl.5} parent=11 // pred_check
        %p305 = pneg %p91
      $region14: #{_forward_impl.5} parent=11 // pred_check_branch
        %307 = sbr.rel (%p305) target = $region16
      $region15: #{_forward_impl.5} parent=11 // pred_region
        _
      $region16: #{_forward_impl.5} parent=11 // pred_fallthru
        _
      // Predicated region
      $region17: #{_forward_impl.5} parent=11 // pred_check
        %p308 = pneg %p112
      $region18: #{_forward_impl.5} parent=11 // pred_check_branch
        %310 = sbr.rel (%p308) target = $region20
      $region19: #{_forward_impl.5} parent=11 // pred_region
        _
      $region20: #{_forward_impl.5} parent=11 // pred_fallthru
        _
      // Predicated region
      $region21: #{_forward_impl.5} parent=11 // pred_check
        %p311 = pneg %p133
      $region22: #{_forward_impl.5} parent=11 // pred_check_branch
        %313 = sbr.rel (%p311) target = $region24
      $region23: #{_forward_impl.5} parent=11 // pred_region
        _
      $region24: #{_forward_impl.5} parent=11 // pred_fallthru
        _
      // Predicated region
      $region25: #{_forward_impl.5} parent=11 // pred_check
        %p314 = pneg %p154
      $region26: #{_forward_impl.5} parent=11 // pred_check_branch
        %316 = sbr.rel (%p314) target = $region28
      $region27: #{_forward_impl.5} parent=11 // pred_region
        _
      $region28: #{_forward_impl.5} parent=11 // pred_fallthru
        _
      // Predicated region
      $region29: #{_forward_impl.5} parent=11 // pred_check
        %p317 = pneg %p175
      $region30: #{_forward_impl.5} parent=11 // pred_check_branch
        %319 = sbr.rel (%p317) target = $region32
      $region31: #{_forward_impl.5} parent=11 // pred_region
        _
      $region32: #{_forward_impl.5} parent=11 // pred_fallthru
        _
      // Predicated region
      $region33: #{_forward_impl.5} parent=11 // pred_check
        %p320 = pneg %p196
      $region34: #{_forward_impl.5} parent=11 // pred_check_branch
        %322 = sbr.rel (%p320) target = $region36
      $region35: #{_forward_impl.5} parent=11 // pred_region
        _
      $region36: #{_forward_impl.5} parent=11 // pred_fallthru
        _
      // Predicated region
      $region37: #{_forward_impl.5} parent=11 // pred_check
        %p323 = pneg %p217
      $region38: #{_forward_impl.5} parent=11 // pred_check_branch
        %325 = sbr.rel (%p323) target = $region40
      $region39: #{_forward_impl.5} parent=11 // pred_region
        _
      $region40: #{_forward_impl.5} parent=11 // pred_fallthru
        _
      // Predicated region
      $region41: #{_forward_impl.5} parent=11 // pred_check
        %p326 = pneg %p238
      $region42: #{_forward_impl.5} parent=11 // pred_check_branch
        %328 = sbr.rel (%p326) target = $region44
      $region43: #{_forward_impl.5} parent=11 // pred_region
        _
      $region44: #{_forward_impl.5} parent=11 // pred_fallthru
        _
    $region12: #{_forward_impl.5} parent=5 // pred_fallthru
      _
    %p329 = scmp.lt.s32.totalorder %s18, 2
    // Predicated region
    $region45: #{_forward_impl.5} parent=5 // pred_check
      %p330 = pneg %p329
    $region46: #{_forward_impl.5} parent=5 // pred_check_branch
      %332 = sbr.rel (%p330) target = $region48
    $region47: #{_forward_impl.5} parent=5 // pred_region
      // Predicated region
      $region49: #{_forward_impl.5} parent=47 // pred_check
        %p333 = pneg %p38
      $region50: #{_forward_impl.5} parent=47 // pred_check_branch
        %335 = sbr.rel (%p333) target = $region52
      $region51: #{_forward_impl.5} parent=47 // pred_region
        %p336 = scmp.lt.s32.totalorder %s18, 1
        %s337 = scalar_select %p336, %s18, 1
        %s338 = smul.addr %s337, 4
        %s339 = smul.addr %s338, 4
        %s340 = scalar_lea.vmem %s0, %s339
      $region52: #{_forward_impl.5} parent=47 // pred_fallthru
        _
      // Predicated region
      $region53: #{_forward_impl.5} parent=47 // pred_check
        %p341 = pneg %p64
      $region54: #{_forward_impl.5} parent=47 // pred_check_branch
        %343 = sbr.rel (%p341) target = $region56
      $region55: #{_forward_impl.5} parent=47 // pred_region
        %p344 = scmp.lt.s32.totalorder %s18, 1
        %s345 = scalar_select %p344, %s18, 1
        %s346 = smul.addr %s345, 8
        %s347 = scalar_lea.vmem %s1, %s346
      $region56: #{_forward_impl.5} parent=47 // pred_fallthru
        _
    $region48: #{_forward_impl.5} parent=5 // pred_fallthru
      _
    %p348 = scmp.le.s32.totalorder 1, %s18
    %p349 = scmp.lt.s32.totalorder %s18, 3
    %p350 = pnand %p348, %p349
    %p351 = pneg %p350
    // Predicated region
    $region57: #{_forward_impl.5} parent=5 // pred_check
      _
    $region58: #{_forward_impl.5} parent=5 // pred_check_branch
      %353 = sbr.rel (%p350) target = $region60
    $region59: #{_forward_impl.5} parent=5 // pred_region
      %s354 = ssub.s32 %s18, 1
      %p355 = scmp.lt.s32.totalorder %s23, 1
      %s356 = scalar_select %p355, %s23, 1
      %s357 = smul.addr %s356, 4
      %s358 = smul.addr %s357, 4
      %s359 = scalar_lea.vmem %s0, %s358
      %p360 = pneg %p44
      %p361 = pneg %p41
      %p362 = scmp.lt.s32.totalorder %s23, 1
      %s363 = scalar_select %p362, %s23, 1
      %s364 = smul.addr %s363, 8
      %s365 = scalar_lea.vmem %s1, %s364
      %p366 = pneg %p70
      %p367 = pneg %p67
      %p368 = pneg %p91
      %p369 = pneg %p88
      %p370 = pneg %p112
      %p371 = pneg %p109
      %p372 = pneg %p133
      %p373 = pneg %p130
      %p374 = pneg %p154
      %p375 = pneg %p151
      %p376 = pneg %p175
      %p377 = pneg %p172
      %p378 = pneg %p196
      %p379 = pneg %p193
      %p380 = pneg %p217
      %p381 = pneg %p214
      %p382 = pneg %p238
      %p383 = pneg %p235
      %p384 = pneg %p264
      %p385 = pneg %p261
      %p386 = scmp.lt.s32.totalorder %s23, 1
      %s387 = scalar_select %p386, %s23, 1
      %s388 = smul.addr %s387, 8
      %s389 = scalar_lea.vmem %s10, %s388
      %p390 = pneg %p290
      %p391 = pneg %p287
      %p392 = scmp.lt.s32.totalorder %s23, 1
      %s393 = scalar_select %p392, %s23, 1
      %s394 = smul.addr %s393, 8
      %s395 = scalar_lea.vmem %s11, %s394
      %p396 = scmp.lt.s32.totalorder %s23, 1
      %s397 = scalar_select %p396, %s23, 1
      %s398 = smul.addr %s397, 4
      %s399 = smul.addr %s398, 4
      %s400 = scalar_lea.vmem %s0, %s399
      %p401 = scmp.lt.s32.totalorder %s23, 1
      %s402 = scalar_select %p401, %s23, 1
      %s403 = smul.addr %s402, 8
      %s404 = scalar_lea.vmem %s1, %s403
      %p405 = scmp.lt.s32.totalorder %s23, 1
      %s406 = scalar_select %p405, %s23, 1
      %s407 = smul.addr %s406, 8
      %s408 = scalar_lea.vmem %s10, %s407
      %p409 = scmp.lt.s32.totalorder %s23, 1
      %s410 = scalar_select %p409, %s23, 1
      %s411 = smul.addr %s410, 8
      %s412 = scalar_lea.vmem %s11, %s411
      %v413 = vld [vmem:[%s400] sm:$0xff]
      %v414 = vld [vmem:[%s400 + $0x8] sm:$0xff]
      %v415 = vld [vmem:[%s2] sm:$0xf]
      %v416 = vld [vmem:[%s2 + $0x4] sm:$0xf]
      %v417 = vld [vmem:[%s2 + $0x8] sm:$0xf]
      %v418 = vld [vmem:[%s2 + $0xc] sm:$0xf]
      %v419 = vld [vmem:[%s2 + $0x10] sm:$0xf]
      %v420 = vld [vmem:[%s2 + $0x14] sm:$0xf]
      %v421 = vld [vmem:[%s2 + $0x18] sm:$0xf]
      %v422 = vld [vmem:[%s2 + $0x1c] sm:$0xf]
      %v423 = vld [vmem:[%s2 + $0x20] sm:$0xf]
      %v424 = vld [vmem:[%s2 + $0x24] sm:$0xf]
      %v425 = vld [vmem:[%s2 + $0x28] sm:$0xf]
      %v426 = vld [vmem:[%s2 + $0x2c] sm:$0xf]
      %v427 = vld [vmem:[%s2 + $0x30] sm:$0xf]
      %v428 = vld [vmem:[%s2 + $0x34] sm:$0xf]
      %v429 = vld [vmem:[%s2 + $0x38] sm:$0xf]
      %v430 = vld [vmem:[%s2 + $0x3c] sm:$0xf]
      %v431 = vld [vmem:[%s2 + $0x40] sm:$0xf]
      %v432 = vld [vmem:[%s2 + $0x44] sm:$0xf]
      %v433 = vld [vmem:[%s2 + $0x48] sm:$0xf]
      %v434 = vld [vmem:[%s2 + $0x4c] sm:$0xf]
      %v435 = vld [vmem:[%s2 + $0x50] sm:$0xf]
      %v436 = vld [vmem:[%s2 + $0x54] sm:$0xf]
      %v437 = vld [vmem:[%s2 + $0x58] sm:$0xf]
      %v438 = vld [vmem:[%s2 + $0x5c] sm:$0xf]
      %v439 = vld [vmem:[%s2 + $0x60] sm:$0xf]
      %v440 = vld [vmem:[%s2 + $0x64] sm:$0xf]
      %v441 = vld [vmem:[%s2 + $0x68] sm:$0xf]
      %v442 = vld [vmem:[%s2 + $0x6c] sm:$0xf]
      %v443 = vld [vmem:[%s2 + $0x70] sm:$0xf]
      %v444 = vld [vmem:[%s2 + $0x74] sm:$0xf]
      %v445 = vld [vmem:[%s2 + $0x78] sm:$0xf]
      %v446 = vld [vmem:[%s2 + $0x7c] sm:$0xf]
      %v447 = vld [vmem:[%s2 + $0x80] sm:$0xf]
      %v448 = vld [vmem:[%s2 + $0x84] sm:$0xf]
      %v449 = vld [vmem:[%s2 + $0x88] sm:$0xf]
      %v450 = vld [vmem:[%s2 + $0x8c] sm:$0xf]
      %v451 = vld [vmem:[%s2 + $0x90] sm:$0xf]
      %v452 = vld [vmem:[%s2 + $0x94] sm:$0xf]
      %v453 = vld [vmem:[%s2 + $0x98] sm:$0xf]
      %v454 = vld [vmem:[%s2 + $0x9c] sm:$0xf]
      %v455 = vld [vmem:[%s2 + $0xa0] sm:$0xf]
      %v456 = vld [vmem:[%s2 + $0xa4] sm:$0xf]
      %v457 = vld [vmem:[%s2 + $0xa8] sm:$0xf]
      %v458 = vld [vmem:[%s2 + $0xac] sm:$0xf]
      %v459 = vld [vmem:[%s2 + $0xb0] sm:$0xf]
      %v460 = vld [vmem:[%s2 + $0xb4] sm:$0xf]
      %v461 = vld [vmem:[%s2 + $0xb8] sm:$0xf]
      %v462 = vld [vmem:[%s2 + $0xbc] sm:$0xf]
      %v463 = vld [vmem:[%s2 + $0xc0] sm:$0xf]
      %v464 = vld [vmem:[%s2 + $0xc4] sm:$0xf]
      %v465 = vld [vmem:[%s2 + $0xc8] sm:$0xf]
      %v466 = vld [vmem:[%s2 + $0xcc] sm:$0xf]
      %v467 = vld [vmem:[%s2 + $0xd0] sm:$0xf]
      %v468 = vld [vmem:[%s2 + $0xd4] sm:$0xf]
      %v469 = vld [vmem:[%s2 + $0xd8] sm:$0xf]
      %v470 = vld [vmem:[%s2 + $0xdc] sm:$0xf]
      %v471 = vld [vmem:[%s2 + $0xe0] sm:$0xf]
      %v472 = vld [vmem:[%s2 + $0xe4] sm:$0xf]
      %v473 = vld [vmem:[%s2 + $0xe8] sm:$0xf]
      %v474 = vld [vmem:[%s2 + $0xec] sm:$0xf]
      %v475 = vld [vmem:[%s2 + $0xf0] sm:$0xf]
      %v476 = vld [vmem:[%s2 + $0xf4] sm:$0xf]
      %v477 = vld [vmem:[%s2 + $0xf8] sm:$0xf]
      %v478 = vld [vmem:[%s2 + $0xfc] sm:$0xf]
      %v479 = vld [vmem:[%s3] sm:$0x1]
      %v481 = vperm.slane %v479, 0
      %v485 = vunpack.c.l.b16 %v413
      %v486 = vunpack.c.h.b16 %v413
      %v487 = vunpack.c.l.b16 %v414
      %v488 = vunpack.c.h.b16 %v414
      %v489 = vpack.c.b16 %v485, %v485
      %v490 = vpack.c.b16 %v486, %v486
      %v491 = vpack.c.b16 %v487, %v487
      %v492 = vpack.c.b16 %v488, %v488
      %v561 = vunpack.c.l.b16 %v415
      %v562 = vunpack.c.l.b16 %v416
      %v563 = vunpack.c.l.b16 %v417
      %v564 = vunpack.c.l.b16 %v418
      %v565 = vunpack.c.l.b16 %v419
      %v566 = vunpack.c.l.b16 %v420
      %v567 = vunpack.c.l.b16 %v421
      %v568 = vunpack.c.l.b16 %v422
      %v569 = vunpack.c.l.b16 %v423
      %v570 = vunpack.c.l.b16 %v424
      %v571 = vunpack.c.l.b16 %v425
      %v572 = vunpack.c.l.b16 %v426
      %v573 = vunpack.c.l.b16 %v427
      %v574 = vunpack.c.l.b16 %v428
      %v575 = vunpack.c.l.b16 %v429
      %v576 = vunpack.c.l.b16 %v430
      %v577 = vunpack.c.l.b16 %v431
      %v578 = vunpack.c.l.b16 %v432
      %v579 = vunpack.c.l.b16 %v433
      %v580 = vunpack.c.l.b16 %v434
      %v581 = vunpack.c.l.b16 %v435
      %v582 = vunpack.c.l.b16 %v436
      %v583 = vunpack.c.l.b16 %v437
      %v584 = vunpack.c.l.b16 %v438
      %v585 = vunpack.c.l.b16 %v439
      %v586 = vunpack.c.l.b16 %v440
      %v587 = vunpack.c.l.b16 %v441
      %v588 = vunpack.c.l.b16 %v442
      %v589 = vunpack.c.l.b16 %v443
      %v590 = vunpack.c.l.b16 %v444
      %v591 = vunpack.c.l.b16 %v445
      %v592 = vunpack.c.l.b16 %v446
      %v593 = vunpack.c.l.b16 %v447
      %v594 = vunpack.c.l.b16 %v448
      %v595 = vunpack.c.l.b16 %v449
      %v596 = vunpack.c.l.b16 %v450
      %v597 = vunpack.c.l.b16 %v451
      %v598 = vunpack.c.l.b16 %v452
      %v599 = vunpack.c.l.b16 %v453
      %v600 = vunpack.c.l.b16 %v454
      %v601 = vunpack.c.l.b16 %v455
      %v602 = vunpack.c.l.b16 %v456
      %v603 = vunpack.c.l.b16 %v457
      %v604 = vunpack.c.l.b16 %v458
      %v605 = vunpack.c.l.b16 %v459
      %v606 = vunpack.c.l.b16 %v460
      %v607 = vunpack.c.l.b16 %v461
      %v608 = vunpack.c.l.b16 %v462
      %v609 = vunpack.c.l.b16 %v463
      %v610 = vunpack.c.l.b16 %v464
      %v611 = vunpack.c.l.b16 %v465
      %v612 = vunpack.c.l.b16 %v466
      %v613 = vunpack.c.l.b16 %v467
      %v614 = vunpack.c.l.b16 %v468
      %v615 = vunpack.c.l.b16 %v469
      %v616 = vunpack.c.l.b16 %v470
      %v617 = vunpack.c.l.b16 %v471
      %v618 = vunpack.c.l.b16 %v472
      %v619 = vunpack.c.l.b16 %v473
      %v620 = vunpack.c.l.b16 %v474
      %v621 = vunpack.c.l.b16 %v475
      %v622 = vunpack.c.l.b16 %v476
      %v623 = vunpack.c.l.b16 %v477
      %v624 = vunpack.c.l.b16 %v478
      %v625 = vpack.c.b16 %v562, %v561
      %v626 = vpack.c.b16 %v564, %v563
      %v627 = vpack.c.b16 %v566, %v565
      %v628 = vpack.c.b16 %v568, %v567
      %v629 = vpack.c.b16 %v570, %v569
      %v630 = vpack.c.b16 %v572, %v571
      %v631 = vpack.c.b16 %v574, %v573
      %v632 = vpack.c.b16 %v576, %v575
      %v633 = vpack.c.b16 %v578, %v577
      %v634 = vpack.c.b16 %v580, %v579
      %v635 = vpack.c.b16 %v582, %v581
      %v636 = vpack.c.b16 %v584, %v583
      %v637 = vpack.c.b16 %v586, %v585
      %v638 = vpack.c.b16 %v588, %v587
      %v639 = vpack.c.b16 %v590, %v589
      %v640 = vpack.c.b16 %v592, %v591
      %v641 = vpack.c.b16 %v594, %v593
      %v642 = vpack.c.b16 %v596, %v595
      %v643 = vpack.c.b16 %v598, %v597
      %v644 = vpack.c.b16 %v600, %v599
      %v645 = vpack.c.b16 %v602, %v601
      %v646 = vpack.c.b16 %v604, %v603
      %v647 = vpack.c.b16 %v606, %v605
      %v648 = vpack.c.b16 %v608, %v607
      %v649 = vpack.c.b16 %v610, %v609
      %v650 = vpack.c.b16 %v612, %v611
      %v651 = vpack.c.b16 %v614, %v613
      %v652 = vpack.c.b16 %v616, %v615
      %v653 = vpack.c.b16 %v618, %v617
      %v654 = vpack.c.b16 %v620, %v619
      %v655 = vpack.c.b16 %v622, %v621
      %v656 = vpack.c.b16 %v624, %v623
      %689 = vmatpush.bf16.msra.mxu0 %v632
      %690 = vmatpush.bf16.msra.mxu0 %v631
      %691 = vmatpush.bf16.msra.mxu0 %v630
      %692 = vmatpush.bf16.msra.mxu0 %v629
      %693 = vmatpush.bf16.msra.mxu0 %v628
      %694 = vmatpush.bf16.msra.mxu0 %v627
      %695 = vmatpush.bf16.msra.mxu0 %v626
      %696 = vmatpush.bf16.msra.mxu0 %v625
      %697 = vmatmul.bf16.gmra.mxu0 %v489
      %v698 = vpop.f32.mrf.mxu0
      %v699 = vadd.f32 %v481, %v698
      %v700 = vpop.f32.mrf.mxu0
      %701 = vdwg.mxu0
      %702 = vmatpush.bf16.msra.mxu0 %v640
      %703 = vmatpush.bf16.msra.mxu0 %v639
      %704 = vmatpush.bf16.msra.mxu0 %v638
      %705 = vmatpush.bf16.msra.mxu0 %v637
      %706 = vmatpush.bf16.msra.mxu0 %v636
      %707 = vmatpush.bf16.msra.mxu0 %v635
      %708 = vmatpush.bf16.msra.mxu0 %v634
      %709 = vmatpush.bf16.msra.mxu0 %v633
      %710 = vmatmul.bf16.gmra.mxu0 %v490
      %v711 = vpop.f32.mrf.mxu0
      %v712 = vadd.f32 %v699, %v711
      %v713 = vpop.f32.mrf.mxu0
      %714 = vdwg.mxu0
      %715 = vmatpush.bf16.msra.mxu0 %v648
      %716 = vmatpush.bf16.msra.mxu0 %v647
      %717 = vmatpush.bf16.msra.mxu0 %v646
      %718 = vmatpush.bf16.msra.mxu0 %v645
      %719 = vmatpush.bf16.msra.mxu0 %v644
      %720 = vmatpush.bf16.msra.mxu0 %v643
      %721 = vmatpush.bf16.msra.mxu0 %v642
      %722 = vmatpush.bf16.msra.mxu0 %v641
      %723 = vmatmul.bf16.gmra.mxu0 %v491
      %v724 = vpop.f32.mrf.mxu0
      %v725 = vadd.f32 %v712, %v724
      %v726 = vpop.f32.mrf.mxu0
      %727 = vdwg.mxu0
      %728 = vmatpush.bf16.msra.mxu0 %v656
      %729 = vmatpush.bf16.msra.mxu0 %v655
      %730 = vmatpush.bf16.msra.mxu0 %v654
      %731 = vmatpush.bf16.msra.mxu0 %v653
      %732 = vmatpush.bf16.msra.mxu0 %v652
      %733 = vmatpush.bf16.msra.mxu0 %v651
      %734 = vmatpush.bf16.msra.mxu0 %v650
      %735 = vmatpush.bf16.msra.mxu0 %v649
      %736 = vmatmul.bf16.gmra.mxu0 %v492
      %v737 = vpop.f32.mrf.mxu0
      %v738 = vadd.f32 %v725, %v737
      %v739 = vpop.f32.mrf.mxu0
      %740 = vdwg.mxu0
      %v741 = vmax.f32 %v738, 0.0
      %v742 = vpack.c.bf16 %v741, %v741
      %v743 = vld [vmem:[%s4] sm:$0xf]
      %v744 = vld [vmem:[%s4 + $0x4] sm:$0xf]
      %v745 = vld [vmem:[%s4 + $0x8] sm:$0xf]
      %v746 = vld [vmem:[%s4 + $0xc] sm:$0xf]
      %v747 = vld [vmem:[%s4 + $0x10] sm:$0xf]
      %v748 = vld [vmem:[%s4 + $0x14] sm:$0xf]
      %v749 = vld [vmem:[%s4 + $0x18] sm:$0xf]
      %v750 = vld [vmem:[%s4 + $0x1c] sm:$0xf]
      %v751 = vld [vmem:[%s4 + $0x20] sm:$0xf]
      %v752 = vld [vmem:[%s4 + $0x24] sm:$0xf]
      %v753 = vld [vmem:[%s4 + $0x28] sm:$0xf]
      %v754 = vld [vmem:[%s4 + $0x2c] sm:$0xf]
      %v755 = vld [vmem:[%s4 + $0x30] sm:$0xf]
      %v756 = vld [vmem:[%s4 + $0x34] sm:$0xf]
      %v757 = vld [vmem:[%s4 + $0x38] sm:$0xf]
      %v758 = vld [vmem:[%s4 + $0x3c] sm:$0xf]
      %v759 = vld [vmem:[%s5] sm:$0x1]
      %v761 = vperm.slane %v759, 0
      %v779 = vunpack.c.l.b16 %v743
      %v780 = vunpack.c.l.b16 %v744
      %v781 = vunpack.c.l.b16 %v745
      %v782 = vunpack.c.l.b16 %v746
      %v783 = vunpack.c.l.b16 %v747
      %v784 = vunpack.c.l.b16 %v748
      %v785 = vunpack.c.l.b16 %v749
      %v786 = vunpack.c.l.b16 %v750
      %v787 = vunpack.c.l.b16 %v751
      %v788 = vunpack.c.l.b16 %v752
      %v789 = vunpack.c.l.b16 %v753
      %v790 = vunpack.c.l.b16 %v754
      %v791 = vunpack.c.l.b16 %v755
      %v792 = vunpack.c.l.b16 %v756
      %v793 = vunpack.c.l.b16 %v757
      %v794 = vunpack.c.l.b16 %v758
      %v795 = vpack.c.b16 %v780, %v779
      %v796 = vpack.c.b16 %v782, %v781
      %v797 = vpack.c.b16 %v784, %v783
      %v798 = vpack.c.b16 %v786, %v785
      %v799 = vpack.c.b16 %v788, %v787
      %v800 = vpack.c.b16 %v790, %v789
      %v801 = vpack.c.b16 %v792, %v791
      %v802 = vpack.c.b16 %v794, %v793
      %811 = vmatpush.bf16.msra.mxu0 %v802
      %812 = vmatpush.bf16.msra.mxu0 %v801
      %813 = vmatpush.bf16.msra.mxu0 %v800
      %814 = vmatpush.bf16.msra.mxu0 %v799
      %815 = vmatpush.bf16.msra.mxu0 %v798
      %816 = vmatpush.bf16.msra.mxu0 %v797
      %817 = vmatpush.bf16.msra.mxu0 %v796
      %818 = vmatpush.bf16.msra.mxu0 %v795
      %819 = vmatmul.bf16.gmra.mxu0 %v742
      %v820 = vpop.f32.mrf.mxu0
      %v821 = vadd.f32 %v761, %v820
      %v822 = vpop.f32.mrf.mxu0
      %823 = vdwg.mxu0
      %v824 = vmax.f32 %v821, 0.0
      %v825 = vpack.c.bf16 %v824, %v824
      %v826 = vld [vmem:[%s6] sm:$0xf]
      %v827 = vld [vmem:[%s6 + $0x4] sm:$0xf]
      %v828 = vld [vmem:[%s6 + $0x8] sm:$0xf]
      %v829 = vld [vmem:[%s6 + $0xc] sm:$0xf]
      %v830 = vld [vmem:[%s6 + $0x10] sm:$0xf]
      %v831 = vld [vmem:[%s6 + $0x14] sm:$0xf]
      %v832 = vld [vmem:[%s6 + $0x18] sm:$0xf]
      %v833 = vld [vmem:[%s6 + $0x1c] sm:$0xf]
      %v834 = vld [vmem:[%s6 + $0x20] sm:$0xf]
      %v835 = vld [vmem:[%s6 + $0x24] sm:$0xf]
      %v836 = vld [vmem:[%s6 + $0x28] sm:$0xf]
      %v837 = vld [vmem:[%s6 + $0x2c] sm:$0xf]
      %v838 = vld [vmem:[%s6 + $0x30] sm:$0xf]
      %v839 = vld [vmem:[%s6 + $0x34] sm:$0xf]
      %v840 = vld [vmem:[%s6 + $0x38] sm:$0xf]
      %v841 = vld [vmem:[%s6 + $0x3c] sm:$0xf]
      %v842 = vld [vmem:[%s7] sm:$0x1]
      %v844 = vperm.slane %v842, 0
      %v862 = vunpack.c.l.b16 %v826
      %v863 = vunpack.c.l.b16 %v827
      %v864 = vunpack.c.l.b16 %v828
      %v865 = vunpack.c.l.b16 %v829
      %v866 = vunpack.c.l.b16 %v830
      %v867 = vunpack.c.l.b16 %v831
      %v868 = vunpack.c.l.b16 %v832
      %v869 = vunpack.c.l.b16 %v833
      %v870 = vunpack.c.l.b16 %v834
      %v871 = vunpack.c.l.b16 %v835
      %v872 = vunpack.c.l.b16 %v836
      %v873 = vunpack.c.l.b16 %v837
      %v874 = vunpack.c.l.b16 %v838
      %v875 = vunpack.c.l.b16 %v839
      %v876 = vunpack.c.l.b16 %v840
      %v877 = vunpack.c.l.b16 %v841
      %v878 = vpack.c.b16 %v863, %v862
      %v879 = vpack.c.b16 %v865, %v864
      %v880 = vpack.c.b16 %v867, %v866
      %v881 = vpack.c.b16 %v869, %v868
      %v882 = vpack.c.b16 %v871, %v870
      %v883 = vpack.c.b16 %v873, %v872
      %v884 = vpack.c.b16 %v875, %v874
      %v885 = vpack.c.b16 %v877, %v876
      %894 = vmatpush.bf16.msra.mxu0 %v885
      %895 = vmatpush.bf16.msra.mxu0 %v884
      %896 = vmatpush.bf16.msra.mxu0 %v883
      %897 = vmatpush.bf16.msra.mxu0 %v882
      %898 = vmatpush.bf16.msra.mxu0 %v881
      %899 = vmatpush.bf16.msra.mxu0 %v880
      %900 = vmatpush.bf16.msra.mxu0 %v879
      %901 = vmatpush.bf16.msra.mxu0 %v878
      %902 = vmatmul.bf16.gmra.mxu0 %v825
      %v903 = vpop.f32.mrf.mxu0
      %v904 = vadd.f32 %v844, %v903
      %v905 = vpop.f32.mrf.mxu0
      %906 = vdwg.mxu0
      %v907 = vlaneseq
      %v908 = vand.u32 %v907, 127
      %vm909 = vcmp.lt.s32.totalorder %v908, 8
      %v910 = vsel %vm909, %v904, -1e+30
      %911 = vmax.xlane.f32.xlu0 %v910
      %v912 = vpop.xlane.xlu0 %911
      %v913 = vsub.f32 %v910, %v912
      %v914 = vmul.f32 %v913, 1.442695
      %v915 = vpow.pop %v914
      %916 = vadd.xlane.f32.xlu0 %v915
      %v917 = vpop.xlane.xlu0 %916
      %v918 = vrcp.pop %v917
      %v919 = vmul.f32 %v915, %v918
      %920 = vst [vmem:[%s408] sm:$0xff] %v919
      %v921 = vld [vmem:[%s8] sm:$0xf]
      %v922 = vld [vmem:[%s8 + $0x4] sm:$0xf]
      %v923 = vld [vmem:[%s8 + $0x8] sm:$0xf]
      %v924 = vld [vmem:[%s8 + $0xc] sm:$0xf]
      %v925 = vld [vmem:[%s8 + $0x10] sm:$0xf]
      %v926 = vld [vmem:[%s8 + $0x14] sm:$0xf]
      %v927 = vld [vmem:[%s8 + $0x18] sm:$0xf]
      %v928 = vld [vmem:[%s8 + $0x1c] sm:$0xf]
      %v929 = vld [vmem:[%s8 + $0x20] sm:$0xf]
      %v930 = vld [vmem:[%s8 + $0x24] sm:$0xf]
      %v931 = vld [vmem:[%s8 + $0x28] sm:$0xf]
      %v932 = vld [vmem:[%s8 + $0x2c] sm:$0xf]
      %v933 = vld [vmem:[%s8 + $0x30] sm:$0xf]
      %v934 = vld [vmem:[%s8 + $0x34] sm:$0xf]
      %v935 = vld [vmem:[%s8 + $0x38] sm:$0xf]
      %v936 = vld [vmem:[%s8 + $0x3c] sm:$0xf]
      %v937 = vld [vmem:[%s9] sm:$0x1]
      %v939 = vperm.slane %v937, 0
      %v957 = vunpack.c.l.b16 %v921
      %v958 = vunpack.c.l.b16 %v922
      %v959 = vunpack.c.l.b16 %v923
      %v960 = vunpack.c.l.b16 %v924
      %v961 = vunpack.c.l.b16 %v925
      %v962 = vunpack.c.l.b16 %v926
      %v963 = vunpack.c.l.b16 %v927
      %v964 = vunpack.c.l.b16 %v928
      %v965 = vunpack.c.l.b16 %v929
      %v966 = vunpack.c.l.b16 %v930
      %v967 = vunpack.c.l.b16 %v931
      %v968 = vunpack.c.l.b16 %v932
      %v969 = vunpack.c.l.b16 %v933
      %v970 = vunpack.c.l.b16 %v934
      %v971 = vunpack.c.l.b16 %v935
      %v972 = vunpack.c.l.b16 %v936
      %v973 = vpack.c.b16 %v958, %v957
      %v974 = vpack.c.b16 %v960, %v959
      %v975 = vpack.c.b16 %v962, %v961
      %v976 = vpack.c.b16 %v964, %v963
      %v977 = vpack.c.b16 %v966, %v965
      %v978 = vpack.c.b16 %v968, %v967
      %v979 = vpack.c.b16 %v970, %v969
      %v980 = vpack.c.b16 %v972, %v971
      %989 = vmatpush.bf16.msra.mxu0 %v980
      %990 = vmatpush.bf16.msra.mxu0 %v979
      %991 = vmatpush.bf16.msra.mxu0 %v978
      %992 = vmatpush.bf16.msra.mxu0 %v977
      %993 = vmatpush.bf16.msra.mxu0 %v976
      %994 = vmatpush.bf16.msra.mxu0 %v975
      %995 = vmatpush.bf16.msra.mxu0 %v974
      %996 = vmatpush.bf16.msra.mxu0 %v973
      %997 = vmatmul.bf16.gmra.mxu0 %v825
      %v998 = vpop.f32.mrf.mxu0
      %v999 = vadd.f32 %v939, %v998
      %v1000 = vpop.f32.mrf.mxu0
      %1001 = vdwg.mxu0
      %v1002 = vld [vmem:[%s404] sm:$0xff]
      %1004 = vrot.lane.b32.xlu0 %v1002, 2
      %v1005 = vpop.permute.xlu0 %1004
      %v1007 = vsub.f32 %v1002, %v1005
      %v1008 = vmul.f32 %v1007, 0.5
      %1010 = vrot.lane.b32.xlu0 %v1008, 126
      %v1011 = vpop.permute.xlu0 %1010
      %v1013 = vadd.f32 %v1002, %v1011
      %v1014 = vmul.f32 %v999, 0.1
      %v1015 = vmul.f32 %v999, 0.2
      %v1016 = vmin.f32 %v1015, 4.1351666
      %1018 = vset.pattern.permute.xlu0 2
      %1019 = vperm.xlu0 %1018, %v1007
      %v1020 = vpop.permute.xlu0 %1019
      %v1022 = vmul.f32 %v1014, %v1020
      %1024 = vset.pattern.permute.xlu0 0
      %1025 = vperm.xlu0 %1024, %v1013
      %v1026 = vpop.permute.xlu0 %1025
      %v1028 = vadd.f32 %v1022, %v1026
      %1029 = vset.pattern.permute.xlu0 3
      %1030 = vperm.xlu0 %1029, %v1007
      %v1031 = vpop.permute.xlu0 %1030
      %v1033 = vmul.f32 %v1014, %v1031
      %1034 = vset.pattern.permute.xlu0 1
      %1035 = vperm.xlu0 %1034, %v1013
      %v1036 = vpop.permute.xlu0 %1035
      %v1038 = vadd.f32 %v1033, %v1036
      %v1039 = vmul.f32 %v1016, 1.442695
      %v1040 = vpow.pop %v1039
      %v1041 = vmul.f32 %v1040, %v1020
      %v1042 = vmul.f32 %v1040, %v1031
      %v1043 = vmul.f32 %v1041, 0.5
      %1045 = vrot.lane.b32.xlu0 %v1043, 64
      %v1046 = vpop.permute.xlu0 %1045
      %v1048 = vsub.f32 %v1028, %v1046
      %v1049 = vmax.f32 %v1048, 0.0
      %1050 = vset.pattern.permute.xlu0 4
      %1051 = vperm.xlu0 %1050, %v1002
      %v1052 = vpop.permute.xlu0 %1051
      %v1054 = vmin.f32 %v1052, %v1049
      %vm1055 = vcmask 261120
      %1056 = vst.msk [vmem:[%s412] sm:$0xff] %vm1055, %v1054
      %v1057 = vmul.f32 %v1042, 0.5
      %1059 = vrot.lane.b32.xlu0 %v1057, 64
      %v1060 = vpop.permute.xlu0 %1059
      %v1062 = vsub.f32 %v1038, %v1060
      %v1063 = vmax.f32 %v1062, 0.0
      %1064 = vset.pattern.permute.xlu0 5
      %1065 = vperm.xlu0 %1064, %v1002
      %v1066 = vpop.permute.xlu0 %1065
      %v1068 = vmin.f32 %v1066, %v1063
      %vm1069 = vcmask 523520
      %1070 = vst.msk [vmem:[%s412] sm:$0xff] %vm1069, %v1068
      %v1071 = vadd.f32 %v1028, %v1046
      %v1072 = vmax.f32 %v1071, 0.0
      %v1073 = vmin.f32 %v1052, %v1072
      %1075 = vrot.lane.b32.xlu0 %v1073, 64
      %v1076 = vpop.permute.xlu0 %1075
      %vm1078 = vcmask 785920
      %1079 = vst.msk [vmem:[%s412] sm:$0xff] %vm1078, %v1076
      %v1080 = vadd.f32 %v1038, %v1060
      %v1081 = vmax.f32 %v1080, 0.0
      %v1082 = vmin.f32 %v1066, %v1081
      %1084 = vrot.lane.b32.xlu0 %v1082, 64
      %v1085 = vpop.permute.xlu0 %1084
      %vm1087 = vcmask 1048320
      %1088 = vst.msk [vmem:[%s412] sm:$0xff] %vm1087, %v1085
      %p1089 = scmp.lt.s32.totalorder %s23, 1
      %s1090 = scalar_select %p1089, %s23, 1
      %s1091 = smul.addr %s1090, 8
      %s1092 = scalar_lea.vmem %s10, %s1091
      %p1093 = scmp.lt.s32.totalorder %s23, 1
      %s1094 = scalar_select %p1093, %s23, 1
      %s1095 = smul.addr %s1094, 8
      %s1096 = scalar_lea.vmem %s11, %s1095
      // Predicated region
      $region61: #{_forward_impl.5} parent=59 // pred_check
        %p1097 = pneg %p261
      $region62: #{_forward_impl.5} parent=59 // pred_check_branch
        %1099 = sbr.rel (%p1097) target = $region64
      $region63: #{_forward_impl.5} parent=59 // pred_region
        _
      $region64: #{_forward_impl.5} parent=59 // pred_fallthru
        _
      // Predicated region
      $region65: #{_forward_impl.5} parent=59 // pred_check
        %p1100 = pneg %p287
      $region66: #{_forward_impl.5} parent=59 // pred_check_branch
        %1102 = sbr.rel (%p1100) target = $region68
      $region67: #{_forward_impl.5} parent=59 // pred_region
        _
      $region68: #{_forward_impl.5} parent=59 // pred_fallthru
        _
    $region60: #{_forward_impl.5} parent=5 // pred_fallthru
      _
    %p1103 = scmp.le.s32.totalorder 2, %s18
    // Predicated region
    $region69: #{_forward_impl.5} parent=5 // pred_check
      %p1104 = pneg %p1103
    $region70: #{_forward_impl.5} parent=5 // pred_check_branch
      %1106 = sbr.rel (%p1104) target = $region72
    $region71: #{_forward_impl.5} parent=5 // pred_region
      %s1107 = ssub.s32 %s18, 2
      // Predicated region
      $region73: #{_forward_impl.5} parent=71 // pred_check
        %p1108 = pneg %p267
      $region74: #{_forward_impl.5} parent=71 // pred_check_branch
        %1110 = sbr.rel (%p1108) target = $region76
      $region75: #{_forward_impl.5} parent=71 // pred_region
        %p1111 = scmp.lt.s32.totalorder %s24, 1
        %s1112 = scalar_select %p1111, %s24, 1
        %s1113 = smul.addr %s1112, 8
        %s1114 = scalar_lea.vmem %s10, %s1113
      $region76: #{_forward_impl.5} parent=71 // pred_fallthru
        _
      // Predicated region
      $region77: #{_forward_impl.5} parent=71 // pred_check
        %p1115 = pneg %p293
      $region78: #{_forward_impl.5} parent=71 // pred_check_branch
        %1117 = sbr.rel (%p1115) target = $region80
      $region79: #{_forward_impl.5} parent=71 // pred_region
        %p1118 = scmp.lt.s32.totalorder %s24, 1
        %s1119 = scalar_select %p1118, %s24, 1
        %s1120 = smul.addr %s1119, 8
        %s1121 = scalar_lea.vmem %s11, %s1120
      $region80: #{_forward_impl.5} parent=71 // pred_fallthru
        _
    $region72: #{_forward_impl.5} parent=5 // pred_fallthru
      _
  $region6: #{_forward_impl.5} parent=0 // loop_footer
    %s22 = sadd.s32 1, %s18
  $region7: #{_forward_impl.5} parent=0 // loop_footer_branch
    %17 = sbr.rel target = $region3
  $region8: #{_forward_impl.5} parent=0 // loop_exit
    _

// kernel: _forward_impl.6
$region0: #{_forward_impl.6}
  #allocation0 [shape = 'u32[]', space=smem, size = 0x4, offset = 0x4, fixed_abs, tag = 'smem constant byte address 0x4 - core index']
  #allocation1 [shape = 'u32[72,128]{1,0:T(1,128)}', space=vmem, size = 0x9000, scoped, tag = 'internal scratch']
  #allocation2 [shape = 's32[1]{0}', space=sflag, size = 0x4, scoped, tag = 'scoped memory for _forward_impl.6']
  #allocation3 [shape = 'u8[512]{0}', space=smem, size = 0x200, scoped, tag = 'prefetched SMEM operand 0']
  %s0 = inlined_call_operand.vmem [shape: s32[8], index: 0, kind: input, shape index: {}]
  %s1 = inlined_call_operand.vmem [shape: bf16[2,16,128], index: 1, kind: input, shape index: {}]
  %s2 = inlined_call_operand.vmem [shape: bf16[8,14,16], index: 2, kind: input, shape index: {}]
  %s3 = inlined_call_operand.vmem [shape: bf16[8,128,112], index: 3, kind: input, shape index: {}]
  %s4 = inlined_call_operand.vmem [shape: f32[8,16,128], index: 4, kind: output, shape index: {}]
  %s5 = sld [smem:[#allocation0]]
  $region45: #{_forward_impl.6} parent=0
    _
  %s7 = ssub.s32 1, %s5
  %s8 = scalar_select 0, %s7, %s5
  %s10 = sshll.u32 %s0, 4
  %s11 = int_to_ptr.vmem [resolvable:$true] %s10
  %13 = dma.vmem_to_smem %s11, 16, [#allocation3], [#allocation2]
  %15 = dma.done [#allocation2], 16
  %16 = sfence
  loop: start=0, step=1, limit=10
  $region2: #{_forward_impl.6} parent=0 // loop_pre_header
    _
  $region3: #{_forward_impl.6} parent=0 // loop_header
    %s18 = sphi 0, %s22
    %p19 = scmp.ge.s32.totalorder %s18, 10
    %s30 = sphi 0, %s32
    %s33 = sphi 0, %s30
    %s34 = sphi 0, %s33
    %s50 = sphi 0, %s34
    %s56 = sphi 0, %s58
    %s59 = sphi 0, %s56
    %s60 = sphi 0, %s59
    %s76 = sphi 0, %s60
    %s82 = sphi 0, %s84
    %s85 = sphi 0, %s82
    %s86 = sphi 0, %s85
    %s102 = sphi 0, %s86
    %s108 = sphi 0, %s110
    %s111 = sphi 0, %s108
    %s112 = sphi 0, %s111
    %s128 = sphi 0, %s112
  $region4: #{_forward_impl.6} parent=0 // loop_header_branch
    %21 = sbr.rel (%p19) target = $region8
  $region5: #{_forward_impl.6} parent=0 // loop_body
    %s23 = ssub.s32 %s18, 1
    %s24 = ssub.s32 %s18, 2
    %s25 = sadd.s32 %s18, 1
    %s26 = sld [smem:[#allocation3 + %s18]]
    %s27 = sld [smem:[#allocation3 + %s25]]
    %s28 = ssub.s32 %s26, %s27
    %p29 = scmp.eq.s32.totalorder %s28, 0
    %s31 = sadd.s32 %s30, 1
    %s32 = scalar_select %p29, %s30, %s31
    %p35 = pneg %p29
    %p36 = scmp.eq.s32.totalorder %s18, 7
    %p37 = por %p35, %p36
    %p38 = scmp.ne.s32.totalorder %s30, %s33
    %p39 = scmp.eq.s32.totalorder %s18, 0
    %p40 = por %p38, %p39
    %p41 = scmp.ne.s32.totalorder %s30, %s33
    %p42 = scmp.eq.s32.totalorder %s23, 7
    %p43 = por %p41, %p42
    %p44 = scmp.ne.s32.totalorder %s33, %s34
    %p45 = scmp.eq.s32.totalorder %s23, 0
    %p46 = por %p44, %p45
    %p47 = scmp.ne.s32.totalorder %s33, %s34
    %p48 = scmp.eq.s32.totalorder %s24, 7
    %p49 = por %p47, %p48
    %p51 = scmp.ne.s32.totalorder %s34, %s50
    %p52 = scmp.eq.s32.totalorder %s24, 0
    %p53 = por %p51, %p52
    %s54 = ssub.s32 %s18, %s25
    %p55 = scmp.eq.s32.totalorder %s54, 0
    %s57 = sadd.s32 %s56, 1
    %s58 = scalar_select %p55, %s56, %s57
    %p61 = pneg %p55
    %p62 = scmp.eq.s32.totalorder %s18, 7
    %p63 = por %p61, %p62
    %p64 = scmp.ne.s32.totalorder %s56, %s59
    %p65 = scmp.eq.s32.totalorder %s18, 0
    %p66 = por %p64, %p65
    %p67 = scmp.ne.s32.totalorder %s56, %s59
    %p68 = scmp.eq.s32.totalorder %s23, 7
    %p69 = por %p67, %p68
    %p70 = scmp.ne.s32.totalorder %s59, %s60
    %p71 = scmp.eq.s32.totalorder %s23, 0
    %p72 = por %p70, %p71
    %p73 = scmp.ne.s32.totalorder %s59, %s60
    %p74 = scmp.eq.s32.totalorder %s24, 7
    %p75 = por %p73, %p74
    %p77 = scmp.ne.s32.totalorder %s60, %s76
    %p78 = scmp.eq.s32.totalorder %s24, 0
    %p79 = por %p77, %p78
    %s80 = ssub.s32 %s18, %s25
    %p81 = scmp.eq.s32.totalorder %s80, 0
    %s83 = sadd.s32 %s82, 1
    %s84 = scalar_select %p81, %s82, %s83
    %p87 = pneg %p81
    %p88 = scmp.eq.s32.totalorder %s18, 7
    %p89 = por %p87, %p88
    %p90 = scmp.ne.s32.totalorder %s82, %s85
    %p91 = scmp.eq.s32.totalorder %s18, 0
    %p92 = por %p90, %p91
    %p93 = scmp.ne.s32.totalorder %s82, %s85
    %p94 = scmp.eq.s32.totalorder %s23, 7
    %p95 = por %p93, %p94
    %p96 = scmp.ne.s32.totalorder %s85, %s86
    %p97 = scmp.eq.s32.totalorder %s23, 0
    %p98 = por %p96, %p97
    %p99 = scmp.ne.s32.totalorder %s85, %s86
    %p100 = scmp.eq.s32.totalorder %s24, 7
    %p101 = por %p99, %p100
    %p103 = scmp.ne.s32.totalorder %s86, %s102
    %p104 = scmp.eq.s32.totalorder %s24, 0
    %p105 = por %p103, %p104
    %s106 = ssub.s32 %s18, %s25
    %p107 = scmp.eq.s32.totalorder %s106, 0
    %s109 = sadd.s32 %s108, 1
    %s110 = scalar_select %p107, %s108, %s109
    %p113 = pneg %p107
    %p114 = scmp.eq.s32.totalorder %s18, 7
    %p115 = por %p113, %p114
    %p116 = scmp.ne.s32.totalorder %s108, %s111
    %p117 = scmp.eq.s32.totalorder %s18, 0
    %p118 = por %p116, %p117
    %p119 = scmp.ne.s32.totalorder %s108, %s111
    %p120 = scmp.eq.s32.totalorder %s23, 7
    %p121 = por %p119, %p120
    %p122 = scmp.ne.s32.totalorder %s111, %s112
    %p123 = scmp.eq.s32.totalorder %s23, 0
    %p124 = por %p122, %p123
    %p125 = scmp.ne.s32.totalorder %s111, %s112
    %p126 = scmp.eq.s32.totalorder %s24, 7
    %p127 = por %p125, %p126
    %p129 = scmp.ne.s32.totalorder %s112, %s128
    %p130 = scmp.eq.s32.totalorder %s24, 0
    %p131 = por %p129, %p130
    %p132 = scmp.le.s32.totalorder 1, %s18
    %p133 = scmp.lt.s32.totalorder %s18, 9
    %p134 = pnand %p132, %p133
    %p135 = pneg %p134
    // Predicated region
    $region9: #{_forward_impl.6} parent=5 // pred_check
      _
    $region10: #{_forward_impl.6} parent=5 // pred_check_branch
      %137 = sbr.rel (%p134) target = $region12
    $region11: #{_forward_impl.6} parent=5 // pred_region
      %s138 = ssub.s32 %s18, 1
    $region12: #{_forward_impl.6} parent=5 // pred_fallthru
      _
    %p139 = scmp.lt.s32.totalorder %s18, 8
    // Predicated region
    $region13: #{_forward_impl.6} parent=5 // pred_check
      %p140 = pneg %p139
    $region14: #{_forward_impl.6} parent=5 // pred_check_branch
      %142 = sbr.rel (%p140) target = $region16
    $region15: #{_forward_impl.6} parent=5 // pred_region
      // Predicated region
      $region17: #{_forward_impl.6} parent=15 // pred_check
        %p143 = pneg %p40
      $region18: #{_forward_impl.6} parent=15 // pred_check_branch
        %145 = sbr.rel (%p143) target = $region20
      $region19: #{_forward_impl.6} parent=15 // pred_region
        %s146 = sld [smem:[#allocation3 + %s18]]
        %p147 = scmp.lt.s32.totalorder %s146, 1
        %s148 = scalar_select %p147, %s146, 1
        %s149 = smul.addr %s148, 2
        %s150 = smul.addr %s149, 4
        %s151 = scalar_lea.vmem %s1, %s150
        %s152 = sld [smem:[#allocation3 + %s18]]
      $region20: #{_forward_impl.6} parent=15 // pred_fallthru
        _
      // Predicated region
      $region21: #{_forward_impl.6} parent=15 // pred_check
        %p153 = pneg %p66
      $region22: #{_forward_impl.6} parent=15 // pred_check_branch
        %155 = sbr.rel (%p153) target = $region24
      $region23: #{_forward_impl.6} parent=15 // pred_region
        %p156 = scmp.lt.s32.totalorder %s18, 7
        %s157 = scalar_select %p156, %s18, 7
        %s158 = smul.addr %s157, 2
        %s159 = smul.addr %s158, 4
        %s160 = scalar_lea.vmem %s2, %s159
      $region24: #{_forward_impl.6} parent=15 // pred_fallthru
        _
      // Predicated region
      $region25: #{_forward_impl.6} parent=15 // pred_check
        %p161 = pneg %p92
      $region26: #{_forward_impl.6} parent=15 // pred_check_branch
        %163 = sbr.rel (%p161) target = $region28
      $region27: #{_forward_impl.6} parent=15 // pred_region
        %p164 = scmp.lt.s32.totalorder %s18, 7
        %s165 = scalar_select %p164, %s18, 7
        %s166 = smul.addr %s165, 16
        %s167 = smul.addr %s166, 4
        %s168 = scalar_lea.vmem %s3, %s167
      $region28: #{_forward_impl.6} parent=15 // pred_fallthru
        _
    $region16: #{_forward_impl.6} parent=5 // pred_fallthru
      _
    %p169 = scmp.le.s32.totalorder 1, %s18
    %p170 = scmp.lt.s32.totalorder %s18, 9
    %p171 = pnand %p169, %p170
    %p172 = pneg %p171
    // Predicated region
    $region29: #{_forward_impl.6} parent=5 // pred_check
      _
    $region30: #{_forward_impl.6} parent=5 // pred_check_branch
      %174 = sbr.rel (%p171) target = $region32
    $region31: #{_forward_impl.6} parent=5 // pred_region
      %s175 = ssub.s32 %s18, 1
      %s176 = sld [smem:[#allocation3 + %s23]]
      %p177 = scmp.lt.s32.totalorder %s176, 1
      %s178 = scalar_select %p177, %s176, 1
      %s179 = smul.addr %s178, 2
      %s180 = smul.addr %s179, 4
      %s181 = scalar_lea.vmem %s1, %s180
      %p182 = pneg %p46
      %p183 = pneg %p43
      %p184 = scmp.lt.s32.totalorder %s23, 7
      %s185 = scalar_select %p184, %s23, 7
      %s186 = smul.addr %s185, 2
      %s187 = smul.addr %s186, 4
      %s188 = scalar_lea.vmem %s2, %s187
      %p189 = pneg %p72
      %p190 = pneg %p69
      %p191 = scmp.lt.s32.totalorder %s23, 7
      %s192 = scalar_select %p191, %s23, 7
      %s193 = smul.addr %s192, 16
      %s194 = smul.addr %s193, 4
      %s195 = scalar_lea.vmem %s3, %s194
      %p196 = pneg %p98
      %p197 = pneg %p95
      %p198 = pneg %p124
      %p199 = pneg %p121
      %p200 = scmp.lt.s32.totalorder %s23, 7
      %s201 = scalar_select %p200, %s23, 7
      %s202 = smul.addr %s201, 2
      %s203 = smul.addr %s202, 8
      %s204 = scalar_lea.vmem %s4, %s203
      %s205 = sld [smem:[#allocation3 + %s23]]
      %p206 = scmp.lt.s32.totalorder %s205, 1
      %s207 = scalar_select %p206, %s205, 1
      %s208 = smul.addr %s207, 2
      %s209 = smul.addr %s208, 4
      %s210 = scalar_lea.vmem %s1, %s209
      %s211 = sld [smem:[#allocation3 + %s23]]
      %p212 = scmp.lt.s32.totalorder %s23, 7
      %s213 = scalar_select %p212, %s23, 7
      %s214 = smul.addr %s213, 2
      %s215 = smul.addr %s214, 4
      %s216 = scalar_lea.vmem %s2, %s215
      %p217 = scmp.lt.s32.totalorder %s23, 7
      %s218 = scalar_select %p217, %s23, 7
      %s219 = smul.addr %s218, 16
      %s220 = smul.addr %s219, 4
      %s221 = scalar_lea.vmem %s3, %s220
      %p222 = scmp.lt.s32.totalorder %s23, 7
      %s223 = scalar_select %p222, %s23, 7
      %s224 = smul.addr %s223, 2
      %s225 = smul.addr %s224, 8
      %s226 = scalar_lea.vmem %s4, %s225
      %v228 = vld [vmem:[%s216] sm:$0xf]
      %v229 = vld [vmem:[%s216 + $0x4] sm:$0x7]
      %v230 = vld [vmem:[%s210] sm:$0xf]
      %v231 = vld [vmem:[%s210 + $0x4] sm:$0xf]
      %v234 = vunpack.c.l.b16 %v228
      %v235 = vunpack.c.l.b16 %v229
      %v236 = vpack.c.b16 %v235, %v234
      %v239 = vunpack.c.l.b16 %v230
      %v240 = vunpack.c.l.b16 %v231
      %v241 = vpack.c.b16 %v240, %v239
      %vm243 = vcmask 130048
      %v245 = vsel %vm243, %v236, 0
      %247 = vmatpush.bf16.msra.mxu0 0
      %248 = vmatpush.bf16.msra.mxu0 0
      %249 = vmatpush.bf16.msra.mxu0 0
      %250 = vmatpush.bf16.msra.mxu0 0
      %251 = vmatpush.bf16.msra.mxu0 0
      %252 = vmatpush.bf16.msra.mxu0 0
      %253 = vmatpush.bf16.msra.mxu0 0
      %254 = vmatpush.bf16.msra.mxu0 %v241
      %255 = vmatmul.bf16.gmra.mxu0 %v245
      %v256 = vpop.f32.mrf.mxu0
      %v257 = vadd.f32 0.0, %v256
      %v258 = vpop.f32.mrf.mxu0
      %v259 = vadd.f32 0.0, %v258
      %260 = vdwg.mxu0
      %v261 = vpack.c.bf16 %v259, %v257
      %v262 = vld [vmem:[%s221] sm:$0xf]
      %v263 = vld [vmem:[%s221 + $0x4] sm:$0xf]
      %v264 = vld [vmem:[%s221 + $0x8] sm:$0xf]
      %v265 = vld [vmem:[%s221 + $0xc] sm:$0xf]
      %v266 = vld [vmem:[%s221 + $0x10] sm:$0xf]
      %v267 = vld [vmem:[%s221 + $0x14] sm:$0xf]
      %v268 = vld [vmem:[%s221 + $0x18] sm:$0xf]
      %v269 = vld [vmem:[%s221 + $0x1c] sm:$0xf]
      %v270 = vld [vmem:[%s221 + $0x20] sm:$0xf]
      %v271 = vld [vmem:[%s221 + $0x24] sm:$0xf]
      %v272 = vld [vmem:[%s221 + $0x28] sm:$0xf]
      %v273 = vld [vmem:[%s221 + $0x2c] sm:$0xf]
      %v274 = vld [vmem:[%s221 + $0x30] sm:$0xf]
      %v275 = vld [vmem:[%s221 + $0x34] sm:$0xf]
      %v276 = vld [vmem:[%s221 + $0x38] sm:$0xf]
      %v277 = vld [vmem:[%s221 + $0x3c] sm:$0xf]
      %v294 = vunpack.c.l.b16 %v262
      %v295 = vunpack.c.l.b16 %v263
      %v296 = vunpack.c.l.b16 %v264
      %v297 = vunpack.c.l.b16 %v265
      %v298 = vunpack.c.l.b16 %v266
      %v299 = vunpack.c.l.b16 %v267
      %v300 = vunpack.c.l.b16 %v268
      %v301 = vunpack.c.l.b16 %v269
      %v302 = vunpack.c.l.b16 %v270
      %v303 = vunpack.c.l.b16 %v271
      %v304 = vunpack.c.l.b16 %v272
      %v305 = vunpack.c.l.b16 %v273
      %v306 = vunpack.c.l.b16 %v274
      %v307 = vunpack.c.l.b16 %v275
      %v308 = vunpack.c.l.b16 %v276
      %v309 = vunpack.c.l.b16 %v277
      %v310 = vpack.c.b16 %v295, %v294
      %v311 = vpack.c.b16 %v297, %v296
      %v312 = vpack.c.b16 %v299, %v298
      %v313 = vpack.c.b16 %v301, %v300
      %v314 = vpack.c.b16 %v303, %v302
      %v315 = vpack.c.b16 %v305, %v304
      %v316 = vpack.c.b16 %v307, %v306
      %v317 = vpack.c.b16 %v309, %v308
      %326 = vmatpush.bf16.msra.mxu0 %v317
      %327 = vmatpush.bf16.msra.mxu0 %v316
      %328 = vmatpush.bf16.msra.mxu0 %v315
      %329 = vmatpush.bf16.msra.mxu0 %v314
      %330 = vmatpush.bf16.msra.mxu0 %v313
      %331 = vmatpush.bf16.msra.mxu0 %v312
      %332 = vmatpush.bf16.msra.mxu0 %v311
      %333 = vmatpush.bf16.msra.mxu0 %v310
      %334 = vmatmul.bf16.gmra.mxu0 %v261
      %v335 = vpop.f32.mrf.mxu0
      %v336 = vadd.f32 0.0, %v335
      %v337 = vpop.f32.mrf.mxu0
      %v338 = vadd.f32 0.0, %v337
      %339 = vdwg.mxu0
      %340 = vst [vmem:[%s226] sm:$0xff] 0.0
      %341 = vst [vmem:[%s226 + $0x8] sm:$0xff] 0.0
      %344 = vrot.lane.b32.xlu0 %v336, 8
      %v345 = vpop.permute.xlu0 %344
      %346 = vrot.lane.b32.xlu0 %v338, 8
      %v347 = vpop.permute.xlu0 %346
      %vm350 = vcmask 982080
      %351 = vst.msk [vmem:[%s226 + $0x1] sm:$0xff] %vm350, %v345
      %vm352 = vcmask 980032
      %353 = vst.msk [vmem:[%s226 + $0x9] sm:$0x3f] %vm352, %v347
      %p354 = scmp.lt.s32.totalorder %s23, 7
      %s355 = scalar_select %p354, %s23, 7
      %s356 = smul.addr %s355, 2
      %s357 = smul.addr %s356, 8
      %s358 = scalar_lea.vmem %s4, %s357
      // Predicated region
      $region33: #{_forward_impl.6} parent=31 // pred_check
        %p359 = pneg %p121
      $region34: #{_forward_impl.6} parent=31 // pred_check_branch
        %361 = sbr.rel (%p359) target = $region36
      $region35: #{_forward_impl.6} parent=31 // pred_region
        _
      $region36: #{_forward_impl.6} parent=31 // pred_fallthru
        _
    $region32: #{_forward_impl.6} parent=5 // pred_fallthru
      _
    %p362 = scmp.le.s32.totalorder 2, %s18
    // Predicated region
    $region37: #{_forward_impl.6} parent=5 // pred_check
      %p363 = pneg %p362
    $region38: #{_forward_impl.6} parent=5 // pred_check_branch
      %365 = sbr.rel (%p363) target = $region40
    $region39: #{_forward_impl.6} parent=5 // pred_region
      %s366 = ssub.s32 %s18, 2
      // Predicated region
      $region41: #{_forward_impl.6} parent=39 // pred_check
        %p367 = pneg %p127
      $region42: #{_forward_impl.6} parent=39 // pred_check_branch
        %369 = sbr.rel (%p367) target = $region44
      $region43: #{_forward_impl.6} parent=39 // pred_region
        %p370 = scmp.lt.s32.totalorder %s24, 7
        %s371 = scalar_select %p370, %s24, 7
        %s372 = smul.addr %s371, 2
        %s373 = smul.addr %s372, 8
        %s374 = scalar_lea.vmem %s4, %s373
      $region44: #{_forward_impl.6} parent=39 // pred_fallthru
        _
    $region40: #{_forward_impl.6} parent=5 // pred_fallthru
      _
  $region6: #{_forward_impl.6} parent=0 // loop_footer
    %s22 = sadd.s32 1, %s18
  $region7: #{_forward_impl.6} parent=0 // loop_footer_branch
    %17 = sbr.rel target = $region3
  $region8: #{_forward_impl.6} parent=0 // loop_exit
    _

// kernel: _forward_impl.7
$region0: #{_forward_impl.7}
  #allocation0 [shape = 'u32[]', space=smem, size = 0x4, offset = 0x4, fixed_abs, tag = 'smem constant byte address 0x4 - core index']
  #allocation1 [shape = 'u32[72,128]{1,0:T(1,128)}', space=vmem, size = 0x9000, scoped, tag = 'internal scratch']
  #allocation2 [shape = 'f32[16,256]{1,0:T(8,128)}', space=vmem, size = 0x4000, scoped, tag = 'scratch operand']
  #allocation3 [shape = 'f32[16,256]{1,0:T(8,128)}', space=vmem, size = 0x4000, scoped, tag = 'scratch operand']
  %s0 = inlined_call_operand.vmem [shape: f32[8,16,128], index: 0, kind: input, shape index: {}]
  %s1 = inlined_call_operand.vmem [shape: bf16[3,128,224], index: 1, kind: input, shape index: {}]
  %s2 = inlined_call_operand.vmem [shape: f32[1,224], index: 2, kind: input, shape index: {}]
  %s3 = inlined_call_operand.vmem [shape: bf16[3,256,224], index: 3, kind: input, shape index: {}]
  %s4 = inlined_call_operand.vmem [shape: f32[1,224], index: 4, kind: input, shape index: {}]
  %s5 = inlined_call_operand.vmem [shape: bf16[3,256,224], index: 5, kind: input, shape index: {}]
  %s6 = inlined_call_operand.vmem [shape: f32[1,224], index: 6, kind: input, shape index: {}]
  %s7 = inlined_call_operand.vmem [shape: bf16[3,256,224], index: 7, kind: input, shape index: {}]
  %s8 = inlined_call_operand.vmem [shape: f32[1,224], index: 8, kind: input, shape index: {}]
  %s9 = inlined_call_operand.vmem [shape: bf16[2,224,448], index: 9, kind: input, shape index: {}]
  %s10 = inlined_call_operand.vmem [shape: f32[1,448], index: 10, kind: input, shape index: {}]
  %s11 = inlined_call_operand.vmem [shape: bf16[448,224], index: 11, kind: input, shape index: {}]
  %s12 = inlined_call_operand.vmem [shape: f32[1,224], index: 12, kind: input, shape index: {}]
  %s13 = inlined_call_operand.vmem [shape: f32[8,2,14,224], index: 13, kind: output, shape index: {}]
  %s14 = sld [smem:[#allocation0]]
  $region85: #{_forward_impl.7} parent=0
    _
  %s16 = ssub.s32 1, %s14
  %s17 = scalar_select 0, %s16, %s14
  loop: start=0, step=1, limit=10
  $region2: #{_forward_impl.7} parent=0 // loop_pre_header
    _
  $region3: #{_forward_impl.7} parent=0 // loop_header
    %s19 = sphi 0, %s23
    %p20 = scmp.ge.s32.totalorder %s19, 10
    %s29 = sphi 0, %s31
    %s32 = sphi 0, %s29
    %s33 = sphi 0, %s32
    %s49 = sphi 0, %s33
    %s53 = sphi 0, %s53
    %s55 = sphi 0, %s53
    %s56 = sphi 0, %s55
    %s70 = sphi 0, %s56
    %s74 = sphi 0, %s74
    %s76 = sphi 0, %s74
    %s77 = sphi 0, %s76
    %s91 = sphi 0, %s77
    %s95 = sphi 0, %s95
    %s97 = sphi 0, %s95
    %s98 = sphi 0, %s97
    %s112 = sphi 0, %s98
    %s116 = sphi 0, %s116
    %s118 = sphi 0, %s116
    %s119 = sphi 0, %s118
    %s133 = sphi 0, %s119
    %s137 = sphi 0, %s137
    %s139 = sphi 0, %s137
    %s140 = sphi 0, %s139
    %s154 = sphi 0, %s140
    %s158 = sphi 0, %s158
    %s160 = sphi 0, %s158
    %s161 = sphi 0, %s160
    %s175 = sphi 0, %s161
    %s179 = sphi 0, %s179
    %s181 = sphi 0, %s179
    %s182 = sphi 0, %s181
    %s196 = sphi 0, %s182
    %s200 = sphi 0, %s200
    %s202 = sphi 0, %s200
    %s203 = sphi 0, %s202
    %s217 = sphi 0, %s203
    %s221 = sphi 0, %s221
    %s223 = sphi 0, %s221
    %s224 = sphi 0, %s223
    %s238 = sphi 0, %s224
    %s242 = sphi 0, %s242
    %s244 = sphi 0, %s242
    %s245 = sphi 0, %s244
    %s259 = sphi 0, %s245
    %s263 = sphi 0, %s263
    %s265 = sphi 0, %s263
    %s266 = sphi 0, %s265
    %s280 = sphi 0, %s266
    %s284 = sphi 0, %s284
    %s286 = sphi 0, %s284
    %s287 = sphi 0, %s286
    %s301 = sphi 0, %s287
    %s307 = sphi 0, %s309
    %s310 = sphi 0, %s307
    %s311 = sphi 0, %s310
    %s327 = sphi 0, %s311
  $region4: #{_forward_impl.7} parent=0 // loop_header_branch
    %22 = sbr.rel (%p20) target = $region8
  $region5: #{_forward_impl.7} parent=0 // loop_body
    %s24 = ssub.s32 %s19, 1
    %s25 = ssub.s32 %s19, 2
    %s26 = sadd.s32 %s19, 1
    %s27 = ssub.s32 %s19, %s26
    %p28 = scmp.eq.s32.totalorder %s27, 0
    %s30 = sadd.s32 %s29, 1
    %s31 = scalar_select %p28, %s29, %s30
    %p34 = pneg %p28
    %p35 = scmp.eq.s32.totalorder %s19, 7
    %p36 = por %p34, %p35
    %p37 = scmp.ne.s32.totalorder %s29, %s32
    %p38 = scmp.eq.s32.totalorder %s19, 0
    %p39 = por %p37, %p38
    %p40 = scmp.ne.s32.totalorder %s29, %s32
    %p41 = scmp.eq.s32.totalorder %s24, 7
    %p42 = por %p40, %p41
    %p43 = scmp.ne.s32.totalorder %s32, %s33
    %p44 = scmp.eq.s32.totalorder %s24, 0
    %p45 = por %p43, %p44
    %p46 = scmp.ne.s32.totalorder %s32, %s33
    %p47 = scmp.eq.s32.totalorder %s25, 7
    %p48 = por %p46, %p47
    %p50 = scmp.ne.s32.totalorder %s33, %s49
    %p51 = scmp.eq.s32.totalorder %s25, 0
    %p52 = por %p50, %p51
    %s54 = sadd.s32 %s53, 1
    %p57 = scmp.eq.s32.totalorder %s19, 7
    %p58 = scmp.ne.s32.totalorder %s53, %s55
    %p59 = scmp.eq.s32.totalorder %s19, 0
    %p60 = por %p58, %p59
    %p61 = scmp.ne.s32.totalorder %s53, %s55
    %p62 = scmp.eq.s32.totalorder %s24, 7
    %p63 = por %p61, %p62
    %p64 = scmp.ne.s32.totalorder %s55, %s56
    %p65 = scmp.eq.s32.totalorder %s24, 0
    %p66 = por %p64, %p65
    %p67 = scmp.ne.s32.totalorder %s55, %s56
    %p68 = scmp.eq.s32.totalorder %s25, 7
    %p69 = por %p67, %p68
    %p71 = scmp.ne.s32.totalorder %s56, %s70
    %p72 = scmp.eq.s32.totalorder %s25, 0
    %p73 = por %p71, %p72
    %s75 = sadd.s32 %s74, 1
    %p78 = scmp.eq.s32.totalorder %s19, 7
    %p79 = scmp.ne.s32.totalorder %s74, %s76
    %p80 = scmp.eq.s32.totalorder %s19, 0
    %p81 = por %p79, %p80
    %p82 = scmp.ne.s32.totalorder %s74, %s76
    %p83 = scmp.eq.s32.totalorder %s24, 7
    %p84 = por %p82, %p83
    %p85 = scmp.ne.s32.totalorder %s76, %s77
    %p86 = scmp.eq.s32.totalorder %s24, 0
    %p87 = por %p85, %p86
    %p88 = scmp.ne.s32.totalorder %s76, %s77
    %p89 = scmp.eq.s32.totalorder %s25, 7
    %p90 = por %p88, %p89
    %p92 = scmp.ne.s32.totalorder %s77, %s91
    %p93 = scmp.eq.s32.totalorder %s25, 0
    %p94 = por %p92, %p93
    %s96 = sadd.s32 %s95, 1
    %p99 = scmp.eq.s32.totalorder %s19, 7
    %p100 = scmp.ne.s32.totalorder %s95, %s97
    %p101 = scmp.eq.s32.totalorder %s19, 0
    %p102 = por %p100, %p101
    %p103 = scmp.ne.s32.totalorder %s95, %s97
    %p104 = scmp.eq.s32.totalorder %s24, 7
    %p105 = por %p103, %p104
    %p106 = scmp.ne.s32.totalorder %s97, %s98
    %p107 = scmp.eq.s32.totalorder %s24, 0
    %p108 = por %p106, %p107
    %p109 = scmp.ne.s32.totalorder %s97, %s98
    %p110 = scmp.eq.s32.totalorder %s25, 7
    %p111 = por %p109, %p110
    %p113 = scmp.ne.s32.totalorder %s98, %s112
    %p114 = scmp.eq.s32.totalorder %s25, 0
    %p115 = por %p113, %p114
    %s117 = sadd.s32 %s116, 1
    %p120 = scmp.eq.s32.totalorder %s19, 7
    %p121 = scmp.ne.s32.totalorder %s116, %s118
    %p122 = scmp.eq.s32.totalorder %s19, 0
    %p123 = por %p121, %p122
    %p124 = scmp.ne.s32.totalorder %s116, %s118
    %p125 = scmp.eq.s32.totalorder %s24, 7
    %p126 = por %p124, %p125
    %p127 = scmp.ne.s32.totalorder %s118, %s119
    %p128 = scmp.eq.s32.totalorder %s24, 0
    %p129 = por %p127, %p128
    %p130 = scmp.ne.s32.totalorder %s118, %s119
    %p131 = scmp.eq.s32.totalorder %s25, 7
    %p132 = por %p130, %p131
    %p134 = scmp.ne.s32.totalorder %s119, %s133
    %p135 = scmp.eq.s32.totalorder %s25, 0
    %p136 = por %p134, %p135
    %s138 = sadd.s32 %s137, 1
    %p141 = scmp.eq.s32.totalorder %s19, 7
    %p142 = scmp.ne.s32.totalorder %s137, %s139
    %p143 = scmp.eq.s32.totalorder %s19, 0
    %p144 = por %p142, %p143
    %p145 = scmp.ne.s32.totalorder %s137, %s139
    %p146 = scmp.eq.s32.totalorder %s24, 7
    %p147 = por %p145, %p146
    %p148 = scmp.ne.s32.totalorder %s139, %s140
    %p149 = scmp.eq.s32.totalorder %s24, 0
    %p150 = por %p148, %p149
    %p151 = scmp.ne.s32.totalorder %s139, %s140
    %p152 = scmp.eq.s32.totalorder %s25, 7
    %p153 = por %p151, %p152
    %p155 = scmp.ne.s32.totalorder %s140, %s154
    %p156 = scmp.eq.s32.totalorder %s25, 0
    %p157 = por %p155, %p156
    %s159 = sadd.s32 %s158, 1
    %p162 = scmp.eq.s32.totalorder %s19, 7
    %p163 = scmp.ne.s32.totalorder %s158, %s160
    %p164 = scmp.eq.s32.totalorder %s19, 0
    %p165 = por %p163, %p164
    %p166 = scmp.ne.s32.totalorder %s158, %s160
    %p167 = scmp.eq.s32.totalorder %s24, 7
    %p168 = por %p166, %p167
    %p169 = scmp.ne.s32.totalorder %s160, %s161
    %p170 = scmp.eq.s32.totalorder %s24, 0
    %p171 = por %p169, %p170
    %p172 = scmp.ne.s32.totalorder %s160, %s161
    %p173 = scmp.eq.s32.totalorder %s25, 7
    %p174 = por %p172, %p173
    %p176 = scmp.ne.s32.totalorder %s161, %s175
    %p177 = scmp.eq.s32.totalorder %s25, 0
    %p178 = por %p176, %p177
    %s180 = sadd.s32 %s179, 1
    %p183 = scmp.eq.s32.totalorder %s19, 7
    %p184 = scmp.ne.s32.totalorder %s179, %s181
    %p185 = scmp.eq.s32.totalorder %s19, 0
    %p186 = por %p184, %p185
    %p187 = scmp.ne.s32.totalorder %s179, %s181
    %p188 = scmp.eq.s32.totalorder %s24, 7
    %p189 = por %p187, %p188
    %p190 = scmp.ne.s32.totalorder %s181, %s182
    %p191 = scmp.eq.s32.totalorder %s24, 0
    %p192 = por %p190, %p191
    %p193 = scmp.ne.s32.totalorder %s181, %s182
    %p194 = scmp.eq.s32.totalorder %s25, 7
    %p195 = por %p193, %p194
    %p197 = scmp.ne.s32.totalorder %s182, %s196
    %p198 = scmp.eq.s32.totalorder %s25, 0
    %p199 = por %p197, %p198
    %s201 = sadd.s32 %s200, 1
    %p204 = scmp.eq.s32.totalorder %s19, 7
    %p205 = scmp.ne.s32.totalorder %s200, %s202
    %p206 = scmp.eq.s32.totalorder %s19, 0
    %p207 = por %p205, %p206
    %p208 = scmp.ne.s32.totalorder %s200, %s202
    %p209 = scmp.eq.s32.totalorder %s24, 7
    %p210 = por %p208, %p209
    %p211 = scmp.ne.s32.totalorder %s202, %s203
    %p212 = scmp.eq.s32.totalorder %s24, 0
    %p213 = por %p211, %p212
    %p214 = scmp.ne.s32.totalorder %s202, %s203
    %p215 = scmp.eq.s32.totalorder %s25, 7
    %p216 = por %p214, %p215
    %p218 = scmp.ne.s32.totalorder %s203, %s217
    %p219 = scmp.eq.s32.totalorder %s25, 0
    %p220 = por %p218, %p219
    %s222 = sadd.s32 %s221, 1
    %p225 = scmp.eq.s32.totalorder %s19, 7
    %p226 = scmp.ne.s32.totalorder %s221, %s223
    %p227 = scmp.eq.s32.totalorder %s19, 0
    %p228 = por %p226, %p227
    %p229 = scmp.ne.s32.totalorder %s221, %s223
    %p230 = scmp.eq.s32.totalorder %s24, 7
    %p231 = por %p229, %p230
    %p232 = scmp.ne.s32.totalorder %s223, %s224
    %p233 = scmp.eq.s32.totalorder %s24, 0
    %p234 = por %p232, %p233
    %p235 = scmp.ne.s32.totalorder %s223, %s224
    %p236 = scmp.eq.s32.totalorder %s25, 7
    %p237 = por %p235, %p236
    %p239 = scmp.ne.s32.totalorder %s224, %s238
    %p240 = scmp.eq.s32.totalorder %s25, 0
    %p241 = por %p239, %p240
    %s243 = sadd.s32 %s242, 1
    %p246 = scmp.eq.s32.totalorder %s19, 7
    %p247 = scmp.ne.s32.totalorder %s242, %s244
    %p248 = scmp.eq.s32.totalorder %s19, 0
    %p249 = por %p247, %p248
    %p250 = scmp.ne.s32.totalorder %s242, %s244
    %p251 = scmp.eq.s32.totalorder %s24, 7
    %p252 = por %p250, %p251
    %p253 = scmp.ne.s32.totalorder %s244, %s245
    %p254 = scmp.eq.s32.totalorder %s24, 0
    %p255 = por %p253, %p254
    %p256 = scmp.ne.s32.totalorder %s244, %s245
    %p257 = scmp.eq.s32.totalorder %s25, 7
    %p258 = por %p256, %p257
    %p260 = scmp.ne.s32.totalorder %s245, %s259
    %p261 = scmp.eq.s32.totalorder %s25, 0
    %p262 = por %p260, %p261
    %s264 = sadd.s32 %s263, 1
    %p267 = scmp.eq.s32.totalorder %s19, 7
    %p268 = scmp.ne.s32.totalorder %s263, %s265
    %p269 = scmp.eq.s32.totalorder %s19, 0
    %p270 = por %p268, %p269
    %p271 = scmp.ne.s32.totalorder %s263, %s265
    %p272 = scmp.eq.s32.totalorder %s24, 7
    %p273 = por %p271, %p272
    %p274 = scmp.ne.s32.totalorder %s265, %s266
    %p275 = scmp.eq.s32.totalorder %s24, 0
    %p276 = por %p274, %p275
    %p277 = scmp.ne.s32.totalorder %s265, %s266
    %p278 = scmp.eq.s32.totalorder %s25, 7
    %p279 = por %p277, %p278
    %p281 = scmp.ne.s32.totalorder %s266, %s280
    %p282 = scmp.eq.s32.totalorder %s25, 0
    %p283 = por %p281, %p282
    %s285 = sadd.s32 %s284, 1
    %p288 = scmp.eq.s32.totalorder %s19, 7
    %p289 = scmp.ne.s32.totalorder %s284, %s286
    %p290 = scmp.eq.s32.totalorder %s19, 0
    %p291 = por %p289, %p290
    %p292 = scmp.ne.s32.totalorder %s284, %s286
    %p293 = scmp.eq.s32.totalorder %s24, 7
    %p294 = por %p292, %p293
    %p295 = scmp.ne.s32.totalorder %s286, %s287
    %p296 = scmp.eq.s32.totalorder %s24, 0
    %p297 = por %p295, %p296
    %p298 = scmp.ne.s32.totalorder %s286, %s287
    %p299 = scmp.eq.s32.totalorder %s25, 7
    %p300 = por %p298, %p299
    %p302 = scmp.ne.s32.totalorder %s287, %s301
    %p303 = scmp.eq.s32.totalorder %s25, 0
    %p304 = por %p302, %p303
    %s305 = ssub.s32 %s19, %s26
    %p306 = scmp.eq.s32.totalorder %s305, 0
    %s308 = sadd.s32 %s307, 1
    %s309 = scalar_select %p306, %s307, %s308
    %p312 = pneg %p306
    %p313 = scmp.eq.s32.totalorder %s19, 7
    %p314 = por %p312, %p313
    %p315 = scmp.ne.s32.totalorder %s307, %s310
    %p316 = scmp.eq.s32.totalorder %s19, 0
    %p317 = por %p315, %p316
    %p318 = scmp.ne.s32.totalorder %s307, %s310
    %p319 = scmp.eq.s32.totalorder %s24, 7
    %p320 = por %p318, %p319
    %p321 = scmp.ne.s32.totalorder %s310, %s311
    %p322 = scmp.eq.s32.totalorder %s24, 0
    %p323 = por %p321, %p322
    %p324 = scmp.ne.s32.totalorder %s310, %s311
    %p325 = scmp.eq.s32.totalorder %s25, 7
    %p326 = por %p324, %p325
    %p328 = scmp.ne.s32.totalorder %s311, %s327
    %p329 = scmp.eq.s32.totalorder %s25, 0
    %p330 = por %p328, %p329
    %p331 = scmp.le.s32.totalorder 1, %s19
    %p332 = scmp.lt.s32.totalorder %s19, 9
    %p333 = pnand %p331, %p332
    %p334 = pneg %p333
    // Predicated region
    $region9: #{_forward_impl.7} parent=5 // pred_check
      _
    $region10: #{_forward_impl.7} parent=5 // pred_check_branch
      %336 = sbr.rel (%p333) target = $region12
    $region11: #{_forward_impl.7} parent=5 // pred_region
      %s337 = ssub.s32 %s19, 1
      // Predicated region
      $region13: #{_forward_impl.7} parent=11 // pred_check
        %p338 = pneg %p66
      $region14: #{_forward_impl.7} parent=11 // pred_check_branch
        %340 = sbr.rel (%p338) target = $region16
      $region15: #{_forward_impl.7} parent=11 // pred_region
        _
      $region16: #{_forward_impl.7} parent=11 // pred_fallthru
        _
      // Predicated region
      $region17: #{_forward_impl.7} parent=11 // pred_check
        %p341 = pneg %p87
      $region18: #{_forward_impl.7} parent=11 // pred_check_branch
        %343 = sbr.rel (%p341) target = $region20
      $region19: #{_forward_impl.7} parent=11 // pred_region
        _
      $region20: #{_forward_impl.7} parent=11 // pred_fallthru
        _
      // Predicated region
      $region21: #{_forward_impl.7} parent=11 // pred_check
        %p344 = pneg %p108
      $region22: #{_forward_impl.7} parent=11 // pred_check_branch
        %346 = sbr.rel (%p344) target = $region24
      $region23: #{_forward_impl.7} parent=11 // pred_region
        _
      $region24: #{_forward_impl.7} parent=11 // pred_fallthru
        _
      // Predicated region
      $region25: #{_forward_impl.7} parent=11 // pred_check
        %p347 = pneg %p129
      $region26: #{_forward_impl.7} parent=11 // pred_check_branch
        %349 = sbr.rel (%p347) target = $region28
      $region27: #{_forward_impl.7} parent=11 // pred_region
        _
      $region28: #{_forward_impl.7} parent=11 // pred_fallthru
        _
      // Predicated region
      $region29: #{_forward_impl.7} parent=11 // pred_check
        %p350 = pneg %p150
      $region30: #{_forward_impl.7} parent=11 // pred_check_branch
        %352 = sbr.rel (%p350) target = $region32
      $region31: #{_forward_impl.7} parent=11 // pred_region
        _
      $region32: #{_forward_impl.7} parent=11 // pred_fallthru
        _
      // Predicated region
      $region33: #{_forward_impl.7} parent=11 // pred_check
        %p353 = pneg %p171
      $region34: #{_forward_impl.7} parent=11 // pred_check_branch
        %355 = sbr.rel (%p353) target = $region36
      $region35: #{_forward_impl.7} parent=11 // pred_region
        _
      $region36: #{_forward_impl.7} parent=11 // pred_fallthru
        _
      // Predicated region
      $region37: #{_forward_impl.7} parent=11 // pred_check
        %p356 = pneg %p192
      $region38: #{_forward_impl.7} parent=11 // pred_check_branch
        %358 = sbr.rel (%p356) target = $region40
      $region39: #{_forward_impl.7} parent=11 // pred_region
        _
      $region40: #{_forward_impl.7} parent=11 // pred_fallthru
        _
      // Predicated region
      $region41: #{_forward_impl.7} parent=11 // pred_check
        %p359 = pneg %p213
      $region42: #{_forward_impl.7} parent=11 // pred_check_branch
        %361 = sbr.rel (%p359) target = $region44
      $region43: #{_forward_impl.7} parent=11 // pred_region
        _
      $region44: #{_forward_impl.7} parent=11 // pred_fallthru
        _
      // Predicated region
      $region45: #{_forward_impl.7} parent=11 // pred_check
        %p362 = pneg %p234
      $region46: #{_forward_impl.7} parent=11 // pred_check_branch
        %364 = sbr.rel (%p362) target = $region48
      $region47: #{_forward_impl.7} parent=11 // pred_region
        _
      $region48: #{_forward_impl.7} parent=11 // pred_fallthru
        _
      // Predicated region
      $region49: #{_forward_impl.7} parent=11 // pred_check
        %p365 = pneg %p255
      $region50: #{_forward_impl.7} parent=11 // pred_check_branch
        %367 = sbr.rel (%p365) target = $region52
      $region51: #{_forward_impl.7} parent=11 // pred_region
        _
      $region52: #{_forward_impl.7} parent=11 // pred_fallthru
        _
      // Predicated region
      $region53: #{_forward_impl.7} parent=11 // pred_check
        %p368 = pneg %p276
      $region54: #{_forward_impl.7} parent=11 // pred_check_branch
        %370 = sbr.rel (%p368) target = $region56
      $region55: #{_forward_impl.7} parent=11 // pred_region
        _
      $region56: #{_forward_impl.7} parent=11 // pred_fallthru
        _
      // Predicated region
      $region57: #{_forward_impl.7} parent=11 // pred_check
        %p371 = pneg %p297
      $region58: #{_forward_impl.7} parent=11 // pred_check_branch
        %373 = sbr.rel (%p371) target = $region60
      $region59: #{_forward_impl.7} parent=11 // pred_region
        _
      $region60: #{_forward_impl.7} parent=11 // pred_fallthru
        _
    $region12: #{_forward_impl.7} parent=5 // pred_fallthru
      _
    %p374 = scmp.lt.s32.totalorder %s19, 8
    // Predicated region
    $region61: #{_forward_impl.7} parent=5 // pred_check
      %p375 = pneg %p374
    $region62: #{_forward_impl.7} parent=5 // pred_check_branch
      %377 = sbr.rel (%p375) target = $region64
    $region63: #{_forward_impl.7} parent=5 // pred_region
      // Predicated region
      $region65: #{_forward_impl.7} parent=63 // pred_check
        %p378 = pneg %p39
      $region66: #{_forward_impl.7} parent=63 // pred_check_branch
        %380 = sbr.rel (%p378) target = $region68
      $region67: #{_forward_impl.7} parent=63 // pred_region
        %p381 = scmp.lt.s32.totalorder %s19, 7
        %s382 = scalar_select %p381, %s19, 7
        %s383 = smul.addr %s382, 2
        %s384 = smul.addr %s383, 8
        %s385 = scalar_lea.vmem %s0, %s384
      $region68: #{_forward_impl.7} parent=63 // pred_fallthru
        _
    $region64: #{_forward_impl.7} parent=5 // pred_fallthru
      _
    %p386 = scmp.le.s32.totalorder 1, %s19
    %p387 = scmp.lt.s32.totalorder %s19, 9
    %p388 = pnand %p386, %p387
    %p389 = pneg %p388
    // Predicated region
    $region69: #{_forward_impl.7} parent=5 // pred_check
      _
    $region70: #{_forward_impl.7} parent=5 // pred_check_branch
      %391 = sbr.rel (%p388) target = $region72
    $region71: #{_forward_impl.7} parent=5 // pred_region
      %s392 = ssub.s32 %s19, 1
      %p393 = scmp.lt.s32.totalorder %s24, 7
      %s394 = scalar_select %p393, %s24, 7
      %s395 = smul.addr %s394, 2
      %s396 = smul.addr %s395, 8
      %s397 = scalar_lea.vmem %s0, %s396
      %p398 = pneg %p45
      %p399 = pneg %p42
      %p400 = pneg %p66
      %p401 = pneg %p63
      %p402 = pneg %p87
      %p403 = pneg %p84
      %p404 = pneg %p108
      %p405 = pneg %p105
      %p406 = pneg %p129
      %p407 = pneg %p126
      %p408 = pneg %p150
      %p409 = pneg %p147
      %p410 = pneg %p171
      %p411 = pneg %p168
      %p412 = pneg %p192
      %p413 = pneg %p189
      %p414 = pneg %p213
      %p415 = pneg %p210
      %p416 = pneg %p234
      %p417 = pneg %p231
      %p418 = pneg %p255
      %p419 = pneg %p252
      %p420 = pneg %p276
      %p421 = pneg %p273
      %p422 = pneg %p297
      %p423 = pneg %p294
      %p424 = pneg %p323
      %p425 = pneg %p320
      %p426 = scmp.lt.s32.totalorder %s24, 7
      %s427 = scalar_select %p426, %s24, 7
      %s428 = smul.addr %s427, 8
      %s429 = smul.addr %s428, 8
      %s430 = scalar_lea.vmem %s13, %s429
      %p431 = scmp.lt.s32.totalorder %s24, 7
      %s432 = scalar_select %p431, %s24, 7
      %s433 = smul.addr %s432, 2
      %s434 = smul.addr %s433, 8
      %s435 = scalar_lea.vmem %s0, %s434
      %p436 = scmp.lt.s32.totalorder %s24, 7
      %s437 = scalar_select %p436, %s24, 7
      %s438 = smul.addr %s437, 8
      %s439 = smul.addr %s438, 8
      %s440 = scalar_lea.vmem %s13, %s439
      %442 = vst [vmem:[#allocation2] sm:$0xff] 0.0
      %443 = vst [vmem:[#allocation2 + $0x8] sm:$0xff] 0.0
      %444 = vst [vmem:[#allocation2 + $0x10] sm:$0xff] 0.0
      %445 = vst [vmem:[#allocation2 + $0x18] sm:$0xff] 0.0
      %446 = vst [vmem:[#allocation3] sm:$0xff] 0.0
      %447 = vst [vmem:[#allocation3 + $0x8] sm:$0xff] 0.0
      %448 = vst [vmem:[#allocation3 + $0x10] sm:$0xff] 0.0
      %449 = vst [vmem:[#allocation3 + $0x18] sm:$0xff] 0.0
      %v450 = vld [vmem:[%s435] sm:$0xff]
      %v451 = vld [vmem:[%s435 + $0x8] sm:$0x3f]
      %v452 = vpack.c.bf16 %v451, %v450
      %v453 = vld [vmem:[%s1] sm:$0xff]
      %v454 = vld [vmem:[%s1 + $0x8] sm:$0xff]
      %v455 = vld [vmem:[%s1 + $0x10] sm:$0xff]
      %v456 = vld [vmem:[%s1 + $0x18] sm:$0xff]
      %v457 = vld [vmem:[%s1 + $0x20] sm:$0xff]
      %v458 = vld [vmem:[%s1 + $0x28] sm:$0xff]
      %v459 = vld [vmem:[%s1 + $0x30] sm:$0xff]
      %v460 = vld [vmem:[%s1 + $0x38] sm:$0xff]
      %v461 = vld [vmem:[%s1 + $0x40] sm:$0xff]
      %v462 = vld [vmem:[%s1 + $0x48] sm:$0xff]
      %v463 = vld [vmem:[%s1 + $0x50] sm:$0xff]
      %v464 = vld [vmem:[%s1 + $0x58] sm:$0xff]
      %v465 = vld [vmem:[%s1 + $0x60] sm:$0xff]
      %v466 = vld [vmem:[%s1 + $0x68] sm:$0xff]
      %v467 = vld [vmem:[%s1 + $0x70] sm:$0xff]
      %v468 = vld [vmem:[%s1 + $0x78] sm:$0xff]
      %v469 = vld [vmem:[%s435 + $0x1] sm:$0xff]
      %v470 = vld [vmem:[%s435 + $0x9] sm:$0x3f]
      %v471 = vpack.c.bf16 %v470, %v469
      %s472 = scalar_lea.vmem %s1, 128
      %v473 = vld [vmem:[%s472] sm:$0xff]
      %v474 = vld [vmem:[%s472 + $0x8] sm:$0xff]
      %v475 = vld [vmem:[%s472 + $0x10] sm:$0xff]
      %v476 = vld [vmem:[%s472 + $0x18] sm:$0xff]
      %v477 = vld [vmem:[%s472 + $0x20] sm:$0xff]
      %v478 = vld [vmem:[%s472 + $0x28] sm:$0xff]
      %v479 = vld [vmem:[%s472 + $0x30] sm:$0xff]
      %v480 = vld [vmem:[%s472 + $0x38] sm:$0xff]
      %v481 = vld [vmem:[%s472 + $0x40] sm:$0xff]
      %v482 = vld [vmem:[%s472 + $0x48] sm:$0xff]
      %v483 = vld [vmem:[%s472 + $0x50] sm:$0xff]
      %v484 = vld [vmem:[%s472 + $0x58] sm:$0xff]
      %v485 = vld [vmem:[%s472 + $0x60] sm:$0xff]
      %v486 = vld [vmem:[%s472 + $0x68] sm:$0xff]
      %v487 = vld [vmem:[%s472 + $0x70] sm:$0xff]
      %v488 = vld [vmem:[%s472 + $0x78] sm:$0xff]
      %v505 = vunpack.c.l.b16 %v473
      %v506 = vunpack.c.h.b16 %v473
      %v507 = vunpack.c.l.b16 %v474
      %v508 = vunpack.c.h.b16 %v474
      %v509 = vunpack.c.l.b16 %v475
      %v510 = vunpack.c.h.b16 %v475
      %v511 = vunpack.c.l.b16 %v476
      %v512 = vunpack.c.h.b16 %v476
      %v513 = vunpack.c.l.b16 %v477
      %v514 = vunpack.c.h.b16 %v477
      %v515 = vunpack.c.l.b16 %v478
      %v516 = vunpack.c.h.b16 %v478
      %v517 = vunpack.c.l.b16 %v479
      %v518 = vunpack.c.h.b16 %v479
      %v519 = vunpack.c.l.b16 %v480
      %v520 = vunpack.c.h.b16 %v480
      %v521 = vunpack.c.l.b16 %v481
      %v522 = vunpack.c.h.b16 %v481
      %v523 = vunpack.c.l.b16 %v482
      %v524 = vunpack.c.h.b16 %v482
      %v525 = vunpack.c.l.b16 %v483
      %v526 = vunpack.c.h.b16 %v483
      %v527 = vunpack.c.l.b16 %v484
      %v528 = vunpack.c.h.b16 %v484
      %v529 = vunpack.c.l.b16 %v485
      %v530 = vunpack.c.h.b16 %v485
      %v531 = vunpack.c.l.b16 %v486
      %v532 = vunpack.c.h.b16 %v486
      %v533 = vunpack.c.l.b16 %v487
      %v534 = vunpack.c.h.b16 %v487
      %v535 = vunpack.c.l.b16 %v488
      %v536 = vunpack.c.h.b16 %v488
      %v537 = vpack.c.b16 %v507, %v505
      %v538 = vpack.c.b16 %v508, %v506
      %v539 = vpack.c.b16 %v511, %v509
      %v540 = vpack.c.b16 %v512, %v510
      %v541 = vpack.c.b16 %v515, %v513
      %v542 = vpack.c.b16 %v516, %v514
      %v543 = vpack.c.b16 %v519, %v517
      %v544 = vpack.c.b16 %v520, %v518
      %v545 = vpack.c.b16 %v523, %v521
      %v546 = vpack.c.b16 %v524, %v522
      %v547 = vpack.c.b16 %v527, %v525
      %v548 = vpack.c.b16 %v528, %v526
      %v549 = vpack.c.b16 %v531, %v529
      %v550 = vpack.c.b16 %v532, %v530
      %v551 = vpack.c.b16 %v535, %v533
      %v552 = vpack.c.b16 %v536, %v534
      %569 = vmatpush.bf16.msra.mxu0 %v551
      %570 = vmatpush.bf16.msra.mxu0 %v549
      %571 = vmatpush.bf16.msra.mxu0 %v547
      %572 = vmatpush.bf16.msra.mxu0 %v545
      %573 = vmatpush.bf16.msra.mxu0 %v543
      %574 = vmatpush.bf16.msra.mxu0 %v541
      %575 = vmatpush.bf16.msra.mxu0 %v539
      %576 = vmatpush.bf16.msra.mxu0 %v537
      %577 = vmatmul.bf16.gmra.mxu0 %v471
      %v578 = vpop.f32.mrf.mxu0
      %v579 = vadd.f32 0.0, %v578
      %v580 = vpop.f32.mrf.mxu0
      %v581 = vadd.f32 0.0, %v580
      %582 = vdwg.mxu0
      %583 = vmatpush.bf16.msra.mxu0 %v552
      %584 = vmatpush.bf16.msra.mxu0 %v550
      %585 = vmatpush.bf16.msra.mxu0 %v548
      %586 = vmatpush.bf16.msra.mxu0 %v546
      %587 = vmatpush.bf16.msra.mxu0 %v544
      %588 = vmatpush.bf16.msra.mxu0 %v542
      %589 = vmatpush.bf16.msra.mxu0 %v540
      %590 = vmatpush.bf16.msra.mxu0 %v538
      %591 = vmatmul.bf16.gmra.mxu0 %v471
      %v592 = vpop.f32.mrf.mxu0
      %v593 = vadd.f32 0.0, %v592
      %v594 = vpop.f32.mrf.mxu0
      %v595 = vadd.f32 0.0, %v594
      %596 = vdwg.mxu0
      %v613 = vunpack.c.l.b16 %v453
      %v614 = vunpack.c.h.b16 %v453
      %v615 = vunpack.c.l.b16 %v454
      %v616 = vunpack.c.h.b16 %v454
      %v617 = vunpack.c.l.b16 %v455
      %v618 = vunpack.c.h.b16 %v455
      %v619 = vunpack.c.l.b16 %v456
      %v620 = vunpack.c.h.b16 %v456
      %v621 = vunpack.c.l.b16 %v457
      %v622 = vunpack.c.h.b16 %v457
      %v623 = vunpack.c.l.b16 %v458
      %v624 = vunpack.c.h.b16 %v458
      %v625 = vunpack.c.l.b16 %v459
      %v626 = vunpack.c.h.b16 %v459
      %v627 = vunpack.c.l.b16 %v460
      %v628 = vunpack.c.h.b16 %v460
      %v629 = vunpack.c.l.b16 %v461
      %v630 = vunpack.c.h.b16 %v461
      %v631 = vunpack.c.l.b16 %v462
      %v632 = vunpack.c.h.b16 %v462
      %v633 = vunpack.c.l.b16 %v463
      %v634 = vunpack.c.h.b16 %v463
      %v635 = vunpack.c.l.b16 %v464
      %v636 = vunpack.c.h.b16 %v464
      %v637 = vunpack.c.l.b16 %v465
      %v638 = vunpack.c.h.b16 %v465
      %v639 = vunpack.c.l.b16 %v466
      %v640 = vunpack.c.h.b16 %v466
      %v641 = vunpack.c.l.b16 %v467
      %v642 = vunpack.c.h.b16 %v467
      %v643 = vunpack.c.l.b16 %v468
      %v644 = vunpack.c.h.b16 %v468
      %v645 = vpack.c.b16 %v615, %v613
      %v646 = vpack.c.b16 %v616, %v614
      %v647 = vpack.c.b16 %v619, %v617
      %v648 = vpack.c.b16 %v620, %v618
      %v649 = vpack.c.b16 %v623, %v621
      %v650 = vpack.c.b16 %v624, %v622
      %v651 = vpack.c.b16 %v627, %v625
      %v652 = vpack.c.b16 %v628, %v626
      %v653 = vpack.c.b16 %v631, %v629
      %v654 = vpack.c.b16 %v632, %v630
      %v655 = vpack.c.b16 %v635, %v633
      %v656 = vpack.c.b16 %v636, %v634
      %v657 = vpack.c.b16 %v639, %v637
      %v658 = vpack.c.b16 %v640, %v638
      %v659 = vpack.c.b16 %v643, %v641
      %v660 = vpack.c.b16 %v644, %v642
      %677 = vmatpush.bf16.msra.mxu0 %v659
      %678 = vmatpush.bf16.msra.mxu0 %v657
      %679 = vmatpush.bf16.msra.mxu0 %v655
      %680 = vmatpush.bf16.msra.mxu0 %v653
      %681 = vmatpush.bf16.msra.mxu0 %v651
      %682 = vmatpush.bf16.msra.mxu0 %v649
      %683 = vmatpush.bf16.msra.mxu0 %v647
      %684 = vmatpush.bf16.msra.mxu0 %v645
      %685 = vmatmul.bf16.gmra.mxu0 %v452
      %v686 = vpop.f32.mrf.mxu0
      %v687 = vadd.f32 %v579, %v686
      %v688 = vpop.f32.mrf.mxu0
      %v689 = vadd.f32 %v581, %v688
      %690 = vdwg.mxu0
      %691 = vmatpush.bf16.msra.mxu0 %v660
      %692 = vmatpush.bf16.msra.mxu0 %v658
      %693 = vmatpush.bf16.msra.mxu0 %v656
      %694 = vmatpush.bf16.msra.mxu0 %v654
      %695 = vmatpush.bf16.msra.mxu0 %v652
      %696 = vmatpush.bf16.msra.mxu0 %v650
      %697 = vmatpush.bf16.msra.mxu0 %v648
      %698 = vmatpush.bf16.msra.mxu0 %v646
      %699 = vmatmul.bf16.gmra.mxu0 %v452
      %v700 = vpop.f32.mrf.mxu0
      %v701 = vadd.f32 %v593, %v700
      %v702 = vpop.f32.mrf.mxu0
      %v703 = vadd.f32 %v595, %v702
      %704 = vdwg.mxu0
      %v705 = vld [vmem:[%s435 + $0x2] sm:$0xff]
      %v706 = vld [vmem:[%s435 + $0xa] sm:$0x3f]
      %v707 = vpack.c.bf16 %v706, %v705
      %s708 = scalar_lea.vmem %s1, 256
      %v709 = vld [vmem:[%s708] sm:$0xff]
      %v710 = vld [vmem:[%s708 + $0x8] sm:$0xff]
      %v711 = vld [vmem:[%s708 + $0x10] sm:$0xff]
      %v712 = vld [vmem:[%s708 + $0x18] sm:$0xff]
      %v713 = vld [vmem:[%s708 + $0x20] sm:$0xff]
      %v714 = vld [vmem:[%s708 + $0x28] sm:$0xff]
      %v715 = vld [vmem:[%s708 + $0x30] sm:$0xff]
      %v716 = vld [vmem:[%s708 + $0x38] sm:$0xff]
      %v717 = vld [vmem:[%s708 + $0x40] sm:$0xff]
      %v718 = vld [vmem:[%s708 + $0x48] sm:$0xff]
      %v719 = vld [vmem:[%s708 + $0x50] sm:$0xff]
      %v720 = vld [vmem:[%s708 + $0x58] sm:$0xff]
      %v721 = vld [vmem:[%s708 + $0x60] sm:$0xff]
      %v722 = vld [vmem:[%s708 + $0x68] sm:$0xff]
      %v723 = vld [vmem:[%s708 + $0x70] sm:$0xff]
      %v724 = vld [vmem:[%s708 + $0x78] sm:$0xff]
      %v741 = vunpack.c.l.b16 %v709
      %v742 = vunpack.c.h.b16 %v709
      %v743 = vunpack.c.l.b16 %v710
      %v744 = vunpack.c.h.b16 %v710
      %v745 = vunpack.c.l.b16 %v711
      %v746 = vunpack.c.h.b16 %v711
      %v747 = vunpack.c.l.b16 %v712
      %v748 = vunpack.c.h.b16 %v712
      %v749 = vunpack.c.l.b16 %v713
      %v750 = vunpack.c.h.b16 %v713
      %v751 = vunpack.c.l.b16 %v714
      %v752 = vunpack.c.h.b16 %v714
      %v753 = vunpack.c.l.b16 %v715
      %v754 = vunpack.c.h.b16 %v715
      %v755 = vunpack.c.l.b16 %v716
      %v756 = vunpack.c.h.b16 %v716
      %v757 = vunpack.c.l.b16 %v717
      %v758 = vunpack.c.h.b16 %v717
      %v759 = vunpack.c.l.b16 %v718
      %v760 = vunpack.c.h.b16 %v718
      %v761 = vunpack.c.l.b16 %v719
      %v762 = vunpack.c.h.b16 %v719
      %v763 = vunpack.c.l.b16 %v720
      %v764 = vunpack.c.h.b16 %v720
      %v765 = vunpack.c.l.b16 %v721
      %v766 = vunpack.c.h.b16 %v721
      %v767 = vunpack.c.l.b16 %v722
      %v768 = vunpack.c.h.b16 %v722
      %v769 = vunpack.c.l.b16 %v723
      %v770 = vunpack.c.h.b16 %v723
      %v771 = vunpack.c.l.b16 %v724
      %v772 = vunpack.c.h.b16 %v724
      %v773 = vpack.c.b16 %v743, %v741
      %v774 = vpack.c.b16 %v744, %v742
      %v775 = vpack.c.b16 %v747, %v745
      %v776 = vpack.c.b16 %v748, %v746
      %v777 = vpack.c.b16 %v751, %v749
      %v778 = vpack.c.b16 %v752, %v750
      %v779 = vpack.c.b16 %v755, %v753
      %v780 = vpack.c.b16 %v756, %v754
      %v781 = vpack.c.b16 %v759, %v757
      %v782 = vpack.c.b16 %v760, %v758
      %v783 = vpack.c.b16 %v763, %v761
      %v784 = vpack.c.b16 %v764, %v762
      %v785 = vpack.c.b16 %v767, %v765
      %v786 = vpack.c.b16 %v768, %v766
      %v787 = vpack.c.b16 %v771, %v769
      %v788 = vpack.c.b16 %v772, %v770
      %805 = vmatpush.bf16.msra.mxu0 %v787
      %806 = vmatpush.bf16.msra.mxu0 %v785
      %807 = vmatpush.bf16.msra.mxu0 %v783
      %808 = vmatpush.bf16.msra.mxu0 %v781
      %809 = vmatpush.bf16.msra.mxu0 %v779
      %810 = vmatpush.bf16.msra.mxu0 %v777
      %811 = vmatpush.bf16.msra.mxu0 %v775
      %812 = vmatpush.bf16.msra.mxu0 %v773
      %813 = vmatmul.bf16.gmra.mxu0 %v707
      %v814 = vpop.f32.mrf.mxu0
      %v815 = vadd.f32 0.0, %v814
      %v816 = vpop.f32.mrf.mxu0
      %v817 = vadd.f32 0.0, %v816
      %818 = vdwg.mxu0
      %819 = vmatpush.bf16.msra.mxu0 %v788
      %820 = vmatpush.bf16.msra.mxu0 %v786
      %821 = vmatpush.bf16.msra.mxu0 %v784
      %822 = vmatpush.bf16.msra.mxu0 %v782
      %823 = vmatpush.bf16.msra.mxu0 %v780
      %824 = vmatpush.bf16.msra.mxu0 %v778
      %825 = vmatpush.bf16.msra.mxu0 %v776
      %826 = vmatpush.bf16.msra.mxu0 %v774
      %827 = vmatmul.bf16.gmra.mxu0 %v707
      %v828 = vpop.f32.mrf.mxu0
      %v829 = vadd.f32 0.0, %v828
      %v830 = vpop.f32.mrf.mxu0
      %v831 = vadd.f32 0.0, %v830
      %832 = vdwg.mxu0
      %v833 = vadd.f32 %v687, %v815
      %v834 = vadd.f32 %v701, %v829
      %v835 = vadd.f32 %v689, %v817
      %v836 = vadd.f32 %v703, %v831
      %v837 = vld [vmem:[%s2] sm:$0x3]
      %v839 = vperm.slane %v837, 0
      %v840 = vperm.slane %v837, 1
      %v843 = vadd.f32 %v833, %v839
      %v844 = vadd.f32 %v834, %v840
      %v845 = vadd.f32 %v835, %v839
      %v846 = vadd.f32 %v836, %v840
      %v847 = vmax.f32 %v843, 0.0
      %v848 = vmax.f32 %v844, 0.0
      %v849 = vmax.f32 %v845, 0.0
      %v850 = vmax.f32 %v846, 0.0
      %vm855 = vcmask 1040384
      %v856 = vrot.slane %v847, 7
      %v857 = vrot.slane %v848, 7
      %v858 = vrot.slane %v849, 7
      %v859 = vsel %vm855, %v856, %v858
      %v860 = vrot.slane %v850, 7
      %v861 = vsel %vm855, %v857, %v860
      %862 = vrot.lane.b32.xlu0 %v856, 16
      %v863 = vpop.permute.xlu0 %862
      %864 = vrot.lane.b32.xlu0 %v857, 16
      %v865 = vpop.permute.xlu0 %864
      %866 = vrot.lane.b32.xlu0 %v859, 16
      %v867 = vpop.permute.xlu0 %866
      %868 = vrot.lane.b32.xlu0 %v861, 16
      %v869 = vpop.permute.xlu0 %868
      %vm870 = vcmask 130048
      %v871 = vsel %vm870, %v863, %v865
      %v872 = vsel %vm870, %v867, %v869
      %vm877 = vcmask 1047681
      %878 = vst.msk [vmem:[#allocation2] sm:$0xfe] %vm877, %v863
      %vm879 = vcmask 916481
      %880 = vst.msk [vmem:[#allocation2 + $0x8] sm:$0xfe] %vm879, %v871
      %vm881 = vcmask 1046656
      %882 = vst.msk [vmem:[#allocation2 + $0x10] sm:$0x7f] %vm881, %v867
      %vm883 = vcmask 915456
      %884 = vst.msk [vmem:[#allocation2 + $0x18] sm:$0x7f] %vm883, %v872
      %v885 = vld [vmem:[#allocation2] sm:$0xff]
      %v886 = vld [vmem:[#allocation2 + $0x8] sm:$0xff]
      %v887 = vld [vmem:[#allocation2 + $0x10] sm:$0x3f]
      %v888 = vld [vmem:[#allocation2 + $0x18] sm:$0x3f]
      %v889 = vpack.c.bf16 %v887, %v885
      %v890 = vpack.c.bf16 %v888, %v886
      %v891 = vld [vmem:[%s3] sm:$0xff]
      %v892 = vld [vmem:[%s3 + $0x8] sm:$0xff]
      %v893 = vld [vmem:[%s3 + $0x10] sm:$0xff]
      %v894 = vld [vmem:[%s3 + $0x18] sm:$0xff]
      %v895 = vld [vmem:[%s3 + $0x20] sm:$0xff]
      %v896 = vld [vmem:[%s3 + $0x28] sm:$0xff]
      %v897 = vld [vmem:[%s3 + $0x30] sm:$0xff]
      %v898 = vld [vmem:[%s3 + $0x38] sm:$0xff]
      %v899 = vld [vmem:[%s3 + $0x40] sm:$0xff]
      %v900 = vld [vmem:[%s3 + $0x48] sm:$0xff]
      %v901 = vld [vmem:[%s3 + $0x50] sm:$0xff]
      %v902 = vld [vmem:[%s3 + $0x58] sm:$0xff]
      %v903 = vld [vmem:[%s3 + $0x60] sm:$0xff]
      %v904 = vld [vmem:[%s3 + $0x68] sm:$0xff]
      %v905 = vld [vmem:[%s3 + $0x70] sm:$0xff]
      %v906 = vld [vmem:[%s3 + $0x78] sm:$0xff]
      %v907 = vld [vmem:[%s3 + $0x80] sm:$0xff]
      %v908 = vld [vmem:[%s3 + $0x88] sm:$0xff]
      %v909 = vld [vmem:[%s3 + $0x90] sm:$0xff]
      %v910 = vld [vmem:[%s3 + $0x98] sm:$0xff]
      %v911 = vld [vmem:[%s3 + $0xa0] sm:$0xff]
      %v912 = vld [vmem:[%s3 + $0xa8] sm:$0xff]
      %v913 = vld [vmem:[%s3 + $0xb0] sm:$0xff]
      %v914 = vld [vmem:[%s3 + $0xb8] sm:$0xff]
      %v915 = vld [vmem:[%s3 + $0xc0] sm:$0xff]
      %v916 = vld [vmem:[%s3 + $0xc8] sm:$0xff]
      %v917 = vld [vmem:[%s3 + $0xd0] sm:$0xff]
      %v918 = vld [vmem:[%s3 + $0xd8] sm:$0xff]
      %v919 = vld [vmem:[%s3 + $0xe0] sm:$0xff]
      %v920 = vld [vmem:[%s3 + $0xe8] sm:$0xff]
      %v921 = vld [vmem:[%s3 + $0xf0] sm:$0xff]
      %v922 = vld [vmem:[%s3 + $0xf8] sm:$0xff]
      %v923 = vld [vmem:[#allocation2] sm:$0xfe]
      %v924 = vld [vmem:[#allocation2 + $0x8] sm:$0xfe]
      %v925 = vld [vmem:[#allocation2 + $0x10] sm:$0x7f]
      %v926 = vld [vmem:[#allocation2 + $0x18] sm:$0x7f]
      %v927 = vpack.c.bf16 %v925, %v923
      %v928 = vpack.c.bf16 %v926, %v924
      %s929 = scalar_lea.vmem %s3, 256
      %v930 = vld [vmem:[%s929] sm:$0xff]
      %v931 = vld [vmem:[%s929 + $0x8] sm:$0xff]
      %v932 = vld [vmem:[%s929 + $0x10] sm:$0xff]
      %v933 = vld [vmem:[%s929 + $0x18] sm:$0xff]
      %v934 = vld [vmem:[%s929 + $0x20] sm:$0xff]
      %v935 = vld [vmem:[%s929 + $0x28] sm:$0xff]
      %v936 = vld [vmem:[%s929 + $0x30] sm:$0xff]
      %v937 = vld [vmem:[%s929 + $0x38] sm:$0xff]
      %v938 = vld [vmem:[%s929 + $0x40] sm:$0xff]
      %v939 = vld [vmem:[%s929 + $0x48] sm:$0xff]
      %v940 = vld [vmem:[%s929 + $0x50] sm:$0xff]
      %v941 = vld [vmem:[%s929 + $0x58] sm:$0xff]
      %v942 = vld [vmem:[%s929 + $0x60] sm:$0xff]
      %v943 = vld [vmem:[%s929 + $0x68] sm:$0xff]
      %v944 = vld [vmem:[%s929 + $0x70] sm:$0xff]
      %v945 = vld [vmem:[%s929 + $0x78] sm:$0xff]
      %v946 = vld [vmem:[%s929 + $0x80] sm:$0xff]
      %v947 = vld [vmem:[%s929 + $0x88] sm:$0xff]
      %v948 = vld [vmem:[%s929 + $0x90] sm:$0xff]
      %v949 = vld [vmem:[%s929 + $0x98] sm:$0xff]
      %v950 = vld [vmem:[%s929 + $0xa0] sm:$0xff]
      %v951 = vld [vmem:[%s929 + $0xa8] sm:$0xff]
      %v952 = vld [vmem:[%s929 + $0xb0] sm:$0xff]
      %v953 = vld [vmem:[%s929 + $0xb8] sm:$0xff]
      %v954 = vld [vmem:[%s929 + $0xc0] sm:$0xff]
      %v955 = vld [vmem:[%s929 + $0xc8] sm:$0xff]
      %v956 = vld [vmem:[%s929 + $0xd0] sm:$0xff]
      %v957 = vld [vmem:[%s929 + $0xd8] sm:$0xff]
      %v958 = vld [vmem:[%s929 + $0xe0] sm:$0xff]
      %v959 = vld [vmem:[%s929 + $0xe8] sm:$0xff]
      %v960 = vld [vmem:[%s929 + $0xf0] sm:$0xff]
      %v961 = vld [vmem:[%s929 + $0xf8] sm:$0xff]
      %v963 = vshrl.u32 %v927, 16
      %v965 = vshll.u32 %v927, 16
      %v967 = vrot.slane %v965, 1
      %v968 = vor.u32 %v963, %v967
      %v970 = vshrl.u32 %v928, 16
      %v972 = vshll.u32 %v928, 16
      %v974 = vrot.slane %v972, 1
      %v975 = vor.u32 %v970, %v974
      %v1010 = vunpack.c.l.b16 %v930
      %v1011 = vunpack.c.h.b16 %v930
      %v1012 = vunpack.c.l.b16 %v931
      %v1013 = vunpack.c.h.b16 %v931
      %v1014 = vunpack.c.l.b16 %v932
      %v1015 = vunpack.c.h.b16 %v932
      %v1016 = vunpack.c.l.b16 %v933
      %v1017 = vunpack.c.h.b16 %v933
      %v1018 = vunpack.c.l.b16 %v934
      %v1019 = vunpack.c.h.b16 %v934
      %v1020 = vunpack.c.l.b16 %v935
      %v1021 = vunpack.c.h.b16 %v935
      %v1022 = vunpack.c.l.b16 %v936
      %v1023 = vunpack.c.h.b16 %v936
      %v1024 = vunpack.c.l.b16 %v937
      %v1025 = vunpack.c.h.b16 %v937
      %v1026 = vunpack.c.l.b16 %v938
      %v1027 = vunpack.c.h.b16 %v938
      %v1028 = vunpack.c.l.b16 %v939
      %v1029 = vunpack.c.h.b16 %v939
      %v1030 = vunpack.c.l.b16 %v940
      %v1031 = vunpack.c.h.b16 %v940
      %v1032 = vunpack.c.l.b16 %v941
      %v1033 = vunpack.c.h.b16 %v941
      %v1034 = vunpack.c.l.b16 %v942
      %v1035 = vunpack.c.h.b16 %v942
      %v1036 = vunpack.c.l.b16 %v943
      %v1037 = vunpack.c.h.b16 %v943
      %v1038 = vunpack.c.l.b16 %v944
      %v1039 = vunpack.c.h.b16 %v944
      %v1040 = vunpack.c.l.b16 %v945
      %v1041 = vunpack.c.h.b16 %v945
      %v1042 = vunpack.c.l.b16 %v946
      %v1043 = vunpack.c.h.b16 %v946
      %v1044 = vunpack.c.l.b16 %v947
      %v1045 = vunpack.c.h.b16 %v947
      %v1046 = vunpack.c.l.b16 %v948
      %v1047 = vunpack.c.h.b16 %v948
      %v1048 = vunpack.c.l.b16 %v949
      %v1049 = vunpack.c.h.b16 %v949
      %v1050 = vunpack.c.l.b16 %v950
      %v1051 = vunpack.c.h.b16 %v950
      %v1052 = vunpack.c.l.b16 %v951
      %v1053 = vunpack.c.h.b16 %v951
      %v1054 = vunpack.c.l.b16 %v952
      %v1055 = vunpack.c.h.b16 %v952
      %v1056 = vunpack.c.l.b16 %v953
      %v1057 = vunpack.c.h.b16 %v953
      %v1058 = vunpack.c.l.b16 %v954
      %v1059 = vunpack.c.h.b16 %v954
      %v1060 = vunpack.c.l.b16 %v955
      %v1061 = vunpack.c.h.b16 %v955
      %v1062 = vunpack.c.l.b16 %v956
      %v1063 = vunpack.c.h.b16 %v956
      %v1064 = vunpack.c.l.b16 %v957
      %v1065 = vunpack.c.h.b16 %v957
      %v1066 = vunpack.c.l.b16 %v958
      %v1067 = vunpack.c.h.b16 %v958
      %v1068 = vunpack.c.l.b16 %v959
      %v1069 = vunpack.c.h.b16 %v959
      %v1070 = vunpack.c.l.b16 %v960
      %v1071 = vunpack.c.h.b16 %v960
      %v1072 = vunpack.c.l.b16 %v961
      %v1073 = vunpack.c.h.b16 %v961
      %v1074 = vpack.c.b16 %v1012, %v1010
      %v1075 = vpack.c.b16 %v1013, %v1011
      %v1076 = vpack.c.b16 %v1016, %v1014
      %v1077 = vpack.c.b16 %v1017, %v1015
      %v1078 = vpack.c.b16 %v1020, %v1018
      %v1079 = vpack.c.b16 %v1021, %v1019
      %v1080 = vpack.c.b16 %v1024, %v1022
      %v1081 = vpack.c.b16 %v1025, %v1023
      %v1082 = vpack.c.b16 %v1028, %v1026
      %v1083 = vpack.c.b16 %v1029, %v1027
      %v1084 = vpack.c.b16 %v1032, %v1030
      %v1085 = vpack.c.b16 %v1033, %v1031
      %v1086 = vpack.c.b16 %v1036, %v1034
      %v1087 = vpack.c.b16 %v1037, %v1035
      %v1088 = vpack.c.b16 %v1040, %v1038
      %v1089 = vpack.c.b16 %v1041, %v1039
      %v1090 = vpack.c.b16 %v1044, %v1042
      %v1091 = vpack.c.b16 %v1045, %v1043
      %v1092 = vpack.c.b16 %v1048, %v1046
      %v1093 = vpack.c.b16 %v1049, %v1047
      %v1094 = vpack.c.b16 %v1052, %v1050
      %v1095 = vpack.c.b16 %v1053, %v1051
      %v1096 = vpack.c.b16 %v1056, %v1054
      %v1097 = vpack.c.b16 %v1057, %v1055
      %v1098 = vpack.c.b16 %v1060, %v1058
      %v1099 = vpack.c.b16 %v1061, %v1059
      %v1100 = vpack.c.b16 %v1064, %v1062
      %v1101 = vpack.c.b16 %v1065, %v1063
      %v1102 = vpack.c.b16 %v1068, %v1066
      %v1103 = vpack.c.b16 %v1069, %v1067
      %v1104 = vpack.c.b16 %v1072, %v1070
      %v1105 = vpack.c.b16 %v1073, %v1071
      %1138 = vmatpush.bf16.msra.mxu0 %v1088
      %1139 = vmatpush.bf16.msra.mxu0 %v1086
      %1140 = vmatpush.bf16.msra.mxu0 %v1084
      %1141 = vmatpush.bf16.msra.mxu0 %v1082
      %1142 = vmatpush.bf16.msra.mxu0 %v1080
      %1143 = vmatpush.bf16.msra.mxu0 %v1078
      %1144 = vmatpush.bf16.msra.mxu0 %v1076
      %1145 = vmatpush.bf16.msra.mxu0 %v1074
      %1146 = vmatmul.bf16.gmra.mxu0 %v968
      %v1147 = vpop.f32.mrf.mxu0
      %v1148 = vadd.f32 0.0, %v1147
      %v1149 = vpop.f32.mrf.mxu0
      %v1150 = vadd.f32 0.0, %v1149
      %1151 = vdwg.mxu0
      %1152 = vmatpush.bf16.msra.mxu0 %v1104
      %1153 = vmatpush.bf16.msra.mxu0 %v1102
      %1154 = vmatpush.bf16.msra.mxu0 %v1100
      %1155 = vmatpush.bf16.msra.mxu0 %v1098
      %1156 = vmatpush.bf16.msra.mxu0 %v1096
      %1157 = vmatpush.bf16.msra.mxu0 %v1094
      %1158 = vmatpush.bf16.msra.mxu0 %v1092
      %1159 = vmatpush.bf16.msra.mxu0 %v1090
      %1160 = vmatmul.bf16.gmra.mxu0 %v975
      %v1161 = vpop.f32.mrf.mxu0
      %v1162 = vadd.f32 %v1148, %v1161
      %v1163 = vpop.f32.mrf.mxu0
      %v1164 = vadd.f32 %v1150, %v1163
      %1165 = vdwg.mxu0
      %1166 = vmatpush.bf16.msra.mxu0 %v1089
      %1167 = vmatpush.bf16.msra.mxu0 %v1087
      %1168 = vmatpush.bf16.msra.mxu0 %v1085
      %1169 = vmatpush.bf16.msra.mxu0 %v1083
      %1170 = vmatpush.bf16.msra.mxu0 %v1081
      %1171 = vmatpush.bf16.msra.mxu0 %v1079
      %1172 = vmatpush.bf16.msra.mxu0 %v1077
      %1173 = vmatpush.bf16.msra.mxu0 %v1075
      %1174 = vmatmul.bf16.gmra.mxu0 %v968
      %v1175 = vpop.f32.mrf.mxu0
      %v1176 = vadd.f32 0.0, %v1175
      %v1177 = vpop.f32.mrf.mxu0
      %v1178 = vadd.f32 0.0, %v1177
      %1179 = vdwg.mxu0
      %1180 = vmatpush.bf16.msra.mxu0 %v1105
      %1181 = vmatpush.bf16.msra.mxu0 %v1103
      %1182 = vmatpush.bf16.msra.mxu0 %v1101
      %1183 = vmatpush.bf16.msra.mxu0 %v1099
      %1184 = vmatpush.bf16.msra.mxu0 %v1097
      %1185 = vmatpush.bf16.msra.mxu0 %v1095
      %1186 = vmatpush.bf16.msra.mxu0 %v1093
      %1187 = vmatpush.bf16.msra.mxu0 %v1091
      %1188 = vmatmul.bf16.gmra.mxu0 %v975
      %v1189 = vpop.f32.mrf.mxu0
      %v1190 = vadd.f32 %v1176, %v1189
      %v1191 = vpop.f32.mrf.mxu0
      %v1192 = vadd.f32 %v1178, %v1191
      %1193 = vdwg.mxu0
      %v1226 = vunpack.c.l.b16 %v891
      %v1227 = vunpack.c.h.b16 %v891
      %v1228 = vunpack.c.l.b16 %v892
      %v1229 = vunpack.c.h.b16 %v892
      %v1230 = vunpack.c.l.b16 %v893
      %v1231 = vunpack.c.h.b16 %v893
      %v1232 = vunpack.c.l.b16 %v894
      %v1233 = vunpack.c.h.b16 %v894
      %v1234 = vunpack.c.l.b16 %v895
      %v1235 = vunpack.c.h.b16 %v895
      %v1236 = vunpack.c.l.b16 %v896
      %v1237 = vunpack.c.h.b16 %v896
      %v1238 = vunpack.c.l.b16 %v897
      %v1239 = vunpack.c.h.b16 %v897
      %v1240 = vunpack.c.l.b16 %v898
      %v1241 = vunpack.c.h.b16 %v898
      %v1242 = vunpack.c.l.b16 %v899
      %v1243 = vunpack.c.h.b16 %v899
      %v1244 = vunpack.c.l.b16 %v900
      %v1245 = vunpack.c.h.b16 %v900
      %v1246 = vunpack.c.l.b16 %v901
      %v1247 = vunpack.c.h.b16 %v901
      %v1248 = vunpack.c.l.b16 %v902
      %v1249 = vunpack.c.h.b16 %v902
      %v1250 = vunpack.c.l.b16 %v903
      %v1251 = vunpack.c.h.b16 %v903
      %v1252 = vunpack.c.l.b16 %v904
      %v1253 = vunpack.c.h.b16 %v904
      %v1254 = vunpack.c.l.b16 %v905
      %v1255 = vunpack.c.h.b16 %v905
      %v1256 = vunpack.c.l.b16 %v906
      %v1257 = vunpack.c.h.b16 %v906
      %v1258 = vunpack.c.l.b16 %v907
      %v1259 = vunpack.c.h.b16 %v907
      %v1260 = vunpack.c.l.b16 %v908
      %v1261 = vunpack.c.h.b16 %v908
      %v1262 = vunpack.c.l.b16 %v909
      %v1263 = vunpack.c.h.b16 %v909
      %v1264 = vunpack.c.l.b16 %v910
      %v1265 = vunpack.c.h.b16 %v910
      %v1266 = vunpack.c.l.b16 %v911
      %v1267 = vunpack.c.h.b16 %v911
      %v1268 = vunpack.c.l.b16 %v912
      %v1269 = vunpack.c.h.b16 %v912
      %v1270 = vunpack.c.l.b16 %v913
      %v1271 = vunpack.c.h.b16 %v913
      %v1272 = vunpack.c.l.b16 %v914
      %v1273 = vunpack.c.h.b16 %v914
      %v1274 = vunpack.c.l.b16 %v915
      %v1275 = vunpack.c.h.b16 %v915
      %v1276 = vunpack.c.l.b16 %v916
      %v1277 = vunpack.c.h.b16 %v916
      %v1278 = vunpack.c.l.b16 %v917
      %v1279 = vunpack.c.h.b16 %v917
      %v1280 = vunpack.c.l.b16 %v918
      %v1281 = vunpack.c.h.b16 %v918
      %v1282 = vunpack.c.l.b16 %v919
      %v1283 = vunpack.c.h.b16 %v919
      %v1284 = vunpack.c.l.b16 %v920
      %v1285 = vunpack.c.h.b16 %v920
      %v1286 = vunpack.c.l.b16 %v921
      %v1287 = vunpack.c.h.b16 %v921
      %v1288 = vunpack.c.l.b16 %v922
      %v1289 = vunpack.c.h.b16 %v922
      %v1290 = vpack.c.b16 %v1228, %v1226
      %v1291 = vpack.c.b16 %v1229, %v1227
      %v1292 = vpack.c.b16 %v1232, %v1230
      %v1293 = vpack.c.b16 %v1233, %v1231
      %v1294 = vpack.c.b16 %v1236, %v1234
      %v1295 = vpack.c.b16 %v1237, %v1235
      %v1296 = vpack.c.b16 %v1240, %v1238
      %v1297 = vpack.c.b16 %v1241, %v1239
      %v1298 = vpack.c.b16 %v1244, %v1242
      %v1299 = vpack.c.b16 %v1245, %v1243
      %v1300 = vpack.c.b16 %v1248, %v1246
      %v1301 = vpack.c.b16 %v1249, %v1247
      %v1302 = vpack.c.b16 %v1252, %v1250
      %v1303 = vpack.c.b16 %v1253, %v1251
      %v1304 = vpack.c.b16 %v1256, %v1254
      %v1305 = vpack.c.b16 %v1257, %v1255
      %v1306 = vpack.c.b16 %v1260, %v1258
      %v1307 = vpack.c.b16 %v1261, %v1259
      %v1308 = vpack.c.b16 %v1264, %v1262
      %v1309 = vpack.c.b16 %v1265, %v1263
      %v1310 = vpack.c.b16 %v1268, %v1266
      %v1311 = vpack.c.b16 %v1269, %v1267
      %v1312 = vpack.c.b16 %v1272, %v1270
      %v1313 = vpack.c.b16 %v1273, %v1271
      %v1314 = vpack.c.b16 %v1276, %v1274
      %v1315 = vpack.c.b16 %v1277, %v1275
      %v1316 = vpack.c.b16 %v1280, %v1278
      %v1317 = vpack.c.b16 %v1281, %v1279
      %v1318 = vpack.c.b16 %v1284, %v1282
      %v1319 = vpack.c.b16 %v1285, %v1283
      %v1320 = vpack.c.b16 %v1288, %v1286
      %v1321 = vpack.c.b16 %v1289, %v1287
      %1354 = vmatpush.bf16.msra.mxu0 %v1304
      %1355 = vmatpush.bf16.msra.mxu0 %v1302
      %1356 = vmatpush.bf16.msra.mxu0 %v1300
      %1357 = vmatpush.bf16.msra.mxu0 %v1298
      %1358 = vmatpush.bf16.msra.mxu0 %v1296
      %1359 = vmatpush.bf16.msra.mxu0 %v1294
      %1360 = vmatpush.bf16.msra.mxu0 %v1292
      %1361 = vmatpush.bf16.msra.mxu0 %v1290
      %1362 = vmatmul.bf16.gmra.mxu0 %v889
      %v1363 = vpop.f32.mrf.mxu0
      %v1364 = vadd.f32 %v1162, %v1363
      %v1365 = vpop.f32.mrf.mxu0
      %v1366 = vadd.f32 %v1164, %v1365
      %1367 = vdwg.mxu0
      %1368 = vmatpush.bf16.msra.mxu0 %v1320
      %1369 = vmatpush.bf16.msra.mxu0 %v1318
      %1370 = vmatpush.bf16.msra.mxu0 %v1316
      %1371 = vmatpush.bf16.msra.mxu0 %v1314
      %1372 = vmatpush.bf16.msra.mxu0 %v1312
      %1373 = vmatpush.bf16.msra.mxu0 %v1310
      %1374 = vmatpush.bf16.msra.mxu0 %v1308
      %1375 = vmatpush.bf16.msra.mxu0 %v1306
      %1376 = vmatmul.bf16.gmra.mxu0 %v890
      %v1377 = vpop.f32.mrf.mxu0
      %v1378 = vadd.f32 %v1364, %v1377
      %v1379 = vpop.f32.mrf.mxu0
      %v1380 = vadd.f32 %v1366, %v1379
      %1381 = vdwg.mxu0
      %1382 = vmatpush.bf16.msra.mxu0 %v1305
      %1383 = vmatpush.bf16.msra.mxu0 %v1303
      %1384 = vmatpush.bf16.msra.mxu0 %v1301
      %1385 = vmatpush.bf16.msra.mxu0 %v1299
      %1386 = vmatpush.bf16.msra.mxu0 %v1297
      %1387 = vmatpush.bf16.msra.mxu0 %v1295
      %1388 = vmatpush.bf16.msra.mxu0 %v1293
      %1389 = vmatpush.bf16.msra.mxu0 %v1291
      %1390 = vmatmul.bf16.gmra.mxu0 %v889
      %v1391 = vpop.f32.mrf.mxu0
      %v1392 = vadd.f32 %v1190, %v1391
      %v1393 = vpop.f32.mrf.mxu0
      %v1394 = vadd.f32 %v1192, %v1393
      %1395 = vdwg.mxu0
      %1396 = vmatpush.bf16.msra.mxu0 %v1321
      %1397 = vmatpush.bf16.msra.mxu0 %v1319
      %1398 = vmatpush.bf16.msra.mxu0 %v1317
      %1399 = vmatpush.bf16.msra.mxu0 %v1315
      %1400 = vmatpush.bf16.msra.mxu0 %v1313
      %1401 = vmatpush.bf16.msra.mxu0 %v1311
      %1402 = vmatpush.bf16.msra.mxu0 %v1309
      %1403 = vmatpush.bf16.msra.mxu0 %v1307
      %1404 = vmatmul.bf16.gmra.mxu0 %v890
      %v1405 = vpop.f32.mrf.mxu0
      %v1406 = vadd.f32 %v1392, %v1405
      %v1407 = vpop.f32.mrf.mxu0
      %v1408 = vadd.f32 %v1394, %v1407
      %1409 = vdwg.mxu0
      %v1410 = vld [vmem:[#allocation2] sm:$0xfc]
      %v1411 = vld [vmem:[#allocation2 + $0x8] sm:$0xfc]
      %v1412 = vld [vmem:[#allocation2 + $0x10] sm:$0xff]
      %v1413 = vld [vmem:[#allocation2 + $0x18] sm:$0xff]
      %v1414 = vpack.c.bf16 %v1412, %v1410
      %v1415 = vpack.c.bf16 %v1413, %v1411
      %s1416 = scalar_lea.vmem %s3, 512
      %v1417 = vld [vmem:[%s1416] sm:$0xff]
      %v1418 = vld [vmem:[%s1416 + $0x8] sm:$0xff]
      %v1419 = vld [vmem:[%s1416 + $0x10] sm:$0xff]
      %v1420 = vld [vmem:[%s1416 + $0x18] sm:$0xff]
      %v1421 = vld [vmem:[%s1416 + $0x20] sm:$0xff]
      %v1422 = vld [vmem:[%s1416 + $0x28] sm:$0xff]
      %v1423 = vld [vmem:[%s1416 + $0x30] sm:$0xff]
      %v1424 = vld [vmem:[%s1416 + $0x38] sm:$0xff]
      %v1425 = vld [vmem:[%s1416 + $0x40] sm:$0xff]
      %v1426 = vld [vmem:[%s1416 + $0x48] sm:$0xff]
      %v1427 = vld [vmem:[%s1416 + $0x50] sm:$0xff]
      %v1428 = vld [vmem:[%s1416 + $0x58] sm:$0xff]
      %v1429 = vld [vmem:[%s1416 + $0x60] sm:$0xff]
      %v1430 = vld [vmem:[%s1416 + $0x68] sm:$0xff]
      %v1431 = vld [vmem:[%s1416 + $0x70] sm:$0xff]
      %v1432 = vld [vmem:[%s1416 + $0x78] sm:$0xff]
      %v1433 = vld [vmem:[%s1416 + $0x80] sm:$0xff]
      %v1434 = vld [vmem:[%s1416 + $0x88] sm:$0xff]
      %v1435 = vld [vmem:[%s1416 + $0x90] sm:$0xff]
      %v1436 = vld [vmem:[%s1416 + $0x98] sm:$0xff]
      %v1437 = vld [vmem:[%s1416 + $0xa0] sm:$0xff]
      %v1438 = vld [vmem:[%s1416 + $0xa8] sm:$0xff]
      %v1439 = vld [vmem:[%s1416 + $0xb0] sm:$0xff]
      %v1440 = vld [vmem:[%s1416 + $0xb8] sm:$0xff]
      %v1441 = vld [vmem:[%s1416 + $0xc0] sm:$0xff]
      %v1442 = vld [vmem:[%s1416 + $0xc8] sm:$0xff]
      %v1443 = vld [vmem:[%s1416 + $0xd0] sm:$0xff]
      %v1444 = vld [vmem:[%s1416 + $0xd8] sm:$0xff]
      %v1445 = vld [vmem:[%s1416 + $0xe0] sm:$0xff]
      %v1446 = vld [vmem:[%s1416 + $0xe8] sm:$0xff]
      %v1447 = vld [vmem:[%s1416 + $0xf0] sm:$0xff]
      %v1448 = vld [vmem:[%s1416 + $0xf8] sm:$0xff]
      %v1451 = vrot.slane %v1414, 1
      %v1452 = vrot.slane %v1415, 1
      %v1487 = vunpack.c.l.b16 %v1417
      %v1488 = vunpack.c.h.b16 %v1417
      %v1489 = vunpack.c.l.b16 %v1418
      %v1490 = vunpack.c.h.b16 %v1418
      %v1491 = vunpack.c.l.b16 %v1419
      %v1492 = vunpack.c.h.b16 %v1419
      %v1493 = vunpack.c.l.b16 %v1420
      %v1494 = vunpack.c.h.b16 %v1420
      %v1495 = vunpack.c.l.b16 %v1421
      %v1496 = vunpack.c.h.b16 %v1421
      %v1497 = vunpack.c.l.b16 %v1422
      %v1498 = vunpack.c.h.b16 %v1422
      %v1499 = vunpack.c.l.b16 %v1423
      %v1500 = vunpack.c.h.b16 %v1423
      %v1501 = vunpack.c.l.b16 %v1424
      %v1502 = vunpack.c.h.b16 %v1424
      %v1503 = vunpack.c.l.b16 %v1425
      %v1504 = vunpack.c.h.b16 %v1425
      %v1505 = vunpack.c.l.b16 %v1426
      %v1506 = vunpack.c.h.b16 %v1426
      %v1507 = vunpack.c.l.b16 %v1427
      %v1508 = vunpack.c.h.b16 %v1427
      %v1509 = vunpack.c.l.b16 %v1428
      %v1510 = vunpack.c.h.b16 %v1428
      %v1511 = vunpack.c.l.b16 %v1429
      %v1512 = vunpack.c.h.b16 %v1429
      %v1513 = vunpack.c.l.b16 %v1430
      %v1514 = vunpack.c.h.b16 %v1430
      %v1515 = vunpack.c.l.b16 %v1431
      %v1516 = vunpack.c.h.b16 %v1431
      %v1517 = vunpack.c.l.b16 %v1432
      %v1518 = vunpack.c.h.b16 %v1432
      %v1519 = vunpack.c.l.b16 %v1433
      %v1520 = vunpack.c.h.b16 %v1433
      %v1521 = vunpack.c.l.b16 %v1434
      %v1522 = vunpack.c.h.b16 %v1434
      %v1523 = vunpack.c.l.b16 %v1435
      %v1524 = vunpack.c.h.b16 %v1435
      %v1525 = vunpack.c.l.b16 %v1436
      %v1526 = vunpack.c.h.b16 %v1436
      %v1527 = vunpack.c.l.b16 %v1437
      %v1528 = vunpack.c.h.b16 %v1437
      %v1529 = vunpack.c.l.b16 %v1438
      %v1530 = vunpack.c.h.b16 %v1438
      %v1531 = vunpack.c.l.b16 %v1439
      %v1532 = vunpack.c.h.b16 %v1439
      %v1533 = vunpack.c.l.b16 %v1440
      %v1534 = vunpack.c.h.b16 %v1440
      %v1535 = vunpack.c.l.b16 %v1441
      %v1536 = vunpack.c.h.b16 %v1441
      %v1537 = vunpack.c.l.b16 %v1442
      %v1538 = vunpack.c.h.b16 %v1442
      %v1539 = vunpack.c.l.b16 %v1443
      %v1540 = vunpack.c.h.b16 %v1443
      %v1541 = vunpack.c.l.b16 %v1444
      %v1542 = vunpack.c.h.b16 %v1444
      %v1543 = vunpack.c.l.b16 %v1445
      %v1544 = vunpack.c.h.b16 %v1445
      %v1545 = vunpack.c.l.b16 %v1446
      %v1546 = vunpack.c.h.b16 %v1446
      %v1547 = vunpack.c.l.b16 %v1447
      %v1548 = vunpack.c.h.b16 %v1447
      %v1549 = vunpack.c.l.b16 %v1448
      %v1550 = vunpack.c.h.b16 %v1448
      %v1551 = vpack.c.b16 %v1489, %v1487
      %v1552 = vpack.c.b16 %v1490, %v1488
      %v1553 = vpack.c.b16 %v1493, %v1491
      %v1554 = vpack.c.b16 %v1494, %v1492
      %v1555 = vpack.c.b16 %v1497, %v1495
      %v1556 = vpack.c.b16 %v1498, %v1496
      %v1557 = vpack.c.b16 %v1501, %v1499
      %v1558 = vpack.c.b16 %v1502, %v1500
      %v1559 = vpack.c.b16 %v1505, %v1503
      %v1560 = vpack.c.b16 %v1506, %v1504
      %v1561 = vpack.c.b16 %v1509, %v1507
      %v1562 = vpack.c.b16 %v1510, %v1508
      %v1563 = vpack.c.b16 %v1513, %v1511
      %v1564 = vpack.c.b16 %v1514, %v1512
      %v1565 = vpack.c.b16 %v1517, %v1515
      %v1566 = vpack.c.b16 %v1518, %v1516
      %v1567 = vpack.c.b16 %v1521, %v1519
      %v1568 = vpack.c.b16 %v1522, %v1520
      %v1569 = vpack.c.b16 %v1525, %v1523
      %v1570 = vpack.c.b16 %v1526, %v1524
      %v1571 = vpack.c.b16 %v1529, %v1527
      %v1572 = vpack.c.b16 %v1530, %v1528
      %v1573 = vpack.c.b16 %v1533, %v1531
      %v1574 = vpack.c.b16 %v1534, %v1532
      %v1575 = vpack.c.b16 %v1537, %v1535
      %v1576 = vpack.c.b16 %v1538, %v1536
      %v1577 = vpack.c.b16 %v1541, %v1539
      %v1578 = vpack.c.b16 %v1542, %v1540
      %v1579 = vpack.c.b16 %v1545, %v1543
      %v1580 = vpack.c.b16 %v1546, %v1544
      %v1581 = vpack.c.b16 %v1549, %v1547
      %v1582 = vpack.c.b16 %v1550, %v1548
      %1615 = vmatpush.bf16.msra.mxu0 %v1565
      %1616 = vmatpush.bf16.msra.mxu0 %v1563
      %1617 = vmatpush.bf16.msra.mxu0 %v1561
      %1618 = vmatpush.bf16.msra.mxu0 %v1559
      %1619 = vmatpush.bf16.msra.mxu0 %v1557
      %1620 = vmatpush.bf16.msra.mxu0 %v1555
      %1621 = vmatpush.bf16.msra.mxu0 %v1553
      %1622 = vmatpush.bf16.msra.mxu0 %v1551
      %1623 = vmatmul.bf16.gmra.mxu0 %v1451
      %v1624 = vpop.f32.mrf.mxu0
      %v1625 = vadd.f32 0.0, %v1624
      %v1626 = vpop.f32.mrf.mxu0
      %v1627 = vadd.f32 0.0, %v1626
      %1628 = vdwg.mxu0
      %1629 = vmatpush.bf16.msra.mxu0 %v1581
      %1630 = vmatpush.bf16.msra.mxu0 %v1579
      %1631 = vmatpush.bf16.msra.mxu0 %v1577
      %1632 = vmatpush.bf16.msra.mxu0 %v1575
      %1633 = vmatpush.bf16.msra.mxu0 %v1573
      %1634 = vmatpush.bf16.msra.mxu0 %v1571
      %1635 = vmatpush.bf16.msra.mxu0 %v1569
      %1636 = vmatpush.bf16.msra.mxu0 %v1567
      %1637 = vmatmul.bf16.gmra.mxu0 %v1452
      %v1638 = vpop.f32.mrf.mxu0
      %v1639 = vadd.f32 %v1625, %v1638
      %v1640 = vpop.f32.mrf.mxu0
      %v1641 = vadd.f32 %v1627, %v1640
      %1642 = vdwg.mxu0
      %1643 = vmatpush.bf16.msra.mxu0 %v1566
      %1644 = vmatpush.bf16.msra.mxu0 %v1564
      %1645 = vmatpush.bf16.msra.mxu0 %v1562
      %1646 = vmatpush.bf16.msra.mxu0 %v1560
      %1647 = vmatpush.bf16.msra.mxu0 %v1558
      %1648 = vmatpush.bf16.msra.mxu0 %v1556
      %1649 = vmatpush.bf16.msra.mxu0 %v1554
      %1650 = vmatpush.bf16.msra.mxu0 %v1552
      %1651 = vmatmul.bf16.gmra.mxu0 %v1451
      %v1652 = vpop.f32.mrf.mxu0
      %v1653 = vadd.f32 0.0, %v1652
      %v1654 = vpop.f32.mrf.mxu0
      %v1655 = vadd.f32 0.0, %v1654
      %1656 = vdwg.mxu0
      %1657 = vmatpush.bf16.msra.mxu0 %v1582
      %1658 = vmatpush.bf16.msra.mxu0 %v1580
      %1659 = vmatpush.bf16.msra.mxu0 %v1578
      %1660 = vmatpush.bf16.msra.mxu0 %v1576
      %1661 = vmatpush.bf16.msra.mxu0 %v1574
      %1662 = vmatpush.bf16.msra.mxu0 %v1572
      %1663 = vmatpush.bf16.msra.mxu0 %v1570
      %1664 = vmatpush.bf16.msra.mxu0 %v1568
      %1665 = vmatmul.bf16.gmra.mxu0 %v1452
      %v1666 = vpop.f32.mrf.mxu0
      %v1667 = vadd.f32 %v1653, %v1666
      %v1668 = vpop.f32.mrf.mxu0
      %v1669 = vadd.f32 %v1655, %v1668
      %1670 = vdwg.mxu0
      %v1671 = vadd.f32 %v1378, %v1639
      %v1672 = vadd.f32 %v1406, %v1667
      %v1673 = vadd.f32 %v1380, %v1641
      %v1674 = vadd.f32 %v1408, %v1669
      %v1675 = vld [vmem:[%s4] sm:$0x3]
      %v1677 = vperm.slane %v1675, 0
      %v1678 = vperm.slane %v1675, 1
      %v1681 = vadd.f32 %v1671, %v1677
      %v1682 = vadd.f32 %v1672, %v1678
      %v1683 = vadd.f32 %v1673, %v1677
      %v1684 = vadd.f32 %v1674, %v1678
      %v1685 = vmax.f32 %v1681, 0.0
      %v1686 = vmax.f32 %v1682, 0.0
      %v1687 = vmax.f32 %v1683, 0.0
      %v1688 = vmax.f32 %v1684, 0.0
      %v1693 = vrot.slane %v1685, 7
      %v1694 = vrot.slane %v1686, 7
      %v1695 = vrot.slane %v1687, 7
      %v1696 = vsel %vm855, %v1693, %v1695
      %v1697 = vrot.slane %v1688, 7
      %v1698 = vsel %vm855, %v1694, %v1697
      %1699 = vrot.lane.b32.xlu0 %v1693, 16
      %v1700 = vpop.permute.xlu0 %1699
      %1701 = vrot.lane.b32.xlu0 %v1694, 16
      %v1702 = vpop.permute.xlu0 %1701
      %1703 = vrot.lane.b32.xlu0 %v1696, 16
      %v1704 = vpop.permute.xlu0 %1703
      %1705 = vrot.lane.b32.xlu0 %v1698, 16
      %v1706 = vpop.permute.xlu0 %1705
      %v1707 = vsel %vm870, %v1700, %v1702
      %v1708 = vsel %vm870, %v1704, %v1706
      %1713 = vst.msk [vmem:[#allocation3] sm:$0xfe] %vm877, %v1700
      %1714 = vst.msk [vmem:[#allocation3 + $0x8] sm:$0xfe] %vm879, %v1707
      %1715 = vst.msk [vmem:[#allocation3 + $0x10] sm:$0x7f] %vm881, %v1704
      %1716 = vst.msk [vmem:[#allocation3 + $0x18] sm:$0x7f] %vm883, %v1708
      %v1717 = vld [vmem:[#allocation3] sm:$0xff]
      %v1718 = vld [vmem:[#allocation3 + $0x8] sm:$0xff]
      %v1719 = vld [vmem:[#allocation3 + $0x10] sm:$0x3f]
      %v1720 = vld [vmem:[#allocation3 + $0x18] sm:$0x3f]
      %v1721 = vpack.c.bf16 %v1719, %v1717
      %v1722 = vpack.c.bf16 %v1720, %v1718
      %v1723 = vld [vmem:[%s5] sm:$0xff]
      %v1724 = vld [vmem:[%s5 + $0x8] sm:$0xff]
      %v1725 = vld [vmem:[%s5 + $0x10] sm:$0xff]
      %v1726 = vld [vmem:[%s5 + $0x18] sm:$0xff]
      %v1727 = vld [vmem:[%s5 + $0x20] sm:$0xff]
      %v1728 = vld [vmem:[%s5 + $0x28] sm:$0xff]
      %v1729 = vld [vmem:[%s5 + $0x30] sm:$0xff]
      %v1730 = vld [vmem:[%s5 + $0x38] sm:$0xff]
      %v1731 = vld [vmem:[%s5 + $0x40] sm:$0xff]
      %v1732 = vld [vmem:[%s5 + $0x48] sm:$0xff]
      %v1733 = vld [vmem:[%s5 + $0x50] sm:$0xff]
      %v1734 = vld [vmem:[%s5 + $0x58] sm:$0xff]
      %v1735 = vld [vmem:[%s5 + $0x60] sm:$0xff]
      %v1736 = vld [vmem:[%s5 + $0x68] sm:$0xff]
      %v1737 = vld [vmem:[%s5 + $0x70] sm:$0xff]
      %v1738 = vld [vmem:[%s5 + $0x78] sm:$0xff]
      %v1739 = vld [vmem:[%s5 + $0x80] sm:$0xff]
      %v1740 = vld [vmem:[%s5 + $0x88] sm:$0xff]
      %v1741 = vld [vmem:[%s5 + $0x90] sm:$0xff]
      %v1742 = vld [vmem:[%s5 + $0x98] sm:$0xff]
      %v1743 = vld [vmem:[%s5 + $0xa0] sm:$0xff]
      %v1744 = vld [vmem:[%s5 + $0xa8] sm:$0xff]
      %v1745 = vld [vmem:[%s5 + $0xb0] sm:$0xff]
      %v1746 = vld [vmem:[%s5 + $0xb8] sm:$0xff]
      %v1747 = vld [vmem:[%s5 + $0xc0] sm:$0xff]
      %v1748 = vld [vmem:[%s5 + $0xc8] sm:$0xff]
      %v1749 = vld [vmem:[%s5 + $0xd0] sm:$0xff]
      %v1750 = vld [vmem:[%s5 + $0xd8] sm:$0xff]
      %v1751 = vld [vmem:[%s5 + $0xe0] sm:$0xff]
      %v1752 = vld [vmem:[%s5 + $0xe8] sm:$0xff]
      %v1753 = vld [vmem:[%s5 + $0xf0] sm:$0xff]
      %v1754 = vld [vmem:[%s5 + $0xf8] sm:$0xff]
      %v1755 = vld [vmem:[#allocation3] sm:$0xfe]
      %v1756 = vld [vmem:[#allocation3 + $0x8] sm:$0xfe]
      %v1757 = vld [vmem:[#allocation3 + $0x10] sm:$0x7f]
      %v1758 = vld [vmem:[#allocation3 + $0x18] sm:$0x7f]
      %v1759 = vpack.c.bf16 %v1757, %v1755
      %v1760 = vpack.c.bf16 %v1758, %v1756
      %s1761 = scalar_lea.vmem %s5, 256
      %v1762 = vld [vmem:[%s1761] sm:$0xff]
      %v1763 = vld [vmem:[%s1761 + $0x8] sm:$0xff]
      %v1764 = vld [vmem:[%s1761 + $0x10] sm:$0xff]
      %v1765 = vld [vmem:[%s1761 + $0x18] sm:$0xff]
      %v1766 = vld [vmem:[%s1761 + $0x20] sm:$0xff]
      %v1767 = vld [vmem:[%s1761 + $0x28] sm:$0xff]
      %v1768 = vld [vmem:[%s1761 + $0x30] sm:$0xff]
      %v1769 = vld [vmem:[%s1761 + $0x38] sm:$0xff]
      %v1770 = vld [vmem:[%s1761 + $0x40] sm:$0xff]
      %v1771 = vld [vmem:[%s1761 + $0x48] sm:$0xff]
      %v1772 = vld [vmem:[%s1761 + $0x50] sm:$0xff]
      %v1773 = vld [vmem:[%s1761 + $0x58] sm:$0xff]
      %v1774 = vld [vmem:[%s1761 + $0x60] sm:$0xff]
      %v1775 = vld [vmem:[%s1761 + $0x68] sm:$0xff]
      %v1776 = vld [vmem:[%s1761 + $0x70] sm:$0xff]
      %v1777 = vld [vmem:[%s1761 + $0x78] sm:$0xff]
      %v1778 = vld [vmem:[%s1761 + $0x80] sm:$0xff]
      %v1779 = vld [vmem:[%s1761 + $0x88] sm:$0xff]
      %v1780 = vld [vmem:[%s1761 + $0x90] sm:$0xff]
      %v1781 = vld [vmem:[%s1761 + $0x98] sm:$0xff]
      %v1782 = vld [vmem:[%s1761 + $0xa0] sm:$0xff]
      %v1783 = vld [vmem:[%s1761 + $0xa8] sm:$0xff]
      %v1784 = vld [vmem:[%s1761 + $0xb0] sm:$0xff]
      %v1785 = vld [vmem:[%s1761 + $0xb8] sm:$0xff]
      %v1786 = vld [vmem:[%s1761 + $0xc0] sm:$0xff]
      %v1787 = vld [vmem:[%s1761 + $0xc8] sm:$0xff]
      %v1788 = vld [vmem:[%s1761 + $0xd0] sm:$0xff]
      %v1789 = vld [vmem:[%s1761 + $0xd8] sm:$0xff]
      %v1790 = vld [vmem:[%s1761 + $0xe0] sm:$0xff]
      %v1791 = vld [vmem:[%s1761 + $0xe8] sm:$0xff]
      %v1792 = vld [vmem:[%s1761 + $0xf0] sm:$0xff]
      %v1793 = vld [vmem:[%s1761 + $0xf8] sm:$0xff]
      %v1795 = vshrl.u32 %v1759, 16
      %v1797 = vshll.u32 %v1759, 16
      %v1799 = vrot.slane %v1797, 1
      %v1800 = vor.u32 %v1795, %v1799
      %v1802 = vshrl.u32 %v1760, 16
      %v1804 = vshll.u32 %v1760, 16
      %v1806 = vrot.slane %v1804, 1
      %v1807 = vor.u32 %v1802, %v1806
      %v1842 = vunpack.c.l.b16 %v1762
      %v1843 = vunpack.c.h.b16 %v1762
      %v1844 = vunpack.c.l.b16 %v1763
      %v1845 = vunpack.c.h.b16 %v1763
      %v1846 = vunpack.c.l.b16 %v1764
      %v1847 = vunpack.c.h.b16 %v1764
      %v1848 = vunpack.c.l.b16 %v1765
      %v1849 = vunpack.c.h.b16 %v1765
      %v1850 = vunpack.c.l.b16 %v1766
      %v1851 = vunpack.c.h.b16 %v1766
      %v1852 = vunpack.c.l.b16 %v1767
      %v1853 = vunpack.c.h.b16 %v1767
      %v1854 = vunpack.c.l.b16 %v1768
      %v1855 = vunpack.c.h.b16 %v1768
      %v1856 = vunpack.c.l.b16 %v1769
      %v1857 = vunpack.c.h.b16 %v1769
      %v1858 = vunpack.c.l.b16 %v1770
      %v1859 = vunpack.c.h.b16 %v1770
      %v1860 = vunpack.c.l.b16 %v1771
      %v1861 = vunpack.c.h.b16 %v1771
      %v1862 = vunpack.c.l.b16 %v1772
      %v1863 = vunpack.c.h.b16 %v1772
      %v1864 = vunpack.c.l.b16 %v1773
      %v1865 = vunpack.c.h.b16 %v1773
      %v1866 = vunpack.c.l.b16 %v1774
      %v1867 = vunpack.c.h.b16 %v1774
      %v1868 = vunpack.c.l.b16 %v1775
      %v1869 = vunpack.c.h.b16 %v1775
      %v1870 = vunpack.c.l.b16 %v1776
      %v1871 = vunpack.c.h.b16 %v1776
      %v1872 = vunpack.c.l.b16 %v1777
      %v1873 = vunpack.c.h.b16 %v1777
      %v1874 = vunpack.c.l.b16 %v1778
      %v1875 = vunpack.c.h.b16 %v1778
      %v1876 = vunpack.c.l.b16 %v1779
      %v1877 = vunpack.c.h.b16 %v1779
      %v1878 = vunpack.c.l.b16 %v1780
      %v1879 = vunpack.c.h.b16 %v1780
      %v1880 = vunpack.c.l.b16 %v1781
      %v1881 = vunpack.c.h.b16 %v1781
      %v1882 = vunpack.c.l.b16 %v1782
      %v1883 = vunpack.c.h.b16 %v1782
      %v1884 = vunpack.c.l.b16 %v1783
      %v1885 = vunpack.c.h.b16 %v1783
      %v1886 = vunpack.c.l.b16 %v1784
      %v1887 = vunpack.c.h.b16 %v1784
      %v1888 = vunpack.c.l.b16 %v1785
      %v1889 = vunpack.c.h.b16 %v1785
      %v1890 = vunpack.c.l.b16 %v1786
      %v1891 = vunpack.c.h.b16 %v1786
      %v1892 = vunpack.c.l.b16 %v1787
      %v1893 = vunpack.c.h.b16 %v1787
      %v1894 = vunpack.c.l.b16 %v1788
      %v1895 = vunpack.c.h.b16 %v1788
      %v1896 = vunpack.c.l.b16 %v1789
      %v1897 = vunpack.c.h.b16 %v1789
      %v1898 = vunpack.c.l.b16 %v1790
      %v1899 = vunpack.c.h.b16 %v1790
      %v1900 = vunpack.c.l.b16 %v1791
      %v1901 = vunpack.c.h.b16 %v1791
      %v1902 = vunpack.c.l.b16 %v1792
      %v1903 = vunpack.c.h.b16 %v1792
      %v1904 = vunpack.c.l.b16 %v1793
      %v1905 = vunpack.c.h.b16 %v1793
      %v1906 = vpack.c.b16 %v1844, %v1842
      %v1907 = vpack.c.b16 %v1845, %v1843
      %v1908 = vpack.c.b16 %v1848, %v1846
      %v1909 = vpack.c.b16 %v1849, %v1847
      %v1910 = vpack.c.b16 %v1852, %v1850
      %v1911 = vpack.c.b16 %v1853, %v1851
      %v1912 = vpack.c.b16 %v1856, %v1854
      %v1913 = vpack.c.b16 %v1857, %v1855
      %v1914 = vpack.c.b16 %v1860, %v1858
      %v1915 = vpack.c.b16 %v1861, %v1859
      %v1916 = vpack.c.b16 %v1864, %v1862
      %v1917 = vpack.c.b16 %v1865, %v1863
      %v1918 = vpack.c.b16 %v1868, %v1866
      %v1919 = vpack.c.b16 %v1869, %v1867
      %v1920 = vpack.c.b16 %v1872, %v1870
      %v1921 = vpack.c.b16 %v1873, %v1871
      %v1922 = vpack.c.b16 %v1876, %v1874
      %v1923 = vpack.c.b16 %v1877, %v1875
      %v1924 = vpack.c.b16 %v1880, %v1878
      %v1925 = vpack.c.b16 %v1881, %v1879
      %v1926 = vpack.c.b16 %v1884, %v1882
      %v1927 = vpack.c.b16 %v1885, %v1883
      %v1928 = vpack.c.b16 %v1888, %v1886
      %v1929 = vpack.c.b16 %v1889, %v1887
      %v1930 = vpack.c.b16 %v1892, %v1890
      %v1931 = vpack.c.b16 %v1893, %v1891
      %v1932 = vpack.c.b16 %v1896, %v1894
      %v1933 = vpack.c.b16 %v1897, %v1895
      %v1934 = vpack.c.b16 %v1900, %v1898
      %v1935 = vpack.c.b16 %v1901, %v1899
      %v1936 = vpack.c.b16 %v1904, %v1902
      %v1937 = vpack.c.b16 %v1905, %v1903
      %1970 = vmatpush.bf16.msra.mxu0 %v1920
      %1971 = vmatpush.bf16.msra.mxu0 %v1918
      %1972 = vmatpush.bf16.msra.mxu0 %v1916
      %1973 = vmatpush.bf16.msra.mxu0 %v1914
      %1974 = vmatpush.bf16.msra.mxu0 %v1912
      %1975 = vmatpush.bf16.msra.mxu0 %v1910
      %1976 = vmatpush.bf16.msra.mxu0 %v1908
      %1977 = vmatpush.bf16.msra.mxu0 %v1906
      %1978 = vmatmul.bf16.gmra.mxu0 %v1800
      %v1979 = vpop.f32.mrf.mxu0
      %v1980 = vadd.f32 0.0, %v1979
      %v1981 = vpop.f32.mrf.mxu0
      %v1982 = vadd.f32 0.0, %v1981
      %1983 = vdwg.mxu0
      %1984 = vmatpush.bf16.msra.mxu0 %v1936
      %1985 = vmatpush.bf16.msra.mxu0 %v1934
      %1986 = vmatpush.bf16.msra.mxu0 %v1932
      %1987 = vmatpush.bf16.msra.mxu0 %v1930
      %1988 = vmatpush.bf16.msra.mxu0 %v1928
      %1989 = vmatpush.bf16.msra.mxu0 %v1926
      %1990 = vmatpush.bf16.msra.mxu0 %v1924
      %1991 = vmatpush.bf16.msra.mxu0 %v1922
      %1992 = vmatmul.bf16.gmra.mxu0 %v1807
      %v1993 = vpop.f32.mrf.mxu0
      %v1994 = vadd.f32 %v1980, %v1993
      %v1995 = vpop.f32.mrf.mxu0
      %v1996 = vadd.f32 %v1982, %v1995
      %1997 = vdwg.mxu0
      %1998 = vmatpush.bf16.msra.mxu0 %v1921
      %1999 = vmatpush.bf16.msra.mxu0 %v1919
      %2000 = vmatpush.bf16.msra.mxu0 %v1917
      %2001 = vmatpush.bf16.msra.mxu0 %v1915
      %2002 = vmatpush.bf16.msra.mxu0 %v1913
      %2003 = vmatpush.bf16.msra.mxu0 %v1911
      %2004 = vmatpush.bf16.msra.mxu0 %v1909
      %2005 = vmatpush.bf16.msra.mxu0 %v1907
      %2006 = vmatmul.bf16.gmra.mxu0 %v1800
      %v2007 = vpop.f32.mrf.mxu0
      %v2008 = vadd.f32 0.0, %v2007
      %v2009 = vpop.f32.mrf.mxu0
      %v2010 = vadd.f32 0.0, %v2009
      %2011 = vdwg.mxu0
      %2012 = vmatpush.bf16.msra.mxu0 %v1937
      %2013 = vmatpush.bf16.msra.mxu0 %v1935
      %2014 = vmatpush.bf16.msra.mxu0 %v1933
      %2015 = vmatpush.bf16.msra.mxu0 %v1931
      %2016 = vmatpush.bf16.msra.mxu0 %v1929
      %2017 = vmatpush.bf16.msra.mxu0 %v1927
      %2018 = vmatpush.bf16.msra.mxu0 %v1925
      %2019 = vmatpush.bf16.msra.mxu0 %v1923
      %2020 = vmatmul.bf16.gmra.mxu0 %v1807
      %v2021 = vpop.f32.mrf.mxu0
      %v2022 = vadd.f32 %v2008, %v2021
      %v2023 = vpop.f32.mrf.mxu0
      %v2024 = vadd.f32 %v2010, %v2023
      %2025 = vdwg.mxu0
      %v2058 = vunpack.c.l.b16 %v1723
      %v2059 = vunpack.c.h.b16 %v1723
      %v2060 = vunpack.c.l.b16 %v1724
      %v2061 = vunpack.c.h.b16 %v1724
      %v2062 = vunpack.c.l.b16 %v1725
      %v2063 = vunpack.c.h.b16 %v1725
      %v2064 = vunpack.c.l.b16 %v1726
      %v2065 = vunpack.c.h.b16 %v1726
      %v2066 = vunpack.c.l.b16 %v1727
      %v2067 = vunpack.c.h.b16 %v1727
      %v2068 = vunpack.c.l.b16 %v1728
      %v2069 = vunpack.c.h.b16 %v1728
      %v2070 = vunpack.c.l.b16 %v1729
      %v2071 = vunpack.c.h.b16 %v1729
      %v2072 = vunpack.c.l.b16 %v1730
      %v2073 = vunpack.c.h.b16 %v1730
      %v2074 = vunpack.c.l.b16 %v1731
      %v2075 = vunpack.c.h.b16 %v1731
      %v2076 = vunpack.c.l.b16 %v1732
      %v2077 = vunpack.c.h.b16 %v1732
      %v2078 = vunpack.c.l.b16 %v1733
      %v2079 = vunpack.c.h.b16 %v1733
      %v2080 = vunpack.c.l.b16 %v1734
      %v2081 = vunpack.c.h.b16 %v1734
      %v2082 = vunpack.c.l.b16 %v1735
      %v2083 = vunpack.c.h.b16 %v1735
      %v2084 = vunpack.c.l.b16 %v1736
      %v2085 = vunpack.c.h.b16 %v1736
      %v2086 = vunpack.c.l.b16 %v1737
      %v2087 = vunpack.c.h.b16 %v1737
      %v2088 = vunpack.c.l.b16 %v1738
      %v2089 = vunpack.c.h.b16 %v1738
      %v2090 = vunpack.c.l.b16 %v1739
      %v2091 = vunpack.c.h.b16 %v1739
      %v2092 = vunpack.c.l.b16 %v1740
      %v2093 = vunpack.c.h.b16 %v1740
      %v2094 = vunpack.c.l.b16 %v1741
      %v2095 = vunpack.c.h.b16 %v1741
      %v2096 = vunpack.c.l.b16 %v1742
      %v2097 = vunpack.c.h.b16 %v1742
      %v2098 = vunpack.c.l.b16 %v1743
      %v2099 = vunpack.c.h.b16 %v1743
      %v2100 = vunpack.c.l.b16 %v1744
      %v2101 = vunpack.c.h.b16 %v1744
      %v2102 = vunpack.c.l.b16 %v1745
      %v2103 = vunpack.c.h.b16 %v1745
      %v2104 = vunpack.c.l.b16 %v1746
      %v2105 = vunpack.c.h.b16 %v1746
      %v2106 = vunpack.c.l.b16 %v1747
      %v2107 = vunpack.c.h.b16 %v1747
      %v2108 = vunpack.c.l.b16 %v1748
      %v2109 = vunpack.c.h.b16 %v1748
      %v2110 = vunpack.c.l.b16 %v1749
      %v2111 = vunpack.c.h.b16 %v1749
      %v2112 = vunpack.c.l.b16 %v1750
      %v2113 = vunpack.c.h.b16 %v1750
      %v2114 = vunpack.c.l.b16 %v1751
      %v2115 = vunpack.c.h.b16 %v1751
      %v2116 = vunpack.c.l.b16 %v1752
      %v2117 = vunpack.c.h.b16 %v1752
      %v2118 = vunpack.c.l.b16 %v1753
      %v2119 = vunpack.c.h.b16 %v1753
      %v2120 = vunpack.c.l.b16 %v1754
      %v2121 = vunpack.c.h.b16 %v1754
      %v2122 = vpack.c.b16 %v2060, %v2058
      %v2123 = vpack.c.b16 %v2061, %v2059
      %v2124 = vpack.c.b16 %v2064, %v2062
      %v2125 = vpack.c.b16 %v2065, %v2063
      %v2126 = vpack.c.b16 %v2068, %v2066
      %v2127 = vpack.c.b16 %v2069, %v2067
      %v2128 = vpack.c.b16 %v2072, %v2070
      %v2129 = vpack.c.b16 %v2073, %v2071
      %v2130 = vpack.c.b16 %v2076, %v2074
      %v2131 = vpack.c.b16 %v2077, %v2075
      %v2132 = vpack.c.b16 %v2080, %v2078
      %v2133 = vpack.c.b16 %v2081, %v2079
      %v2134 = vpack.c.b16 %v2084, %v2082
      %v2135 = vpack.c.b16 %v2085, %v2083
      %v2136 = vpack.c.b16 %v2088, %v2086
      %v2137 = vpack.c.b16 %v2089, %v2087
      %v2138 = vpack.c.b16 %v2092, %v2090
      %v2139 = vpack.c.b16 %v2093, %v2091
      %v2140 = vpack.c.b16 %v2096, %v2094
      %v2141 = vpack.c.b16 %v2097, %v2095
      %v2142 = vpack.c.b16 %v2100, %v2098
      %v2143 = vpack.c.b16 %v2101, %v2099
      %v2144 = vpack.c.b16 %v2104, %v2102
      %v2145 = vpack.c.b16 %v2105, %v2103
      %v2146 = vpack.c.b16 %v2108, %v2106
      %v2147 = vpack.c.b16 %v2109, %v2107
      %v2148 = vpack.c.b16 %v2112, %v2110
      %v2149 = vpack.c.b16 %v2113, %v2111
      %v2150 = vpack.c.b16 %v2116, %v2114
      %v2151 = vpack.c.b16 %v2117, %v2115
      %v2152 = vpack.c.b16 %v2120, %v2118
      %v2153 = vpack.c.b16 %v2121, %v2119
      %2186 = vmatpush.bf16.msra.mxu0 %v2136
      %2187 = vmatpush.bf16.msra.mxu0 %v2134
      %2188 = vmatpush.bf16.msra.mxu0 %v2132
      %2189 = vmatpush.bf16.msra.mxu0 %v2130
      %2190 = vmatpush.bf16.msra.mxu0 %v2128
      %2191 = vmatpush.bf16.msra.mxu0 %v2126
      %2192 = vmatpush.bf16.msra.mxu0 %v2124
      %2193 = vmatpush.bf16.msra.mxu0 %v2122
      %2194 = vmatmul.bf16.gmra.mxu0 %v1721
      %v2195 = vpop.f32.mrf.mxu0
      %v2196 = vadd.f32 %v1994, %v2195
      %v2197 = vpop.f32.mrf.mxu0
      %v2198 = vadd.f32 %v1996, %v2197
      %2199 = vdwg.mxu0
      %2200 = vmatpush.bf16.msra.mxu0 %v2152
      %2201 = vmatpush.bf16.msra.mxu0 %v2150
      %2202 = vmatpush.bf16.msra.mxu0 %v2148
      %2203 = vmatpush.bf16.msra.mxu0 %v2146
      %2204 = vmatpush.bf16.msra.mxu0 %v2144
      %2205 = vmatpush.bf16.msra.mxu0 %v2142
      %2206 = vmatpush.bf16.msra.mxu0 %v2140
      %2207 = vmatpush.bf16.msra.mxu0 %v2138
      %2208 = vmatmul.bf16.gmra.mxu0 %v1722
      %v2209 = vpop.f32.mrf.mxu0
      %v2210 = vadd.f32 %v2196, %v2209
      %v2211 = vpop.f32.mrf.mxu0
      %v2212 = vadd.f32 %v2198, %v2211
      %2213 = vdwg.mxu0
      %2214 = vmatpush.bf16.msra.mxu0 %v2137
      %2215 = vmatpush.bf16.msra.mxu0 %v2135
      %2216 = vmatpush.bf16.msra.mxu0 %v2133
      %2217 = vmatpush.bf16.msra.mxu0 %v2131
      %2218 = vmatpush.bf16.msra.mxu0 %v2129
      %2219 = vmatpush.bf16.msra.mxu0 %v2127
      %2220 = vmatpush.bf16.msra.mxu0 %v2125
      %2221 = vmatpush.bf16.msra.mxu0 %v2123
      %2222 = vmatmul.bf16.gmra.mxu0 %v1721
      %v2223 = vpop.f32.mrf.mxu0
      %v2224 = vadd.f32 %v2022, %v2223
      %v2225 = vpop.f32.mrf.mxu0
      %v2226 = vadd.f32 %v2024, %v2225
      %2227 = vdwg.mxu0
      %2228 = vmatpush.bf16.msra.mxu0 %v2153
      %2229 = vmatpush.bf16.msra.mxu0 %v2151
      %2230 = vmatpush.bf16.msra.mxu0 %v2149
      %2231 = vmatpush.bf16.msra.mxu0 %v2147
      %2232 = vmatpush.bf16.msra.mxu0 %v2145
      %2233 = vmatpush.bf16.msra.mxu0 %v2143
      %2234 = vmatpush.bf16.msra.mxu0 %v2141
      %2235 = vmatpush.bf16.msra.mxu0 %v2139
      %2236 = vmatmul.bf16.gmra.mxu0 %v1722
      %v2237 = vpop.f32.mrf.mxu0
      %v2238 = vadd.f32 %v2224, %v2237
      %v2239 = vpop.f32.mrf.mxu0
      %v2240 = vadd.f32 %v2226, %v2239
      %2241 = vdwg.mxu0
      %v2242 = vld [vmem:[#allocation3] sm:$0xfc]
      %v2243 = vld [vmem:[#allocation3 + $0x8] sm:$0xfc]
      %v2244 = vld [vmem:[#allocation3 + $0x10] sm:$0xff]
      %v2245 = vld [vmem:[#allocation3 + $0x18] sm:$0xff]
      %v2246 = vpack.c.bf16 %v2244, %v2242
      %v2247 = vpack.c.bf16 %v2245, %v2243
      %s2248 = scalar_lea.vmem %s5, 512
      %v2249 = vld [vmem:[%s2248] sm:$0xff]
      %v2250 = vld [vmem:[%s2248 + $0x8] sm:$0xff]
      %v2251 = vld [vmem:[%s2248 + $0x10] sm:$0xff]
      %v2252 = vld [vmem:[%s2248 + $0x18] sm:$0xff]
      %v2253 = vld [vmem:[%s2248 + $0x20] sm:$0xff]
      %v2254 = vld [vmem:[%s2248 + $0x28] sm:$0xff]
      %v2255 = vld [vmem:[%s2248 + $0x30] sm:$0xff]
      %v2256 = vld [vmem:[%s2248 + $0x38] sm:$0xff]
      %v2257 = vld [vmem:[%s2248 + $0x40] sm:$0xff]
      %v2258 = vld [vmem:[%s2248 + $0x48] sm:$0xff]
      %v2259 = vld [vmem:[%s2248 + $0x50] sm:$0xff]
      %v2260 = vld [vmem:[%s2248 + $0x58] sm:$0xff]
      %v2261 = vld [vmem:[%s2248 + $0x60] sm:$0xff]
      %v2262 = vld [vmem:[%s2248 + $0x68] sm:$0xff]
      %v2263 = vld [vmem:[%s2248 + $0x70] sm:$0xff]
      %v2264 = vld [vmem:[%s2248 + $0x78] sm:$0xff]
      %v2265 = vld [vmem:[%s2248 + $0x80] sm:$0xff]
      %v2266 = vld [vmem:[%s2248 + $0x88] sm:$0xff]
      %v2267 = vld [vmem:[%s2248 + $0x90] sm:$0xff]
      %v2268 = vld [vmem:[%s2248 + $0x98] sm:$0xff]
      %v2269 = vld [vmem:[%s2248 + $0xa0] sm:$0xff]
      %v2270 = vld [vmem:[%s2248 + $0xa8] sm:$0xff]
      %v2271 = vld [vmem:[%s2248 + $0xb0] sm:$0xff]
      %v2272 = vld [vmem:[%s2248 + $0xb8] sm:$0xff]
      %v2273 = vld [vmem:[%s2248 + $0xc0] sm:$0xff]
      %v2274 = vld [vmem:[%s2248 + $0xc8] sm:$0xff]
      %v2275 = vld [vmem:[%s2248 + $0xd0] sm:$0xff]
      %v2276 = vld [vmem:[%s2248 + $0xd8] sm:$0xff]
      %v2277 = vld [vmem:[%s2248 + $0xe0] sm:$0xff]
      %v2278 = vld [vmem:[%s2248 + $0xe8] sm:$0xff]
      %v2279 = vld [vmem:[%s2248 + $0xf0] sm:$0xff]
      %v2280 = vld [vmem:[%s2248 + $0xf8] sm:$0xff]
      %v2283 = vrot.slane %v2246, 1
      %v2284 = vrot.slane %v2247, 1
      %v2319 = vunpack.c.l.b16 %v2249
      %v2320 = vunpack.c.h.b16 %v2249
      %v2321 = vunpack.c.l.b16 %v2250
      %v2322 = vunpack.c.h.b16 %v2250
      %v2323 = vunpack.c.l.b16 %v2251
      %v2324 = vunpack.c.h.b16 %v2251
      %v2325 = vunpack.c.l.b16 %v2252
      %v2326 = vunpack.c.h.b16 %v2252
      %v2327 = vunpack.c.l.b16 %v2253
      %v2328 = vunpack.c.h.b16 %v2253
      %v2329 = vunpack.c.l.b16 %v2254
      %v2330 = vunpack.c.h.b16 %v2254
      %v2331 = vunpack.c.l.b16 %v2255
      %v2332 = vunpack.c.h.b16 %v2255
      %v2333 = vunpack.c.l.b16 %v2256
      %v2334 = vunpack.c.h.b16 %v2256
      %v2335 = vunpack.c.l.b16 %v2257
      %v2336 = vunpack.c.h.b16 %v2257
      %v2337 = vunpack.c.l.b16 %v2258
      %v2338 = vunpack.c.h.b16 %v2258
      %v2339 = vunpack.c.l.b16 %v2259
      %v2340 = vunpack.c.h.b16 %v2259
      %v2341 = vunpack.c.l.b16 %v2260
      %v2342 = vunpack.c.h.b16 %v2260
      %v2343 = vunpack.c.l.b16 %v2261
      %v2344 = vunpack.c.h.b16 %v2261
      %v2345 = vunpack.c.l.b16 %v2262
      %v2346 = vunpack.c.h.b16 %v2262
      %v2347 = vunpack.c.l.b16 %v2263
      %v2348 = vunpack.c.h.b16 %v2263
      %v2349 = vunpack.c.l.b16 %v2264
      %v2350 = vunpack.c.h.b16 %v2264
      %v2351 = vunpack.c.l.b16 %v2265
      %v2352 = vunpack.c.h.b16 %v2265
      %v2353 = vunpack.c.l.b16 %v2266
      %v2354 = vunpack.c.h.b16 %v2266
      %v2355 = vunpack.c.l.b16 %v2267
      %v2356 = vunpack.c.h.b16 %v2267
      %v2357 = vunpack.c.l.b16 %v2268
      %v2358 = vunpack.c.h.b16 %v2268
      %v2359 = vunpack.c.l.b16 %v2269
      %v2360 = vunpack.c.h.b16 %v2269
      %v2361 = vunpack.c.l.b16 %v2270
      %v2362 = vunpack.c.h.b16 %v2270
      %v2363 = vunpack.c.l.b16 %v2271
      %v2364 = vunpack.c.h.b16 %v2271
      %v2365 = vunpack.c.l.b16 %v2272
      %v2366 = vunpack.c.h.b16 %v2272
      %v2367 = vunpack.c.l.b16 %v2273
      %v2368 = vunpack.c.h.b16 %v2273
      %v2369 = vunpack.c.l.b16 %v2274
      %v2370 = vunpack.c.h.b16 %v2274
      %v2371 = vunpack.c.l.b16 %v2275
      %v2372 = vunpack.c.h.b16 %v2275
      %v2373 = vunpack.c.l.b16 %v2276
      %v2374 = vunpack.c.h.b16 %v2276
      %v2375 = vunpack.c.l.b16 %v2277
      %v2376 = vunpack.c.h.b16 %v2277
      %v2377 = vunpack.c.l.b16 %v2278
      %v2378 = vunpack.c.h.b16 %v2278
      %v2379 = vunpack.c.l.b16 %v2279
      %v2380 = vunpack.c.h.b16 %v2279
      %v2381 = vunpack.c.l.b16 %v2280
      %v2382 = vunpack.c.h.b16 %v2280
      %v2383 = vpack.c.b16 %v2321, %v2319
      %v2384 = vpack.c.b16 %v2322, %v2320
      %v2385 = vpack.c.b16 %v2325, %v2323
      %v2386 = vpack.c.b16 %v2326, %v2324
      %v2387 = vpack.c.b16 %v2329, %v2327
      %v2388 = vpack.c.b16 %v2330, %v2328
      %v2389 = vpack.c.b16 %v2333, %v2331
      %v2390 = vpack.c.b16 %v2334, %v2332
      %v2391 = vpack.c.b16 %v2337, %v2335
      %v2392 = vpack.c.b16 %v2338, %v2336
      %v2393 = vpack.c.b16 %v2341, %v2339
      %v2394 = vpack.c.b16 %v2342, %v2340
      %v2395 = vpack.c.b16 %v2345, %v2343
      %v2396 = vpack.c.b16 %v2346, %v2344
      %v2397 = vpack.c.b16 %v2349, %v2347
      %v2398 = vpack.c.b16 %v2350, %v2348
      %v2399 = vpack.c.b16 %v2353, %v2351
      %v2400 = vpack.c.b16 %v2354, %v2352
      %v2401 = vpack.c.b16 %v2357, %v2355
      %v2402 = vpack.c.b16 %v2358, %v2356
      %v2403 = vpack.c.b16 %v2361, %v2359
      %v2404 = vpack.c.b16 %v2362, %v2360
      %v2405 = vpack.c.b16 %v2365, %v2363
      %v2406 = vpack.c.b16 %v2366, %v2364
      %v2407 = vpack.c.b16 %v2369, %v2367
      %v2408 = vpack.c.b16 %v2370, %v2368
      %v2409 = vpack.c.b16 %v2373, %v2371
      %v2410 = vpack.c.b16 %v2374, %v2372
      %v2411 = vpack.c.b16 %v2377, %v2375
      %v2412 = vpack.c.b16 %v2378, %v2376
      %v2413 = vpack.c.b16 %v2381, %v2379
      %v2414 = vpack.c.b16 %v2382, %v2380
      %2447 = vmatpush.bf16.msra.mxu0 %v2397
      %2448 = vmatpush.bf16.msra.mxu0 %v2395
      %2449 = vmatpush.bf16.msra.mxu0 %v2393
      %2450 = vmatpush.bf16.msra.mxu0 %v2391
      %2451 = vmatpush.bf16.msra.mxu0 %v2389
      %2452 = vmatpush.bf16.msra.mxu0 %v2387
      %2453 = vmatpush.bf16.msra.mxu0 %v2385
      %2454 = vmatpush.bf16.msra.mxu0 %v2383
      %2455 = vmatmul.bf16.gmra.mxu0 %v2283
      %v2456 = vpop.f32.mrf.mxu0
      %v2457 = vadd.f32 0.0, %v2456
      %v2458 = vpop.f32.mrf.mxu0
      %v2459 = vadd.f32 0.0, %v2458
      %2460 = vdwg.mxu0
      %2461 = vmatpush.bf16.msra.mxu0 %v2413
      %2462 = vmatpush.bf16.msra.mxu0 %v2411
      %2463 = vmatpush.bf16.msra.mxu0 %v2409
      %2464 = vmatpush.bf16.msra.mxu0 %v2407
      %2465 = vmatpush.bf16.msra.mxu0 %v2405
      %2466 = vmatpush.bf16.msra.mxu0 %v2403
      %2467 = vmatpush.bf16.msra.mxu0 %v2401
      %2468 = vmatpush.bf16.msra.mxu0 %v2399
      %2469 = vmatmul.bf16.gmra.mxu0 %v2284
      %v2470 = vpop.f32.mrf.mxu0
      %v2471 = vadd.f32 %v2457, %v2470
      %v2472 = vpop.f32.mrf.mxu0
      %v2473 = vadd.f32 %v2459, %v2472
      %2474 = vdwg.mxu0
      %2475 = vmatpush.bf16.msra.mxu0 %v2398
      %2476 = vmatpush.bf16.msra.mxu0 %v2396
      %2477 = vmatpush.bf16.msra.mxu0 %v2394
      %2478 = vmatpush.bf16.msra.mxu0 %v2392
      %2479 = vmatpush.bf16.msra.mxu0 %v2390
      %2480 = vmatpush.bf16.msra.mxu0 %v2388
      %2481 = vmatpush.bf16.msra.mxu0 %v2386
      %2482 = vmatpush.bf16.msra.mxu0 %v2384
      %2483 = vmatmul.bf16.gmra.mxu0 %v2283
      %v2484 = vpop.f32.mrf.mxu0
      %v2485 = vadd.f32 0.0, %v2484
      %v2486 = vpop.f32.mrf.mxu0
      %v2487 = vadd.f32 0.0, %v2486
      %2488 = vdwg.mxu0
      %2489 = vmatpush.bf16.msra.mxu0 %v2414
      %2490 = vmatpush.bf16.msra.mxu0 %v2412
      %2491 = vmatpush.bf16.msra.mxu0 %v2410
      %2492 = vmatpush.bf16.msra.mxu0 %v2408
      %2493 = vmatpush.bf16.msra.mxu0 %v2406
      %2494 = vmatpush.bf16.msra.mxu0 %v2404
      %2495 = vmatpush.bf16.msra.mxu0 %v2402
      %2496 = vmatpush.bf16.msra.mxu0 %v2400
      %2497 = vmatmul.bf16.gmra.mxu0 %v2284
      %v2498 = vpop.f32.mrf.mxu0
      %v2499 = vadd.f32 %v2485, %v2498
      %v2500 = vpop.f32.mrf.mxu0
      %v2501 = vadd.f32 %v2487, %v2500
      %2502 = vdwg.mxu0
      %v2503 = vadd.f32 %v2210, %v2471
      %v2504 = vadd.f32 %v2238, %v2499
      %v2505 = vadd.f32 %v2212, %v2473
      %v2506 = vadd.f32 %v2240, %v2501
      %v2507 = vld [vmem:[%s6] sm:$0x3]
      %v2509 = vperm.slane %v2507, 0
      %v2510 = vperm.slane %v2507, 1
      %v2513 = vadd.f32 %v2503, %v2509
      %v2514 = vadd.f32 %v2504, %v2510
      %v2515 = vadd.f32 %v2505, %v2509
      %v2516 = vadd.f32 %v2506, %v2510
      %v2517 = vmax.f32 %v2513, 0.0
      %v2518 = vmax.f32 %v2514, 0.0
      %v2519 = vmax.f32 %v2515, 0.0
      %v2520 = vmax.f32 %v2516, 0.0
      %v2525 = vrot.slane %v2517, 7
      %v2526 = vrot.slane %v2518, 7
      %v2527 = vrot.slane %v2519, 7
      %v2528 = vsel %vm855, %v2525, %v2527
      %v2529 = vrot.slane %v2520, 7
      %v2530 = vsel %vm855, %v2526, %v2529
      %2531 = vrot.lane.b32.xlu0 %v2525, 16
      %v2532 = vpop.permute.xlu0 %2531
      %2533 = vrot.lane.b32.xlu0 %v2526, 16
      %v2534 = vpop.permute.xlu0 %2533
      %2535 = vrot.lane.b32.xlu0 %v2528, 16
      %v2536 = vpop.permute.xlu0 %2535
      %2537 = vrot.lane.b32.xlu0 %v2530, 16
      %v2538 = vpop.permute.xlu0 %2537
      %v2539 = vsel %vm870, %v2532, %v2534
      %v2540 = vsel %vm870, %v2536, %v2538
      %2545 = vst.msk [vmem:[#allocation2] sm:$0xfe] %vm877, %v2532
      %2546 = vst.msk [vmem:[#allocation2 + $0x8] sm:$0xfe] %vm879, %v2539
      %2547 = vst.msk [vmem:[#allocation2 + $0x10] sm:$0x7f] %vm881, %v2536
      %2548 = vst.msk [vmem:[#allocation2 + $0x18] sm:$0x7f] %vm883, %v2540
      %v2549 = vld [vmem:[#allocation2] sm:$0xff]
      %v2550 = vld [vmem:[#allocation2 + $0x8] sm:$0xff]
      %v2551 = vld [vmem:[#allocation2 + $0x10] sm:$0x3f]
      %v2552 = vld [vmem:[#allocation2 + $0x18] sm:$0x3f]
      %v2553 = vpack.c.bf16 %v2551, %v2549
      %v2554 = vpack.c.bf16 %v2552, %v2550
      %v2555 = vld [vmem:[%s7] sm:$0xff]
      %v2556 = vld [vmem:[%s7 + $0x8] sm:$0xff]
      %v2557 = vld [vmem:[%s7 + $0x10] sm:$0xff]
      %v2558 = vld [vmem:[%s7 + $0x18] sm:$0xff]
      %v2559 = vld [vmem:[%s7 + $0x20] sm:$0xff]
      %v2560 = vld [vmem:[%s7 + $0x28] sm:$0xff]
      %v2561 = vld [vmem:[%s7 + $0x30] sm:$0xff]
      %v2562 = vld [vmem:[%s7 + $0x38] sm:$0xff]
      %v2563 = vld [vmem:[%s7 + $0x40] sm:$0xff]
      %v2564 = vld [vmem:[%s7 + $0x48] sm:$0xff]
      %v2565 = vld [vmem:[%s7 + $0x50] sm:$0xff]
      %v2566 = vld [vmem:[%s7 + $0x58] sm:$0xff]
      %v2567 = vld [vmem:[%s7 + $0x60] sm:$0xff]
      %v2568 = vld [vmem:[%s7 + $0x68] sm:$0xff]
      %v2569 = vld [vmem:[%s7 + $0x70] sm:$0xff]
      %v2570 = vld [vmem:[%s7 + $0x78] sm:$0xff]
      %v2571 = vld [vmem:[%s7 + $0x80] sm:$0xff]
      %v2572 = vld [vmem:[%s7 + $0x88] sm:$0xff]
      %v2573 = vld [vmem:[%s7 + $0x90] sm:$0xff]
      %v2574 = vld [vmem:[%s7 + $0x98] sm:$0xff]
      %v2575 = vld [vmem:[%s7 + $0xa0] sm:$0xff]
      %v2576 = vld [vmem:[%s7 + $0xa8] sm:$0xff]
      %v2577 = vld [vmem:[%s7 + $0xb0] sm:$0xff]
      %v2578 = vld [vmem:[%s7 + $0xb8] sm:$0xff]
      %v2579 = vld [vmem:[%s7 + $0xc0] sm:$0xff]
      %v2580 = vld [vmem:[%s7 + $0xc8] sm:$0xff]
      %v2581 = vld [vmem:[%s7 + $0xd0] sm:$0xff]
      %v2582 = vld [vmem:[%s7 + $0xd8] sm:$0xff]
      %v2583 = vld [vmem:[%s7 + $0xe0] sm:$0xff]
      %v2584 = vld [vmem:[%s7 + $0xe8] sm:$0xff]
      %v2585 = vld [vmem:[%s7 + $0xf0] sm:$0xff]
      %v2586 = vld [vmem:[%s7 + $0xf8] sm:$0xff]
      %v2587 = vld [vmem:[#allocation2] sm:$0xfe]
      %v2588 = vld [vmem:[#allocation2 + $0x8] sm:$0xfe]
      %v2589 = vld [vmem:[#allocation2 + $0x10] sm:$0x7f]
      %v2590 = vld [vmem:[#allocation2 + $0x18] sm:$0x7f]
      %v2591 = vpack.c.bf16 %v2589, %v2587
      %v2592 = vpack.c.bf16 %v2590, %v2588
      %s2593 = scalar_lea.vmem %s7, 256
      %v2594 = vld [vmem:[%s2593] sm:$0xff]
      %v2595 = vld [vmem:[%s2593 + $0x8] sm:$0xff]
      %v2596 = vld [vmem:[%s2593 + $0x10] sm:$0xff]
      %v2597 = vld [vmem:[%s2593 + $0x18] sm:$0xff]
      %v2598 = vld [vmem:[%s2593 + $0x20] sm:$0xff]
      %v2599 = vld [vmem:[%s2593 + $0x28] sm:$0xff]
      %v2600 = vld [vmem:[%s2593 + $0x30] sm:$0xff]
      %v2601 = vld [vmem:[%s2593 + $0x38] sm:$0xff]
      %v2602 = vld [vmem:[%s2593 + $0x40] sm:$0xff]
      %v2603 = vld [vmem:[%s2593 + $0x48] sm:$0xff]
      %v2604 = vld [vmem:[%s2593 + $0x50] sm:$0xff]
      %v2605 = vld [vmem:[%s2593 + $0x58] sm:$0xff]
      %v2606 = vld [vmem:[%s2593 + $0x60] sm:$0xff]
      %v2607 = vld [vmem:[%s2593 + $0x68] sm:$0xff]
      %v2608 = vld [vmem:[%s2593 + $0x70] sm:$0xff]
      %v2609 = vld [vmem:[%s2593 + $0x78] sm:$0xff]
      %v2610 = vld [vmem:[%s2593 + $0x80] sm:$0xff]
      %v2611 = vld [vmem:[%s2593 + $0x88] sm:$0xff]
      %v2612 = vld [vmem:[%s2593 + $0x90] sm:$0xff]
      %v2613 = vld [vmem:[%s2593 + $0x98] sm:$0xff]
      %v2614 = vld [vmem:[%s2593 + $0xa0] sm:$0xff]
      %v2615 = vld [vmem:[%s2593 + $0xa8] sm:$0xff]
      %v2616 = vld [vmem:[%s2593 + $0xb0] sm:$0xff]
      %v2617 = vld [vmem:[%s2593 + $0xb8] sm:$0xff]
      %v2618 = vld [vmem:[%s2593 + $0xc0] sm:$0xff]
      %v2619 = vld [vmem:[%s2593 + $0xc8] sm:$0xff]
      %v2620 = vld [vmem:[%s2593 + $0xd0] sm:$0xff]
      %v2621 = vld [vmem:[%s2593 + $0xd8] sm:$0xff]
      %v2622 = vld [vmem:[%s2593 + $0xe0] sm:$0xff]
      %v2623 = vld [vmem:[%s2593 + $0xe8] sm:$0xff]
      %v2624 = vld [vmem:[%s2593 + $0xf0] sm:$0xff]
      %v2625 = vld [vmem:[%s2593 + $0xf8] sm:$0xff]
      %v2627 = vshrl.u32 %v2591, 16
      %v2629 = vshll.u32 %v2591, 16
      %v2631 = vrot.slane %v2629, 1
      %v2632 = vor.u32 %v2627, %v2631
      %v2634 = vshrl.u32 %v2592, 16
      %v2636 = vshll.u32 %v2592, 16
      %v2638 = vrot.slane %v2636, 1
      %v2639 = vor.u32 %v2634, %v2638
      %v2674 = vunpack.c.l.b16 %v2594
      %v2675 = vunpack.c.h.b16 %v2594
      %v2676 = vunpack.c.l.b16 %v2595
      %v2677 = vunpack.c.h.b16 %v2595
      %v2678 = vunpack.c.l.b16 %v2596
      %v2679 = vunpack.c.h.b16 %v2596
      %v2680 = vunpack.c.l.b16 %v2597
      %v2681 = vunpack.c.h.b16 %v2597
      %v2682 = vunpack.c.l.b16 %v2598
      %v2683 = vunpack.c.h.b16 %v2598
      %v2684 = vunpack.c.l.b16 %v2599
      %v2685 = vunpack.c.h.b16 %v2599
      %v2686 = vunpack.c.l.b16 %v2600
      %v2687 = vunpack.c.h.b16 %v2600
      %v2688 = vunpack.c.l.b16 %v2601
      %v2689 = vunpack.c.h.b16 %v2601
      %v2690 = vunpack.c.l.b16 %v2602
      %v2691 = vunpack.c.h.b16 %v2602
      %v2692 = vunpack.c.l.b16 %v2603
      %v2693 = vunpack.c.h.b16 %v2603
      %v2694 = vunpack.c.l.b16 %v2604
      %v2695 = vunpack.c.h.b16 %v2604
      %v2696 = vunpack.c.l.b16 %v2605
      %v2697 = vunpack.c.h.b16 %v2605
      %v2698 = vunpack.c.l.b16 %v2606
      %v2699 = vunpack.c.h.b16 %v2606
      %v2700 = vunpack.c.l.b16 %v2607
      %v2701 = vunpack.c.h.b16 %v2607
      %v2702 = vunpack.c.l.b16 %v2608
      %v2703 = vunpack.c.h.b16 %v2608
      %v2704 = vunpack.c.l.b16 %v2609
      %v2705 = vunpack.c.h.b16 %v2609
      %v2706 = vunpack.c.l.b16 %v2610
      %v2707 = vunpack.c.h.b16 %v2610
      %v2708 = vunpack.c.l.b16 %v2611
      %v2709 = vunpack.c.h.b16 %v2611
      %v2710 = vunpack.c.l.b16 %v2612
      %v2711 = vunpack.c.h.b16 %v2612
      %v2712 = vunpack.c.l.b16 %v2613
      %v2713 = vunpack.c.h.b16 %v2613
      %v2714 = vunpack.c.l.b16 %v2614
      %v2715 = vunpack.c.h.b16 %v2614
      %v2716 = vunpack.c.l.b16 %v2615
      %v2717 = vunpack.c.h.b16 %v2615
      %v2718 = vunpack.c.l.b16 %v2616
      %v2719 = vunpack.c.h.b16 %v2616
      %v2720 = vunpack.c.l.b16 %v2617
      %v2721 = vunpack.c.h.b16 %v2617
      %v2722 = vunpack.c.l.b16 %v2618
      %v2723 = vunpack.c.h.b16 %v2618
      %v2724 = vunpack.c.l.b16 %v2619
      %v2725 = vunpack.c.h.b16 %v2619
      %v2726 = vunpack.c.l.b16 %v2620
      %v2727 = vunpack.c.h.b16 %v2620
      %v2728 = vunpack.c.l.b16 %v2621
      %v2729 = vunpack.c.h.b16 %v2621
      %v2730 = vunpack.c.l.b16 %v2622
      %v2731 = vunpack.c.h.b16 %v2622
      %v2732 = vunpack.c.l.b16 %v2623
      %v2733 = vunpack.c.h.b16 %v2623
      %v2734 = vunpack.c.l.b16 %v2624
      %v2735 = vunpack.c.h.b16 %v2624
      %v2736 = vunpack.c.l.b16 %v2625
      %v2737 = vunpack.c.h.b16 %v2625
      %v2738 = vpack.c.b16 %v2676, %v2674
      %v2739 = vpack.c.b16 %v2677, %v2675
      %v2740 = vpack.c.b16 %v2680, %v2678
      %v2741 = vpack.c.b16 %v2681, %v2679
      %v2742 = vpack.c.b16 %v2684, %v2682
      %v2743 = vpack.c.b16 %v2685, %v2683
      %v2744 = vpack.c.b16 %v2688, %v2686
      %v2745 = vpack.c.b16 %v2689, %v2687
      %v2746 = vpack.c.b16 %v2692, %v2690
      %v2747 = vpack.c.b16 %v2693, %v2691
      %v2748 = vpack.c.b16 %v2696, %v2694
      %v2749 = vpack.c.b16 %v2697, %v2695
      %v2750 = vpack.c.b16 %v2700, %v2698
      %v2751 = vpack.c.b16 %v2701, %v2699
      %v2752 = vpack.c.b16 %v2704, %v2702
      %v2753 = vpack.c.b16 %v2705, %v2703
      %v2754 = vpack.c.b16 %v2708, %v2706
      %v2755 = vpack.c.b16 %v2709, %v2707
      %v2756 = vpack.c.b16 %v2712, %v2710
      %v2757 = vpack.c.b16 %v2713, %v2711
      %v2758 = vpack.c.b16 %v2716, %v2714
      %v2759 = vpack.c.b16 %v2717, %v2715
      %v2760 = vpack.c.b16 %v2720, %v2718
      %v2761 = vpack.c.b16 %v2721, %v2719
      %v2762 = vpack.c.b16 %v2724, %v2722
      %v2763 = vpack.c.b16 %v2725, %v2723
      %v2764 = vpack.c.b16 %v2728, %v2726
      %v2765 = vpack.c.b16 %v2729, %v2727
      %v2766 = vpack.c.b16 %v2732, %v2730
      %v2767 = vpack.c.b16 %v2733, %v2731
      %v2768 = vpack.c.b16 %v2736, %v2734
      %v2769 = vpack.c.b16 %v2737, %v2735
      %2802 = vmatpush.bf16.msra.mxu0 %v2752
      %2803 = vmatpush.bf16.msra.mxu0 %v2750
      %2804 = vmatpush.bf16.msra.mxu0 %v2748
      %2805 = vmatpush.bf16.msra.mxu0 %v2746
      %2806 = vmatpush.bf16.msra.mxu0 %v2744
      %2807 = vmatpush.bf16.msra.mxu0 %v2742
      %2808 = vmatpush.bf16.msra.mxu0 %v2740
      %2809 = vmatpush.bf16.msra.mxu0 %v2738
      %2810 = vmatmul.bf16.gmra.mxu0 %v2632
      %v2811 = vpop.f32.mrf.mxu0
      %v2812 = vadd.f32 0.0, %v2811
      %v2813 = vpop.f32.mrf.mxu0
      %v2814 = vadd.f32 0.0, %v2813
      %2815 = vdwg.mxu0
      %2816 = vmatpush.bf16.msra.mxu0 %v2768
      %2817 = vmatpush.bf16.msra.mxu0 %v2766
      %2818 = vmatpush.bf16.msra.mxu0 %v2764
      %2819 = vmatpush.bf16.msra.mxu0 %v2762
      %2820 = vmatpush.bf16.msra.mxu0 %v2760
      %2821 = vmatpush.bf16.msra.mxu0 %v2758
      %2822 = vmatpush.bf16.msra.mxu0 %v2756
      %2823 = vmatpush.bf16.msra.mxu0 %v2754
      %2824 = vmatmul.bf16.gmra.mxu0 %v2639
      %v2825 = vpop.f32.mrf.mxu0
      %v2826 = vadd.f32 %v2812, %v2825
      %v2827 = vpop.f32.mrf.mxu0
      %v2828 = vadd.f32 %v2814, %v2827
      %2829 = vdwg.mxu0
      %2830 = vmatpush.bf16.msra.mxu0 %v2753
      %2831 = vmatpush.bf16.msra.mxu0 %v2751
      %2832 = vmatpush.bf16.msra.mxu0 %v2749
      %2833 = vmatpush.bf16.msra.mxu0 %v2747
      %2834 = vmatpush.bf16.msra.mxu0 %v2745
      %2835 = vmatpush.bf16.msra.mxu0 %v2743
      %2836 = vmatpush.bf16.msra.mxu0 %v2741
      %2837 = vmatpush.bf16.msra.mxu0 %v2739
      %2838 = vmatmul.bf16.gmra.mxu0 %v2632
      %v2839 = vpop.f32.mrf.mxu0
      %v2840 = vadd.f32 0.0, %v2839
      %v2841 = vpop.f32.mrf.mxu0
      %v2842 = vadd.f32 0.0, %v2841
      %2843 = vdwg.mxu0
      %2844 = vmatpush.bf16.msra.mxu0 %v2769
      %2845 = vmatpush.bf16.msra.mxu0 %v2767
      %2846 = vmatpush.bf16.msra.mxu0 %v2765
      %2847 = vmatpush.bf16.msra.mxu0 %v2763
      %2848 = vmatpush.bf16.msra.mxu0 %v2761
      %2849 = vmatpush.bf16.msra.mxu0 %v2759
      %2850 = vmatpush.bf16.msra.mxu0 %v2757
      %2851 = vmatpush.bf16.msra.mxu0 %v2755
      %2852 = vmatmul.bf16.gmra.mxu0 %v2639
      %v2853 = vpop.f32.mrf.mxu0
      %v2854 = vadd.f32 %v2840, %v2853
      %v2855 = vpop.f32.mrf.mxu0
      %v2856 = vadd.f32 %v2842, %v2855
      %2857 = vdwg.mxu0
      %v2890 = vunpack.c.l.b16 %v2555
      %v2891 = vunpack.c.h.b16 %v2555
      %v2892 = vunpack.c.l.b16 %v2556
      %v2893 = vunpack.c.h.b16 %v2556
      %v2894 = vunpack.c.l.b16 %v2557
      %v2895 = vunpack.c.h.b16 %v2557
      %v2896 = vunpack.c.l.b16 %v2558
      %v2897 = vunpack.c.h.b16 %v2558
      %v2898 = vunpack.c.l.b16 %v2559
      %v2899 = vunpack.c.h.b16 %v2559
      %v2900 = vunpack.c.l.b16 %v2560
      %v2901 = vunpack.c.h.b16 %v2560
      %v2902 = vunpack.c.l.b16 %v2561
      %v2903 = vunpack.c.h.b16 %v2561
      %v2904 = vunpack.c.l.b16 %v2562
      %v2905 = vunpack.c.h.b16 %v2562
      %v2906 = vunpack.c.l.b16 %v2563
      %v2907 = vunpack.c.h.b16 %v2563
      %v2908 = vunpack.c.l.b16 %v2564
      %v2909 = vunpack.c.h.b16 %v2564
      %v2910 = vunpack.c.l.b16 %v2565
      %v2911 = vunpack.c.h.b16 %v2565
      %v2912 = vunpack.c.l.b16 %v2566
      %v2913 = vunpack.c.h.b16 %v2566
      %v2914 = vunpack.c.l.b16 %v2567
      %v2915 = vunpack.c.h.b16 %v2567
      %v2916 = vunpack.c.l.b16 %v2568
      %v2917 = vunpack.c.h.b16 %v2568
      %v2918 = vunpack.c.l.b16 %v2569
      %v2919 = vunpack.c.h.b16 %v2569
      %v2920 = vunpack.c.l.b16 %v2570
      %v2921 = vunpack.c.h.b16 %v2570
      %v2922 = vunpack.c.l.b16 %v2571
      %v2923 = vunpack.c.h.b16 %v2571
      %v2924 = vunpack.c.l.b16 %v2572
      %v2925 = vunpack.c.h.b16 %v2572
      %v2926 = vunpack.c.l.b16 %v2573
      %v2927 = vunpack.c.h.b16 %v2573
      %v2928 = vunpack.c.l.b16 %v2574
      %v2929 = vunpack.c.h.b16 %v2574
      %v2930 = vunpack.c.l.b16 %v2575
      %v2931 = vunpack.c.h.b16 %v2575
      %v2932 = vunpack.c.l.b16 %v2576
      %v2933 = vunpack.c.h.b16 %v2576
      %v2934 = vunpack.c.l.b16 %v2577
      %v2935 = vunpack.c.h.b16 %v2577
      %v2936 = vunpack.c.l.b16 %v2578
      %v2937 = vunpack.c.h.b16 %v2578
      %v2938 = vunpack.c.l.b16 %v2579
      %v2939 = vunpack.c.h.b16 %v2579
      %v2940 = vunpack.c.l.b16 %v2580
      %v2941 = vunpack.c.h.b16 %v2580
      %v2942 = vunpack.c.l.b16 %v2581
      %v2943 = vunpack.c.h.b16 %v2581
      %v2944 = vunpack.c.l.b16 %v2582
      %v2945 = vunpack.c.h.b16 %v2582
      %v2946 = vunpack.c.l.b16 %v2583
      %v2947 = vunpack.c.h.b16 %v2583
      %v2948 = vunpack.c.l.b16 %v2584
      %v2949 = vunpack.c.h.b16 %v2584
      %v2950 = vunpack.c.l.b16 %v2585
      %v2951 = vunpack.c.h.b16 %v2585
      %v2952 = vunpack.c.l.b16 %v2586
      %v2953 = vunpack.c.h.b16 %v2586
      %v2954 = vpack.c.b16 %v2892, %v2890
      %v2955 = vpack.c.b16 %v2893, %v2891
      %v2956 = vpack.c.b16 %v2896, %v2894
      %v2957 = vpack.c.b16 %v2897, %v2895
      %v2958 = vpack.c.b16 %v2900, %v2898
      %v2959 = vpack.c.b16 %v2901, %v2899
      %v2960 = vpack.c.b16 %v2904, %v2902
      %v2961 = vpack.c.b16 %v2905, %v2903
      %v2962 = vpack.c.b16 %v2908, %v2906
      %v2963 = vpack.c.b16 %v2909, %v2907
      %v2964 = vpack.c.b16 %v2912, %v2910
      %v2965 = vpack.c.b16 %v2913, %v2911
      %v2966 = vpack.c.b16 %v2916, %v2914
      %v2967 = vpack.c.b16 %v2917, %v2915
      %v2968 = vpack.c.b16 %v2920, %v2918
      %v2969 = vpack.c.b16 %v2921, %v2919
      %v2970 = vpack.c.b16 %v2924, %v2922
      %v2971 = vpack.c.b16 %v2925, %v2923
      %v2972 = vpack.c.b16 %v2928, %v2926
      %v2973 = vpack.c.b16 %v2929, %v2927
      %v2974 = vpack.c.b16 %v2932, %v2930
      %v2975 = vpack.c.b16 %v2933, %v2931
      %v2976 = vpack.c.b16 %v2936, %v2934
      %v2977 = vpack.c.b16 %v2937, %v2935
      %v2978 = vpack.c.b16 %v2940, %v2938
      %v2979 = vpack.c.b16 %v2941, %v2939
      %v2980 = vpack.c.b16 %v2944, %v2942
      %v2981 = vpack.c.b16 %v2945, %v2943
      %v2982 = vpack.c.b16 %v2948, %v2946
      %v2983 = vpack.c.b16 %v2949, %v2947
      %v2984 = vpack.c.b16 %v2952, %v2950
      %v2985 = vpack.c.b16 %v2953, %v2951
      %3018 = vmatpush.bf16.msra.mxu0 %v2968
      %3019 = vmatpush.bf16.msra.mxu0 %v2966
      %3020 = vmatpush.bf16.msra.mxu0 %v2964
      %3021 = vmatpush.bf16.msra.mxu0 %v2962
      %3022 = vmatpush.bf16.msra.mxu0 %v2960
      %3023 = vmatpush.bf16.msra.mxu0 %v2958
      %3024 = vmatpush.bf16.msra.mxu0 %v2956
      %3025 = vmatpush.bf16.msra.mxu0 %v2954
      %3026 = vmatmul.bf16.gmra.mxu0 %v2553
      %v3027 = vpop.f32.mrf.mxu0
      %v3028 = vadd.f32 %v2826, %v3027
      %v3029 = vpop.f32.mrf.mxu0
      %v3030 = vadd.f32 %v2828, %v3029
      %3031 = vdwg.mxu0
      %3032 = vmatpush.bf16.msra.mxu0 %v2984
      %3033 = vmatpush.bf16.msra.mxu0 %v2982
      %3034 = vmatpush.bf16.msra.mxu0 %v2980
      %3035 = vmatpush.bf16.msra.mxu0 %v2978
      %3036 = vmatpush.bf16.msra.mxu0 %v2976
      %3037 = vmatpush.bf16.msra.mxu0 %v2974
      %3038 = vmatpush.bf16.msra.mxu0 %v2972
      %3039 = vmatpush.bf16.msra.mxu0 %v2970
      %3040 = vmatmul.bf16.gmra.mxu0 %v2554
      %v3041 = vpop.f32.mrf.mxu0
      %v3042 = vadd.f32 %v3028, %v3041
      %v3043 = vpop.f32.mrf.mxu0
      %v3044 = vadd.f32 %v3030, %v3043
      %3045 = vdwg.mxu0
      %3046 = vmatpush.bf16.msra.mxu0 %v2969
      %3047 = vmatpush.bf16.msra.mxu0 %v2967
      %3048 = vmatpush.bf16.msra.mxu0 %v2965
      %3049 = vmatpush.bf16.msra.mxu0 %v2963
      %3050 = vmatpush.bf16.msra.mxu0 %v2961
      %3051 = vmatpush.bf16.msra.mxu0 %v2959
      %3052 = vmatpush.bf16.msra.mxu0 %v2957
      %3053 = vmatpush.bf16.msra.mxu0 %v2955
      %3054 = vmatmul.bf16.gmra.mxu0 %v2553
      %v3055 = vpop.f32.mrf.mxu0
      %v3056 = vadd.f32 %v2854, %v3055
      %v3057 = vpop.f32.mrf.mxu0
      %v3058 = vadd.f32 %v2856, %v3057
      %3059 = vdwg.mxu0
      %3060 = vmatpush.bf16.msra.mxu0 %v2985
      %3061 = vmatpush.bf16.msra.mxu0 %v2983
      %3062 = vmatpush.bf16.msra.mxu0 %v2981
      %3063 = vmatpush.bf16.msra.mxu0 %v2979
      %3064 = vmatpush.bf16.msra.mxu0 %v2977
      %3065 = vmatpush.bf16.msra.mxu0 %v2975
      %3066 = vmatpush.bf16.msra.mxu0 %v2973
      %3067 = vmatpush.bf16.msra.mxu0 %v2971
      %3068 = vmatmul.bf16.gmra.mxu0 %v2554
      %v3069 = vpop.f32.mrf.mxu0
      %v3070 = vadd.f32 %v3056, %v3069
      %v3071 = vpop.f32.mrf.mxu0
      %v3072 = vadd.f32 %v3058, %v3071
      %3073 = vdwg.mxu0
      %v3074 = vld [vmem:[#allocation2] sm:$0xfc]
      %v3075 = vld [vmem:[#allocation2 + $0x8] sm:$0xfc]
      %v3076 = vld [vmem:[#allocation2 + $0x10] sm:$0xff]
      %v3077 = vld [vmem:[#allocation2 + $0x18] sm:$0xff]
      %v3078 = vpack.c.bf16 %v3076, %v3074
      %v3079 = vpack.c.bf16 %v3077, %v3075
      %s3080 = scalar_lea.vmem %s7, 512
      %v3081 = vld [vmem:[%s3080] sm:$0xff]
      %v3082 = vld [vmem:[%s3080 + $0x8] sm:$0xff]
      %v3083 = vld [vmem:[%s3080 + $0x10] sm:$0xff]
      %v3084 = vld [vmem:[%s3080 + $0x18] sm:$0xff]
      %v3085 = vld [vmem:[%s3080 + $0x20] sm:$0xff]
      %v3086 = vld [vmem:[%s3080 + $0x28] sm:$0xff]
      %v3087 = vld [vmem:[%s3080 + $0x30] sm:$0xff]
      %v3088 = vld [vmem:[%s3080 + $0x38] sm:$0xff]
      %v3089 = vld [vmem:[%s3080 + $0x40] sm:$0xff]
      %v3090 = vld [vmem:[%s3080 + $0x48] sm:$0xff]
      %v3091 = vld [vmem:[%s3080 + $0x50] sm:$0xff]
      %v3092 = vld [vmem:[%s3080 + $0x58] sm:$0xff]
      %v3093 = vld [vmem:[%s3080 + $0x60] sm:$0xff]
      %v3094 = vld [vmem:[%s3080 + $0x68] sm:$0xff]
      %v3095 = vld [vmem:[%s3080 + $0x70] sm:$0xff]
      %v3096 = vld [vmem:[%s3080 + $0x78] sm:$0xff]
      %v3097 = vld [vmem:[%s3080 + $0x80] sm:$0xff]
      %v3098 = vld [vmem:[%s3080 + $0x88] sm:$0xff]
      %v3099 = vld [vmem:[%s3080 + $0x90] sm:$0xff]
      %v3100 = vld [vmem:[%s3080 + $0x98] sm:$0xff]
      %v3101 = vld [vmem:[%s3080 + $0xa0] sm:$0xff]
      %v3102 = vld [vmem:[%s3080 + $0xa8] sm:$0xff]
      %v3103 = vld [vmem:[%s3080 + $0xb0] sm:$0xff]
      %v3104 = vld [vmem:[%s3080 + $0xb8] sm:$0xff]
      %v3105 = vld [vmem:[%s3080 + $0xc0] sm:$0xff]
      %v3106 = vld [vmem:[%s3080 + $0xc8] sm:$0xff]
      %v3107 = vld [vmem:[%s3080 + $0xd0] sm:$0xff]
      %v3108 = vld [vmem:[%s3080 + $0xd8] sm:$0xff]
      %v3109 = vld [vmem:[%s3080 + $0xe0] sm:$0xff]
      %v3110 = vld [vmem:[%s3080 + $0xe8] sm:$0xff]
      %v3111 = vld [vmem:[%s3080 + $0xf0] sm:$0xff]
      %v3112 = vld [vmem:[%s3080 + $0xf8] sm:$0xff]
      %v3115 = vrot.slane %v3078, 1
      %v3116 = vrot.slane %v3079, 1
      %v3151 = vunpack.c.l.b16 %v3081
      %v3152 = vunpack.c.h.b16 %v3081
      %v3153 = vunpack.c.l.b16 %v3082
      %v3154 = vunpack.c.h.b16 %v3082
      %v3155 = vunpack.c.l.b16 %v3083
      %v3156 = vunpack.c.h.b16 %v3083
      %v3157 = vunpack.c.l.b16 %v3084
      %v3158 = vunpack.c.h.b16 %v3084
      %v3159 = vunpack.c.l.b16 %v3085
      %v3160 = vunpack.c.h.b16 %v3085
      %v3161 = vunpack.c.l.b16 %v3086
      %v3162 = vunpack.c.h.b16 %v3086
      %v3163 = vunpack.c.l.b16 %v3087
      %v3164 = vunpack.c.h.b16 %v3087
      %v3165 = vunpack.c.l.b16 %v3088
      %v3166 = vunpack.c.h.b16 %v3088
      %v3167 = vunpack.c.l.b16 %v3089
      %v3168 = vunpack.c.h.b16 %v3089
      %v3169 = vunpack.c.l.b16 %v3090
      %v3170 = vunpack.c.h.b16 %v3090
      %v3171 = vunpack.c.l.b16 %v3091
      %v3172 = vunpack.c.h.b16 %v3091
      %v3173 = vunpack.c.l.b16 %v3092
      %v3174 = vunpack.c.h.b16 %v3092
      %v3175 = vunpack.c.l.b16 %v3093
      %v3176 = vunpack.c.h.b16 %v3093
      %v3177 = vunpack.c.l.b16 %v3094
      %v3178 = vunpack.c.h.b16 %v3094
      %v3179 = vunpack.c.l.b16 %v3095
      %v3180 = vunpack.c.h.b16 %v3095
      %v3181 = vunpack.c.l.b16 %v3096
      %v3182 = vunpack.c.h.b16 %v3096
      %v3183 = vunpack.c.l.b16 %v3097
      %v3184 = vunpack.c.h.b16 %v3097
      %v3185 = vunpack.c.l.b16 %v3098
      %v3186 = vunpack.c.h.b16 %v3098
      %v3187 = vunpack.c.l.b16 %v3099
      %v3188 = vunpack.c.h.b16 %v3099
      %v3189 = vunpack.c.l.b16 %v3100
      %v3190 = vunpack.c.h.b16 %v3100
      %v3191 = vunpack.c.l.b16 %v3101
      %v3192 = vunpack.c.h.b16 %v3101
      %v3193 = vunpack.c.l.b16 %v3102
      %v3194 = vunpack.c.h.b16 %v3102
      %v3195 = vunpack.c.l.b16 %v3103
      %v3196 = vunpack.c.h.b16 %v3103
      %v3197 = vunpack.c.l.b16 %v3104
      %v3198 = vunpack.c.h.b16 %v3104
      %v3199 = vunpack.c.l.b16 %v3105
      %v3200 = vunpack.c.h.b16 %v3105
      %v3201 = vunpack.c.l.b16 %v3106
      %v3202 = vunpack.c.h.b16 %v3106
      %v3203 = vunpack.c.l.b16 %v3107
      %v3204 = vunpack.c.h.b16 %v3107
      %v3205 = vunpack.c.l.b16 %v3108
      %v3206 = vunpack.c.h.b16 %v3108
      %v3207 = vunpack.c.l.b16 %v3109
      %v3208 = vunpack.c.h.b16 %v3109
      %v3209 = vunpack.c.l.b16 %v3110
      %v3210 = vunpack.c.h.b16 %v3110
      %v3211 = vunpack.c.l.b16 %v3111
      %v3212 = vunpack.c.h.b16 %v3111
      %v3213 = vunpack.c.l.b16 %v3112
      %v3214 = vunpack.c.h.b16 %v3112
      %v3215 = vpack.c.b16 %v3153, %v3151
      %v3216 = vpack.c.b16 %v3154, %v3152
      %v3217 = vpack.c.b16 %v3157, %v3155
      %v3218 = vpack.c.b16 %v3158, %v3156
      %v3219 = vpack.c.b16 %v3161, %v3159
      %v3220 = vpack.c.b16 %v3162, %v3160
      %v3221 = vpack.c.b16 %v3165, %v3163
      %v3222 = vpack.c.b16 %v3166, %v3164
      %v3223 = vpack.c.b16 %v3169, %v3167
      %v3224 = vpack.c.b16 %v3170, %v3168
      %v3225 = vpack.c.b16 %v3173, %v3171
      %v3226 = vpack.c.b16 %v3174, %v3172
      %v3227 = vpack.c.b16 %v3177, %v3175
      %v3228 = vpack.c.b16 %v3178, %v3176
      %v3229 = vpack.c.b16 %v3181, %v3179
      %v3230 = vpack.c.b16 %v3182, %v3180
      %v3231 = vpack.c.b16 %v3185, %v3183
      %v3232 = vpack.c.b16 %v3186, %v3184
      %v3233 = vpack.c.b16 %v3189, %v3187
      %v3234 = vpack.c.b16 %v3190, %v3188
      %v3235 = vpack.c.b16 %v3193, %v3191
      %v3236 = vpack.c.b16 %v3194, %v3192
      %v3237 = vpack.c.b16 %v3197, %v3195
      %v3238 = vpack.c.b16 %v3198, %v3196
      %v3239 = vpack.c.b16 %v3201, %v3199
      %v3240 = vpack.c.b16 %v3202, %v3200
      %v3241 = vpack.c.b16 %v3205, %v3203
      %v3242 = vpack.c.b16 %v3206, %v3204
      %v3243 = vpack.c.b16 %v3209, %v3207
      %v3244 = vpack.c.b16 %v3210, %v3208
      %v3245 = vpack.c.b16 %v3213, %v3211
      %v3246 = vpack.c.b16 %v3214, %v3212
      %3279 = vmatpush.bf16.msra.mxu0 %v3229
      %3280 = vmatpush.bf16.msra.mxu0 %v3227
      %3281 = vmatpush.bf16.msra.mxu0 %v3225
      %3282 = vmatpush.bf16.msra.mxu0 %v3223
      %3283 = vmatpush.bf16.msra.mxu0 %v3221
      %3284 = vmatpush.bf16.msra.mxu0 %v3219
      %3285 = vmatpush.bf16.msra.mxu0 %v3217
      %3286 = vmatpush.bf16.msra.mxu0 %v3215
      %3287 = vmatmul.bf16.gmra.mxu0 %v3115
      %v3288 = vpop.f32.mrf.mxu0
      %v3289 = vadd.f32 0.0, %v3288
      %v3290 = vpop.f32.mrf.mxu0
      %v3291 = vadd.f32 0.0, %v3290
      %3292 = vdwg.mxu0
      %3293 = vmatpush.bf16.msra.mxu0 %v3245
      %3294 = vmatpush.bf16.msra.mxu0 %v3243
      %3295 = vmatpush.bf16.msra.mxu0 %v3241
      %3296 = vmatpush.bf16.msra.mxu0 %v3239
      %3297 = vmatpush.bf16.msra.mxu0 %v3237
      %3298 = vmatpush.bf16.msra.mxu0 %v3235
      %3299 = vmatpush.bf16.msra.mxu0 %v3233
      %3300 = vmatpush.bf16.msra.mxu0 %v3231
      %3301 = vmatmul.bf16.gmra.mxu0 %v3116
      %v3302 = vpop.f32.mrf.mxu0
      %v3303 = vadd.f32 %v3289, %v3302
      %v3304 = vpop.f32.mrf.mxu0
      %v3305 = vadd.f32 %v3291, %v3304
      %3306 = vdwg.mxu0
      %3307 = vmatpush.bf16.msra.mxu0 %v3230
      %3308 = vmatpush.bf16.msra.mxu0 %v3228
      %3309 = vmatpush.bf16.msra.mxu0 %v3226
      %3310 = vmatpush.bf16.msra.mxu0 %v3224
      %3311 = vmatpush.bf16.msra.mxu0 %v3222
      %3312 = vmatpush.bf16.msra.mxu0 %v3220
      %3313 = vmatpush.bf16.msra.mxu0 %v3218
      %3314 = vmatpush.bf16.msra.mxu0 %v3216
      %3315 = vmatmul.bf16.gmra.mxu0 %v3115
      %v3316 = vpop.f32.mrf.mxu0
      %v3317 = vadd.f32 0.0, %v3316
      %v3318 = vpop.f32.mrf.mxu0
      %v3319 = vadd.f32 0.0, %v3318
      %3320 = vdwg.mxu0
      %3321 = vmatpush.bf16.msra.mxu0 %v3246
      %3322 = vmatpush.bf16.msra.mxu0 %v3244
      %3323 = vmatpush.bf16.msra.mxu0 %v3242
      %3324 = vmatpush.bf16.msra.mxu0 %v3240
      %3325 = vmatpush.bf16.msra.mxu0 %v3238
      %3326 = vmatpush.bf16.msra.mxu0 %v3236
      %3327 = vmatpush.bf16.msra.mxu0 %v3234
      %3328 = vmatpush.bf16.msra.mxu0 %v3232
      %3329 = vmatmul.bf16.gmra.mxu0 %v3116
      %v3330 = vpop.f32.mrf.mxu0
      %v3331 = vadd.f32 %v3317, %v3330
      %v3332 = vpop.f32.mrf.mxu0
      %v3333 = vadd.f32 %v3319, %v3332
      %3334 = vdwg.mxu0
      %v3335 = vadd.f32 %v3042, %v3303
      %v3336 = vadd.f32 %v3070, %v3331
      %v3337 = vadd.f32 %v3044, %v3305
      %v3338 = vadd.f32 %v3072, %v3333
      %v3339 = vld [vmem:[%s8] sm:$0x3]
      %v3341 = vperm.slane %v3339, 0
      %v3342 = vperm.slane %v3339, 1
      %v3345 = vadd.f32 %v3335, %v3341
      %v3346 = vadd.f32 %v3336, %v3342
      %v3347 = vadd.f32 %v3337, %v3341
      %v3348 = vadd.f32 %v3338, %v3342
      %v3349 = vmax.f32 %v3345, 0.0
      %v3350 = vmax.f32 %v3346, 0.0
      %v3351 = vmax.f32 %v3347, 0.0
      %v3352 = vmax.f32 %v3348, 0.0
      %v3353 = vpack.c.bf16 %v3351, %v3349
      %v3354 = vpack.c.bf16 %v3352, %v3350
      %v3355 = vld [vmem:[%s9] sm:$0xff]
      %v3356 = vld [vmem:[%s9 + $0x8] sm:$0xff]
      %v3357 = vld [vmem:[%s9 + $0x10] sm:$0xff]
      %v3358 = vld [vmem:[%s9 + $0x18] sm:$0xff]
      %v3359 = vld [vmem:[%s9 + $0x20] sm:$0xff]
      %v3360 = vld [vmem:[%s9 + $0x28] sm:$0xff]
      %v3361 = vld [vmem:[%s9 + $0x30] sm:$0xff]
      %v3362 = vld [vmem:[%s9 + $0x38] sm:$0xff]
      %v3363 = vld [vmem:[%s9 + $0x40] sm:$0xff]
      %v3364 = vld [vmem:[%s9 + $0x48] sm:$0xff]
      %v3365 = vld [vmem:[%s9 + $0x50] sm:$0xff]
      %v3366 = vld [vmem:[%s9 + $0x58] sm:$0xff]
      %v3367 = vld [vmem:[%s9 + $0x60] sm:$0xff]
      %v3368 = vld [vmem:[%s9 + $0x68] sm:$0xff]
      %v3369 = vld [vmem:[%s9 + $0x70] sm:$0xff]
      %v3370 = vld [vmem:[%s9 + $0x78] sm:$0xff]
      %v3371 = vld [vmem:[%s9 + $0x80] sm:$0xff]
      %v3372 = vld [vmem:[%s9 + $0x88] sm:$0xff]
      %v3373 = vld [vmem:[%s9 + $0x90] sm:$0xff]
      %v3374 = vld [vmem:[%s9 + $0x98] sm:$0xff]
      %v3375 = vld [vmem:[%s9 + $0xa0] sm:$0xff]
      %v3376 = vld [vmem:[%s9 + $0xa8] sm:$0xff]
      %v3377 = vld [vmem:[%s9 + $0xb0] sm:$0xff]
      %v3378 = vld [vmem:[%s9 + $0xb8] sm:$0xff]
      %v3379 = vld [vmem:[%s9 + $0xc0] sm:$0xff]
      %v3380 = vld [vmem:[%s9 + $0xc8] sm:$0xff]
      %v3381 = vld [vmem:[%s9 + $0xd0] sm:$0xff]
      %v3382 = vld [vmem:[%s9 + $0xd8] sm:$0xff]
      %v3383 = vld [vmem:[%s9 + $0xe0] sm:$0xff]
      %v3384 = vld [vmem:[%s9 + $0xe8] sm:$0xff]
      %v3385 = vld [vmem:[%s9 + $0xf0] sm:$0xff]
      %v3386 = vld [vmem:[%s9 + $0xf8] sm:$0xff]
      %v3387 = vld [vmem:[%s9 + $0x100] sm:$0xff]
      %v3388 = vld [vmem:[%s9 + $0x108] sm:$0xff]
      %v3389 = vld [vmem:[%s9 + $0x110] sm:$0xff]
      %v3390 = vld [vmem:[%s9 + $0x118] sm:$0xff]
      %v3391 = vld [vmem:[%s9 + $0x120] sm:$0xff]
      %v3392 = vld [vmem:[%s9 + $0x128] sm:$0xff]
      %v3393 = vld [vmem:[%s9 + $0x130] sm:$0xff]
      %v3394 = vld [vmem:[%s9 + $0x138] sm:$0xff]
      %v3395 = vld [vmem:[%s9 + $0x140] sm:$0xff]
      %v3396 = vld [vmem:[%s9 + $0x148] sm:$0xff]
      %v3397 = vld [vmem:[%s9 + $0x150] sm:$0xff]
      %v3398 = vld [vmem:[%s9 + $0x158] sm:$0xff]
      %v3399 = vld [vmem:[%s9 + $0x160] sm:$0xff]
      %v3400 = vld [vmem:[%s9 + $0x168] sm:$0xff]
      %v3401 = vld [vmem:[%s9 + $0x170] sm:$0xff]
      %v3402 = vld [vmem:[%s9 + $0x178] sm:$0xff]
      %v3403 = vld [vmem:[%s9 + $0x180] sm:$0xff]
      %v3404 = vld [vmem:[%s9 + $0x188] sm:$0xff]
      %v3405 = vld [vmem:[%s9 + $0x190] sm:$0xff]
      %v3406 = vld [vmem:[%s9 + $0x198] sm:$0xff]
      %v3407 = vld [vmem:[%s9 + $0x1a0] sm:$0xff]
      %v3408 = vld [vmem:[%s9 + $0x1a8] sm:$0xff]
      %v3409 = vld [vmem:[%s9 + $0x1b0] sm:$0xff]
      %v3410 = vld [vmem:[%s9 + $0x1b8] sm:$0xff]
      %v3411 = vld [vmem:[%s10] sm:$0xf]
      %v3413 = vperm.slane %v3411, 0
      %v3414 = vperm.slane %v3411, 1
      %v3415 = vperm.slane %v3411, 2
      %v3416 = vperm.slane %v3411, 3
      %v3477 = vunpack.c.l.b16 %v3355
      %v3478 = vunpack.c.h.b16 %v3355
      %v3479 = vunpack.c.l.b16 %v3356
      %v3480 = vunpack.c.h.b16 %v3356
      %v3481 = vunpack.c.l.b16 %v3357
      %v3482 = vunpack.c.h.b16 %v3357
      %v3483 = vunpack.c.l.b16 %v3358
      %v3484 = vunpack.c.h.b16 %v3358
      %v3485 = vunpack.c.l.b16 %v3359
      %v3486 = vunpack.c.h.b16 %v3359
      %v3487 = vunpack.c.l.b16 %v3360
      %v3488 = vunpack.c.h.b16 %v3360
      %v3489 = vunpack.c.l.b16 %v3361
      %v3490 = vunpack.c.h.b16 %v3361
      %v3491 = vunpack.c.l.b16 %v3362
      %v3492 = vunpack.c.h.b16 %v3362
      %v3493 = vunpack.c.l.b16 %v3363
      %v3494 = vunpack.c.h.b16 %v3363
      %v3495 = vunpack.c.l.b16 %v3364
      %v3496 = vunpack.c.h.b16 %v3364
      %v3497 = vunpack.c.l.b16 %v3365
      %v3498 = vunpack.c.h.b16 %v3365
      %v3499 = vunpack.c.l.b16 %v3366
      %v3500 = vunpack.c.h.b16 %v3366
      %v3501 = vunpack.c.l.b16 %v3367
      %v3502 = vunpack.c.h.b16 %v3367
      %v3503 = vunpack.c.l.b16 %v3368
      %v3504 = vunpack.c.h.b16 %v3368
      %v3505 = vunpack.c.l.b16 %v3369
      %v3506 = vunpack.c.h.b16 %v3369
      %v3507 = vunpack.c.l.b16 %v3370
      %v3508 = vunpack.c.h.b16 %v3370
      %v3509 = vunpack.c.l.b16 %v3371
      %v3510 = vunpack.c.h.b16 %v3371
      %v3511 = vunpack.c.l.b16 %v3372
      %v3512 = vunpack.c.h.b16 %v3372
      %v3513 = vunpack.c.l.b16 %v3373
      %v3514 = vunpack.c.h.b16 %v3373
      %v3515 = vunpack.c.l.b16 %v3374
      %v3516 = vunpack.c.h.b16 %v3374
      %v3517 = vunpack.c.l.b16 %v3375
      %v3518 = vunpack.c.h.b16 %v3375
      %v3519 = vunpack.c.l.b16 %v3376
      %v3520 = vunpack.c.h.b16 %v3376
      %v3521 = vunpack.c.l.b16 %v3377
      %v3522 = vunpack.c.h.b16 %v3377
      %v3523 = vunpack.c.l.b16 %v3378
      %v3524 = vunpack.c.h.b16 %v3378
      %v3525 = vunpack.c.l.b16 %v3379
      %v3526 = vunpack.c.h.b16 %v3379
      %v3527 = vunpack.c.l.b16 %v3380
      %v3528 = vunpack.c.h.b16 %v3380
      %v3529 = vunpack.c.l.b16 %v3381
      %v3530 = vunpack.c.h.b16 %v3381
      %v3531 = vunpack.c.l.b16 %v3382
      %v3532 = vunpack.c.h.b16 %v3382
      %v3533 = vunpack.c.l.b16 %v3383
      %v3534 = vunpack.c.h.b16 %v3383
      %v3535 = vunpack.c.l.b16 %v3384
      %v3536 = vunpack.c.h.b16 %v3384
      %v3537 = vunpack.c.l.b16 %v3385
      %v3538 = vunpack.c.h.b16 %v3385
      %v3539 = vunpack.c.l.b16 %v3386
      %v3540 = vunpack.c.h.b16 %v3386
      %v3541 = vunpack.c.l.b16 %v3387
      %v3542 = vunpack.c.h.b16 %v3387
      %v3543 = vunpack.c.l.b16 %v3388
      %v3544 = vunpack.c.h.b16 %v3388
      %v3545 = vunpack.c.l.b16 %v3389
      %v3546 = vunpack.c.h.b16 %v3389
      %v3547 = vunpack.c.l.b16 %v3390
      %v3548 = vunpack.c.h.b16 %v3390
      %v3549 = vunpack.c.l.b16 %v3391
      %v3550 = vunpack.c.h.b16 %v3391
      %v3551 = vunpack.c.l.b16 %v3392
      %v3552 = vunpack.c.h.b16 %v3392
      %v3553 = vunpack.c.l.b16 %v3393
      %v3554 = vunpack.c.h.b16 %v3393
      %v3555 = vunpack.c.l.b16 %v3394
      %v3556 = vunpack.c.h.b16 %v3394
      %v3557 = vunpack.c.l.b16 %v3395
      %v3558 = vunpack.c.h.b16 %v3395
      %v3559 = vunpack.c.l.b16 %v3396
      %v3560 = vunpack.c.h.b16 %v3396
      %v3561 = vunpack.c.l.b16 %v3397
      %v3562 = vunpack.c.h.b16 %v3397
      %v3563 = vunpack.c.l.b16 %v3398
      %v3564 = vunpack.c.h.b16 %v3398
      %v3565 = vunpack.c.l.b16 %v3399
      %v3566 = vunpack.c.h.b16 %v3399
      %v3567 = vunpack.c.l.b16 %v3400
      %v3568 = vunpack.c.h.b16 %v3400
      %v3569 = vunpack.c.l.b16 %v3401
      %v3570 = vunpack.c.h.b16 %v3401
      %v3571 = vunpack.c.l.b16 %v3402
      %v3572 = vunpack.c.h.b16 %v3402
      %v3573 = vunpack.c.l.b16 %v3403
      %v3574 = vunpack.c.h.b16 %v3403
      %v3575 = vunpack.c.l.b16 %v3404
      %v3576 = vunpack.c.h.b16 %v3404
      %v3577 = vunpack.c.l.b16 %v3405
      %v3578 = vunpack.c.h.b16 %v3405
      %v3579 = vunpack.c.l.b16 %v3406
      %v3580 = vunpack.c.h.b16 %v3406
      %v3581 = vunpack.c.l.b16 %v3407
      %v3582 = vunpack.c.h.b16 %v3407
      %v3583 = vunpack.c.l.b16 %v3408
      %v3584 = vunpack.c.h.b16 %v3408
      %v3585 = vunpack.c.l.b16 %v3409
      %v3586 = vunpack.c.h.b16 %v3409
      %v3587 = vunpack.c.l.b16 %v3410
      %v3588 = vunpack.c.h.b16 %v3410
      %v3589 = vpack.c.b16 %v3481, %v3477
      %v3590 = vpack.c.b16 %v3482, %v3478
      %v3591 = vpack.c.b16 %v3483, %v3479
      %v3592 = vpack.c.b16 %v3484, %v3480
      %v3593 = vpack.c.b16 %v3489, %v3485
      %v3594 = vpack.c.b16 %v3490, %v3486
      %v3595 = vpack.c.b16 %v3491, %v3487
      %v3596 = vpack.c.b16 %v3492, %v3488
      %v3597 = vpack.c.b16 %v3497, %v3493
      %v3598 = vpack.c.b16 %v3498, %v3494
      %v3599 = vpack.c.b16 %v3499, %v3495
      %v3600 = vpack.c.b16 %v3500, %v3496
      %v3601 = vpack.c.b16 %v3505, %v3501
      %v3602 = vpack.c.b16 %v3506, %v3502
      %v3603 = vpack.c.b16 %v3507, %v3503
      %v3604 = vpack.c.b16 %v3508, %v3504
      %v3605 = vpack.c.b16 %v3513, %v3509
      %v3606 = vpack.c.b16 %v3514, %v3510
      %v3607 = vpack.c.b16 %v3515, %v3511
      %v3608 = vpack.c.b16 %v3516, %v3512
      %v3609 = vpack.c.b16 %v3521, %v3517
      %v3610 = vpack.c.b16 %v3522, %v3518
      %v3611 = vpack.c.b16 %v3523, %v3519
      %v3612 = vpack.c.b16 %v3524, %v3520
      %v3613 = vpack.c.b16 %v3529, %v3525
      %v3614 = vpack.c.b16 %v3530, %v3526
      %v3615 = vpack.c.b16 %v3531, %v3527
      %v3616 = vpack.c.b16 %v3532, %v3528
      %v3617 = vpack.c.b16 %v3537, %v3533
      %v3618 = vpack.c.b16 %v3538, %v3534
      %v3619 = vpack.c.b16 %v3539, %v3535
      %v3620 = vpack.c.b16 %v3540, %v3536
      %v3621 = vpack.c.b16 %v3545, %v3541
      %v3622 = vpack.c.b16 %v3546, %v3542
      %v3623 = vpack.c.b16 %v3547, %v3543
      %v3624 = vpack.c.b16 %v3548, %v3544
      %v3625 = vpack.c.b16 %v3553, %v3549
      %v3626 = vpack.c.b16 %v3554, %v3550
      %v3627 = vpack.c.b16 %v3555, %v3551
      %v3628 = vpack.c.b16 %v3556, %v3552
      %v3629 = vpack.c.b16 %v3561, %v3557
      %v3630 = vpack.c.b16 %v3562, %v3558
      %v3631 = vpack.c.b16 %v3563, %v3559
      %v3632 = vpack.c.b16 %v3564, %v3560
      %v3633 = vpack.c.b16 %v3569, %v3565
      %v3634 = vpack.c.b16 %v3570, %v3566
      %v3635 = vpack.c.b16 %v3571, %v3567
      %v3636 = vpack.c.b16 %v3572, %v3568
      %v3637 = vpack.c.b16 %v3577, %v3573
      %v3638 = vpack.c.b16 %v3578, %v3574
      %v3639 = vpack.c.b16 %v3579, %v3575
      %v3640 = vpack.c.b16 %v3580, %v3576
      %v3641 = vpack.c.b16 %v3585, %v3581
      %v3642 = vpack.c.b16 %v3586, %v3582
      %v3643 = vpack.c.b16 %v3587, %v3583
      %v3644 = vpack.c.b16 %v3588, %v3584
      %vm3701 = vcmask 785408
      %v3703 = vsel %vm3701, %v3354, 0
      %3705 = vmatpush.bf16.msra.mxu0 %v3617
      %3706 = vmatpush.bf16.msra.mxu0 %v3613
      %3707 = vmatpush.bf16.msra.mxu0 %v3609
      %3708 = vmatpush.bf16.msra.mxu0 %v3605
      %3709 = vmatpush.bf16.msra.mxu0 %v3601
      %3710 = vmatpush.bf16.msra.mxu0 %v3597
      %3711 = vmatpush.bf16.msra.mxu0 %v3593
      %3712 = vmatpush.bf16.msra.mxu0 %v3589
      %3713 = vmatmul.bf16.gmra.mxu0 %v3353
      %v3714 = vpop.f32.mrf.mxu0
      %v3715 = vadd.f32 %v3413, %v3714
      %v3716 = vpop.f32.mrf.mxu0
      %v3717 = vadd.f32 %v3413, %v3716
      %3718 = vdwg.mxu0
      %3719 = vmatpush.bf16.msra.mxu0 0
      %3720 = vmatpush.bf16.msra.mxu0 0
      %3721 = vmatpush.bf16.msra.mxu0 %v3641
      %3722 = vmatpush.bf16.msra.mxu0 %v3637
      %3723 = vmatpush.bf16.msra.mxu0 %v3633
      %3724 = vmatpush.bf16.msra.mxu0 %v3629
      %3725 = vmatpush.bf16.msra.mxu0 %v3625
      %3726 = vmatpush.bf16.msra.mxu0 %v3621
      %3727 = vmatmul.bf16.gmra.mxu0 %v3703
      %v3728 = vpop.f32.mrf.mxu0
      %v3729 = vadd.f32 %v3715, %v3728
      %v3730 = vpop.f32.mrf.mxu0
      %v3731 = vadd.f32 %v3717, %v3730
      %3732 = vdwg.mxu0
      %3733 = vmatpush.bf16.msra.mxu0 %v3618
      %3734 = vmatpush.bf16.msra.mxu0 %v3614
      %3735 = vmatpush.bf16.msra.mxu0 %v3610
      %3736 = vmatpush.bf16.msra.mxu0 %v3606
      %3737 = vmatpush.bf16.msra.mxu0 %v3602
      %3738 = vmatpush.bf16.msra.mxu0 %v3598
      %3739 = vmatpush.bf16.msra.mxu0 %v3594
      %3740 = vmatpush.bf16.msra.mxu0 %v3590
      %3741 = vmatmul.bf16.gmra.mxu0 %v3353
      %v3742 = vpop.f32.mrf.mxu0
      %v3743 = vadd.f32 %v3414, %v3742
      %v3744 = vpop.f32.mrf.mxu0
      %v3745 = vadd.f32 %v3414, %v3744
      %3746 = vdwg.mxu0
      %3747 = vmatpush.bf16.msra.mxu0 0
      %3748 = vmatpush.bf16.msra.mxu0 0
      %3749 = vmatpush.bf16.msra.mxu0 %v3642
      %3750 = vmatpush.bf16.msra.mxu0 %v3638
      %3751 = vmatpush.bf16.msra.mxu0 %v3634
      %3752 = vmatpush.bf16.msra.mxu0 %v3630
      %3753 = vmatpush.bf16.msra.mxu0 %v3626
      %3754 = vmatpush.bf16.msra.mxu0 %v3622
      %3755 = vmatmul.bf16.gmra.mxu0 %v3703
      %v3756 = vpop.f32.mrf.mxu0
      %v3757 = vadd.f32 %v3743, %v3756
      %v3758 = vpop.f32.mrf.mxu0
      %v3759 = vadd.f32 %v3745, %v3758
      %3760 = vdwg.mxu0
      %3761 = vmatpush.bf16.msra.mxu0 %v3619
      %3762 = vmatpush.bf16.msra.mxu0 %v3615
      %3763 = vmatpush.bf16.msra.mxu0 %v3611
      %3764 = vmatpush.bf16.msra.mxu0 %v3607
      %3765 = vmatpush.bf16.msra.mxu0 %v3603
      %3766 = vmatpush.bf16.msra.mxu0 %v3599
      %3767 = vmatpush.bf16.msra.mxu0 %v3595
      %3768 = vmatpush.bf16.msra.mxu0 %v3591
      %3769 = vmatmul.bf16.gmra.mxu0 %v3353
      %v3770 = vpop.f32.mrf.mxu0
      %v3771 = vadd.f32 %v3415, %v3770
      %v3772 = vpop.f32.mrf.mxu0
      %v3773 = vadd.f32 %v3415, %v3772
      %3774 = vdwg.mxu0
      %3775 = vmatpush.bf16.msra.mxu0 0
      %3776 = vmatpush.bf16.msra.mxu0 0
      %3777 = vmatpush.bf16.msra.mxu0 %v3643
      %3778 = vmatpush.bf16.msra.mxu0 %v3639
      %3779 = vmatpush.bf16.msra.mxu0 %v3635
      %3780 = vmatpush.bf16.msra.mxu0 %v3631
      %3781 = vmatpush.bf16.msra.mxu0 %v3627
      %3782 = vmatpush.bf16.msra.mxu0 %v3623
      %3783 = vmatmul.bf16.gmra.mxu0 %v3703
      %v3784 = vpop.f32.mrf.mxu0
      %v3785 = vadd.f32 %v3771, %v3784
      %v3786 = vpop.f32.mrf.mxu0
      %v3787 = vadd.f32 %v3773, %v3786
      %3788 = vdwg.mxu0
      %3789 = vmatpush.bf16.msra.mxu0 %v3620
      %3790 = vmatpush.bf16.msra.mxu0 %v3616
      %3791 = vmatpush.bf16.msra.mxu0 %v3612
      %3792 = vmatpush.bf16.msra.mxu0 %v3608
      %3793 = vmatpush.bf16.msra.mxu0 %v3604
      %3794 = vmatpush.bf16.msra.mxu0 %v3600
      %3795 = vmatpush.bf16.msra.mxu0 %v3596
      %3796 = vmatpush.bf16.msra.mxu0 %v3592
      %3797 = vmatmul.bf16.gmra.mxu0 %v3353
      %v3798 = vpop.f32.mrf.mxu0
      %v3799 = vadd.f32 %v3416, %v3798
      %v3800 = vpop.f32.mrf.mxu0
      %v3801 = vadd.f32 %v3416, %v3800
      %3802 = vdwg.mxu0
      %3803 = vmatpush.bf16.msra.mxu0 0
      %3804 = vmatpush.bf16.msra.mxu0 0
      %3805 = vmatpush.bf16.msra.mxu0 %v3644
      %3806 = vmatpush.bf16.msra.mxu0 %v3640
      %3807 = vmatpush.bf16.msra.mxu0 %v3636
      %3808 = vmatpush.bf16.msra.mxu0 %v3632
      %3809 = vmatpush.bf16.msra.mxu0 %v3628
      %3810 = vmatpush.bf16.msra.mxu0 %v3624
      %3811 = vmatmul.bf16.gmra.mxu0 %v3703
      %v3812 = vpop.f32.mrf.mxu0
      %v3813 = vadd.f32 %v3799, %v3812
      %v3814 = vpop.f32.mrf.mxu0
      %v3815 = vadd.f32 %v3801, %v3814
      %3816 = vdwg.mxu0
      %v3817 = vmax.f32 %v3729, 0.0
      %v3818 = vmax.f32 %v3757, 0.0
      %v3819 = vmax.f32 %v3785, 0.0
      %v3820 = vmax.f32 %v3813, 0.0
      %v3821 = vmax.f32 %v3731, 0.0
      %v3822 = vmax.f32 %v3759, 0.0
      %v3823 = vmax.f32 %v3787, 0.0
      %v3824 = vmax.f32 %v3815, 0.0
      %v3825 = vpack.c.bf16 %v3821, %v3817
      %v3826 = vpack.c.bf16 %v3822, %v3818
      %v3827 = vpack.c.bf16 %v3823, %v3819
      %v3828 = vpack.c.bf16 %v3824, %v3820
      %v3829 = vld [vmem:[%s11] sm:$0xff]
      %v3830 = vld [vmem:[%s11 + $0x8] sm:$0xff]
      %v3831 = vld [vmem:[%s11 + $0x10] sm:$0xff]
      %v3832 = vld [vmem:[%s11 + $0x18] sm:$0xff]
      %v3833 = vld [vmem:[%s11 + $0x20] sm:$0xff]
      %v3834 = vld [vmem:[%s11 + $0x28] sm:$0xff]
      %v3835 = vld [vmem:[%s11 + $0x30] sm:$0xff]
      %v3836 = vld [vmem:[%s11 + $0x38] sm:$0xff]
      %v3837 = vld [vmem:[%s11 + $0x40] sm:$0xff]
      %v3838 = vld [vmem:[%s11 + $0x48] sm:$0xff]
      %v3839 = vld [vmem:[%s11 + $0x50] sm:$0xff]
      %v3840 = vld [vmem:[%s11 + $0x58] sm:$0xff]
      %v3841 = vld [vmem:[%s11 + $0x60] sm:$0xff]
      %v3842 = vld [vmem:[%s11 + $0x68] sm:$0xff]
      %v3843 = vld [vmem:[%s11 + $0x70] sm:$0xff]
      %v3844 = vld [vmem:[%s11 + $0x78] sm:$0xff]
      %v3845 = vld [vmem:[%s11 + $0x80] sm:$0xff]
      %v3846 = vld [vmem:[%s11 + $0x88] sm:$0xff]
      %v3847 = vld [vmem:[%s11 + $0x90] sm:$0xff]
      %v3848 = vld [vmem:[%s11 + $0x98] sm:$0xff]
      %v3849 = vld [vmem:[%s11 + $0xa0] sm:$0xff]
      %v3850 = vld [vmem:[%s11 + $0xa8] sm:$0xff]
      %v3851 = vld [vmem:[%s11 + $0xb0] sm:$0xff]
      %v3852 = vld [vmem:[%s11 + $0xb8] sm:$0xff]
      %v3853 = vld [vmem:[%s11 + $0xc0] sm:$0xff]
      %v3854 = vld [vmem:[%s11 + $0xc8] sm:$0xff]
      %v3855 = vld [vmem:[%s11 + $0xd0] sm:$0xff]
      %v3856 = vld [vmem:[%s11 + $0xd8] sm:$0xff]
      %v3857 = vld [vmem:[%s11 + $0xe0] sm:$0xff]
      %v3858 = vld [vmem:[%s11 + $0xe8] sm:$0xff]
      %v3859 = vld [vmem:[%s11 + $0xf0] sm:$0xff]
      %v3860 = vld [vmem:[%s11 + $0xf8] sm:$0xff]
      %v3861 = vld [vmem:[%s11 + $0x100] sm:$0xff]
      %v3862 = vld [vmem:[%s11 + $0x108] sm:$0xff]
      %v3863 = vld [vmem:[%s11 + $0x110] sm:$0xff]
      %v3864 = vld [vmem:[%s11 + $0x118] sm:$0xff]
      %v3865 = vld [vmem:[%s11 + $0x120] sm:$0xff]
      %v3866 = vld [vmem:[%s11 + $0x128] sm:$0xff]
      %v3867 = vld [vmem:[%s11 + $0x130] sm:$0xff]
      %v3868 = vld [vmem:[%s11 + $0x138] sm:$0xff]
      %v3869 = vld [vmem:[%s11 + $0x140] sm:$0xff]
      %v3870 = vld [vmem:[%s11 + $0x148] sm:$0xff]
      %v3871 = vld [vmem:[%s11 + $0x150] sm:$0xff]
      %v3872 = vld [vmem:[%s11 + $0x158] sm:$0xff]
      %v3873 = vld [vmem:[%s11 + $0x160] sm:$0xff]
      %v3874 = vld [vmem:[%s11 + $0x168] sm:$0xff]
      %v3875 = vld [vmem:[%s11 + $0x170] sm:$0xff]
      %v3876 = vld [vmem:[%s11 + $0x178] sm:$0xff]
      %v3877 = vld [vmem:[%s11 + $0x180] sm:$0xff]
      %v3878 = vld [vmem:[%s11 + $0x188] sm:$0xff]
      %v3879 = vld [vmem:[%s11 + $0x190] sm:$0xff]
      %v3880 = vld [vmem:[%s11 + $0x198] sm:$0xff]
      %v3881 = vld [vmem:[%s11 + $0x1a0] sm:$0xff]
      %v3882 = vld [vmem:[%s11 + $0x1a8] sm:$0xff]
      %v3883 = vld [vmem:[%s11 + $0x1b0] sm:$0xff]
      %v3884 = vld [vmem:[%s11 + $0x1b8] sm:$0xff]
      %v3885 = vld [vmem:[%s12] sm:$0x3]
      %v3887 = vperm.slane %v3885, 0
      %v3888 = vperm.slane %v3885, 1
      %v3947 = vunpack.c.l.b16 %v3829
      %v3948 = vunpack.c.h.b16 %v3829
      %v3949 = vunpack.c.l.b16 %v3830
      %v3950 = vunpack.c.h.b16 %v3830
      %v3951 = vunpack.c.l.b16 %v3831
      %v3952 = vunpack.c.h.b16 %v3831
      %v3953 = vunpack.c.l.b16 %v3832
      %v3954 = vunpack.c.h.b16 %v3832
      %v3955 = vunpack.c.l.b16 %v3833
      %v3956 = vunpack.c.h.b16 %v3833
      %v3957 = vunpack.c.l.b16 %v3834
      %v3958 = vunpack.c.h.b16 %v3834
      %v3959 = vunpack.c.l.b16 %v3835
      %v3960 = vunpack.c.h.b16 %v3835
      %v3961 = vunpack.c.l.b16 %v3836
      %v3962 = vunpack.c.h.b16 %v3836
      %v3963 = vunpack.c.l.b16 %v3837
      %v3964 = vunpack.c.h.b16 %v3837
      %v3965 = vunpack.c.l.b16 %v3838
      %v3966 = vunpack.c.h.b16 %v3838
      %v3967 = vunpack.c.l.b16 %v3839
      %v3968 = vunpack.c.h.b16 %v3839
      %v3969 = vunpack.c.l.b16 %v3840
      %v3970 = vunpack.c.h.b16 %v3840
      %v3971 = vunpack.c.l.b16 %v3841
      %v3972 = vunpack.c.h.b16 %v3841
      %v3973 = vunpack.c.l.b16 %v3842
      %v3974 = vunpack.c.h.b16 %v3842
      %v3975 = vunpack.c.l.b16 %v3843
      %v3976 = vunpack.c.h.b16 %v3843
      %v3977 = vunpack.c.l.b16 %v3844
      %v3978 = vunpack.c.h.b16 %v3844
      %v3979 = vunpack.c.l.b16 %v3845
      %v3980 = vunpack.c.h.b16 %v3845
      %v3981 = vunpack.c.l.b16 %v3846
      %v3982 = vunpack.c.h.b16 %v3846
      %v3983 = vunpack.c.l.b16 %v3847
      %v3984 = vunpack.c.h.b16 %v3847
      %v3985 = vunpack.c.l.b16 %v3848
      %v3986 = vunpack.c.h.b16 %v3848
      %v3987 = vunpack.c.l.b16 %v3849
      %v3988 = vunpack.c.h.b16 %v3849
      %v3989 = vunpack.c.l.b16 %v3850
      %v3990 = vunpack.c.h.b16 %v3850
      %v3991 = vunpack.c.l.b16 %v3851
      %v3992 = vunpack.c.h.b16 %v3851
      %v3993 = vunpack.c.l.b16 %v3852
      %v3994 = vunpack.c.h.b16 %v3852
      %v3995 = vunpack.c.l.b16 %v3853
      %v3996 = vunpack.c.h.b16 %v3853
      %v3997 = vunpack.c.l.b16 %v3854
      %v3998 = vunpack.c.h.b16 %v3854
      %v3999 = vunpack.c.l.b16 %v3855
      %v4000 = vunpack.c.h.b16 %v3855
      %v4001 = vunpack.c.l.b16 %v3856
      %v4002 = vunpack.c.h.b16 %v3856
      %v4003 = vunpack.c.l.b16 %v3857
      %v4004 = vunpack.c.h.b16 %v3857
      %v4005 = vunpack.c.l.b16 %v3858
      %v4006 = vunpack.c.h.b16 %v3858
      %v4007 = vunpack.c.l.b16 %v3859
      %v4008 = vunpack.c.h.b16 %v3859
      %v4009 = vunpack.c.l.b16 %v3860
      %v4010 = vunpack.c.h.b16 %v3860
      %v4011 = vunpack.c.l.b16 %v3861
      %v4012 = vunpack.c.h.b16 %v3861
      %v4013 = vunpack.c.l.b16 %v3862
      %v4014 = vunpack.c.h.b16 %v3862
      %v4015 = vunpack.c.l.b16 %v3863
      %v4016 = vunpack.c.h.b16 %v3863
      %v4017 = vunpack.c.l.b16 %v3864
      %v4018 = vunpack.c.h.b16 %v3864
      %v4019 = vunpack.c.l.b16 %v3865
      %v4020 = vunpack.c.h.b16 %v3865
      %v4021 = vunpack.c.l.b16 %v3866
      %v4022 = vunpack.c.h.b16 %v3866
      %v4023 = vunpack.c.l.b16 %v3867
      %v4024 = vunpack.c.h.b16 %v3867
      %v4025 = vunpack.c.l.b16 %v3868
      %v4026 = vunpack.c.h.b16 %v3868
      %v4027 = vunpack.c.l.b16 %v3869
      %v4028 = vunpack.c.h.b16 %v3869
      %v4029 = vunpack.c.l.b16 %v3870
      %v4030 = vunpack.c.h.b16 %v3870
      %v4031 = vunpack.c.l.b16 %v3871
      %v4032 = vunpack.c.h.b16 %v3871
      %v4033 = vunpack.c.l.b16 %v3872
      %v4034 = vunpack.c.h.b16 %v3872
      %v4035 = vunpack.c.l.b16 %v3873
      %v4036 = vunpack.c.h.b16 %v3873
      %v4037 = vunpack.c.l.b16 %v3874
      %v4038 = vunpack.c.h.b16 %v3874
      %v4039 = vunpack.c.l.b16 %v3875
      %v4040 = vunpack.c.h.b16 %v3875
      %v4041 = vunpack.c.l.b16 %v3876
      %v4042 = vunpack.c.h.b16 %v3876
      %v4043 = vunpack.c.l.b16 %v3877
      %v4044 = vunpack.c.h.b16 %v3877
      %v4045 = vunpack.c.l.b16 %v3878
      %v4046 = vunpack.c.h.b16 %v3878
      %v4047 = vunpack.c.l.b16 %v3879
      %v4048 = vunpack.c.h.b16 %v3879
      %v4049 = vunpack.c.l.b16 %v3880
      %v4050 = vunpack.c.h.b16 %v3880
      %v4051 = vunpack.c.l.b16 %v3881
      %v4052 = vunpack.c.h.b16 %v3881
      %v4053 = vunpack.c.l.b16 %v3882
      %v4054 = vunpack.c.h.b16 %v3882
      %v4055 = vunpack.c.l.b16 %v3883
      %v4056 = vunpack.c.h.b16 %v3883
      %v4057 = vunpack.c.l.b16 %v3884
      %v4058 = vunpack.c.h.b16 %v3884
      %v4059 = vpack.c.b16 %v3949, %v3947
      %v4060 = vpack.c.b16 %v3950, %v3948
      %v4061 = vpack.c.b16 %v3953, %v3951
      %v4062 = vpack.c.b16 %v3954, %v3952
      %v4063 = vpack.c.b16 %v3957, %v3955
      %v4064 = vpack.c.b16 %v3958, %v3956
      %v4065 = vpack.c.b16 %v3961, %v3959
      %v4066 = vpack.c.b16 %v3962, %v3960
      %v4067 = vpack.c.b16 %v3965, %v3963
      %v4068 = vpack.c.b16 %v3966, %v3964
      %v4069 = vpack.c.b16 %v3969, %v3967
      %v4070 = vpack.c.b16 %v3970, %v3968
      %v4071 = vpack.c.b16 %v3973, %v3971
      %v4072 = vpack.c.b16 %v3974, %v3972
      %v4073 = vpack.c.b16 %v3977, %v3975
      %v4074 = vpack.c.b16 %v3978, %v3976
      %v4075 = vpack.c.b16 %v3981, %v3979
      %v4076 = vpack.c.b16 %v3982, %v3980
      %v4077 = vpack.c.b16 %v3985, %v3983
      %v4078 = vpack.c.b16 %v3986, %v3984
      %v4079 = vpack.c.b16 %v3989, %v3987
      %v4080 = vpack.c.b16 %v3990, %v3988
      %v4081 = vpack.c.b16 %v3993, %v3991
      %v4082 = vpack.c.b16 %v3994, %v3992
      %v4083 = vpack.c.b16 %v3997, %v3995
      %v4084 = vpack.c.b16 %v3998, %v3996
      %v4085 = vpack.c.b16 %v4001, %v3999
      %v4086 = vpack.c.b16 %v4002, %v4000
      %v4087 = vpack.c.b16 %v4005, %v4003
      %v4088 = vpack.c.b16 %v4006, %v4004
      %v4089 = vpack.c.b16 %v4009, %v4007
      %v4090 = vpack.c.b16 %v4010, %v4008
      %v4091 = vpack.c.b16 %v4013, %v4011
      %v4092 = vpack.c.b16 %v4014, %v4012
      %v4093 = vpack.c.b16 %v4017, %v4015
      %v4094 = vpack.c.b16 %v4018, %v4016
      %v4095 = vpack.c.b16 %v4021, %v4019
      %v4096 = vpack.c.b16 %v4022, %v4020
      %v4097 = vpack.c.b16 %v4025, %v4023
      %v4098 = vpack.c.b16 %v4026, %v4024
      %v4099 = vpack.c.b16 %v4029, %v4027
      %v4100 = vpack.c.b16 %v4030, %v4028
      %v4101 = vpack.c.b16 %v4033, %v4031
      %v4102 = vpack.c.b16 %v4034, %v4032
      %v4103 = vpack.c.b16 %v4037, %v4035
      %v4104 = vpack.c.b16 %v4038, %v4036
      %v4105 = vpack.c.b16 %v4041, %v4039
      %v4106 = vpack.c.b16 %v4042, %v4040
      %v4107 = vpack.c.b16 %v4045, %v4043
      %v4108 = vpack.c.b16 %v4046, %v4044
      %v4109 = vpack.c.b16 %v4049, %v4047
      %v4110 = vpack.c.b16 %v4050, %v4048
      %v4111 = vpack.c.b16 %v4053, %v4051
      %v4112 = vpack.c.b16 %v4054, %v4052
      %v4113 = vpack.c.b16 %v4057, %v4055
      %v4114 = vpack.c.b16 %v4058, %v4056
      %vm4171 = vcmask 523264
      %v4173 = vsel %vm4171, %v3828, 0
      %4175 = vmatpush.bf16.msra.mxu0 %v4073
      %4176 = vmatpush.bf16.msra.mxu0 %v4071
      %4177 = vmatpush.bf16.msra.mxu0 %v4069
      %4178 = vmatpush.bf16.msra.mxu0 %v4067
      %4179 = vmatpush.bf16.msra.mxu0 %v4065
      %4180 = vmatpush.bf16.msra.mxu0 %v4063
      %4181 = vmatpush.bf16.msra.mxu0 %v4061
      %4182 = vmatpush.bf16.msra.mxu0 %v4059
      %4183 = vmatmul.bf16.gmra.mxu0 %v3825
      %v4184 = vpop.f32.mrf.mxu0
      %v4185 = vadd.f32 %v3887, %v4184
      %v4186 = vpop.f32.mrf.mxu0
      %v4187 = vadd.f32 %v3887, %v4186
      %4188 = vdwg.mxu0
      %4189 = vmatpush.bf16.msra.mxu0 %v4089
      %4190 = vmatpush.bf16.msra.mxu0 %v4087
      %4191 = vmatpush.bf16.msra.mxu0 %v4085
      %4192 = vmatpush.bf16.msra.mxu0 %v4083
      %4193 = vmatpush.bf16.msra.mxu0 %v4081
      %4194 = vmatpush.bf16.msra.mxu0 %v4079
      %4195 = vmatpush.bf16.msra.mxu0 %v4077
      %4196 = vmatpush.bf16.msra.mxu0 %v4075
      %4197 = vmatmul.bf16.gmra.mxu0 %v3826
      %v4198 = vpop.f32.mrf.mxu0
      %v4199 = vadd.f32 %v4185, %v4198
      %v4200 = vpop.f32.mrf.mxu0
      %v4201 = vadd.f32 %v4187, %v4200
      %4202 = vdwg.mxu0
      %4203 = vmatpush.bf16.msra.mxu0 %v4105
      %4204 = vmatpush.bf16.msra.mxu0 %v4103
      %4205 = vmatpush.bf16.msra.mxu0 %v4101
      %4206 = vmatpush.bf16.msra.mxu0 %v4099
      %4207 = vmatpush.bf16.msra.mxu0 %v4097
      %4208 = vmatpush.bf16.msra.mxu0 %v4095
      %4209 = vmatpush.bf16.msra.mxu0 %v4093
      %4210 = vmatpush.bf16.msra.mxu0 %v4091
      %4211 = vmatmul.bf16.gmra.mxu0 %v3827
      %v4212 = vpop.f32.mrf.mxu0
      %v4213 = vadd.f32 %v4199, %v4212
      %v4214 = vpop.f32.mrf.mxu0
      %v4215 = vadd.f32 %v4201, %v4214
      %4216 = vdwg.mxu0
      %4217 = vmatpush.bf16.msra.mxu0 0
      %4218 = vmatpush.bf16.msra.mxu0 0
      %4219 = vmatpush.bf16.msra.mxu0 0
      %4220 = vmatpush.bf16.msra.mxu0 0
      %4221 = vmatpush.bf16.msra.mxu0 %v4113
      %4222 = vmatpush.bf16.msra.mxu0 %v4111
      %4223 = vmatpush.bf16.msra.mxu0 %v4109
      %4224 = vmatpush.bf16.msra.mxu0 %v4107
      %4225 = vmatmul.bf16.gmra.mxu0 %v4173
      %v4226 = vpop.f32.mrf.mxu0
      %v4227 = vadd.f32 %v4213, %v4226
      %v4228 = vpop.f32.mrf.mxu0
      %v4229 = vadd.f32 %v4215, %v4228
      %4230 = vdwg.mxu0
      %4231 = vmatpush.bf16.msra.mxu0 %v4074
      %4232 = vmatpush.bf16.msra.mxu0 %v4072
      %4233 = vmatpush.bf16.msra.mxu0 %v4070
      %4234 = vmatpush.bf16.msra.mxu0 %v4068
      %4235 = vmatpush.bf16.msra.mxu0 %v4066
      %4236 = vmatpush.bf16.msra.mxu0 %v4064
      %4237 = vmatpush.bf16.msra.mxu0 %v4062
      %4238 = vmatpush.bf16.msra.mxu0 %v4060
      %4239 = vmatmul.bf16.gmra.mxu0 %v3825
      %v4240 = vpop.f32.mrf.mxu0
      %v4241 = vadd.f32 %v3888, %v4240
      %v4242 = vpop.f32.mrf.mxu0
      %v4243 = vadd.f32 %v3888, %v4242
      %4244 = vdwg.mxu0
      %4245 = vmatpush.bf16.msra.mxu0 %v4090
      %4246 = vmatpush.bf16.msra.mxu0 %v4088
      %4247 = vmatpush.bf16.msra.mxu0 %v4086
      %4248 = vmatpush.bf16.msra.mxu0 %v4084
      %4249 = vmatpush.bf16.msra.mxu0 %v4082
      %4250 = vmatpush.bf16.msra.mxu0 %v4080
      %4251 = vmatpush.bf16.msra.mxu0 %v4078
      %4252 = vmatpush.bf16.msra.mxu0 %v4076
      %4253 = vmatmul.bf16.gmra.mxu0 %v3826
      %v4254 = vpop.f32.mrf.mxu0
      %v4255 = vadd.f32 %v4241, %v4254
      %v4256 = vpop.f32.mrf.mxu0
      %v4257 = vadd.f32 %v4243, %v4256
      %4258 = vdwg.mxu0
      %4259 = vmatpush.bf16.msra.mxu0 %v4106
      %4260 = vmatpush.bf16.msra.mxu0 %v4104
      %4261 = vmatpush.bf16.msra.mxu0 %v4102
      %4262 = vmatpush.bf16.msra.mxu0 %v4100
      %4263 = vmatpush.bf16.msra.mxu0 %v4098
      %4264 = vmatpush.bf16.msra.mxu0 %v4096
      %4265 = vmatpush.bf16.msra.mxu0 %v4094
      %4266 = vmatpush.bf16.msra.mxu0 %v4092
      %4267 = vmatmul.bf16.gmra.mxu0 %v3827
      %v4268 = vpop.f32.mrf.mxu0
      %v4269 = vadd.f32 %v4255, %v4268
      %v4270 = vpop.f32.mrf.mxu0
      %v4271 = vadd.f32 %v4257, %v4270
      %4272 = vdwg.mxu0
      %4273 = vmatpush.bf16.msra.mxu0 0
      %4274 = vmatpush.bf16.msra.mxu0 0
      %4275 = vmatpush.bf16.msra.mxu0 0
      %4276 = vmatpush.bf16.msra.mxu0 0
      %4277 = vmatpush.bf16.msra.mxu0 %v4114
      %4278 = vmatpush.bf16.msra.mxu0 %v4112
      %4279 = vmatpush.bf16.msra.mxu0 %v4110
      %4280 = vmatpush.bf16.msra.mxu0 %v4108
      %4281 = vmatmul.bf16.gmra.mxu0 %v4173
      %v4282 = vpop.f32.mrf.mxu0
      %v4283 = vadd.f32 %v4269, %v4282
      %v4284 = vpop.f32.mrf.mxu0
      %v4285 = vadd.f32 %v4271, %v4284
      %4286 = vdwg.mxu0
      %v4287 = vsub.f32 0.0, %v4227
      %v4288 = vsub.f32 0.0, %v4283
      %v4289 = vsub.f32 0.0, %v4229
      %v4290 = vsub.f32 0.0, %v4285
      %v4291 = vmul.f32 %v4287, 1.442695
      %v4292 = vpow.pop %v4291
      %v4293 = vmul.f32 %v4288, 1.442695
      %v4294 = vpow.pop %v4293
      %v4295 = vmul.f32 %v4289, 1.442695
      %v4296 = vpow.pop %v4295
      %v4297 = vmul.f32 %v4290, 1.442695
      %v4298 = vpow.pop %v4297
      %v4299 = vadd.f32 %v4292, 1.0
      %v4300 = vadd.f32 %v4294, 1.0
      %v4301 = vadd.f32 %v4296, 1.0
      %v4302 = vadd.f32 %v4298, 1.0
      %v4303 = vrcp.pop %v4299
      %v4304 = vrcp.pop %v4300
      %v4305 = vrcp.pop %v4301
      %v4306 = vrcp.pop %v4302
      %4307 = vst [vmem:[%s440] sm:$0xff] %v4303
      %4308 = vst.msk [vmem:[%s440 + $0x8] sm:$0xff] %vm3701, %v4304
      %4309 = vst [vmem:[%s440 + $0x10] sm:$0x3f] %v4305
      %vm4310 = vcmask 783360
      %4311 = vst.msk [vmem:[%s440 + $0x18] sm:$0x3f] %vm4310, %v4306
      %s4312 = scalar_lea.vmem %s9, 448
      %v4313 = vld [vmem:[%s4312] sm:$0xff]
      %v4314 = vld [vmem:[%s4312 + $0x8] sm:$0xff]
      %v4315 = vld [vmem:[%s4312 + $0x10] sm:$0xff]
      %v4316 = vld [vmem:[%s4312 + $0x18] sm:$0xff]
      %v4317 = vld [vmem:[%s4312 + $0x20] sm:$0xff]
      %v4318 = vld [vmem:[%s4312 + $0x28] sm:$0xff]
      %v4319 = vld [vmem:[%s4312 + $0x30] sm:$0xff]
      %v4320 = vld [vmem:[%s4312 + $0x38] sm:$0xff]
      %v4321 = vld [vmem:[%s4312 + $0x40] sm:$0xff]
      %v4322 = vld [vmem:[%s4312 + $0x48] sm:$0xff]
      %v4323 = vld [vmem:[%s4312 + $0x50] sm:$0xff]
      %v4324 = vld [vmem:[%s4312 + $0x58] sm:$0xff]
      %v4325 = vld [vmem:[%s4312 + $0x60] sm:$0xff]
      %v4326 = vld [vmem:[%s4312 + $0x68] sm:$0xff]
      %v4327 = vld [vmem:[%s4312 + $0x70] sm:$0xff]
      %v4328 = vld [vmem:[%s4312 + $0x78] sm:$0xff]
      %v4329 = vld [vmem:[%s4312 + $0x80] sm:$0xff]
      %v4330 = vld [vmem:[%s4312 + $0x88] sm:$0xff]
      %v4331 = vld [vmem:[%s4312 + $0x90] sm:$0xff]
      %v4332 = vld [vmem:[%s4312 + $0x98] sm:$0xff]
      %v4333 = vld [vmem:[%s4312 + $0xa0] sm:$0xff]
      %v4334 = vld [vmem:[%s4312 + $0xa8] sm:$0xff]
      %v4335 = vld [vmem:[%s4312 + $0xb0] sm:$0xff]
      %v4336 = vld [vmem:[%s4312 + $0xb8] sm:$0xff]
      %v4337 = vld [vmem:[%s4312 + $0xc0] sm:$0xff]
      %v4338 = vld [vmem:[%s4312 + $0xc8] sm:$0xff]
      %v4339 = vld [vmem:[%s4312 + $0xd0] sm:$0xff]
      %v4340 = vld [vmem:[%s4312 + $0xd8] sm:$0xff]
      %v4341 = vld [vmem:[%s4312 + $0xe0] sm:$0xff]
      %v4342 = vld [vmem:[%s4312 + $0xe8] sm:$0xff]
      %v4343 = vld [vmem:[%s4312 + $0xf0] sm:$0xff]
      %v4344 = vld [vmem:[%s4312 + $0xf8] sm:$0xff]
      %v4345 = vld [vmem:[%s4312 + $0x100] sm:$0xff]
      %v4346 = vld [vmem:[%s4312 + $0x108] sm:$0xff]
      %v4347 = vld [vmem:[%s4312 + $0x110] sm:$0xff]
      %v4348 = vld [vmem:[%s4312 + $0x118] sm:$0xff]
      %v4349 = vld [vmem:[%s4312 + $0x120] sm:$0xff]
      %v4350 = vld [vmem:[%s4312 + $0x128] sm:$0xff]
      %v4351 = vld [vmem:[%s4312 + $0x130] sm:$0xff]
      %v4352 = vld [vmem:[%s4312 + $0x138] sm:$0xff]
      %v4353 = vld [vmem:[%s4312 + $0x140] sm:$0xff]
      %v4354 = vld [vmem:[%s4312 + $0x148] sm:$0xff]
      %v4355 = vld [vmem:[%s4312 + $0x150] sm:$0xff]
      %v4356 = vld [vmem:[%s4312 + $0x158] sm:$0xff]
      %v4357 = vld [vmem:[%s4312 + $0x160] sm:$0xff]
      %v4358 = vld [vmem:[%s4312 + $0x168] sm:$0xff]
      %v4359 = vld [vmem:[%s4312 + $0x170] sm:$0xff]
      %v4360 = vld [vmem:[%s4312 + $0x178] sm:$0xff]
      %v4361 = vld [vmem:[%s4312 + $0x180] sm:$0xff]
      %v4362 = vld [vmem:[%s4312 + $0x188] sm:$0xff]
      %v4363 = vld [vmem:[%s4312 + $0x190] sm:$0xff]
      %v4364 = vld [vmem:[%s4312 + $0x198] sm:$0xff]
      %v4365 = vld [vmem:[%s4312 + $0x1a0] sm:$0xff]
      %v4366 = vld [vmem:[%s4312 + $0x1a8] sm:$0xff]
      %v4367 = vld [vmem:[%s4312 + $0x1b0] sm:$0xff]
      %v4368 = vld [vmem:[%s4312 + $0x1b8] sm:$0xff]
      %v4369 = vld [vmem:[%s10] sm:$0xf]
      %v4371 = vperm.slane %v4369, 0
      %v4372 = vperm.slane %v4369, 1
      %v4373 = vperm.slane %v4369, 2
      %v4374 = vperm.slane %v4369, 3
      %v4435 = vunpack.c.l.b16 %v4313
      %v4436 = vunpack.c.h.b16 %v4313
      %v4437 = vunpack.c.l.b16 %v4314
      %v4438 = vunpack.c.h.b16 %v4314
      %v4439 = vunpack.c.l.b16 %v4315
      %v4440 = vunpack.c.h.b16 %v4315
      %v4441 = vunpack.c.l.b16 %v4316
      %v4442 = vunpack.c.h.b16 %v4316
      %v4443 = vunpack.c.l.b16 %v4317
      %v4444 = vunpack.c.h.b16 %v4317
      %v4445 = vunpack.c.l.b16 %v4318
      %v4446 = vunpack.c.h.b16 %v4318
      %v4447 = vunpack.c.l.b16 %v4319
      %v4448 = vunpack.c.h.b16 %v4319
      %v4449 = vunpack.c.l.b16 %v4320
      %v4450 = vunpack.c.h.b16 %v4320
      %v4451 = vunpack.c.l.b16 %v4321
      %v4452 = vunpack.c.h.b16 %v4321
      %v4453 = vunpack.c.l.b16 %v4322
      %v4454 = vunpack.c.h.b16 %v4322
      %v4455 = vunpack.c.l.b16 %v4323
      %v4456 = vunpack.c.h.b16 %v4323
      %v4457 = vunpack.c.l.b16 %v4324
      %v4458 = vunpack.c.h.b16 %v4324
      %v4459 = vunpack.c.l.b16 %v4325
      %v4460 = vunpack.c.h.b16 %v4325
      %v4461 = vunpack.c.l.b16 %v4326
      %v4462 = vunpack.c.h.b16 %v4326
      %v4463 = vunpack.c.l.b16 %v4327
      %v4464 = vunpack.c.h.b16 %v4327
      %v4465 = vunpack.c.l.b16 %v4328
      %v4466 = vunpack.c.h.b16 %v4328
      %v4467 = vunpack.c.l.b16 %v4329
      %v4468 = vunpack.c.h.b16 %v4329
      %v4469 = vunpack.c.l.b16 %v4330
      %v4470 = vunpack.c.h.b16 %v4330
      %v4471 = vunpack.c.l.b16 %v4331
      %v4472 = vunpack.c.h.b16 %v4331
      %v4473 = vunpack.c.l.b16 %v4332
      %v4474 = vunpack.c.h.b16 %v4332
      %v4475 = vunpack.c.l.b16 %v4333
      %v4476 = vunpack.c.h.b16 %v4333
      %v4477 = vunpack.c.l.b16 %v4334
      %v4478 = vunpack.c.h.b16 %v4334
      %v4479 = vunpack.c.l.b16 %v4335
      %v4480 = vunpack.c.h.b16 %v4335
      %v4481 = vunpack.c.l.b16 %v4336
      %v4482 = vunpack.c.h.b16 %v4336
      %v4483 = vunpack.c.l.b16 %v4337
      %v4484 = vunpack.c.h.b16 %v4337
      %v4485 = vunpack.c.l.b16 %v4338
      %v4486 = vunpack.c.h.b16 %v4338
      %v4487 = vunpack.c.l.b16 %v4339
      %v4488 = vunpack.c.h.b16 %v4339
      %v4489 = vunpack.c.l.b16 %v4340
      %v4490 = vunpack.c.h.b16 %v4340
      %v4491 = vunpack.c.l.b16 %v4341
      %v4492 = vunpack.c.h.b16 %v4341
      %v4493 = vunpack.c.l.b16 %v4342
      %v4494 = vunpack.c.h.b16 %v4342
      %v4495 = vunpack.c.l.b16 %v4343
      %v4496 = vunpack.c.h.b16 %v4343
      %v4497 = vunpack.c.l.b16 %v4344
      %v4498 = vunpack.c.h.b16 %v4344
      %v4499 = vunpack.c.l.b16 %v4345
      %v4500 = vunpack.c.h.b16 %v4345
      %v4501 = vunpack.c.l.b16 %v4346
      %v4502 = vunpack.c.h.b16 %v4346
      %v4503 = vunpack.c.l.b16 %v4347
      %v4504 = vunpack.c.h.b16 %v4347
      %v4505 = vunpack.c.l.b16 %v4348
      %v4506 = vunpack.c.h.b16 %v4348
      %v4507 = vunpack.c.l.b16 %v4349
      %v4508 = vunpack.c.h.b16 %v4349
      %v4509 = vunpack.c.l.b16 %v4350
      %v4510 = vunpack.c.h.b16 %v4350
      %v4511 = vunpack.c.l.b16 %v4351
      %v4512 = vunpack.c.h.b16 %v4351
      %v4513 = vunpack.c.l.b16 %v4352
      %v4514 = vunpack.c.h.b16 %v4352
      %v4515 = vunpack.c.l.b16 %v4353
      %v4516 = vunpack.c.h.b16 %v4353
      %v4517 = vunpack.c.l.b16 %v4354
      %v4518 = vunpack.c.h.b16 %v4354
      %v4519 = vunpack.c.l.b16 %v4355
      %v4520 = vunpack.c.h.b16 %v4355
      %v4521 = vunpack.c.l.b16 %v4356
      %v4522 = vunpack.c.h.b16 %v4356
      %v4523 = vunpack.c.l.b16 %v4357
      %v4524 = vunpack.c.h.b16 %v4357
      %v4525 = vunpack.c.l.b16 %v4358
      %v4526 = vunpack.c.h.b16 %v4358
      %v4527 = vunpack.c.l.b16 %v4359
      %v4528 = vunpack.c.h.b16 %v4359
      %v4529 = vunpack.c.l.b16 %v4360
      %v4530 = vunpack.c.h.b16 %v4360
      %v4531 = vunpack.c.l.b16 %v4361
      %v4532 = vunpack.c.h.b16 %v4361
      %v4533 = vunpack.c.l.b16 %v4362
      %v4534 = vunpack.c.h.b16 %v4362
      %v4535 = vunpack.c.l.b16 %v4363
      %v4536 = vunpack.c.h.b16 %v4363
      %v4537 = vunpack.c.l.b16 %v4364
      %v4538 = vunpack.c.h.b16 %v4364
      %v4539 = vunpack.c.l.b16 %v4365
      %v4540 = vunpack.c.h.b16 %v4365
      %v4541 = vunpack.c.l.b16 %v4366
      %v4542 = vunpack.c.h.b16 %v4366
      %v4543 = vunpack.c.l.b16 %v4367
      %v4544 = vunpack.c.h.b16 %v4367
      %v4545 = vunpack.c.l.b16 %v4368
      %v4546 = vunpack.c.h.b16 %v4368
      %v4547 = vpack.c.b16 %v4439, %v4435
      %v4548 = vpack.c.b16 %v4440, %v4436
      %v4549 = vpack.c.b16 %v4441, %v4437
      %v4550 = vpack.c.b16 %v4442, %v4438
      %v4551 = vpack.c.b16 %v4447, %v4443
      %v4552 = vpack.c.b16 %v4448, %v4444
      %v4553 = vpack.c.b16 %v4449, %v4445
      %v4554 = vpack.c.b16 %v4450, %v4446
      %v4555 = vpack.c.b16 %v4455, %v4451
      %v4556 = vpack.c.b16 %v4456, %v4452
      %v4557 = vpack.c.b16 %v4457, %v4453
      %v4558 = vpack.c.b16 %v4458, %v4454
      %v4559 = vpack.c.b16 %v4463, %v4459
      %v4560 = vpack.c.b16 %v4464, %v4460
      %v4561 = vpack.c.b16 %v4465, %v4461
      %v4562 = vpack.c.b16 %v4466, %v4462
      %v4563 = vpack.c.b16 %v4471, %v4467
      %v4564 = vpack.c.b16 %v4472, %v4468
      %v4565 = vpack.c.b16 %v4473, %v4469
      %v4566 = vpack.c.b16 %v4474, %v4470
      %v4567 = vpack.c.b16 %v4479, %v4475
      %v4568 = vpack.c.b16 %v4480, %v4476
      %v4569 = vpack.c.b16 %v4481, %v4477
      %v4570 = vpack.c.b16 %v4482, %v4478
      %v4571 = vpack.c.b16 %v4487, %v4483
      %v4572 = vpack.c.b16 %v4488, %v4484
      %v4573 = vpack.c.b16 %v4489, %v4485
      %v4574 = vpack.c.b16 %v4490, %v4486
      %v4575 = vpack.c.b16 %v4495, %v4491
      %v4576 = vpack.c.b16 %v4496, %v4492
      %v4577 = vpack.c.b16 %v4497, %v4493
      %v4578 = vpack.c.b16 %v4498, %v4494
      %v4579 = vpack.c.b16 %v4503, %v4499
      %v4580 = vpack.c.b16 %v4504, %v4500
      %v4581 = vpack.c.b16 %v4505, %v4501
      %v4582 = vpack.c.b16 %v4506, %v4502
      %v4583 = vpack.c.b16 %v4511, %v4507
      %v4584 = vpack.c.b16 %v4512, %v4508
      %v4585 = vpack.c.b16 %v4513, %v4509
      %v4586 = vpack.c.b16 %v4514, %v4510
      %v4587 = vpack.c.b16 %v4519, %v4515
      %v4588 = vpack.c.b16 %v4520, %v4516
      %v4589 = vpack.c.b16 %v4521, %v4517
      %v4590 = vpack.c.b16 %v4522, %v4518
      %v4591 = vpack.c.b16 %v4527, %v4523
      %v4592 = vpack.c.b16 %v4528, %v4524
      %v4593 = vpack.c.b16 %v4529, %v4525
      %v4594 = vpack.c.b16 %v4530, %v4526
      %v4595 = vpack.c.b16 %v4535, %v4531
      %v4596 = vpack.c.b16 %v4536, %v4532
      %v4597 = vpack.c.b16 %v4537, %v4533
      %v4598 = vpack.c.b16 %v4538, %v4534
      %v4599 = vpack.c.b16 %v4543, %v4539
      %v4600 = vpack.c.b16 %v4544, %v4540
      %v4601 = vpack.c.b16 %v4545, %v4541
      %v4602 = vpack.c.b16 %v4546, %v4542
      %4659 = vmatpush.bf16.msra.mxu0 %v4575
      %4660 = vmatpush.bf16.msra.mxu0 %v4571
      %4661 = vmatpush.bf16.msra.mxu0 %v4567
      %4662 = vmatpush.bf16.msra.mxu0 %v4563
      %4663 = vmatpush.bf16.msra.mxu0 %v4559
      %4664 = vmatpush.bf16.msra.mxu0 %v4555
      %4665 = vmatpush.bf16.msra.mxu0 %v4551
      %4666 = vmatpush.bf16.msra.mxu0 %v4547
      %4667 = vmatmul.bf16.gmra.mxu0 %v3353
      %v4668 = vpop.f32.mrf.mxu0
      %v4669 = vadd.f32 %v4371, %v4668
      %v4670 = vpop.f32.mrf.mxu0
      %v4671 = vadd.f32 %v4371, %v4670
      %4672 = vdwg.mxu0
      %4673 = vmatpush.bf16.msra.mxu0 0
      %4674 = vmatpush.bf16.msra.mxu0 0
      %4675 = vmatpush.bf16.msra.mxu0 %v4599
      %4676 = vmatpush.bf16.msra.mxu0 %v4595
      %4677 = vmatpush.bf16.msra.mxu0 %v4591
      %4678 = vmatpush.bf16.msra.mxu0 %v4587
      %4679 = vmatpush.bf16.msra.mxu0 %v4583
      %4680 = vmatpush.bf16.msra.mxu0 %v4579
      %4681 = vmatmul.bf16.gmra.mxu0 %v3703
      %v4682 = vpop.f32.mrf.mxu0
      %v4683 = vadd.f32 %v4669, %v4682
      %v4684 = vpop.f32.mrf.mxu0
      %v4685 = vadd.f32 %v4671, %v4684
      %4686 = vdwg.mxu0
      %4687 = vmatpush.bf16.msra.mxu0 %v4576
      %4688 = vmatpush.bf16.msra.mxu0 %v4572
      %4689 = vmatpush.bf16.msra.mxu0 %v4568
      %4690 = vmatpush.bf16.msra.mxu0 %v4564
      %4691 = vmatpush.bf16.msra.mxu0 %v4560
      %4692 = vmatpush.bf16.msra.mxu0 %v4556
      %4693 = vmatpush.bf16.msra.mxu0 %v4552
      %4694 = vmatpush.bf16.msra.mxu0 %v4548
      %4695 = vmatmul.bf16.gmra.mxu0 %v3353
      %v4696 = vpop.f32.mrf.mxu0
      %v4697 = vadd.f32 %v4372, %v4696
      %v4698 = vpop.f32.mrf.mxu0
      %v4699 = vadd.f32 %v4372, %v4698
      %4700 = vdwg.mxu0
      %4701 = vmatpush.bf16.msra.mxu0 0
      %4702 = vmatpush.bf16.msra.mxu0 0
      %4703 = vmatpush.bf16.msra.mxu0 %v4600
      %4704 = vmatpush.bf16.msra.mxu0 %v4596
      %4705 = vmatpush.bf16.msra.mxu0 %v4592
      %4706 = vmatpush.bf16.msra.mxu0 %v4588
      %4707 = vmatpush.bf16.msra.mxu0 %v4584
      %4708 = vmatpush.bf16.msra.mxu0 %v4580
      %4709 = vmatmul.bf16.gmra.mxu0 %v3703
      %v4710 = vpop.f32.mrf.mxu0
      %v4711 = vadd.f32 %v4697, %v4710
      %v4712 = vpop.f32.mrf.mxu0
      %v4713 = vadd.f32 %v4699, %v4712
      %4714 = vdwg.mxu0
      %4715 = vmatpush.bf16.msra.mxu0 %v4577
      %4716 = vmatpush.bf16.msra.mxu0 %v4573
      %4717 = vmatpush.bf16.msra.mxu0 %v4569
      %4718 = vmatpush.bf16.msra.mxu0 %v4565
      %4719 = vmatpush.bf16.msra.mxu0 %v4561
      %4720 = vmatpush.bf16.msra.mxu0 %v4557
      %4721 = vmatpush.bf16.msra.mxu0 %v4553
      %4722 = vmatpush.bf16.msra.mxu0 %v4549
      %4723 = vmatmul.bf16.gmra.mxu0 %v3353
      %v4724 = vpop.f32.mrf.mxu0
      %v4725 = vadd.f32 %v4373, %v4724
      %v4726 = vpop.f32.mrf.mxu0
      %v4727 = vadd.f32 %v4373, %v4726
      %4728 = vdwg.mxu0
      %4729 = vmatpush.bf16.msra.mxu0 0
      %4730 = vmatpush.bf16.msra.mxu0 0
      %4731 = vmatpush.bf16.msra.mxu0 %v4601
      %4732 = vmatpush.bf16.msra.mxu0 %v4597
      %4733 = vmatpush.bf16.msra.mxu0 %v4593
      %4734 = vmatpush.bf16.msra.mxu0 %v4589
      %4735 = vmatpush.bf16.msra.mxu0 %v4585
      %4736 = vmatpush.bf16.msra.mxu0 %v4581
      %4737 = vmatmul.bf16.gmra.mxu0 %v3703
      %v4738 = vpop.f32.mrf.mxu0
      %v4739 = vadd.f32 %v4725, %v4738
      %v4740 = vpop.f32.mrf.mxu0
      %v4741 = vadd.f32 %v4727, %v4740
      %4742 = vdwg.mxu0
      %4743 = vmatpush.bf16.msra.mxu0 %v4578
      %4744 = vmatpush.bf16.msra.mxu0 %v4574
      %4745 = vmatpush.bf16.msra.mxu0 %v4570
      %4746 = vmatpush.bf16.msra.mxu0 %v4566
      %4747 = vmatpush.bf16.msra.mxu0 %v4562
      %4748 = vmatpush.bf16.msra.mxu0 %v4558
      %4749 = vmatpush.bf16.msra.mxu0 %v4554
      %4750 = vmatpush.bf16.msra.mxu0 %v4550
      %4751 = vmatmul.bf16.gmra.mxu0 %v3353
      %v4752 = vpop.f32.mrf.mxu0
      %v4753 = vadd.f32 %v4374, %v4752
      %v4754 = vpop.f32.mrf.mxu0
      %v4755 = vadd.f32 %v4374, %v4754
      %4756 = vdwg.mxu0
      %4757 = vmatpush.bf16.msra.mxu0 0
      %4758 = vmatpush.bf16.msra.mxu0 0
      %4759 = vmatpush.bf16.msra.mxu0 %v4602
      %4760 = vmatpush.bf16.msra.mxu0 %v4598
      %4761 = vmatpush.bf16.msra.mxu0 %v4594
      %4762 = vmatpush.bf16.msra.mxu0 %v4590
      %4763 = vmatpush.bf16.msra.mxu0 %v4586
      %4764 = vmatpush.bf16.msra.mxu0 %v4582
      %4765 = vmatmul.bf16.gmra.mxu0 %v3703
      %v4766 = vpop.f32.mrf.mxu0
      %v4767 = vadd.f32 %v4753, %v4766
      %v4768 = vpop.f32.mrf.mxu0
      %v4769 = vadd.f32 %v4755, %v4768
      %4770 = vdwg.mxu0
      %v4771 = vmax.f32 %v4683, 0.0
      %v4772 = vmax.f32 %v4711, 0.0
      %v4773 = vmax.f32 %v4739, 0.0
      %v4774 = vmax.f32 %v4767, 0.0
      %v4775 = vmax.f32 %v4685, 0.0
      %v4776 = vmax.f32 %v4713, 0.0
      %v4777 = vmax.f32 %v4741, 0.0
      %v4778 = vmax.f32 %v4769, 0.0
      %v4779 = vpack.c.bf16 %v4775, %v4771
      %v4780 = vpack.c.bf16 %v4776, %v4772
      %v4781 = vpack.c.bf16 %v4777, %v4773
      %v4782 = vpack.c.bf16 %v4778, %v4774
      %v4783 = vld [vmem:[%s11] sm:$0xff]
      %v4784 = vld [vmem:[%s11 + $0x8] sm:$0xff]
      %v4785 = vld [vmem:[%s11 + $0x10] sm:$0xff]
      %v4786 = vld [vmem:[%s11 + $0x18] sm:$0xff]
      %v4787 = vld [vmem:[%s11 + $0x20] sm:$0xff]
      %v4788 = vld [vmem:[%s11 + $0x28] sm:$0xff]
      %v4789 = vld [vmem:[%s11 + $0x30] sm:$0xff]
      %v4790 = vld [vmem:[%s11 + $0x38] sm:$0xff]
      %v4791 = vld [vmem:[%s11 + $0x40] sm:$0xff]
      %v4792 = vld [vmem:[%s11 + $0x48] sm:$0xff]
      %v4793 = vld [vmem:[%s11 + $0x50] sm:$0xff]
      %v4794 = vld [vmem:[%s11 + $0x58] sm:$0xff]
      %v4795 = vld [vmem:[%s11 + $0x60] sm:$0xff]
      %v4796 = vld [vmem:[%s11 + $0x68] sm:$0xff]
      %v4797 = vld [vmem:[%s11 + $0x70] sm:$0xff]
      %v4798 = vld [vmem:[%s11 + $0x78] sm:$0xff]
      %v4799 = vld [vmem:[%s11 + $0x80] sm:$0xff]
      %v4800 = vld [vmem:[%s11 + $0x88] sm:$0xff]
      %v4801 = vld [vmem:[%s11 + $0x90] sm:$0xff]
      %v4802 = vld [vmem:[%s11 + $0x98] sm:$0xff]
      %v4803 = vld [vmem:[%s11 + $0xa0] sm:$0xff]
      %v4804 = vld [vmem:[%s11 + $0xa8] sm:$0xff]
      %v4805 = vld [vmem:[%s11 + $0xb0] sm:$0xff]
      %v4806 = vld [vmem:[%s11 + $0xb8] sm:$0xff]
      %v4807 = vld [vmem:[%s11 + $0xc0] sm:$0xff]
      %v4808 = vld [vmem:[%s11 + $0xc8] sm:$0xff]
      %v4809 = vld [vmem:[%s11 + $0xd0] sm:$0xff]
      %v4810 = vld [vmem:[%s11 + $0xd8] sm:$0xff]
      %v4811 = vld [vmem:[%s11 + $0xe0] sm:$0xff]
      %v4812 = vld [vmem:[%s11 + $0xe8] sm:$0xff]
      %v4813 = vld [vmem:[%s11 + $0xf0] sm:$0xff]
      %v4814 = vld [vmem:[%s11 + $0xf8] sm:$0xff]
      %v4815 = vld [vmem:[%s11 + $0x100] sm:$0xff]
      %v4816 = vld [vmem:[%s11 + $0x108] sm:$0xff]
      %v4817 = vld [vmem:[%s11 + $0x110] sm:$0xff]
      %v4818 = vld [vmem:[%s11 + $0x118] sm:$0xff]
      %v4819 = vld [vmem:[%s11 + $0x120] sm:$0xff]
      %v4820 = vld [vmem:[%s11 + $0x128] sm:$0xff]
      %v4821 = vld [vmem:[%s11 + $0x130] sm:$0xff]
      %v4822 = vld [vmem:[%s11 + $0x138] sm:$0xff]
      %v4823 = vld [vmem:[%s11 + $0x140] sm:$0xff]
      %v4824 = vld [vmem:[%s11 + $0x148] sm:$0xff]
      %v4825 = vld [vmem:[%s11 + $0x150] sm:$0xff]
      %v4826 = vld [vmem:[%s11 + $0x158] sm:$0xff]
      %v4827 = vld [vmem:[%s11 + $0x160] sm:$0xff]
      %v4828 = vld [vmem:[%s11 + $0x168] sm:$0xff]
      %v4829 = vld [vmem:[%s11 + $0x170] sm:$0xff]
      %v4830 = vld [vmem:[%s11 + $0x178] sm:$0xff]
      %v4831 = vld [vmem:[%s11 + $0x180] sm:$0xff]
      %v4832 = vld [vmem:[%s11 + $0x188] sm:$0xff]
      %v4833 = vld [vmem:[%s11 + $0x190] sm:$0xff]
      %v4834 = vld [vmem:[%s11 + $0x198] sm:$0xff]
      %v4835 = vld [vmem:[%s11 + $0x1a0] sm:$0xff]
      %v4836 = vld [vmem:[%s11 + $0x1a8] sm:$0xff]
      %v4837 = vld [vmem:[%s11 + $0x1b0] sm:$0xff]
      %v4838 = vld [vmem:[%s11 + $0x1b8] sm:$0xff]
      %v4839 = vld [vmem:[%s12] sm:$0x3]
      %v4841 = vperm.slane %v4839, 0
      %v4842 = vperm.slane %v4839, 1
      %v4901 = vunpack.c.l.b16 %v4783
      %v4902 = vunpack.c.h.b16 %v4783
      %v4903 = vunpack.c.l.b16 %v4784
      %v4904 = vunpack.c.h.b16 %v4784
      %v4905 = vunpack.c.l.b16 %v4785
      %v4906 = vunpack.c.h.b16 %v4785
      %v4907 = vunpack.c.l.b16 %v4786
      %v4908 = vunpack.c.h.b16 %v4786
      %v4909 = vunpack.c.l.b16 %v4787
      %v4910 = vunpack.c.h.b16 %v4787
      %v4911 = vunpack.c.l.b16 %v4788
      %v4912 = vunpack.c.h.b16 %v4788
      %v4913 = vunpack.c.l.b16 %v4789
      %v4914 = vunpack.c.h.b16 %v4789
      %v4915 = vunpack.c.l.b16 %v4790
      %v4916 = vunpack.c.h.b16 %v4790
      %v4917 = vunpack.c.l.b16 %v4791
      %v4918 = vunpack.c.h.b16 %v4791
      %v4919 = vunpack.c.l.b16 %v4792
      %v4920 = vunpack.c.h.b16 %v4792
      %v4921 = vunpack.c.l.b16 %v4793
      %v4922 = vunpack.c.h.b16 %v4793
      %v4923 = vunpack.c.l.b16 %v4794
      %v4924 = vunpack.c.h.b16 %v4794
      %v4925 = vunpack.c.l.b16 %v4795
      %v4926 = vunpack.c.h.b16 %v4795
      %v4927 = vunpack.c.l.b16 %v4796
      %v4928 = vunpack.c.h.b16 %v4796
      %v4929 = vunpack.c.l.b16 %v4797
      %v4930 = vunpack.c.h.b16 %v4797
      %v4931 = vunpack.c.l.b16 %v4798
      %v4932 = vunpack.c.h.b16 %v4798
      %v4933 = vunpack.c.l.b16 %v4799
      %v4934 = vunpack.c.h.b16 %v4799
      %v4935 = vunpack.c.l.b16 %v4800
      %v4936 = vunpack.c.h.b16 %v4800
      %v4937 = vunpack.c.l.b16 %v4801
      %v4938 = vunpack.c.h.b16 %v4801
      %v4939 = vunpack.c.l.b16 %v4802
      %v4940 = vunpack.c.h.b16 %v4802
      %v4941 = vunpack.c.l.b16 %v4803
      %v4942 = vunpack.c.h.b16 %v4803
      %v4943 = vunpack.c.l.b16 %v4804
      %v4944 = vunpack.c.h.b16 %v4804
      %v4945 = vunpack.c.l.b16 %v4805
      %v4946 = vunpack.c.h.b16 %v4805
      %v4947 = vunpack.c.l.b16 %v4806
      %v4948 = vunpack.c.h.b16 %v4806
      %v4949 = vunpack.c.l.b16 %v4807
      %v4950 = vunpack.c.h.b16 %v4807
      %v4951 = vunpack.c.l.b16 %v4808
      %v4952 = vunpack.c.h.b16 %v4808
      %v4953 = vunpack.c.l.b16 %v4809
      %v4954 = vunpack.c.h.b16 %v4809
      %v4955 = vunpack.c.l.b16 %v4810
      %v4956 = vunpack.c.h.b16 %v4810
      %v4957 = vunpack.c.l.b16 %v4811
      %v4958 = vunpack.c.h.b16 %v4811
      %v4959 = vunpack.c.l.b16 %v4812
      %v4960 = vunpack.c.h.b16 %v4812
      %v4961 = vunpack.c.l.b16 %v4813
      %v4962 = vunpack.c.h.b16 %v4813
      %v4963 = vunpack.c.l.b16 %v4814
      %v4964 = vunpack.c.h.b16 %v4814
      %v4965 = vunpack.c.l.b16 %v4815
      %v4966 = vunpack.c.h.b16 %v4815
      %v4967 = vunpack.c.l.b16 %v4816
      %v4968 = vunpack.c.h.b16 %v4816
      %v4969 = vunpack.c.l.b16 %v4817
      %v4970 = vunpack.c.h.b16 %v4817
      %v4971 = vunpack.c.l.b16 %v4818
      %v4972 = vunpack.c.h.b16 %v4818
      %v4973 = vunpack.c.l.b16 %v4819
      %v4974 = vunpack.c.h.b16 %v4819
      %v4975 = vunpack.c.l.b16 %v4820
      %v4976 = vunpack.c.h.b16 %v4820
      %v4977 = vunpack.c.l.b16 %v4821
      %v4978 = vunpack.c.h.b16 %v4821
      %v4979 = vunpack.c.l.b16 %v4822
      %v4980 = vunpack.c.h.b16 %v4822
      %v4981 = vunpack.c.l.b16 %v4823
      %v4982 = vunpack.c.h.b16 %v4823
      %v4983 = vunpack.c.l.b16 %v4824
      %v4984 = vunpack.c.h.b16 %v4824
      %v4985 = vunpack.c.l.b16 %v4825
      %v4986 = vunpack.c.h.b16 %v4825
      %v4987 = vunpack.c.l.b16 %v4826
      %v4988 = vunpack.c.h.b16 %v4826
      %v4989 = vunpack.c.l.b16 %v4827
      %v4990 = vunpack.c.h.b16 %v4827
      %v4991 = vunpack.c.l.b16 %v4828
      %v4992 = vunpack.c.h.b16 %v4828
      %v4993 = vunpack.c.l.b16 %v4829
      %v4994 = vunpack.c.h.b16 %v4829
      %v4995 = vunpack.c.l.b16 %v4830
      %v4996 = vunpack.c.h.b16 %v4830
      %v4997 = vunpack.c.l.b16 %v4831
      %v4998 = vunpack.c.h.b16 %v4831
      %v4999 = vunpack.c.l.b16 %v4832
      %v5000 = vunpack.c.h.b16 %v4832
      %v5001 = vunpack.c.l.b16 %v4833
      %v5002 = vunpack.c.h.b16 %v4833
      %v5003 = vunpack.c.l.b16 %v4834
      %v5004 = vunpack.c.h.b16 %v4834
      %v5005 = vunpack.c.l.b16 %v4835
      %v5006 = vunpack.c.h.b16 %v4835
      %v5007 = vunpack.c.l.b16 %v4836
      %v5008 = vunpack.c.h.b16 %v4836
      %v5009 = vunpack.c.l.b16 %v4837
      %v5010 = vunpack.c.h.b16 %v4837
      %v5011 = vunpack.c.l.b16 %v4838
      %v5012 = vunpack.c.h.b16 %v4838
      %v5013 = vpack.c.b16 %v4903, %v4901
      %v5014 = vpack.c.b16 %v4904, %v4902
      %v5015 = vpack.c.b16 %v4907, %v4905
      %v5016 = vpack.c.b16 %v4908, %v4906
      %v5017 = vpack.c.b16 %v4911, %v4909
      %v5018 = vpack.c.b16 %v4912, %v4910
      %v5019 = vpack.c.b16 %v4915, %v4913
      %v5020 = vpack.c.b16 %v4916, %v4914
      %v5021 = vpack.c.b16 %v4919, %v4917
      %v5022 = vpack.c.b16 %v4920, %v4918
      %v5023 = vpack.c.b16 %v4923, %v4921
      %v5024 = vpack.c.b16 %v4924, %v4922
      %v5025 = vpack.c.b16 %v4927, %v4925
      %v5026 = vpack.c.b16 %v4928, %v4926
      %v5027 = vpack.c.b16 %v4931, %v4929
      %v5028 = vpack.c.b16 %v4932, %v4930
      %v5029 = vpack.c.b16 %v4935, %v4933
      %v5030 = vpack.c.b16 %v4936, %v4934
      %v5031 = vpack.c.b16 %v4939, %v4937
      %v5032 = vpack.c.b16 %v4940, %v4938
      %v5033 = vpack.c.b16 %v4943, %v4941
      %v5034 = vpack.c.b16 %v4944, %v4942
      %v5035 = vpack.c.b16 %v4947, %v4945
      %v5036 = vpack.c.b16 %v4948, %v4946
      %v5037 = vpack.c.b16 %v4951, %v4949
      %v5038 = vpack.c.b16 %v4952, %v4950
      %v5039 = vpack.c.b16 %v4955, %v4953
      %v5040 = vpack.c.b16 %v4956, %v4954
      %v5041 = vpack.c.b16 %v4959, %v4957
      %v5042 = vpack.c.b16 %v4960, %v4958
      %v5043 = vpack.c.b16 %v4963, %v4961
      %v5044 = vpack.c.b16 %v4964, %v4962
      %v5045 = vpack.c.b16 %v4967, %v4965
      %v5046 = vpack.c.b16 %v4968, %v4966
      %v5047 = vpack.c.b16 %v4971, %v4969
      %v5048 = vpack.c.b16 %v4972, %v4970
      %v5049 = vpack.c.b16 %v4975, %v4973
      %v5050 = vpack.c.b16 %v4976, %v4974
      %v5051 = vpack.c.b16 %v4979, %v4977
      %v5052 = vpack.c.b16 %v4980, %v4978
      %v5053 = vpack.c.b16 %v4983, %v4981
      %v5054 = vpack.c.b16 %v4984, %v4982
      %v5055 = vpack.c.b16 %v4987, %v4985
      %v5056 = vpack.c.b16 %v4988, %v4986
      %v5057 = vpack.c.b16 %v4991, %v4989
      %v5058 = vpack.c.b16 %v4992, %v4990
      %v5059 = vpack.c.b16 %v4995, %v4993
      %v5060 = vpack.c.b16 %v4996, %v4994
      %v5061 = vpack.c.b16 %v4999, %v4997
      %v5062 = vpack.c.b16 %v5000, %v4998
      %v5063 = vpack.c.b16 %v5003, %v5001
      %v5064 = vpack.c.b16 %v5004, %v5002
      %v5065 = vpack.c.b16 %v5007, %v5005
      %v5066 = vpack.c.b16 %v5008, %v5006
      %v5067 = vpack.c.b16 %v5011, %v5009
      %v5068 = vpack.c.b16 %v5012, %v5010
      %v5126 = vsel %vm4171, %v4782, 0
      %5128 = vmatpush.bf16.msra.mxu0 %v5027
      %5129 = vmatpush.bf16.msra.mxu0 %v5025
      %5130 = vmatpush.bf16.msra.mxu0 %v5023
      %5131 = vmatpush.bf16.msra.mxu0 %v5021
      %5132 = vmatpush.bf16.msra.mxu0 %v5019
      %5133 = vmatpush.bf16.msra.mxu0 %v5017
      %5134 = vmatpush.bf16.msra.mxu0 %v5015
      %5135 = vmatpush.bf16.msra.mxu0 %v5013
      %5136 = vmatmul.bf16.gmra.mxu0 %v4779
      %v5137 = vpop.f32.mrf.mxu0
      %v5138 = vadd.f32 %v4841, %v5137
      %v5139 = vpop.f32.mrf.mxu0
      %v5140 = vadd.f32 %v4841, %v5139
      %5141 = vdwg.mxu0
      %5142 = vmatpush.bf16.msra.mxu0 %v5043
      %5143 = vmatpush.bf16.msra.mxu0 %v5041
      %5144 = vmatpush.bf16.msra.mxu0 %v5039
      %5145 = vmatpush.bf16.msra.mxu0 %v5037
      %5146 = vmatpush.bf16.msra.mxu0 %v5035
      %5147 = vmatpush.bf16.msra.mxu0 %v5033
      %5148 = vmatpush.bf16.msra.mxu0 %v5031
      %5149 = vmatpush.bf16.msra.mxu0 %v5029
      %5150 = vmatmul.bf16.gmra.mxu0 %v4780
      %v5151 = vpop.f32.mrf.mxu0
      %v5152 = vadd.f32 %v5138, %v5151
      %v5153 = vpop.f32.mrf.mxu0
      %v5154 = vadd.f32 %v5140, %v5153
      %5155 = vdwg.mxu0
      %5156 = vmatpush.bf16.msra.mxu0 %v5059
      %5157 = vmatpush.bf16.msra.mxu0 %v5057
      %5158 = vmatpush.bf16.msra.mxu0 %v5055
      %5159 = vmatpush.bf16.msra.mxu0 %v5053
      %5160 = vmatpush.bf16.msra.mxu0 %v5051
      %5161 = vmatpush.bf16.msra.mxu0 %v5049
      %5162 = vmatpush.bf16.msra.mxu0 %v5047
      %5163 = vmatpush.bf16.msra.mxu0 %v5045
      %5164 = vmatmul.bf16.gmra.mxu0 %v4781
      %v5165 = vpop.f32.mrf.mxu0
      %v5166 = vadd.f32 %v5152, %v5165
      %v5167 = vpop.f32.mrf.mxu0
      %v5168 = vadd.f32 %v5154, %v5167
      %5169 = vdwg.mxu0
      %5170 = vmatpush.bf16.msra.mxu0 0
      %5171 = vmatpush.bf16.msra.mxu0 0
      %5172 = vmatpush.bf16.msra.mxu0 0
      %5173 = vmatpush.bf16.msra.mxu0 0
      %5174 = vmatpush.bf16.msra.mxu0 %v5067
      %5175 = vmatpush.bf16.msra.mxu0 %v5065
      %5176 = vmatpush.bf16.msra.mxu0 %v5063
      %5177 = vmatpush.bf16.msra.mxu0 %v5061
      %5178 = vmatmul.bf16.gmra.mxu0 %v5126
      %v5179 = vpop.f32.mrf.mxu0
      %v5180 = vadd.f32 %v5166, %v5179
      %v5181 = vpop.f32.mrf.mxu0
      %v5182 = vadd.f32 %v5168, %v5181
      %5183 = vdwg.mxu0
      %5184 = vmatpush.bf16.msra.mxu0 %v5028
      %5185 = vmatpush.bf16.msra.mxu0 %v5026
      %5186 = vmatpush.bf16.msra.mxu0 %v5024
      %5187 = vmatpush.bf16.msra.mxu0 %v5022
      %5188 = vmatpush.bf16.msra.mxu0 %v5020
      %5189 = vmatpush.bf16.msra.mxu0 %v5018
      %5190 = vmatpush.bf16.msra.mxu0 %v5016
      %5191 = vmatpush.bf16.msra.mxu0 %v5014
      %5192 = vmatmul.bf16.gmra.mxu0 %v4779
      %v5193 = vpop.f32.mrf.mxu0
      %v5194 = vadd.f32 %v4842, %v5193
      %v5195 = vpop.f32.mrf.mxu0
      %v5196 = vadd.f32 %v4842, %v5195
      %5197 = vdwg.mxu0
      %5198 = vmatpush.bf16.msra.mxu0 %v5044
      %5199 = vmatpush.bf16.msra.mxu0 %v5042
      %5200 = vmatpush.bf16.msra.mxu0 %v5040
      %5201 = vmatpush.bf16.msra.mxu0 %v5038
      %5202 = vmatpush.bf16.msra.mxu0 %v5036
      %5203 = vmatpush.bf16.msra.mxu0 %v5034
      %5204 = vmatpush.bf16.msra.mxu0 %v5032
      %5205 = vmatpush.bf16.msra.mxu0 %v5030
      %5206 = vmatmul.bf16.gmra.mxu0 %v4780
      %v5207 = vpop.f32.mrf.mxu0
      %v5208 = vadd.f32 %v5194, %v5207
      %v5209 = vpop.f32.mrf.mxu0
      %v5210 = vadd.f32 %v5196, %v5209
      %5211 = vdwg.mxu0
      %5212 = vmatpush.bf16.msra.mxu0 %v5060
      %5213 = vmatpush.bf16.msra.mxu0 %v5058
      %5214 = vmatpush.bf16.msra.mxu0 %v5056
      %5215 = vmatpush.bf16.msra.mxu0 %v5054
      %5216 = vmatpush.bf16.msra.mxu0 %v5052
      %5217 = vmatpush.bf16.msra.mxu0 %v5050
      %5218 = vmatpush.bf16.msra.mxu0 %v5048
      %5219 = vmatpush.bf16.msra.mxu0 %v5046
      %5220 = vmatmul.bf16.gmra.mxu0 %v4781
      %v5221 = vpop.f32.mrf.mxu0
      %v5222 = vadd.f32 %v5208, %v5221
      %v5223 = vpop.f32.mrf.mxu0
      %v5224 = vadd.f32 %v5210, %v5223
      %5225 = vdwg.mxu0
      %5226 = vmatpush.bf16.msra.mxu0 0
      %5227 = vmatpush.bf16.msra.mxu0 0
      %5228 = vmatpush.bf16.msra.mxu0 0
      %5229 = vmatpush.bf16.msra.mxu0 0
      %5230 = vmatpush.bf16.msra.mxu0 %v5068
      %5231 = vmatpush.bf16.msra.mxu0 %v5066
      %5232 = vmatpush.bf16.msra.mxu0 %v5064
      %5233 = vmatpush.bf16.msra.mxu0 %v5062
      %5234 = vmatmul.bf16.gmra.mxu0 %v5126
      %v5235 = vpop.f32.mrf.mxu0
      %v5236 = vadd.f32 %v5222, %v5235
      %v5237 = vpop.f32.mrf.mxu0
      %v5238 = vadd.f32 %v5224, %v5237
      %5239 = vdwg.mxu0
      %v5240 = vsub.f32 0.0, %v5180
      %v5241 = vsub.f32 0.0, %v5236
      %v5242 = vsub.f32 0.0, %v5182
      %v5243 = vsub.f32 0.0, %v5238
      %v5244 = vmul.f32 %v5240, 1.442695
      %v5245 = vpow.pop %v5244
      %v5246 = vmul.f32 %v5241, 1.442695
      %v5247 = vpow.pop %v5246
      %v5248 = vmul.f32 %v5242, 1.442695
      %v5249 = vpow.pop %v5248
      %v5250 = vmul.f32 %v5243, 1.442695
      %v5251 = vpow.pop %v5250
      %v5252 = vadd.f32 %v5245, 1.0
      %v5253 = vadd.f32 %v5247, 1.0
      %v5254 = vadd.f32 %v5249, 1.0
      %v5255 = vadd.f32 %v5251, 1.0
      %v5256 = vrcp.pop %v5252
      %v5257 = vrcp.pop %v5253
      %v5258 = vrcp.pop %v5254
      %v5259 = vrcp.pop %v5255
      %s5260 = scalar_lea.vmem %s440, 32
      %5261 = vst [vmem:[%s5260] sm:$0xff] %v5256
      %5262 = vst.msk [vmem:[%s5260 + $0x8] sm:$0xff] %vm3701, %v5257
      %5263 = vst [vmem:[%s5260 + $0x10] sm:$0x3f] %v5258
      %5264 = vst.msk [vmem:[%s5260 + $0x18] sm:$0x3f] %vm4310, %v5259
      %p5265 = scmp.lt.s32.totalorder %s24, 7
      %s5266 = scalar_select %p5265, %s24, 7
      %s5267 = smul.addr %s5266, 8
      %s5268 = smul.addr %s5267, 8
      %s5269 = scalar_lea.vmem %s13, %s5268
      // Predicated region
      $region73: #{_forward_impl.7} parent=71 // pred_check
        %p5270 = pneg %p320
      $region74: #{_forward_impl.7} parent=71 // pred_check_branch
        %5272 = sbr.rel (%p5270) target = $region76
      $region75: #{_forward_impl.7} parent=71 // pred_region
        _
      $region76: #{_forward_impl.7} parent=71 // pred_fallthru
        _
    $region72: #{_forward_impl.7} parent=5 // pred_fallthru
      _
    %p5273 = scmp.le.s32.totalorder 2, %s19
    // Predicated region
    $region77: #{_forward_impl.7} parent=5 // pred_check
      %p5274 = pneg %p5273
    $region78: #{_forward_impl.7} parent=5 // pred_check_branch
      %5276 = sbr.rel (%p5274) target = $region80
    $region79: #{_forward_impl.7} parent=5 // pred_region
      %s5277 = ssub.s32 %s19, 2
      // Predicated region
      $region81: #{_forward_impl.7} parent=79 // pred_check
        %p5278 = pneg %p326
      $region82: #{_forward_impl.7} parent=79 // pred_check_branch
        %5280 = sbr.rel (%p5278) target = $region84
      $region83: #{_forward_impl.7} parent=79 // pred_region
        %p5281 = scmp.lt.s32.totalorder %s25, 7
        %s5282 = scalar_select %p5281, %s25, 7
        %s5283 = smul.addr %s5282, 8
        %s5284 = smul.addr %s5283, 8
        %s5285 = scalar_lea.vmem %s13, %s5284
      $region84: #{_forward_impl.7} parent=79 // pred_fallthru
        _
    $region80: #{_forward_impl.7} parent=5 // pred_fallthru
      _
  $region6: #{_forward_impl.7} parent=0 // loop_footer
    %s23 = sadd.s32 1, %s19
  $region7: #{_forward_impl.7} parent=0 // loop_footer_branch
    %18 = sbr.rel target = $region3
  $region8: #{_forward_impl.7} parent=0 // loop_exit
    _

</llo_original>
